<compile_context>
chip_gen: v6e
topology: v6e:2x2x1
jax: 0.10.0
libtpu: 0.0.40
codegen_flags: <defaults>
</compile_context>

<pallas_src>
import jax
import jax.numpy as jnp
from jax.experimental import pallas as pl
from jax.experimental.pallas import tpu as pltpu

_BN_EPS = 1e-5


def _round_up(x, m):
    return (x + m - 1) // m * m


# --------------------------------------------------------------------------
# Pallas kernel: full EDCN stack (post-embedding) for one batch tile.
# rows_ref packs, per cross layer: [0] cross_w row, [1] cross_b,
# [2] MLP bias 1 (BN folded), [3] MLP bias 2 (BN folded).
# --------------------------------------------------------------------------
def edcn_kernel(x_ref, rows_ref, w1_ref, w2_ref, lrw_ref, lrb_ref, out_ref):
    x = x_ref[...].astype(jnp.float32)
    num_layers = rows_ref.shape[0]

    # RegulationModule: softmax over a single scalar == 1.0 -> identity.
    cross = x
    deep = x
    cross0 = x
    bridge = x

    # TODO(synk): for large n_cross_layers switch to lax.fori_loop + per-layer
    # (Dp, Dp) weight streaming (emit_pipeline) to bound vregs/VMEM; the static
    # unroll is fine at the small L used here.
    for i in range(num_layers):                 # static unroll (L is small)
        if i > 0:
            cross = bridge
            deep = bridge

        r = rows_ref[i]                         # (4, Dp) packed per-layer rows

        # CrossLayer: cross += w(cross) * cross0 + b.  Linear(D, 1) done as a
        # VPU multiply + lane reduction (an N=1 MXU matmul wastes the array).
        wx = jnp.sum(cross * r[0:1], axis=-1, keepdims=True)      # (tb, 1)
        cross = cross + wx * cross0 + r[1:2]

        # MLP: Linear -> (folded eval-BN) -> ReLU, twice.  Dropout = identity.
        # Activations stay f32; cast to the (bf16) weight dtype only at the
        # MXU boundary.
        h = jnp.dot(deep.astype(w1_ref.dtype), w1_ref[i],
                    preferred_element_type=jnp.float32)
        h = jnp.maximum(h + r[2:3], 0.0)
        h = jnp.dot(h.astype(w2_ref.dtype), w2_ref[i],
                    preferred_element_type=jnp.float32)
        deep = jnp.maximum(h + r[3:4], 0.0)

        # BridgeModule, bridge_type='hadamard_product' (EDCN default).
        # TODO(synk): concatenation / attention_pooling bridges not wired in.
        bridge = cross * deep

    # LR over concat([cross, deep, bridge], dim=1): fused VPU mul + lane reduce
    # instead of three (tb, D) @ (D, 1) matmuls.
    lrw = lrw_ref[...]                                            # (3, Dp)
    v = cross * lrw[0:1] + deep * lrw[1:2] + bridge * lrw[2:3]
    y = jnp.sum(v, axis=-1) + lrb_ref[0, 0]                       # (tb,)
    # (tb,) -> (1, tb) relayout rides the XLU; MXU/VPU have slack at this size
    # so the lane-dense (unmasked vst) output store stays the right trade.
    out_ref[...] = jax.nn.sigmoid(y)[None, :]                     # (1, tb) row


# --------------------------------------------------------------------------
# Wrapper: batch-tiled grid, parameters resident (constant index maps).
# --------------------------------------------------------------------------
def edcn_forward(embed_x, prep, *, tb=256):
    B, D = embed_x.shape
    Dp = prep["w1"].shape[-1]
    assert D == prep["d"]

    # Pick the batch tile: as large as reasonable (per-step overhead, MXU fill,
    # wide lane-dense stores) but keep >= 2 grid steps so the "parallel" batch
    # axis can shard across v7x's two TensorCores.
    tb = min(tb, _round_up(B, 8))
    if B > 8 and _round_up(B, tb) // tb < 2:
        tb = max(8, _round_up((B + 1) // 2, 8))
    assert tb % 8 == 0, "batch tile must be a multiple of 8 (f32 sublane)"
    b_pad = _round_up(B, tb)
    grid = (b_pad // tb,)

    x = embed_x.astype(jnp.float32)
    if b_pad != B or Dp != D:
        x = jnp.pad(x, ((0, b_pad - B), (0, Dp - D)))   # zero rows/lanes are inert

    # Generation-aware VMEM ceiling: leave headroom under v7x's 64 MiB, allow
    # more on the 128 MiB parts (v5e/v6e).
    try:
        phys_vmem = int(getattr(pltpu.get_tpu_info(), "vmem_capacity_bytes",
                                64 << 20))
    except Exception:                                   # no device / old jax
        phys_vmem = 64 << 20
    vmem_cap = (48 << 20) if phys_vmem <= (64 << 20) else (100 << 20)

    consts = (prep["rows"], prep["w1"], prep["w2"], prep["lr_w"])

    def run(single_buffer_weights):
        def const_spec(shape):
            nd = len(shape)
            kwargs = {}
            if single_buffer_weights:
                # Constant index maps are fetched once; don't double-buffer.
                kwargs["pipeline_mode"] = pl.Buffered(1)
            return pl.BlockSpec(shape, lambda b, _nd=nd: (0,) * _nd, **kwargs)

        in_specs = [
            pl.BlockSpec((tb, Dp), lambda b: (b, 0)),               # activations
            const_spec(prep["rows"].shape),                         # packed rows
            const_spec(prep["w1"].shape),                           # MLP weights 1
            const_spec(prep["w2"].shape),                           # MLP weights 2
            const_spec(prep["lr_w"].shape),                         # LR weight rows
            pl.BlockSpec(memory_space=pltpu.MemorySpace.SMEM),      # LR bias scalar
        ]
        out_spec = pl.BlockSpec((1, tb), lambda b: (0, b))          # lane-dense out

        # VMEM budget from the actual buffer sizes (block bytes x buffer count)
        # plus an estimate of live f32 temporaries, with headroom.
        wbuf = 1 if single_buffer_weights else 2
        const_bytes = wbuf * sum(int(a.size) * a.dtype.itemsize for a in consts)
        act_bytes = 2 * tb * Dp * 4                                 # 2-buf input
        out_bytes = 2 * tb * 4                                      # 2-buf output
        live_bytes = 8 * tb * Dp * 4                                # cross/deep/...
        est = act_bytes + out_bytes + const_bytes + live_bytes
        vmem_limit = int(min(max(est + (4 << 20), 32 << 20), vmem_cap))

        return pl.pallas_call(
            edcn_kernel,
            grid=grid,
            in_specs=in_specs,
            out_specs=out_spec,
            out_shape=jax.ShapeDtypeStruct((1, b_pad), jnp.float32),
            compiler_params=pltpu.CompilerParams(
                dimension_semantics=("parallel",),
                vmem_limit_bytes=vmem_limit),
        )(x, prep["rows"], prep["w1"], prep["w2"], prep["lr_w"], prep["lr_b"])

    try:
        out = run(single_buffer_weights=True)
    except Exception:
        # Fallback if this jax build rejects pipeline_mode=pl.Buffered(1) on
        # the auto-pipeline; semantics identical, just double-buffers weights.
        out = run(single_buffer_weights=False)
    return out[0, :B]                  # matches torch.sigmoid(y.squeeze(1)) -> (B,)


# --------------------------------------------------------------------------
# Host-side parameter construction (torch-like layout, Linear stored (in,out)).
# --------------------------------------------------------------------------
def init_raw_params(key, num_fields, embed_dim, n_cross_layers):
    D = num_fields * embed_dim
    L = n_cross_layers
    ks = iter(jax.random.split(key, 20))

    def unif(shape, fan_in):
        bound = 1.0 / jnp.sqrt(jnp.float32(fan_in))
        return jax.random.uniform(next(ks), shape, jnp.float32, -bound, bound)

    def nrm(shape, scale=0.1):
        return scale * jax.random.normal(next(ks), shape, jnp.float32)

    return dict(
        # CrossLayer: Linear(D, 1, bias=False) weight row + bias parameter.
        cross_w=unif((L, D), D), cross_b=nrm((L, D)),
        # MLP(dims=[D, D]): two Linear(D, D) + BatchNorm1d eval running stats.
        w1=unif((L, D, D), D), b1=unif((L, D), D),
        w2=unif((L, D, D), D), b2=unif((L, D), D),
        bn1_gamma=1.0 + nrm((L, D)), bn1_beta=nrm((L, D)),
        bn1_mean=nrm((L, D)), bn1_var=0.5 + jax.random.uniform(next(ks), (L, D)),
        bn2_gamma=1.0 + nrm((L, D)), bn2_beta=nrm((L, D)),
        bn2_mean=nrm((L, D)), bn2_var=0.5 + jax.random.uniform(next(ks), (L, D)),
        # LR over the (B, 3D) stack.
        lr_w=unif((3 * D,), 3 * D), lr_b=unif((1,), 3 * D),
    )


def prepare_params(raw, *, lane=128, matmul_dtype=jnp.bfloat16):
    """Fold eval-mode BN into the Linears, pack per-layer row vectors, zero-pad
    the feature dim to a lane multiple, and store the big matmul weights in
    bfloat16 by default (bf16-native MXUs on v5e/v6e/v7x; halves weight DMA
    and resident VMEM).  Pass matmul_dtype=jnp.float32 for exact comparisons."""
    D = raw["w1"].shape[-1]
    Dp = _round_up(D, lane)
    pd = Dp - D

    def fold(w, b, gamma, beta, mean, var):
        s = gamma / jnp.sqrt(var + _BN_EPS)                 # (L, D)
        return w * s[:, None, :], b * s + (beta - mean * s)

    w1f, b1f = fold(raw["w1"], raw["b1"], raw["bn1_gamma"], raw["bn1_beta"],
                    raw["bn1_mean"], raw["bn1_var"])
    w2f, b2f = fold(raw["w2"], raw["b2"], raw["bn2_gamma"], raw["bn2_beta"],
                    raw["bn2_mean"], raw["bn2_var"])

    rows = jnp.stack([raw["cross_w"], raw["cross_b"], b1f, b2f], axis=1)  # (L,4,D)
    lr_w = raw["lr_w"].reshape(3, D)

    rows = jnp.pad(rows, ((0, 0), (0, 0), (0, pd)))
    lr_w = jnp.pad(lr_w, ((0, 0), (0, pd)))
    w1f = jnp.pad(w1f, ((0, 0), (0, pd), (0, pd))).astype(matmul_dtype)
    w2f = jnp.pad(w2f, ((0, 0), (0, pd), (0, pd))).astype(matmul_dtype)

    return dict(rows=rows, w1=w1f, w2=w2f, lr_w=lr_w,
                lr_b=raw["lr_b"].reshape(1, 1), d=D)


# --------------------------------------------------------------------------
# Pure-JAX reference mirroring the torch forward (eval mode), from raw params.
# --------------------------------------------------------------------------
def edcn_ref(embed_x, raw):
    L = raw["w1"].shape[0]

    def bn(x, g, b, m, v):
        return (x - m) / jnp.sqrt(v + _BN_EPS) * g + b

    # Regulation gates: softmax over a single scalar == 1.0 -> identity.
    cross = embed_x
    deep = embed_x
    cross0 = cross
    bridge = cross
    for i in range(L):
        if i > 0:
            cross = bridge
            deep = bridge
        wx = jnp.sum(cross * raw["cross_w"][i], axis=-1, keepdims=True)
        cross = cross + wx * cross0 + raw["cross_b"][i]
        h = deep @ raw["w1"][i] + raw["b1"][i]
        h = jnp.maximum(bn(h, raw["bn1_gamma"][i], raw["bn1_beta"][i],
                           raw["bn1_mean"][i], raw["bn1_var"][i]), 0.0)
        h = h @ raw["w2"][i] + raw["b2"][i]
        deep = jnp.maximum(bn(h, raw["bn2_gamma"][i], raw["bn2_beta"][i],
                              raw["bn2_mean"][i], raw["bn2_var"][i]), 0.0)
        bridge = cross * deep
    stack = jnp.concatenate([cross, deep, bridge], axis=1)
    y = stack @ raw["lr_w"] + raw["lr_b"]
    return jax.nn.sigmoid(y)


if __name__ == "__main__":
    # Small synthetic config: 4 sparse features, embed_dim=8 -> D=32, 2 cross
    # layers; batch 512 with tb=256 gives a 2-step "parallel" grid (both v7x
    # TensorCores busy, per-step overhead amortised over 256 rows).
    B, num_fields, embed_dim, n_cross_layers, vocab = 512, 4, 8, 2, 16
    D = num_fields * embed_dim

    key = jax.random.PRNGKey(0)
    k_emb, k_idx, k_par = jax.random.split(key, 3)

    # EmbeddingLayer glue (squeeze_dim=True): gather + concat -> (B, D).
    # TODO(synk): the embedding gather stays in plain JAX (data-dependent HBM
    # gather; not worth a Pallas kernel at these sizes).
    tables = 0.1 * jax.random.normal(k_emb, (num_fields, vocab, embed_dim),
                                     jnp.float32)
    idx = jax.random.randint(k_idx, (B, num_fields), 0, vocab)
    embed_x = jnp.concatenate([tables[f][idx[:, f]] for f in range(num_fields)],
                              axis=-1)

    raw = init_raw_params(k_par, num_fields, embed_dim, n_cross_layers)
    prep = prepare_params(raw)          # bf16 matmul weights by default

    out = jax.block_until_ready(edcn_forward(embed_x, prep, tb=256))
    ref = jax.block_until_ready(edcn_ref(embed_x, raw))

    assert out.shape == (B,)
    # bf16 matmul weights -> relaxed tolerance vs the f32 reference.
    assert jnp.allclose(out, ref, rtol=1e-2, atol=1e-2), (
        float(jnp.max(jnp.abs(out - ref))))
    print("KERNEL_OK")
</pallas_src>

<mosaic_0001>
module attributes {stable_mosaic.version = 11 : i64} {
  func.func @edcn_kernel(%arg0: i32, %arg1: memref<256x128xf32, #tpu.memory_space<vmem>>, %arg2: memref<2x4x128xf32, #tpu.memory_space<vmem>>, %arg3: memref<2x128x128xbf16, #tpu.memory_space<vmem>>, %arg4: memref<2x128x128xbf16, #tpu.memory_space<vmem>>, %arg5: memref<3x128xf32, #tpu.memory_space<vmem>>, %arg6: memref<1x1xf32, #tpu.memory_space<smem>>, %arg7: memref<1x256xf32, #tpu.memory_space<vmem>>) attributes {dimension_semantics = [#tpu.dimension_semantics<parallel>], iteration_bounds = array<i64: 2>, scalar_prefetch = 0 : i64, scratch_operands = 0 : i64, tpu.core_type = #tpu.core_type<tc>, window_params = [{transform_indices = @transform_0, window_bounds = array<i64: 256, 128>}, {pipeline_mode = #tpu.pipeline_mode<synchronous>, transform_indices = @transform_1, window_bounds = array<i64: 2, 4, 128>}, {pipeline_mode = #tpu.pipeline_mode<synchronous>, transform_indices = @transform_2, window_bounds = array<i64: 2, 128, 128>}, {pipeline_mode = #tpu.pipeline_mode<synchronous>, transform_indices = @transform_3, window_bounds = array<i64: 2, 128, 128>}, {pipeline_mode = #tpu.pipeline_mode<synchronous>, transform_indices = @transform_4, window_bounds = array<i64: 3, 128>}, {transform_indices = @transform_5, window_bounds = array<i64: 1, 1>}, {transform_indices = @transform_6, window_bounds = array<i64: 1, 256>}]} {
    %c0 = arith.constant 0 : index
    %c0_0 = arith.constant 0 : index
    %0 = vector.load %arg1[%c0, %c0_0] : memref<256x128xf32, #tpu.memory_space<vmem>>, vector<256x128xf32>
    %c0_1 = arith.constant 0 : index
    %c0_2 = arith.constant 0 : index
    %c0_3 = arith.constant 0 : index
    %1 = vector.load %arg2[%c0_1, %c0_2, %c0_3] : memref<2x4x128xf32, #tpu.memory_space<vmem>>, vector<1x4x128xf32>
    %2 = vector.shape_cast %1 : vector<1x4x128xf32> to vector<4x128xf32>
    %3 = vector.extract_strided_slice %2 {offsets = [0, 0], sizes = [1, 128], strides = [1, 1]} : vector<4x128xf32> to vector<1x128xf32>
    %4 = vector.broadcast %3 : vector<1x128xf32> to vector<256x128xf32>
    %5 = arith.mulf %0, %4 : vector<256x128xf32>
    %cst = arith.constant dense<0.000000e+00> : vector<256xf32>
    %6 = vector.multi_reduction <add>, %5, %cst [1] : vector<256x128xf32> to vector<256xf32>
    %7 = vector.shape_cast %6 : vector<256xf32> to vector<256x1xf32>
    %8 = vector.broadcast %7 : vector<256x1xf32> to vector<256x128xf32>
    %9 = arith.mulf %8, %0 : vector<256x128xf32>
    %10 = arith.addf %0, %9 : vector<256x128xf32>
    %11 = vector.extract_strided_slice %2 {offsets = [1, 0], sizes = [1, 128], strides = [1, 1]} : vector<4x128xf32> to vector<1x128xf32>
    %12 = vector.broadcast %11 : vector<1x128xf32> to vector<256x128xf32>
    %13 = arith.addf %10, %12 : vector<256x128xf32>
    %14 = arith.truncf %0 : vector<256x128xf32> to vector<256x128xbf16>
    %c0_4 = arith.constant 0 : index
    %c0_5 = arith.constant 0 : index
    %c0_6 = arith.constant 0 : index
    %15 = vector.load %arg3[%c0_4, %c0_5, %c0_6] : memref<2x128x128xbf16, #tpu.memory_space<vmem>>, vector<1x128x128xbf16>
    %16 = vector.shape_cast %15 : vector<1x128x128xbf16> to vector<128x128xbf16>
    %cst_7 = arith.constant dense<0.000000e+00> : vector<256x128xf32>
    %17 = tpu.matmul %14, %16, %cst_7 {dimension_numbers = #tpu.dot_dimension_numbers<[1], [0], [0], [1], [0, 0, 1, 1], [], []>} : vector<256x128xbf16>, vector<128x128xbf16>, vector<256x128xf32> -> vector<256x128xf32>
    %18 = vector.extract_strided_slice %2 {offsets = [2, 0], sizes = [1, 128], strides = [1, 1]} : vector<4x128xf32> to vector<1x128xf32>
    %19 = vector.broadcast %18 : vector<1x128xf32> to vector<256x128xf32>
    %20 = arith.addf %17, %19 : vector<256x128xf32>
    %cst_8 = arith.constant 0.000000e+00 : f32
    %21 = vector.broadcast %cst_8 : f32 to vector<256x128xf32>
    %22 = arith.maximumf %20, %21 : vector<256x128xf32>
    %23 = arith.truncf %22 : vector<256x128xf32> to vector<256x128xbf16>
    %c0_9 = arith.constant 0 : index
    %c0_10 = arith.constant 0 : index
    %c0_11 = arith.constant 0 : index
    %24 = vector.load %arg4[%c0_9, %c0_10, %c0_11] : memref<2x128x128xbf16, #tpu.memory_space<vmem>>, vector<1x128x128xbf16>
    %25 = vector.shape_cast %24 : vector<1x128x128xbf16> to vector<128x128xbf16>
    %cst_12 = arith.constant dense<0.000000e+00> : vector<256x128xf32>
    %26 = tpu.matmul %23, %25, %cst_12 {dimension_numbers = #tpu.dot_dimension_numbers<[1], [0], [0], [1], [0, 0, 1, 1], [], []>} : vector<256x128xbf16>, vector<128x128xbf16>, vector<256x128xf32> -> vector<256x128xf32>
    %27 = vector.extract_strided_slice %2 {offsets = [3, 0], sizes = [1, 128], strides = [1, 1]} : vector<4x128xf32> to vector<1x128xf32>
    %28 = vector.broadcast %27 : vector<1x128xf32> to vector<256x128xf32>
    %29 = arith.addf %26, %28 : vector<256x128xf32>
    %cst_13 = arith.constant 0.000000e+00 : f32
    %30 = vector.broadcast %cst_13 : f32 to vector<256x128xf32>
    %31 = arith.maximumf %29, %30 : vector<256x128xf32>
    %32 = arith.mulf %13, %31 : vector<256x128xf32>
    %c1 = arith.constant 1 : index
    %c0_14 = arith.constant 0 : index
    %c0_15 = arith.constant 0 : index
    %33 = vector.load %arg2[%c1, %c0_14, %c0_15] : memref<2x4x128xf32, #tpu.memory_space<vmem>>, vector<1x4x128xf32>
    %34 = vector.shape_cast %33 : vector<1x4x128xf32> to vector<4x128xf32>
    %35 = vector.extract_strided_slice %34 {offsets = [0, 0], sizes = [1, 128], strides = [1, 1]} : vector<4x128xf32> to vector<1x128xf32>
    %36 = vector.broadcast %35 : vector<1x128xf32> to vector<256x128xf32>
    %37 = arith.mulf %32, %36 : vector<256x128xf32>
    %cst_16 = arith.constant dense<0.000000e+00> : vector<256xf32>
    %38 = vector.multi_reduction <add>, %37, %cst_16 [1] : vector<256x128xf32> to vector<256xf32>
    %39 = vector.shape_cast %38 : vector<256xf32> to vector<256x1xf32>
    %40 = vector.broadcast %39 : vector<256x1xf32> to vector<256x128xf32>
    %41 = arith.mulf %40, %0 : vector<256x128xf32>
    %42 = arith.addf %32, %41 : vector<256x128xf32>
    %43 = vector.extract_strided_slice %34 {offsets = [1, 0], sizes = [1, 128], strides = [1, 1]} : vector<4x128xf32> to vector<1x128xf32>
    %44 = vector.broadcast %43 : vector<1x128xf32> to vector<256x128xf32>
    %45 = arith.addf %42, %44 : vector<256x128xf32>
    %46 = arith.truncf %32 : vector<256x128xf32> to vector<256x128xbf16>
    %c1_17 = arith.constant 1 : index
    %c0_18 = arith.constant 0 : index
    %c0_19 = arith.constant 0 : index
    %47 = vector.load %arg3[%c1_17, %c0_18, %c0_19] : memref<2x128x128xbf16, #tpu.memory_space<vmem>>, vector<1x128x128xbf16>
    %48 = vector.shape_cast %47 : vector<1x128x128xbf16> to vector<128x128xbf16>
    %cst_20 = arith.constant dense<0.000000e+00> : vector<256x128xf32>
    %49 = tpu.matmul %46, %48, %cst_20 {dimension_numbers = #tpu.dot_dimension_numbers<[1], [0], [0], [1], [0, 0, 1, 1], [], []>} : vector<256x128xbf16>, vector<128x128xbf16>, vector<256x128xf32> -> vector<256x128xf32>
    %50 = vector.extract_strided_slice %34 {offsets = [2, 0], sizes = [1, 128], strides = [1, 1]} : vector<4x128xf32> to vector<1x128xf32>
    %51 = vector.broadcast %50 : vector<1x128xf32> to vector<256x128xf32>
    %52 = arith.addf %49, %51 : vector<256x128xf32>
    %cst_21 = arith.constant 0.000000e+00 : f32
    %53 = vector.broadcast %cst_21 : f32 to vector<256x128xf32>
    %54 = arith.maximumf %52, %53 : vector<256x128xf32>
    %55 = arith.truncf %54 : vector<256x128xf32> to vector<256x128xbf16>
    %c1_22 = arith.constant 1 : index
    %c0_23 = arith.constant 0 : index
    %c0_24 = arith.constant 0 : index
    %56 = vector.load %arg4[%c1_22, %c0_23, %c0_24] : memref<2x128x128xbf16, #tpu.memory_space<vmem>>, vector<1x128x128xbf16>
    %57 = vector.shape_cast %56 : vector<1x128x128xbf16> to vector<128x128xbf16>
    %cst_25 = arith.constant dense<0.000000e+00> : vector<256x128xf32>
    %58 = tpu.matmul %55, %57, %cst_25 {dimension_numbers = #tpu.dot_dimension_numbers<[1], [0], [0], [1], [0, 0, 1, 1], [], []>} : vector<256x128xbf16>, vector<128x128xbf16>, vector<256x128xf32> -> vector<256x128xf32>
    %59 = vector.extract_strided_slice %34 {offsets = [3, 0], sizes = [1, 128], strides = [1, 1]} : vector<4x128xf32> to vector<1x128xf32>
    %60 = vector.broadcast %59 : vector<1x128xf32> to vector<256x128xf32>
    %61 = arith.addf %58, %60 : vector<256x128xf32>
    %cst_26 = arith.constant 0.000000e+00 : f32
    %62 = vector.broadcast %cst_26 : f32 to vector<256x128xf32>
    %63 = arith.maximumf %61, %62 : vector<256x128xf32>
    %64 = arith.mulf %45, %63 : vector<256x128xf32>
    %c0_27 = arith.constant 0 : index
    %c0_28 = arith.constant 0 : index
    %65 = vector.load %arg5[%c0_27, %c0_28] : memref<3x128xf32, #tpu.memory_space<vmem>>, vector<3x128xf32>
    %66 = vector.extract_strided_slice %65 {offsets = [0, 0], sizes = [1, 128], strides = [1, 1]} : vector<3x128xf32> to vector<1x128xf32>
    %67 = vector.broadcast %66 : vector<1x128xf32> to vector<256x128xf32>
    %68 = arith.mulf %45, %67 : vector<256x128xf32>
    %69 = vector.extract_strided_slice %65 {offsets = [1, 0], sizes = [1, 128], strides = [1, 1]} : vector<3x128xf32> to vector<1x128xf32>
    %70 = vector.broadcast %69 : vector<1x128xf32> to vector<256x128xf32>
    %71 = arith.mulf %63, %70 : vector<256x128xf32>
    %72 = arith.addf %68, %71 : vector<256x128xf32>
    %73 = vector.extract_strided_slice %65 {offsets = [2, 0], sizes = [1, 128], strides = [1, 1]} : vector<3x128xf32> to vector<1x128xf32>
    %74 = vector.broadcast %73 : vector<1x128xf32> to vector<256x128xf32>
    %75 = arith.mulf %64, %74 : vector<256x128xf32>
    %76 = arith.addf %72, %75 : vector<256x128xf32>
    %cst_29 = arith.constant dense<0.000000e+00> : vector<256xf32>
    %77 = vector.multi_reduction <add>, %76, %cst_29 [1] : vector<256x128xf32> to vector<256xf32>
    %c0_30 = arith.constant 0 : index
    %c0_31 = arith.constant 0 : index
    %78 = memref.load %arg6[%c0_30, %c0_31] : memref<1x1xf32, #tpu.memory_space<smem>>
    %79 = vector.broadcast %78 : f32 to vector<256xf32>
    %80 = arith.addf %77, %79 : vector<256xf32>
    %81 = arith.negf %80 : vector<256xf32>
    %82 = math.exp %81 : vector<256xf32>
    %cst_32 = arith.constant 1.000000e+00 : f32
    %83 = vector.broadcast %cst_32 : f32 to vector<256xf32>
    %84 = arith.addf %83, %82 : vector<256xf32>
    %85 = arith.divf %83, %84 : vector<256xf32>
    %86 = vector.shape_cast %85 : vector<256xf32> to vector<1x256xf32>
    %c0_33 = arith.constant 0 : index
    %c0_34 = arith.constant 0 : index
    %87 = vector.load %arg7[%c0_33, %c0_34] : memref<1x256xf32, #tpu.memory_space<vmem>>, vector<1x256xf32>
    tpu.vector_store %arg7[%c0_33, %c0_34], %86 {strides = array<i32>} : memref<1x256xf32, #tpu.memory_space<vmem>>, vector<1x256xf32>,
    return
  }
  func.func @transform_0(%arg0: i32) -> (i32, i32) {
    %c0_i32 = arith.constant 0 : i32
    %c0_i32_0 = arith.constant 0 : i32
    return %arg0, %c0_i32 : i32, i32
  }
  func.func @transform_1(%arg0: i32) -> (i32, i32, i32) {
    %c0_i32 = arith.constant 0 : i32
    %c0_i32_0 = arith.constant 0 : i32
    %c0_i32_1 = arith.constant 0 : i32
    %c0_i32_2 = arith.constant 0 : i32
    return %c0_i32, %c0_i32_0, %c0_i32_1 : i32, i32, i32
  }
  func.func @transform_2(%arg0: i32) -> (i32, i32, i32) {
    %c0_i32 = arith.constant 0 : i32
    %c0_i32_0 = arith.constant 0 : i32
    %c0_i32_1 = arith.constant 0 : i32
    %c0_i32_2 = arith.constant 0 : i32
    return %c0_i32, %c0_i32_0, %c0_i32_1 : i32, i32, i32
  }
  func.func @transform_3(%arg0: i32) -> (i32, i32, i32) {
    %c0_i32 = arith.constant 0 : i32
    %c0_i32_0 = arith.constant 0 : i32
    %c0_i32_1 = arith.constant 0 : i32
    %c0_i32_2 = arith.constant 0 : i32
    return %c0_i32, %c0_i32_0, %c0_i32_1 : i32, i32, i32
  }
  func.func @transform_4(%arg0: i32) -> (i32, i32) {
    %c0_i32 = arith.constant 0 : i32
    %c0_i32_0 = arith.constant 0 : i32
    %c0_i32_1 = arith.constant 0 : i32
    return %c0_i32, %c0_i32_0 : i32, i32
  }
  func.func @transform_5(%arg0: i32) -> (i32, i32) {
    %c0_i32 = arith.constant 0 : i32
    %c0_i32_0 = arith.constant 0 : i32
    %c0_i32_1 = arith.constant 0 : i32
    return %c0_i32, %c0_i32_0 : i32, i32
  }
  func.func @transform_6(%arg0: i32) -> (i32, i32) {
    %c0_i32 = arith.constant 0 : i32
    %c0_i32_0 = arith.constant 0 : i32
    return %c0_i32, %arg0 : i32, i32
  }
}

module attributes {stable_mosaic.version = 11 : i64} {
  func.func @edcn_kernel(%arg0: i32, %arg1: memref<256x128xf32, #tpu.memory_space<vmem>>, %arg2: memref<2x4x128xf32, #tpu.memory_space<vmem>>, %arg3: memref<2x128x128xbf16, #tpu.memory_space<vmem>>, %arg4: memref<2x128x128xbf16, #tpu.memory_space<vmem>>, %arg5: memref<3x128xf32, #tpu.memory_space<vmem>>, %arg6: memref<1x1xf32, #tpu.memory_space<smem>>, %arg7: memref<1x256xf32, #tpu.memory_space<vmem>>) attributes {dimension_semantics = [#tpu.dimension_semantics<parallel>], iteration_bounds = array<i64: 2>, scalar_prefetch = 0 : i64, scratch_operands = 0 : i64, tpu.core_type = #tpu.core_type<tc>, window_params = [{transform_indices = @transform_0, window_bounds = array<i64: 256, 128>}, {pipeline_mode = #tpu.pipeline_mode<synchronous>, transform_indices = @transform_1, window_bounds = array<i64: 2, 4, 128>}, {pipeline_mode = #tpu.pipeline_mode<synchronous>, transform_indices = @transform_2, window_bounds = array<i64: 2, 128, 128>}, {pipeline_mode = #tpu.pipeline_mode<synchronous>, transform_indices = @transform_3, window_bounds = array<i64: 2, 128, 128>}, {pipeline_mode = #tpu.pipeline_mode<synchronous>, transform_indices = @transform_4, window_bounds = array<i64: 3, 128>}, {transform_indices = @transform_5, window_bounds = array<i64: 1, 1>}, {transform_indices = @transform_6, window_bounds = array<i64: 1, 256>}]} {
    %c0 = arith.constant 0 : index
    %c0_0 = arith.constant 0 : index
    %0 = vector.load %arg1[%c0, %c0_0] : memref<256x128xf32, #tpu.memory_space<vmem>>, vector<256x128xf32>
    %c0_1 = arith.constant 0 : index
    %c0_2 = arith.constant 0 : index
    %c0_3 = arith.constant 0 : index
    %1 = vector.load %arg2[%c0_1, %c0_2, %c0_3] : memref<2x4x128xf32, #tpu.memory_space<vmem>>, vector<1x4x128xf32>
    %2 = vector.shape_cast %1 : vector<1x4x128xf32> to vector<4x128xf32>
    %3 = vector.extract_strided_slice %2 {offsets = [0, 0], sizes = [1, 128], strides = [1, 1]} : vector<4x128xf32> to vector<1x128xf32>
    %4 = vector.broadcast %3 : vector<1x128xf32> to vector<256x128xf32>
    %5 = arith.mulf %0, %4 : vector<256x128xf32>
    %cst = arith.constant dense<0.000000e+00> : vector<256xf32>
    %6 = vector.multi_reduction <add>, %5, %cst [1] : vector<256x128xf32> to vector<256xf32>
    %7 = vector.shape_cast %6 : vector<256xf32> to vector<256x1xf32>
    %8 = vector.broadcast %7 : vector<256x1xf32> to vector<256x128xf32>
    %9 = arith.mulf %8, %0 : vector<256x128xf32>
    %10 = arith.addf %0, %9 : vector<256x128xf32>
    %11 = vector.extract_strided_slice %2 {offsets = [1, 0], sizes = [1, 128], strides = [1, 1]} : vector<4x128xf32> to vector<1x128xf32>
    %12 = vector.broadcast %11 : vector<1x128xf32> to vector<256x128xf32>
    %13 = arith.addf %10, %12 : vector<256x128xf32>
    %14 = arith.truncf %0 : vector<256x128xf32> to vector<256x128xbf16>
    %c0_4 = arith.constant 0 : index
    %c0_5 = arith.constant 0 : index
    %c0_6 = arith.constant 0 : index
    %15 = vector.load %arg3[%c0_4, %c0_5, %c0_6] : memref<2x128x128xbf16, #tpu.memory_space<vmem>>, vector<1x128x128xbf16>
    %16 = vector.shape_cast %15 : vector<1x128x128xbf16> to vector<128x128xbf16>
    %cst_7 = arith.constant dense<0.000000e+00> : vector<256x128xf32>
    %17 = tpu.matmul %14, %16, %cst_7 {dimension_numbers = #tpu.dot_dimension_numbers<[1], [0], [0], [1], [0, 0, 1, 1], [], []>} : vector<256x128xbf16>, vector<128x128xbf16>, vector<256x128xf32> -> vector<256x128xf32>
    %18 = vector.extract_strided_slice %2 {offsets = [2, 0], sizes = [1, 128], strides = [1, 1]} : vector<4x128xf32> to vector<1x128xf32>
    %19 = vector.broadcast %18 : vector<1x128xf32> to vector<256x128xf32>
    %20 = arith.addf %17, %19 : vector<256x128xf32>
    %cst_8 = arith.constant 0.000000e+00 : f32
    %21 = vector.broadcast %cst_8 : f32 to vector<256x128xf32>
    %22 = arith.maximumf %20, %21 : vector<256x128xf32>
    %23 = arith.truncf %22 : vector<256x128xf32> to vector<256x128xbf16>
    %c0_9 = arith.constant 0 : index
    %c0_10 = arith.constant 0 : index
    %c0_11 = arith.constant 0 : index
    %24 = vector.load %arg4[%c0_9, %c0_10, %c0_11] : memref<2x128x128xbf16, #tpu.memory_space<vmem>>, vector<1x128x128xbf16>
    %25 = vector.shape_cast %24 : vector<1x128x128xbf16> to vector<128x128xbf16>
    %cst_12 = arith.constant dense<0.000000e+00> : vector<256x128xf32>
    %26 = tpu.matmul %23, %25, %cst_12 {dimension_numbers = #tpu.dot_dimension_numbers<[1], [0], [0], [1], [0, 0, 1, 1], [], []>} : vector<256x128xbf16>, vector<128x128xbf16>, vector<256x128xf32> -> vector<256x128xf32>
    %27 = vector.extract_strided_slice %2 {offsets = [3, 0], sizes = [1, 128], strides = [1, 1]} : vector<4x128xf32> to vector<1x128xf32>
    %28 = vector.broadcast %27 : vector<1x128xf32> to vector<256x128xf32>
    %29 = arith.addf %26, %28 : vector<256x128xf32>
    %cst_13 = arith.constant 0.000000e+00 : f32
    %30 = vector.broadcast %cst_13 : f32 to vector<256x128xf32>
    %31 = arith.maximumf %29, %30 : vector<256x128xf32>
    %32 = arith.mulf %13, %31 : vector<256x128xf32>
    %c1 = arith.constant 1 : index
    %c0_14 = arith.constant 0 : index
    %c0_15 = arith.constant 0 : index
    %33 = vector.load %arg2[%c1, %c0_14, %c0_15] : memref<2x4x128xf32, #tpu.memory_space<vmem>>, vector<1x4x128xf32>
    %34 = vector.shape_cast %33 : vector<1x4x128xf32> to vector<4x128xf32>
    %35 = vector.extract_strided_slice %34 {offsets = [0, 0], sizes = [1, 128], strides = [1, 1]} : vector<4x128xf32> to vector<1x128xf32>
    %36 = vector.broadcast %35 : vector<1x128xf32> to vector<256x128xf32>
    %37 = arith.mulf %32, %36 : vector<256x128xf32>
    %cst_16 = arith.constant dense<0.000000e+00> : vector<256xf32>
    %38 = vector.multi_reduction <add>, %37, %cst_16 [1] : vector<256x128xf32> to vector<256xf32>
    %39 = vector.shape_cast %38 : vector<256xf32> to vector<256x1xf32>
    %40 = vector.broadcast %39 : vector<256x1xf32> to vector<256x128xf32>
    %41 = arith.mulf %40, %0 : vector<256x128xf32>
    %42 = arith.addf %32, %41 : vector<256x128xf32>
    %43 = vector.extract_strided_slice %34 {offsets = [1, 0], sizes = [1, 128], strides = [1, 1]} : vector<4x128xf32> to vector<1x128xf32>
    %44 = vector.broadcast %43 : vector<1x128xf32> to vector<256x128xf32>
    %45 = arith.addf %42, %44 : vector<256x128xf32>
    %46 = arith.truncf %32 : vector<256x128xf32> to vector<256x128xbf16>
    %c1_17 = arith.constant 1 : index
    %c0_18 = arith.constant 0 : index
    %c0_19 = arith.constant 0 : index
    %47 = vector.load %arg3[%c1_17, %c0_18, %c0_19] : memref<2x128x128xbf16, #tpu.memory_space<vmem>>, vector<1x128x128xbf16>
    %48 = vector.shape_cast %47 : vector<1x128x128xbf16> to vector<128x128xbf16>
    %cst_20 = arith.constant dense<0.000000e+00> : vector<256x128xf32>
    %49 = tpu.matmul %46, %48, %cst_20 {dimension_numbers = #tpu.dot_dimension_numbers<[1], [0], [0], [1], [0, 0, 1, 1], [], []>} : vector<256x128xbf16>, vector<128x128xbf16>, vector<256x128xf32> -> vector<256x128xf32>
    %50 = vector.extract_strided_slice %34 {offsets = [2, 0], sizes = [1, 128], strides = [1, 1]} : vector<4x128xf32> to vector<1x128xf32>
    %51 = vector.broadcast %50 : vector<1x128xf32> to vector<256x128xf32>
    %52 = arith.addf %49, %51 : vector<256x128xf32>
    %cst_21 = arith.constant 0.000000e+00 : f32
    %53 = vector.broadcast %cst_21 : f32 to vector<256x128xf32>
    %54 = arith.maximumf %52, %53 : vector<256x128xf32>
    %55 = arith.truncf %54 : vector<256x128xf32> to vector<256x128xbf16>
    %c1_22 = arith.constant 1 : index
    %c0_23 = arith.constant 0 : index
    %c0_24 = arith.constant 0 : index
    %56 = vector.load %arg4[%c1_22, %c0_23, %c0_24] : memref<2x128x128xbf16, #tpu.memory_space<vmem>>, vector<1x128x128xbf16>
    %57 = vector.shape_cast %56 : vector<1x128x128xbf16> to vector<128x128xbf16>
    %cst_25 = arith.constant dense<0.000000e+00> : vector<256x128xf32>
    %58 = tpu.matmul %55, %57, %cst_25 {dimension_numbers = #tpu.dot_dimension_numbers<[1], [0], [0], [1], [0, 0, 1, 1], [], []>} : vector<256x128xbf16>, vector<128x128xbf16>, vector<256x128xf32> -> vector<256x128xf32>
    %59 = vector.extract_strided_slice %34 {offsets = [3, 0], sizes = [1, 128], strides = [1, 1]} : vector<4x128xf32> to vector<1x128xf32>
    %60 = vector.broadcast %59 : vector<1x128xf32> to vector<256x128xf32>
    %61 = arith.addf %58, %60 : vector<256x128xf32>
    %cst_26 = arith.constant 0.000000e+00 : f32
    %62 = vector.broadcast %cst_26 : f32 to vector<256x128xf32>
    %63 = arith.maximumf %61, %62 : vector<256x128xf32>
    %64 = arith.mulf %45, %63 : vector<256x128xf32>
    %c0_27 = arith.constant 0 : index
    %c0_28 = arith.constant 0 : index
    %65 = vector.load %arg5[%c0_27, %c0_28] : memref<3x128xf32, #tpu.memory_space<vmem>>, vector<3x128xf32>
    %66 = vector.extract_strided_slice %65 {offsets = [0, 0], sizes = [1, 128], strides = [1, 1]} : vector<3x128xf32> to vector<1x128xf32>
    %67 = vector.broadcast %66 : vector<1x128xf32> to vector<256x128xf32>
    %68 = arith.mulf %45, %67 : vector<256x128xf32>
    %69 = vector.extract_strided_slice %65 {offsets = [1, 0], sizes = [1, 128], strides = [1, 1]} : vector<3x128xf32> to vector<1x128xf32>
    %70 = vector.broadcast %69 : vector<1x128xf32> to vector<256x128xf32>
    %71 = arith.mulf %63, %70 : vector<256x128xf32>
    %72 = arith.addf %68, %71 : vector<256x128xf32>
    %73 = vector.extract_strided_slice %65 {offsets = [2, 0], sizes = [1, 128], strides = [1, 1]} : vector<3x128xf32> to vector<1x128xf32>
    %74 = vector.broadcast %73 : vector<1x128xf32> to vector<256x128xf32>
    %75 = arith.mulf %64, %74 : vector<256x128xf32>
    %76 = arith.addf %72, %75 : vector<256x128xf32>
    %cst_29 = arith.constant dense<0.000000e+00> : vector<256xf32>
    %77 = vector.multi_reduction <add>, %76, %cst_29 [1] : vector<256x128xf32> to vector<256xf32>
    %c0_30 = arith.constant 0 : index
    %c0_31 = arith.constant 0 : index
    %78 = memref.load %arg6[%c0_30, %c0_31] : memref<1x1xf32, #tpu.memory_space<smem>>
    %79 = vector.broadcast %78 : f32 to vector<256xf32>
    %80 = arith.addf %77, %79 : vector<256xf32>
    %81 = arith.negf %80 : vector<256xf32>
    %82 = math.exp %81 : vector<256xf32>
    %cst_32 = arith.constant 1.000000e+00 : f32
    %83 = vector.broadcast %cst_32 : f32 to vector<256xf32>
    %84 = arith.addf %83, %82 : vector<256xf32>
    %85 = arith.divf %83, %84 : vector<256xf32>
    %86 = vector.shape_cast %85 : vector<256xf32> to vector<1x256xf32>
    %c0_33 = arith.constant 0 : index
    %c0_34 = arith.constant 0 : index
    %87 = vector.load %arg7[%c0_33, %c0_34] : memref<1x256xf32, #tpu.memory_space<vmem>>, vector<1x256xf32>
    tpu.vector_store %arg7[%c0_33, %c0_34], %86 {strides = array<i32>} : memref<1x256xf32, #tpu.memory_space<vmem>>, vector<1x256xf32>,
    return
  }
  func.func @transform_0(%arg0: i32) -> (i32, i32) {
    %c0_i32 = arith.constant 0 : i32
    %c0_i32_0 = arith.constant 0 : i32
    return %arg0, %c0_i32 : i32, i32
  }
  func.func @transform_1(%arg0: i32) -> (i32, i32, i32) {
    %c0_i32 = arith.constant 0 : i32
    %c0_i32_0 = arith.constant 0 : i32
    %c0_i32_1 = arith.constant 0 : i32
    %c0_i32_2 = arith.constant 0 : i32
    return %c0_i32, %c0_i32_0, %c0_i32_1 : i32, i32, i32
  }
  func.func @transform_2(%arg0: i32) -> (i32, i32, i32) {
    %c0_i32 = arith.constant 0 : i32
    %c0_i32_0 = arith.constant 0 : i32
    %c0_i32_1 = arith.constant 0 : i32
    %c0_i32_2 = arith.constant 0 : i32
    return %c0_i32, %c0_i32_0, %c0_i32_1 : i32, i32, i32
  }
  func.func @transform_3(%arg0: i32) -> (i32, i32, i32) {
    %c0_i32 = arith.constant 0 : i32
    %c0_i32_0 = arith.constant 0 : i32
    %c0_i32_1 = arith.constant 0 : i32
    %c0_i32_2 = arith.constant 0 : i32
    return %c0_i32, %c0_i32_0, %c0_i32_1 : i32, i32, i32
  }
  func.func @transform_4(%arg0: i32) -> (i32, i32) {
    %c0_i32 = arith.constant 0 : i32
    %c0_i32_0 = arith.constant 0 : i32
    %c0_i32_1 = arith.constant 0 : i32
    return %c0_i32, %c0_i32_0 : i32, i32
  }
  func.func @transform_5(%arg0: i32) -> (i32, i32) {
    %c0_i32 = arith.constant 0 : i32
    %c0_i32_0 = arith.constant 0 : i32
    %c0_i32_1 = arith.constant 0 : i32
    return %c0_i32, %c0_i32_0 : i32, i32
  }
  func.func @transform_6(%arg0: i32) -> (i32, i32) {
    %c0_i32 = arith.constant 0 : i32
    %c0_i32_0 = arith.constant 0 : i32
    return %c0_i32, %arg0 : i32, i32
  }
}

</mosaic_0001>

<llo_original>
// kernel: tpu_custom_call.1
$region0: #{tpu_custom_call.1}
  #allocation0 [shape = 'u32[]', space=smem, size = 0x4, offset = 0x4, fixed_abs, tag = 'smem constant byte address 0x4 - core index']
  #allocation1 [shape = 'u32[144,128]{1,0:T(1,128)}', space=vmem, size = 0x12000, scoped, tag = 'internal scratch']
  #allocation2 [shape = 'f32[1,1]{1,0:T(1,128)S(6)}', space=smem, size = 0x200, scoped, tag = 'scoped memory for tpu_custom_call.1']
  %s0 = inlined_call_operand.hbm [shape: f32[512,128], index: 0, kind: input, shape index: {}]
  %s1 = inlined_call_operand.hbm [shape: f32[2,4,128], index: 1, kind: input, shape index: {}]
  %s2 = inlined_call_operand.hbm [shape: bf16[2,128,128], index: 2, kind: input, shape index: {}]
  %s3 = inlined_call_operand.hbm [shape: bf16[2,128,128], index: 3, kind: input, shape index: {}]
  %s4 = inlined_call_operand.vmem [shape: f32[3,128], index: 4, kind: input, shape index: {}]
  %s5 = inlined_call_operand.<no memory space> [shape: f32[1,1], index: 5, kind: input, shape index: {}]
  %s6 = inlined_call_operand.hbm [shape: f32[1,512], index: 6, kind: output, shape index: {}]
  %s7 = sld [smem:[#allocation0]]
  $region73: #{tpu_custom_call.1} parent=0
    _
  %s9 = ssub.s32 1, %s7
  %s10 = scalar_select 0, %s9, %s7
  %11 = sst [smem:[#allocation2]] %s5
  $region1: #{tpu_custom_call.1} parent=0
    #allocation3 [shape = 'u8[262144]{0}', space=vmem, size = 0x40000, scoped, tag = 'input window, operand 0']
    #allocation4 [shape = 's32[2]{0}', space=sflag, size = 0x8, scoped, tag = 'scoped memory for tpu_custom_call.1']
    #allocation5 [shape = 's32[2]{0}', space=sflag, size = 0x8, scoped, tag = 'scoped memory for tpu_custom_call.1']
    #allocation6 [shape = 'u8[4096]{0}', space=vmem, size = 0x1000, scoped, tag = 'input window, operand 1, single buffered']
    #allocation7 [shape = 's32[1]{0}', space=sflag, size = 0x4, scoped, tag = 'scoped memory for tpu_custom_call.1']
    #allocation8 [shape = 'u8[65536]{0}', space=vmem, size = 0x10000, scoped, tag = 'input window, operand 2, single buffered']
    #allocation9 [shape = 'u8[65536]{0}', space=vmem, size = 0x10000, scoped, tag = 'input window, operand 3, single buffered']
    #allocation10 [shape = 's32[1]{0}', space=sflag, size = 0x4, scoped, tag = 'scoped memory for tpu_custom_call.1']
    #allocation11 [shape = 'u8[2048]{0}', space=vmem, size = 0x800, scoped, tag = 'output window, operand 0']
    %12 = vsyncpa [#allocation4], 0
    %s13 = scalar_lea.sflag [#allocation4], 1
    %14 = vsyncpa %s13, 0
    %15 = vsyncpa [#allocation7], 0
    %16 = vsyncpa [#allocation10], 0
    %17 = vsyncpa [#allocation5], 0
    %s18 = scalar_lea.sflag [#allocation5], 1
    %19 = vsyncpa %s18, 0
    loop: start=0, step=1, limit=4
    $region2: #{tpu_custom_call.1} parent=1 // loop_pre_header
      _
    $region3: #{tpu_custom_call.1} parent=1 // loop_header
      %s21 = sphi 0, %s25
      %p22 = scmp.ge.s32.totalorder %s21, 4
      %s31 = sphi 0, %s33
      %s34 = sphi 0, %s31
      %s35 = sphi 0, %s34
      %s51 = sphi 0, %s35
      %s55 = sphi 0, %s55
      %s57 = sphi 0, %s55
      %s58 = sphi 0, %s57
      %s72 = sphi 0, %s58
      %s76 = sphi 0, %s76
      %s78 = sphi 0, %s76
      %s79 = sphi 0, %s78
      %s93 = sphi 0, %s79
      %s97 = sphi 0, %s97
      %s99 = sphi 0, %s97
      %s100 = sphi 0, %s99
      %s114 = sphi 0, %s100
      %s118 = sphi 0, %s118
      %s120 = sphi 0, %s118
      %s121 = sphi 0, %s120
      %s135 = sphi 0, %s121
      %s139 = sphi 0, %s139
      %s141 = sphi 0, %s139
      %s142 = sphi 0, %s141
      %s156 = sphi 0, %s142
      %s162 = sphi 0, %s164
      %s165 = sphi 0, %s162
      %s166 = sphi 0, %s165
      %s182 = sphi 0, %s166
    $region4: #{tpu_custom_call.1} parent=1 // loop_header_branch
      %24 = sbr.rel (%p22) target = $region8
    $region5: #{tpu_custom_call.1} parent=1 // loop_body
      %s26 = ssub.s32 %s21, 1
      %s27 = ssub.s32 %s21, 2
      %s28 = sadd.s32 %s21, 1
      %s29 = ssub.s32 %s21, %s28
      %p30 = scmp.eq.s32.totalorder %s29, 0
      %s32 = sadd.s32 %s31, 1
      %s33 = scalar_select %p30, %s31, %s32
      %p36 = pneg %p30
      %p37 = scmp.eq.s32.totalorder %s21, 1
      %p38 = por %p36, %p37
      %p39 = scmp.ne.s32.totalorder %s31, %s34
      %p40 = scmp.eq.s32.totalorder %s21, 0
      %p41 = por %p39, %p40
      %p42 = scmp.ne.s32.totalorder %s31, %s34
      %p43 = scmp.eq.s32.totalorder %s26, 1
      %p44 = por %p42, %p43
      %p45 = scmp.ne.s32.totalorder %s34, %s35
      %p46 = scmp.eq.s32.totalorder %s26, 0
      %p47 = por %p45, %p46
      %p48 = scmp.ne.s32.totalorder %s34, %s35
      %p49 = scmp.eq.s32.totalorder %s27, 1
      %p50 = por %p48, %p49
      %p52 = scmp.ne.s32.totalorder %s35, %s51
      %p53 = scmp.eq.s32.totalorder %s27, 0
      %p54 = por %p52, %p53
      %s56 = sadd.s32 %s55, 1
      %p59 = scmp.eq.s32.totalorder %s21, 1
      %p60 = scmp.ne.s32.totalorder %s55, %s57
      %p61 = scmp.eq.s32.totalorder %s21, 0
      %p62 = por %p60, %p61
      %p63 = scmp.ne.s32.totalorder %s55, %s57
      %p64 = scmp.eq.s32.totalorder %s26, 1
      %p65 = por %p63, %p64
      %p66 = scmp.ne.s32.totalorder %s57, %s58
      %p67 = scmp.eq.s32.totalorder %s26, 0
      %p68 = por %p66, %p67
      %p69 = scmp.ne.s32.totalorder %s57, %s58
      %p70 = scmp.eq.s32.totalorder %s27, 1
      %p71 = por %p69, %p70
      %p73 = scmp.ne.s32.totalorder %s58, %s72
      %p74 = scmp.eq.s32.totalorder %s27, 0
      %p75 = por %p73, %p74
      %s77 = sadd.s32 %s76, 1
      %p80 = scmp.eq.s32.totalorder %s21, 1
      %p81 = scmp.ne.s32.totalorder %s76, %s78
      %p82 = scmp.eq.s32.totalorder %s21, 0
      %p83 = por %p81, %p82
      %p84 = scmp.ne.s32.totalorder %s76, %s78
      %p85 = scmp.eq.s32.totalorder %s26, 1
      %p86 = por %p84, %p85
      %p87 = scmp.ne.s32.totalorder %s78, %s79
      %p88 = scmp.eq.s32.totalorder %s26, 0
      %p89 = por %p87, %p88
      %p90 = scmp.ne.s32.totalorder %s78, %s79
      %p91 = scmp.eq.s32.totalorder %s27, 1
      %p92 = por %p90, %p91
      %p94 = scmp.ne.s32.totalorder %s79, %s93
      %p95 = scmp.eq.s32.totalorder %s27, 0
      %p96 = por %p94, %p95
      %s98 = sadd.s32 %s97, 1
      %p101 = scmp.eq.s32.totalorder %s21, 1
      %p102 = scmp.ne.s32.totalorder %s97, %s99
      %p103 = scmp.eq.s32.totalorder %s21, 0
      %p104 = por %p102, %p103
      %p105 = scmp.ne.s32.totalorder %s97, %s99
      %p106 = scmp.eq.s32.totalorder %s26, 1
      %p107 = por %p105, %p106
      %p108 = scmp.ne.s32.totalorder %s99, %s100
      %p109 = scmp.eq.s32.totalorder %s26, 0
      %p110 = por %p108, %p109
      %p111 = scmp.ne.s32.totalorder %s99, %s100
      %p112 = scmp.eq.s32.totalorder %s27, 1
      %p113 = por %p111, %p112
      %p115 = scmp.ne.s32.totalorder %s100, %s114
      %p116 = scmp.eq.s32.totalorder %s27, 0
      %p117 = por %p115, %p116
      %s119 = sadd.s32 %s118, 1
      %p122 = scmp.eq.s32.totalorder %s21, 1
      %p123 = scmp.ne.s32.totalorder %s118, %s120
      %p124 = scmp.eq.s32.totalorder %s21, 0
      %p125 = por %p123, %p124
      %p126 = scmp.ne.s32.totalorder %s118, %s120
      %p127 = scmp.eq.s32.totalorder %s26, 1
      %p128 = por %p126, %p127
      %p129 = scmp.ne.s32.totalorder %s120, %s121
      %p130 = scmp.eq.s32.totalorder %s26, 0
      %p131 = por %p129, %p130
      %p132 = scmp.ne.s32.totalorder %s120, %s121
      %p133 = scmp.eq.s32.totalorder %s27, 1
      %p134 = por %p132, %p133
      %p136 = scmp.ne.s32.totalorder %s121, %s135
      %p137 = scmp.eq.s32.totalorder %s27, 0
      %p138 = por %p136, %p137
      %s140 = sadd.s32 %s139, 1
      %p143 = scmp.eq.s32.totalorder %s21, 1
      %p144 = scmp.ne.s32.totalorder %s139, %s141
      %p145 = scmp.eq.s32.totalorder %s21, 0
      %p146 = por %p144, %p145
      %p147 = scmp.ne.s32.totalorder %s139, %s141
      %p148 = scmp.eq.s32.totalorder %s26, 1
      %p149 = por %p147, %p148
      %p150 = scmp.ne.s32.totalorder %s141, %s142
      %p151 = scmp.eq.s32.totalorder %s26, 0
      %p152 = por %p150, %p151
      %p153 = scmp.ne.s32.totalorder %s141, %s142
      %p154 = scmp.eq.s32.totalorder %s27, 1
      %p155 = por %p153, %p154
      %p157 = scmp.ne.s32.totalorder %s142, %s156
      %p158 = scmp.eq.s32.totalorder %s27, 0
      %p159 = por %p157, %p158
      %s160 = ssub.s32 %s21, %s28
      %p161 = scmp.eq.s32.totalorder %s160, 0
      %s163 = sadd.s32 %s162, 1
      %s164 = scalar_select %p161, %s162, %s163
      %p167 = pneg %p161
      %p168 = scmp.eq.s32.totalorder %s21, 1
      %p169 = por %p167, %p168
      %p170 = scmp.ne.s32.totalorder %s162, %s165
      %p171 = scmp.eq.s32.totalorder %s21, 0
      %p172 = por %p170, %p171
      %p173 = scmp.ne.s32.totalorder %s162, %s165
      %p174 = scmp.eq.s32.totalorder %s26, 1
      %p175 = por %p173, %p174
      %p176 = scmp.ne.s32.totalorder %s165, %s166
      %p177 = scmp.eq.s32.totalorder %s26, 0
      %p178 = por %p176, %p177
      %p179 = scmp.ne.s32.totalorder %s165, %s166
      %p180 = scmp.eq.s32.totalorder %s27, 1
      %p181 = por %p179, %p180
      %p183 = scmp.ne.s32.totalorder %s166, %s182
      %p184 = scmp.eq.s32.totalorder %s27, 0
      %p185 = por %p183, %p184
      %p186 = scmp.le.s32.totalorder 1, %s21
      %p187 = scmp.lt.s32.totalorder %s21, 3
      %p188 = pnand %p186, %p187
      %p189 = pneg %p188
      // Predicated region
      $region9: #{tpu_custom_call.1} parent=5 // pred_check
        _
      $region10: #{tpu_custom_call.1} parent=5 // pred_check_branch
        %191 = sbr.rel (%p188) target = $region12
      $region11: #{tpu_custom_call.1} parent=5 // pred_region
        %s192 = ssub.s32 %s21, 1
        // Predicated region
        $region13: #{tpu_custom_call.1} parent=11 // pred_check
          %p193 = pneg %p68
        $region14: #{tpu_custom_call.1} parent=11 // pred_check_branch
          %195 = sbr.rel (%p193) target = $region16
        $region15: #{tpu_custom_call.1} parent=11 // pred_region
          %s197 = ssub.s32 128, 128
          %198 = vsyncadd [#allocation7], %s197
          %s199 = sshll.u32 [#allocation6], 4
          %s200 = int_to_ptr.vmem [resolvable:$true] %s199
          %205 = dma.hbm_to_vmem [thread:$0]  %s1, 128, %s200, [#allocation7], 64, 64, 4
        $region16: #{tpu_custom_call.1} parent=11 // pred_fallthru
          _
        // Predicated region
        $region17: #{tpu_custom_call.1} parent=11 // pred_check
          %p206 = pneg %p89
        $region18: #{tpu_custom_call.1} parent=11 // pred_check_branch
          %208 = sbr.rel (%p206) target = $region20
        $region19: #{tpu_custom_call.1} parent=11 // pred_region
          %s210 = ssub.s32 2048, 2048
          %211 = vsyncadd [#allocation7], %s210
          %s212 = sshll.u32 [#allocation8], 4
          %s213 = int_to_ptr.vmem [resolvable:$true] %s212
          %218 = dma.hbm_to_vmem [thread:$0]  %s2, 2048, %s213, [#allocation7], 64, 64, 4
        $region20: #{tpu_custom_call.1} parent=11 // pred_fallthru
          _
        // Predicated region
        $region21: #{tpu_custom_call.1} parent=11 // pred_check
          %p219 = pneg %p110
        $region22: #{tpu_custom_call.1} parent=11 // pred_check_branch
          %221 = sbr.rel (%p219) target = $region24
        $region23: #{tpu_custom_call.1} parent=11 // pred_region
          %s223 = ssub.s32 2048, 2048
          %224 = vsyncadd [#allocation10], %s223
          %s225 = sshll.u32 [#allocation9], 4
          %s226 = int_to_ptr.vmem [resolvable:$true] %s225
          %231 = dma.hbm_to_vmem [thread:$0]  %s3, 2048, %s226, [#allocation10], 64, 64, 4
        $region24: #{tpu_custom_call.1} parent=11 // pred_fallthru
          _
        // Predicated region
        $region25: #{tpu_custom_call.1} parent=11 // pred_check
          %p232 = pneg %p131
        $region26: #{tpu_custom_call.1} parent=11 // pred_check_branch
          %234 = sbr.rel (%p232) target = $region28
        $region27: #{tpu_custom_call.1} parent=11 // pred_region
          _
        $region28: #{tpu_custom_call.1} parent=11 // pred_fallthru
          _
        // Predicated region
        $region29: #{tpu_custom_call.1} parent=11 // pred_check
          %p235 = pneg %p152
        $region30: #{tpu_custom_call.1} parent=11 // pred_check_branch
          %237 = sbr.rel (%p235) target = $region32
        $region31: #{tpu_custom_call.1} parent=11 // pred_region
          _
        $region32: #{tpu_custom_call.1} parent=11 // pred_fallthru
          _
      $region12: #{tpu_custom_call.1} parent=5 // pred_fallthru
        _
      %p238 = scmp.lt.s32.totalorder %s21, 2
      // Predicated region
      $region33: #{tpu_custom_call.1} parent=5 // pred_check
        %p239 = pneg %p238
      $region34: #{tpu_custom_call.1} parent=5 // pred_check_branch
        %241 = sbr.rel (%p239) target = $region36
      $region35: #{tpu_custom_call.1} parent=5 // pred_region
        // Predicated region
        $region37: #{tpu_custom_call.1} parent=35 // pred_check
          %p242 = pneg %p41
        $region38: #{tpu_custom_call.1} parent=35 // pred_check_branch
          %244 = sbr.rel (%p242) target = $region40
        $region39: #{tpu_custom_call.1} parent=35 // pred_region
          %s245 = sand.u32 %s31, 1
          %s246 = scalar_lea.sflag [#allocation4], %s245
          %s247 = sand.u32 %s31, 1
          %s248 = smul.addr %s247, 256
          %s249 = scalar_lea.vmem [#allocation3], %s248
          %s250 = smul.u32 32, %s21
          %s252 = ssub.s32 4096, 4096
          %253 = vsyncadd %s246, %s252
          %s254 = smul.addr %s250, 128
          %s255 = scalar_lea.hbm %s0, %s254
          %s256 = sshll.u32 %s249, 4
          %s257 = int_to_ptr.vmem [resolvable:$true] %s256
          %262 = dma.hbm_to_vmem [thread:$0]  %s255, 4096, %s257, %s246, 128, 128, 8
        $region40: #{tpu_custom_call.1} parent=35 // pred_fallthru
          _
      $region36: #{tpu_custom_call.1} parent=5 // pred_fallthru
        _
      %p263 = scmp.le.s32.totalorder 1, %s21
      %p264 = scmp.lt.s32.totalorder %s21, 3
      %p265 = pnand %p263, %p264
      %p266 = pneg %p265
      // Predicated region
      $region41: #{tpu_custom_call.1} parent=5 // pred_check
        _
      $region42: #{tpu_custom_call.1} parent=5 // pred_check_branch
        %268 = sbr.rel (%p265) target = $region44
      $region43: #{tpu_custom_call.1} parent=5 // pred_region
        %s269 = ssub.s32 %s21, 1
        %s270 = sand.u32 %s34, 1
        %s271 = scalar_lea.sflag [#allocation4], %s270
        %s272 = sand.u32 %s34, 1
        %s273 = smul.addr %s272, 256
        %s274 = scalar_lea.vmem [#allocation3], %s273
        // Predicated region
        $region45: #{tpu_custom_call.1} parent=43 // pred_check
          %p275 = pneg %p47
        $region46: #{tpu_custom_call.1} parent=43 // pred_check_branch
          %277 = sbr.rel (%p275) target = $region48
        $region47: #{tpu_custom_call.1} parent=43 // pred_region
          %278 = dma.done %s271, 4096
        $region48: #{tpu_custom_call.1} parent=43 // pred_fallthru
          _
        // Predicated region
        $region49: #{tpu_custom_call.1} parent=43 // pred_check
          %p279 = pneg %p68
        $region50: #{tpu_custom_call.1} parent=43 // pred_check_branch
          %281 = sbr.rel (%p279) target = $region52
        $region51: #{tpu_custom_call.1} parent=43 // pred_region
          %282 = dma.done [#allocation7], 128
        $region52: #{tpu_custom_call.1} parent=43 // pred_fallthru
          _
        // Predicated region
        $region53: #{tpu_custom_call.1} parent=43 // pred_check
          %p283 = pneg %p89
        $region54: #{tpu_custom_call.1} parent=43 // pred_check_branch
          %285 = sbr.rel (%p283) target = $region56
        $region55: #{tpu_custom_call.1} parent=43 // pred_region
          %286 = dma.done [#allocation7], 2048
        $region56: #{tpu_custom_call.1} parent=43 // pred_fallthru
          _
        // Predicated region
        $region57: #{tpu_custom_call.1} parent=43 // pred_check
          %p287 = pneg %p110
        $region58: #{tpu_custom_call.1} parent=43 // pred_check_branch
          %289 = sbr.rel (%p287) target = $region60
        $region59: #{tpu_custom_call.1} parent=43 // pred_region
          %290 = dma.done [#allocation10], 2048
        $region60: #{tpu_custom_call.1} parent=43 // pred_fallthru
          _
        %s291 = sand.u32 %s34, 1
        %s292 = scalar_lea.sflag [#allocation4], %s291
        %s293 = sand.u32 %s34, 1
        %s294 = smul.addr %s293, 256
        %s295 = scalar_lea.vmem [#allocation3], %s294
        %p296 = pneg %p47
        %p297 = pneg %p44
        %p298 = pneg %p68
        %p299 = pneg %p65
        %p300 = pneg %p89
        %p301 = pneg %p86
        %p302 = pneg %p110
        %p303 = pneg %p107
        %p304 = pneg %p131
        %p305 = pneg %p128
        %p306 = pneg %p152
        %p307 = pneg %p149
        %p308 = pneg %p178
        %p309 = pneg %p175
        %s310 = sand.u32 %s165, 1
        %s311 = scalar_lea.sflag [#allocation5], %s310
        %s312 = sand.u32 %s165, 1
        %s313 = smul.addr %s312, 2
        %s314 = scalar_lea.vmem [#allocation11], %s313
        %s315 = smul.u32 32, %s26
        %s316 = smul.u32 2, %s26
        %v318 = vld [vmem:[%s274] sm:$0xff]
        %v319 = vld [vmem:[%s274 + $0x8] sm:$0xff]
        %v320 = vld [vmem:[%s274 + $0x10] sm:$0xff]
        %v321 = vld [vmem:[%s274 + $0x18] sm:$0xff]
        %v322 = vld [vmem:[%s274 + $0x20] sm:$0xff]
        %v323 = vld [vmem:[%s274 + $0x28] sm:$0xff]
        %v324 = vld [vmem:[%s274 + $0x30] sm:$0xff]
        %v325 = vld [vmem:[%s274 + $0x38] sm:$0xff]
        %v326 = vld [vmem:[%s274 + $0x40] sm:$0xff]
        %v327 = vld [vmem:[%s274 + $0x48] sm:$0xff]
        %v328 = vld [vmem:[%s274 + $0x50] sm:$0xff]
        %v329 = vld [vmem:[%s274 + $0x58] sm:$0xff]
        %v330 = vld [vmem:[%s274 + $0x60] sm:$0xff]
        %v331 = vld [vmem:[%s274 + $0x68] sm:$0xff]
        %v332 = vld [vmem:[%s274 + $0x70] sm:$0xff]
        %v333 = vld [vmem:[%s274 + $0x78] sm:$0xff]
        %v334 = vld [vmem:[%s274 + $0x80] sm:$0xff]
        %v335 = vld [vmem:[%s274 + $0x88] sm:$0xff]
        %v336 = vld [vmem:[%s274 + $0x90] sm:$0xff]
        %v337 = vld [vmem:[%s274 + $0x98] sm:$0xff]
        %v338 = vld [vmem:[%s274 + $0xa0] sm:$0xff]
        %v339 = vld [vmem:[%s274 + $0xa8] sm:$0xff]
        %v340 = vld [vmem:[%s274 + $0xb0] sm:$0xff]
        %v341 = vld [vmem:[%s274 + $0xb8] sm:$0xff]
        %v342 = vld [vmem:[%s274 + $0xc0] sm:$0xff]
        %v343 = vld [vmem:[%s274 + $0xc8] sm:$0xff]
        %v344 = vld [vmem:[%s274 + $0xd0] sm:$0xff]
        %v345 = vld [vmem:[%s274 + $0xd8] sm:$0xff]
        %v346 = vld [vmem:[%s274 + $0xe0] sm:$0xff]
        %v347 = vld [vmem:[%s274 + $0xe8] sm:$0xff]
        %v348 = vld [vmem:[%s274 + $0xf0] sm:$0xff]
        %v349 = vld [vmem:[%s274 + $0xf8] sm:$0xff]
        %v350 = vld [vmem:[#allocation6] sm:$0xf]
        %v351 = vlaneseq
        %v352 = vshrl.u32 %v351, 7
        %v353 = vsub.s32 0, %v352
        %v354 = vrot.slane %v350, %v353
        %v355 = vmul.f32 %v318, %v354
        %v356 = vmul.f32 %v319, %v354
        %v357 = vmul.f32 %v320, %v354
        %v358 = vmul.f32 %v321, %v354
        %v359 = vmul.f32 %v322, %v354
        %v360 = vmul.f32 %v323, %v354
        %v361 = vmul.f32 %v324, %v354
        %v362 = vmul.f32 %v325, %v354
        %v363 = vmul.f32 %v326, %v354
        %v364 = vmul.f32 %v327, %v354
        %v365 = vmul.f32 %v328, %v354
        %v366 = vmul.f32 %v329, %v354
        %v367 = vmul.f32 %v330, %v354
        %v368 = vmul.f32 %v331, %v354
        %v369 = vmul.f32 %v332, %v354
        %v370 = vmul.f32 %v333, %v354
        %v371 = vmul.f32 %v334, %v354
        %v372 = vmul.f32 %v335, %v354
        %v373 = vmul.f32 %v336, %v354
        %v374 = vmul.f32 %v337, %v354
        %v375 = vmul.f32 %v338, %v354
        %v376 = vmul.f32 %v339, %v354
        %v377 = vmul.f32 %v340, %v354
        %v378 = vmul.f32 %v341, %v354
        %v379 = vmul.f32 %v342, %v354
        %v380 = vmul.f32 %v343, %v354
        %v381 = vmul.f32 %v344, %v354
        %v382 = vmul.f32 %v345, %v354
        %v383 = vmul.f32 %v346, %v354
        %v384 = vmul.f32 %v347, %v354
        %v385 = vmul.f32 %v348, %v354
        %v386 = vmul.f32 %v349, %v354
        %387 = vadd.xlane.f32.xlu0 %v355
        %v388 = vpop.xlane.xlu0 %387
        %389 = vadd.xlane.f32.xlu0 %v356
        %v390 = vpop.xlane.xlu0 %389
        %391 = vadd.xlane.f32.xlu0 %v357
        %v392 = vpop.xlane.xlu0 %391
        %393 = vadd.xlane.f32.xlu0 %v358
        %v394 = vpop.xlane.xlu0 %393
        %395 = vadd.xlane.f32.xlu0 %v359
        %v396 = vpop.xlane.xlu0 %395
        %397 = vadd.xlane.f32.xlu0 %v360
        %v398 = vpop.xlane.xlu0 %397
        %399 = vadd.xlane.f32.xlu0 %v361
        %v400 = vpop.xlane.xlu0 %399
        %401 = vadd.xlane.f32.xlu0 %v362
        %v402 = vpop.xlane.xlu0 %401
        %403 = vadd.xlane.f32.xlu0 %v363
        %v404 = vpop.xlane.xlu0 %403
        %405 = vadd.xlane.f32.xlu0 %v364
        %v406 = vpop.xlane.xlu0 %405
        %407 = vadd.xlane.f32.xlu0 %v365
        %v408 = vpop.xlane.xlu0 %407
        %409 = vadd.xlane.f32.xlu0 %v366
        %v410 = vpop.xlane.xlu0 %409
        %411 = vadd.xlane.f32.xlu0 %v367
        %v412 = vpop.xlane.xlu0 %411
        %413 = vadd.xlane.f32.xlu0 %v368
        %v414 = vpop.xlane.xlu0 %413
        %415 = vadd.xlane.f32.xlu0 %v369
        %v416 = vpop.xlane.xlu0 %415
        %417 = vadd.xlane.f32.xlu0 %v370
        %v418 = vpop.xlane.xlu0 %417
        %419 = vadd.xlane.f32.xlu0 %v371
        %v420 = vpop.xlane.xlu0 %419
        %421 = vadd.xlane.f32.xlu0 %v372
        %v422 = vpop.xlane.xlu0 %421
        %423 = vadd.xlane.f32.xlu0 %v373
        %v424 = vpop.xlane.xlu0 %423
        %425 = vadd.xlane.f32.xlu0 %v374
        %v426 = vpop.xlane.xlu0 %425
        %427 = vadd.xlane.f32.xlu0 %v375
        %v428 = vpop.xlane.xlu0 %427
        %429 = vadd.xlane.f32.xlu0 %v376
        %v430 = vpop.xlane.xlu0 %429
        %431 = vadd.xlane.f32.xlu0 %v377
        %v432 = vpop.xlane.xlu0 %431
        %433 = vadd.xlane.f32.xlu0 %v378
        %v434 = vpop.xlane.xlu0 %433
        %435 = vadd.xlane.f32.xlu0 %v379
        %v436 = vpop.xlane.xlu0 %435
        %437 = vadd.xlane.f32.xlu0 %v380
        %v438 = vpop.xlane.xlu0 %437
        %439 = vadd.xlane.f32.xlu0 %v381
        %v440 = vpop.xlane.xlu0 %439
        %441 = vadd.xlane.f32.xlu0 %v382
        %v442 = vpop.xlane.xlu0 %441
        %443 = vadd.xlane.f32.xlu0 %v383
        %v444 = vpop.xlane.xlu0 %443
        %445 = vadd.xlane.f32.xlu0 %v384
        %v446 = vpop.xlane.xlu0 %445
        %447 = vadd.xlane.f32.xlu0 %v385
        %v448 = vpop.xlane.xlu0 %447
        %449 = vadd.xlane.f32.xlu0 %v386
        %v450 = vpop.xlane.xlu0 %449
        %v451 = vmul.f32 %v388, %v318
        %v452 = vmul.f32 %v390, %v319
        %v453 = vmul.f32 %v392, %v320
        %v454 = vmul.f32 %v394, %v321
        %v455 = vmul.f32 %v396, %v322
        %v456 = vmul.f32 %v398, %v323
        %v457 = vmul.f32 %v400, %v324
        %v458 = vmul.f32 %v402, %v325
        %v459 = vmul.f32 %v404, %v326
        %v460 = vmul.f32 %v406, %v327
        %v461 = vmul.f32 %v408, %v328
        %v462 = vmul.f32 %v410, %v329
        %v463 = vmul.f32 %v412, %v330
        %v464 = vmul.f32 %v414, %v331
        %v465 = vmul.f32 %v416, %v332
        %v466 = vmul.f32 %v418, %v333
        %v467 = vmul.f32 %v420, %v334
        %v468 = vmul.f32 %v422, %v335
        %v469 = vmul.f32 %v424, %v336
        %v470 = vmul.f32 %v426, %v337
        %v471 = vmul.f32 %v428, %v338
        %v472 = vmul.f32 %v430, %v339
        %v473 = vmul.f32 %v432, %v340
        %v474 = vmul.f32 %v434, %v341
        %v475 = vmul.f32 %v436, %v342
        %v476 = vmul.f32 %v438, %v343
        %v477 = vmul.f32 %v440, %v344
        %v478 = vmul.f32 %v442, %v345
        %v479 = vmul.f32 %v444, %v346
        %v480 = vmul.f32 %v446, %v347
        %v481 = vmul.f32 %v448, %v348
        %v482 = vmul.f32 %v450, %v349
        %v483 = vadd.f32 %v318, %v451
        %v484 = vadd.f32 %v319, %v452
        %v485 = vadd.f32 %v320, %v453
        %v486 = vadd.f32 %v321, %v454
        %v487 = vadd.f32 %v322, %v455
        %v488 = vadd.f32 %v323, %v456
        %v489 = vadd.f32 %v324, %v457
        %v490 = vadd.f32 %v325, %v458
        %v491 = vadd.f32 %v326, %v459
        %v492 = vadd.f32 %v327, %v460
        %v493 = vadd.f32 %v328, %v461
        %v494 = vadd.f32 %v329, %v462
        %v495 = vadd.f32 %v330, %v463
        %v496 = vadd.f32 %v331, %v464
        %v497 = vadd.f32 %v332, %v465
        %v498 = vadd.f32 %v333, %v466
        %v499 = vadd.f32 %v334, %v467
        %v500 = vadd.f32 %v335, %v468
        %v501 = vadd.f32 %v336, %v469
        %v502 = vadd.f32 %v337, %v470
        %v503 = vadd.f32 %v338, %v471
        %v504 = vadd.f32 %v339, %v472
        %v505 = vadd.f32 %v340, %v473
        %v506 = vadd.f32 %v341, %v474
        %v507 = vadd.f32 %v342, %v475
        %v508 = vadd.f32 %v343, %v476
        %v509 = vadd.f32 %v344, %v477
        %v510 = vadd.f32 %v345, %v478
        %v511 = vadd.f32 %v346, %v479
        %v512 = vadd.f32 %v347, %v480
        %v513 = vadd.f32 %v348, %v481
        %v514 = vadd.f32 %v349, %v482
        %v515 = vlaneseq
        %v516 = vshrl.u32 %v515, 7
        %v517 = vsub.s32 1, %v516
        %v518 = vrot.slane %v350, %v517
        %v519 = vadd.f32 %v483, %v518
        %v520 = vadd.f32 %v484, %v518
        %v521 = vadd.f32 %v485, %v518
        %v522 = vadd.f32 %v486, %v518
        %v523 = vadd.f32 %v487, %v518
        %v524 = vadd.f32 %v488, %v518
        %v525 = vadd.f32 %v489, %v518
        %v526 = vadd.f32 %v490, %v518
        %v527 = vadd.f32 %v491, %v518
        %v528 = vadd.f32 %v492, %v518
        %v529 = vadd.f32 %v493, %v518
        %v530 = vadd.f32 %v494, %v518
        %v531 = vadd.f32 %v495, %v518
        %v532 = vadd.f32 %v496, %v518
        %v533 = vadd.f32 %v497, %v518
        %v534 = vadd.f32 %v498, %v518
        %v535 = vadd.f32 %v499, %v518
        %v536 = vadd.f32 %v500, %v518
        %v537 = vadd.f32 %v501, %v518
        %v538 = vadd.f32 %v502, %v518
        %v539 = vadd.f32 %v503, %v518
        %v540 = vadd.f32 %v504, %v518
        %v541 = vadd.f32 %v505, %v518
        %v542 = vadd.f32 %v506, %v518
        %v543 = vadd.f32 %v507, %v518
        %v544 = vadd.f32 %v508, %v518
        %v545 = vadd.f32 %v509, %v518
        %v546 = vadd.f32 %v510, %v518
        %v547 = vadd.f32 %v511, %v518
        %v548 = vadd.f32 %v512, %v518
        %v549 = vadd.f32 %v513, %v518
        %v550 = vadd.f32 %v514, %v518
        %v551 = vpack.c.bf16 %v319, %v318
        %v552 = vpack.c.bf16 %v321, %v320
        %v553 = vpack.c.bf16 %v323, %v322
        %v554 = vpack.c.bf16 %v325, %v324
        %v555 = vpack.c.bf16 %v327, %v326
        %v556 = vpack.c.bf16 %v329, %v328
        %v557 = vpack.c.bf16 %v331, %v330
        %v558 = vpack.c.bf16 %v333, %v332
        %v559 = vpack.c.bf16 %v335, %v334
        %v560 = vpack.c.bf16 %v337, %v336
        %v561 = vpack.c.bf16 %v339, %v338
        %v562 = vpack.c.bf16 %v341, %v340
        %v563 = vpack.c.bf16 %v343, %v342
        %v564 = vpack.c.bf16 %v345, %v344
        %v565 = vpack.c.bf16 %v347, %v346
        %v566 = vpack.c.bf16 %v349, %v348
        %v567 = vld [vmem:[#allocation8] sm:$0xf]
        %v568 = vld [vmem:[#allocation8 + $0x4] sm:$0xf]
        %v569 = vld [vmem:[#allocation8 + $0x8] sm:$0xf]
        %v570 = vld [vmem:[#allocation8 + $0xc] sm:$0xf]
        %v571 = vld [vmem:[#allocation8 + $0x10] sm:$0xf]
        %v572 = vld [vmem:[#allocation8 + $0x14] sm:$0xf]
        %v573 = vld [vmem:[#allocation8 + $0x18] sm:$0xf]
        %v574 = vld [vmem:[#allocation8 + $0x1c] sm:$0xf]
        %v575 = vld [vmem:[#allocation8 + $0x20] sm:$0xf]
        %v576 = vld [vmem:[#allocation8 + $0x24] sm:$0xf]
        %v577 = vld [vmem:[#allocation8 + $0x28] sm:$0xf]
        %v578 = vld [vmem:[#allocation8 + $0x2c] sm:$0xf]
        %v579 = vld [vmem:[#allocation8 + $0x30] sm:$0xf]
        %v580 = vld [vmem:[#allocation8 + $0x34] sm:$0xf]
        %v581 = vld [vmem:[#allocation8 + $0x38] sm:$0xf]
        %v582 = vld [vmem:[#allocation8 + $0x3c] sm:$0xf]
        %v583 = vlaneseq
        %v584 = vshrl.u32 %v583, 7
        %v585 = vsub.s32 2, %v584
        %v586 = vrot.slane %v350, %v585
        %v603 = vunpack.c.l.b16 %v567
        %v604 = vunpack.c.l.b16 %v568
        %v605 = vunpack.c.l.b16 %v569
        %v606 = vunpack.c.l.b16 %v570
        %v607 = vunpack.c.l.b16 %v571
        %v608 = vunpack.c.l.b16 %v572
        %v609 = vunpack.c.l.b16 %v573
        %v610 = vunpack.c.l.b16 %v574
        %v611 = vunpack.c.l.b16 %v575
        %v612 = vunpack.c.l.b16 %v576
        %v613 = vunpack.c.l.b16 %v577
        %v614 = vunpack.c.l.b16 %v578
        %v615 = vunpack.c.l.b16 %v579
        %v616 = vunpack.c.l.b16 %v580
        %v617 = vunpack.c.l.b16 %v581
        %v618 = vunpack.c.l.b16 %v582
        %v619 = vpack.c.b16 %v604, %v603
        %v620 = vpack.c.b16 %v606, %v605
        %v621 = vpack.c.b16 %v608, %v607
        %v622 = vpack.c.b16 %v610, %v609
        %v623 = vpack.c.b16 %v612, %v611
        %v624 = vpack.c.b16 %v614, %v613
        %v625 = vpack.c.b16 %v616, %v615
        %v626 = vpack.c.b16 %v618, %v617
        %635 = vmatprep.subr.bf16.mxu0 0
        %636 = vmatpush1.bf16.msra.mxu0 %v626
        %637 = vmatprep.subr.bf16.mxu0 0
        %638 = vmatpush1.bf16.msra.mxu0 %v625
        %639 = vmatprep.subr.bf16.mxu0 0
        %640 = vmatpush1.bf16.msra.mxu0 %v624
        %641 = vmatprep.subr.bf16.mxu0 0
        %642 = vmatpush1.bf16.msra.mxu0 %v623
        %643 = vmatprep.subr.bf16.mxu0 0
        %644 = vmatpush1.bf16.msra.mxu0 %v622
        %645 = vmatprep.subr.bf16.mxu0 0
        %646 = vmatpush1.bf16.msra.mxu0 %v621
        %647 = vmatprep.subr.bf16.mxu0 0
        %648 = vmatpush1.bf16.msra.mxu0 %v620
        %649 = vmatprep.subr.bf16.mxu0 0
        %650 = vmatpush1.bf16.msra.mxu0 %v619
        %651 = vmatprep.subr.bf16.mxu0 0
        %652 = vmatpush2.bf16.msra.mxu0 0
        %653 = vmatprep.subr.bf16.mxu0 0
        %654 = vmatpush2.bf16.msra.mxu0 0
        %655 = vmatprep.subr.bf16.mxu0 0
        %656 = vmatpush2.bf16.msra.mxu0 0
        %657 = vmatprep.subr.bf16.mxu0 0
        %658 = vmatpush2.bf16.msra.mxu0 0
        %659 = vmatprep.subr.bf16.mxu0 0
        %660 = vmatpush2.bf16.msra.mxu0 0
        %661 = vmatprep.subr.bf16.mxu0 0
        %662 = vmatpush2.bf16.msra.mxu0 0
        %663 = vmatprep.subr.bf16.mxu0 0
        %664 = vmatpush2.bf16.msra.mxu0 0
        %665 = vmatprep.subr.bf16.mxu0 0
        %666 = vmatpush2.bf16.msra.mxu0 0
        %667 = vmatprep.mubr.bf16.mxu0 0
        %668 = vmatmul.mubr.bf16.gmra.mxu0 %v551
        %v669 = vpop.f32.mrf.mxu0
        %v670 = vadd.f32 %v586, %v669
        %v671 = vpop.f32.mrf.mxu0
        %v672 = vpop.f32.mrf.mxu0
        %v673 = vadd.f32 %v586, %v672
        %v674 = vpop.f32.mrf.mxu0
        %675 = vmatprep.mubr.bf16.mxu0 0
        %676 = vmatmul.mubr.bf16.gmra.mxu0 %v552
        %v677 = vpop.f32.mrf.mxu0
        %v678 = vadd.f32 %v586, %v677
        %v679 = vpop.f32.mrf.mxu0
        %v680 = vpop.f32.mrf.mxu0
        %v681 = vadd.f32 %v586, %v680
        %v682 = vpop.f32.mrf.mxu0
        %683 = vmatprep.mubr.bf16.mxu0 0
        %684 = vmatmul.mubr.bf16.gmra.mxu0 %v553
        %v685 = vpop.f32.mrf.mxu0
        %v686 = vadd.f32 %v586, %v685
        %v687 = vpop.f32.mrf.mxu0
        %v688 = vpop.f32.mrf.mxu0
        %v689 = vadd.f32 %v586, %v688
        %v690 = vpop.f32.mrf.mxu0
        %691 = vmatprep.mubr.bf16.mxu0 0
        %692 = vmatmul.mubr.bf16.gmra.mxu0 %v554
        %v693 = vpop.f32.mrf.mxu0
        %v694 = vadd.f32 %v586, %v693
        %v695 = vpop.f32.mrf.mxu0
        %v696 = vpop.f32.mrf.mxu0
        %v697 = vadd.f32 %v586, %v696
        %v698 = vpop.f32.mrf.mxu0
        %699 = vmatprep.mubr.bf16.mxu0 0
        %700 = vmatmul.mubr.bf16.gmra.mxu0 %v555
        %v701 = vpop.f32.mrf.mxu0
        %v702 = vadd.f32 %v586, %v701
        %v703 = vpop.f32.mrf.mxu0
        %v704 = vpop.f32.mrf.mxu0
        %v705 = vadd.f32 %v586, %v704
        %v706 = vpop.f32.mrf.mxu0
        %707 = vmatprep.mubr.bf16.mxu0 0
        %708 = vmatmul.mubr.bf16.gmra.mxu0 %v556
        %v709 = vpop.f32.mrf.mxu0
        %v710 = vadd.f32 %v586, %v709
        %v711 = vpop.f32.mrf.mxu0
        %v712 = vpop.f32.mrf.mxu0
        %v713 = vadd.f32 %v586, %v712
        %v714 = vpop.f32.mrf.mxu0
        %715 = vmatprep.mubr.bf16.mxu0 0
        %716 = vmatmul.mubr.bf16.gmra.mxu0 %v557
        %v717 = vpop.f32.mrf.mxu0
        %v718 = vadd.f32 %v586, %v717
        %v719 = vpop.f32.mrf.mxu0
        %v720 = vpop.f32.mrf.mxu0
        %v721 = vadd.f32 %v586, %v720
        %v722 = vpop.f32.mrf.mxu0
        %723 = vmatprep.mubr.bf16.mxu0 0
        %724 = vmatmul.mubr.bf16.gmra.mxu0 %v558
        %v725 = vpop.f32.mrf.mxu0
        %v726 = vadd.f32 %v586, %v725
        %v727 = vpop.f32.mrf.mxu0
        %v728 = vpop.f32.mrf.mxu0
        %v729 = vadd.f32 %v586, %v728
        %v730 = vpop.f32.mrf.mxu0
        %731 = vmatprep.mubr.bf16.mxu0 0
        %732 = vmatmul.mubr.bf16.gmra.mxu0 %v559
        %v733 = vpop.f32.mrf.mxu0
        %v734 = vadd.f32 %v586, %v733
        %v735 = vpop.f32.mrf.mxu0
        %v736 = vpop.f32.mrf.mxu0
        %v737 = vadd.f32 %v586, %v736
        %v738 = vpop.f32.mrf.mxu0
        %739 = vmatprep.mubr.bf16.mxu0 0
        %740 = vmatmul.mubr.bf16.gmra.mxu0 %v560
        %v741 = vpop.f32.mrf.mxu0
        %v742 = vadd.f32 %v586, %v741
        %v743 = vpop.f32.mrf.mxu0
        %v744 = vpop.f32.mrf.mxu0
        %v745 = vadd.f32 %v586, %v744
        %v746 = vpop.f32.mrf.mxu0
        %747 = vmatprep.mubr.bf16.mxu0 0
        %748 = vmatmul.mubr.bf16.gmra.mxu0 %v561
        %v749 = vpop.f32.mrf.mxu0
        %v750 = vadd.f32 %v586, %v749
        %v751 = vpop.f32.mrf.mxu0
        %v752 = vpop.f32.mrf.mxu0
        %v753 = vadd.f32 %v586, %v752
        %v754 = vpop.f32.mrf.mxu0
        %755 = vmatprep.mubr.bf16.mxu0 0
        %756 = vmatmul.mubr.bf16.gmra.mxu0 %v562
        %v757 = vpop.f32.mrf.mxu0
        %v758 = vadd.f32 %v586, %v757
        %v759 = vpop.f32.mrf.mxu0
        %v760 = vpop.f32.mrf.mxu0
        %v761 = vadd.f32 %v586, %v760
        %v762 = vpop.f32.mrf.mxu0
        %763 = vmatprep.mubr.bf16.mxu0 0
        %764 = vmatmul.mubr.bf16.gmra.mxu0 %v563
        %v765 = vpop.f32.mrf.mxu0
        %v766 = vadd.f32 %v586, %v765
        %v767 = vpop.f32.mrf.mxu0
        %v768 = vpop.f32.mrf.mxu0
        %v769 = vadd.f32 %v586, %v768
        %v770 = vpop.f32.mrf.mxu0
        %771 = vmatprep.mubr.bf16.mxu0 0
        %772 = vmatmul.mubr.bf16.gmra.mxu0 %v564
        %v773 = vpop.f32.mrf.mxu0
        %v774 = vadd.f32 %v586, %v773
        %v775 = vpop.f32.mrf.mxu0
        %v776 = vpop.f32.mrf.mxu0
        %v777 = vadd.f32 %v586, %v776
        %v778 = vpop.f32.mrf.mxu0
        %779 = vmatprep.mubr.bf16.mxu0 0
        %780 = vmatmul.mubr.bf16.gmra.mxu0 %v565
        %v781 = vpop.f32.mrf.mxu0
        %v782 = vadd.f32 %v586, %v781
        %v783 = vpop.f32.mrf.mxu0
        %v784 = vpop.f32.mrf.mxu0
        %v785 = vadd.f32 %v586, %v784
        %v786 = vpop.f32.mrf.mxu0
        %787 = vmatprep.mubr.bf16.mxu0 0
        %788 = vmatmul.mubr.bf16.gmra.mxu0 %v566
        %v789 = vpop.f32.mrf.mxu0
        %v790 = vadd.f32 %v586, %v789
        %v791 = vpop.f32.mrf.mxu0
        %v792 = vpop.f32.mrf.mxu0
        %v793 = vadd.f32 %v586, %v792
        %v794 = vpop.f32.mrf.mxu0
        %795 = vdwg.mxu0
        %v796 = vmax.f32 %v670, 0.0
        %v797 = vmax.f32 %v673, 0.0
        %v798 = vmax.f32 %v678, 0.0
        %v799 = vmax.f32 %v681, 0.0
        %v800 = vmax.f32 %v686, 0.0
        %v801 = vmax.f32 %v689, 0.0
        %v802 = vmax.f32 %v694, 0.0
        %v803 = vmax.f32 %v697, 0.0
        %v804 = vmax.f32 %v702, 0.0
        %v805 = vmax.f32 %v705, 0.0
        %v806 = vmax.f32 %v710, 0.0
        %v807 = vmax.f32 %v713, 0.0
        %v808 = vmax.f32 %v718, 0.0
        %v809 = vmax.f32 %v721, 0.0
        %v810 = vmax.f32 %v726, 0.0
        %v811 = vmax.f32 %v729, 0.0
        %v812 = vmax.f32 %v734, 0.0
        %v813 = vmax.f32 %v737, 0.0
        %v814 = vmax.f32 %v742, 0.0
        %v815 = vmax.f32 %v745, 0.0
        %v816 = vmax.f32 %v750, 0.0
        %v817 = vmax.f32 %v753, 0.0
        %v818 = vmax.f32 %v758, 0.0
        %v819 = vmax.f32 %v761, 0.0
        %v820 = vmax.f32 %v766, 0.0
        %v821 = vmax.f32 %v769, 0.0
        %v822 = vmax.f32 %v774, 0.0
        %v823 = vmax.f32 %v777, 0.0
        %v824 = vmax.f32 %v782, 0.0
        %v825 = vmax.f32 %v785, 0.0
        %v826 = vmax.f32 %v790, 0.0
        %v827 = vmax.f32 %v793, 0.0
        %v828 = vpack.c.bf16 %v797, %v796
        %v829 = vpack.c.bf16 %v799, %v798
        %v830 = vpack.c.bf16 %v801, %v800
        %v831 = vpack.c.bf16 %v803, %v802
        %v832 = vpack.c.bf16 %v805, %v804
        %v833 = vpack.c.bf16 %v807, %v806
        %v834 = vpack.c.bf16 %v809, %v808
        %v835 = vpack.c.bf16 %v811, %v810
        %v836 = vpack.c.bf16 %v813, %v812
        %v837 = vpack.c.bf16 %v815, %v814
        %v838 = vpack.c.bf16 %v817, %v816
        %v839 = vpack.c.bf16 %v819, %v818
        %v840 = vpack.c.bf16 %v821, %v820
        %v841 = vpack.c.bf16 %v823, %v822
        %v842 = vpack.c.bf16 %v825, %v824
        %v843 = vpack.c.bf16 %v827, %v826
        %v844 = vld [vmem:[#allocation9] sm:$0xf]
        %v845 = vld [vmem:[#allocation9 + $0x4] sm:$0xf]
        %v846 = vld [vmem:[#allocation9 + $0x8] sm:$0xf]
        %v847 = vld [vmem:[#allocation9 + $0xc] sm:$0xf]
        %v848 = vld [vmem:[#allocation9 + $0x10] sm:$0xf]
        %v849 = vld [vmem:[#allocation9 + $0x14] sm:$0xf]
        %v850 = vld [vmem:[#allocation9 + $0x18] sm:$0xf]
        %v851 = vld [vmem:[#allocation9 + $0x1c] sm:$0xf]
        %v852 = vld [vmem:[#allocation9 + $0x20] sm:$0xf]
        %v853 = vld [vmem:[#allocation9 + $0x24] sm:$0xf]
        %v854 = vld [vmem:[#allocation9 + $0x28] sm:$0xf]
        %v855 = vld [vmem:[#allocation9 + $0x2c] sm:$0xf]
        %v856 = vld [vmem:[#allocation9 + $0x30] sm:$0xf]
        %v857 = vld [vmem:[#allocation9 + $0x34] sm:$0xf]
        %v858 = vld [vmem:[#allocation9 + $0x38] sm:$0xf]
        %v859 = vld [vmem:[#allocation9 + $0x3c] sm:$0xf]
        %v860 = vlaneseq
        %v861 = vshrl.u32 %v860, 7
        %v862 = vsub.s32 3, %v861
        %v863 = vrot.slane %v350, %v862
        %v880 = vunpack.c.l.b16 %v844
        %v881 = vunpack.c.l.b16 %v845
        %v882 = vunpack.c.l.b16 %v846
        %v883 = vunpack.c.l.b16 %v847
        %v884 = vunpack.c.l.b16 %v848
        %v885 = vunpack.c.l.b16 %v849
        %v886 = vunpack.c.l.b16 %v850
        %v887 = vunpack.c.l.b16 %v851
        %v888 = vunpack.c.l.b16 %v852
        %v889 = vunpack.c.l.b16 %v853
        %v890 = vunpack.c.l.b16 %v854
        %v891 = vunpack.c.l.b16 %v855
        %v892 = vunpack.c.l.b16 %v856
        %v893 = vunpack.c.l.b16 %v857
        %v894 = vunpack.c.l.b16 %v858
        %v895 = vunpack.c.l.b16 %v859
        %v896 = vpack.c.b16 %v881, %v880
        %v897 = vpack.c.b16 %v883, %v882
        %v898 = vpack.c.b16 %v885, %v884
        %v899 = vpack.c.b16 %v887, %v886
        %v900 = vpack.c.b16 %v889, %v888
        %v901 = vpack.c.b16 %v891, %v890
        %v902 = vpack.c.b16 %v893, %v892
        %v903 = vpack.c.b16 %v895, %v894
        %912 = vmatprep.subr.bf16.mxu0 0
        %913 = vmatpush1.bf16.msra.mxu0 %v903
        %914 = vmatprep.subr.bf16.mxu0 0
        %915 = vmatpush1.bf16.msra.mxu0 %v902
        %916 = vmatprep.subr.bf16.mxu0 0
        %917 = vmatpush1.bf16.msra.mxu0 %v901
        %918 = vmatprep.subr.bf16.mxu0 0
        %919 = vmatpush1.bf16.msra.mxu0 %v900
        %920 = vmatprep.subr.bf16.mxu0 0
        %921 = vmatpush1.bf16.msra.mxu0 %v899
        %922 = vmatprep.subr.bf16.mxu0 0
        %923 = vmatpush1.bf16.msra.mxu0 %v898
        %924 = vmatprep.subr.bf16.mxu0 0
        %925 = vmatpush1.bf16.msra.mxu0 %v897
        %926 = vmatprep.subr.bf16.mxu0 0
        %927 = vmatpush1.bf16.msra.mxu0 %v896
        %928 = vmatprep.subr.bf16.mxu0 0
        %929 = vmatpush2.bf16.msra.mxu0 0
        %930 = vmatprep.subr.bf16.mxu0 0
        %931 = vmatpush2.bf16.msra.mxu0 0
        %932 = vmatprep.subr.bf16.mxu0 0
        %933 = vmatpush2.bf16.msra.mxu0 0
        %934 = vmatprep.subr.bf16.mxu0 0
        %935 = vmatpush2.bf16.msra.mxu0 0
        %936 = vmatprep.subr.bf16.mxu0 0
        %937 = vmatpush2.bf16.msra.mxu0 0
        %938 = vmatprep.subr.bf16.mxu0 0
        %939 = vmatpush2.bf16.msra.mxu0 0
        %940 = vmatprep.subr.bf16.mxu0 0
        %941 = vmatpush2.bf16.msra.mxu0 0
        %942 = vmatprep.subr.bf16.mxu0 0
        %943 = vmatpush2.bf16.msra.mxu0 0
        %944 = vmatprep.mubr.bf16.mxu0 0
        %945 = vmatmul.mubr.bf16.gmra.mxu0 %v828
        %v946 = vpop.f32.mrf.mxu0
        %v947 = vadd.f32 %v863, %v946
        %v948 = vpop.f32.mrf.mxu0
        %v949 = vpop.f32.mrf.mxu0
        %v950 = vadd.f32 %v863, %v949
        %v951 = vpop.f32.mrf.mxu0
        %952 = vmatprep.mubr.bf16.mxu0 0
        %953 = vmatmul.mubr.bf16.gmra.mxu0 %v829
        %v954 = vpop.f32.mrf.mxu0
        %v955 = vadd.f32 %v863, %v954
        %v956 = vpop.f32.mrf.mxu0
        %v957 = vpop.f32.mrf.mxu0
        %v958 = vadd.f32 %v863, %v957
        %v959 = vpop.f32.mrf.mxu0
        %960 = vmatprep.mubr.bf16.mxu0 0
        %961 = vmatmul.mubr.bf16.gmra.mxu0 %v830
        %v962 = vpop.f32.mrf.mxu0
        %v963 = vadd.f32 %v863, %v962
        %v964 = vpop.f32.mrf.mxu0
        %v965 = vpop.f32.mrf.mxu0
        %v966 = vadd.f32 %v863, %v965
        %v967 = vpop.f32.mrf.mxu0
        %968 = vmatprep.mubr.bf16.mxu0 0
        %969 = vmatmul.mubr.bf16.gmra.mxu0 %v831
        %v970 = vpop.f32.mrf.mxu0
        %v971 = vadd.f32 %v863, %v970
        %v972 = vpop.f32.mrf.mxu0
        %v973 = vpop.f32.mrf.mxu0
        %v974 = vadd.f32 %v863, %v973
        %v975 = vpop.f32.mrf.mxu0
        %976 = vmatprep.mubr.bf16.mxu0 0
        %977 = vmatmul.mubr.bf16.gmra.mxu0 %v832
        %v978 = vpop.f32.mrf.mxu0
        %v979 = vadd.f32 %v863, %v978
        %v980 = vpop.f32.mrf.mxu0
        %v981 = vpop.f32.mrf.mxu0
        %v982 = vadd.f32 %v863, %v981
        %v983 = vpop.f32.mrf.mxu0
        %984 = vmatprep.mubr.bf16.mxu0 0
        %985 = vmatmul.mubr.bf16.gmra.mxu0 %v833
        %v986 = vpop.f32.mrf.mxu0
        %v987 = vadd.f32 %v863, %v986
        %v988 = vpop.f32.mrf.mxu0
        %v989 = vpop.f32.mrf.mxu0
        %v990 = vadd.f32 %v863, %v989
        %v991 = vpop.f32.mrf.mxu0
        %992 = vmatprep.mubr.bf16.mxu0 0
        %993 = vmatmul.mubr.bf16.gmra.mxu0 %v834
        %v994 = vpop.f32.mrf.mxu0
        %v995 = vadd.f32 %v863, %v994
        %v996 = vpop.f32.mrf.mxu0
        %v997 = vpop.f32.mrf.mxu0
        %v998 = vadd.f32 %v863, %v997
        %v999 = vpop.f32.mrf.mxu0
        %1000 = vmatprep.mubr.bf16.mxu0 0
        %1001 = vmatmul.mubr.bf16.gmra.mxu0 %v835
        %v1002 = vpop.f32.mrf.mxu0
        %v1003 = vadd.f32 %v863, %v1002
        %v1004 = vpop.f32.mrf.mxu0
        %v1005 = vpop.f32.mrf.mxu0
        %v1006 = vadd.f32 %v863, %v1005
        %v1007 = vpop.f32.mrf.mxu0
        %1008 = vmatprep.mubr.bf16.mxu0 0
        %1009 = vmatmul.mubr.bf16.gmra.mxu0 %v836
        %v1010 = vpop.f32.mrf.mxu0
        %v1011 = vadd.f32 %v863, %v1010
        %v1012 = vpop.f32.mrf.mxu0
        %v1013 = vpop.f32.mrf.mxu0
        %v1014 = vadd.f32 %v863, %v1013
        %v1015 = vpop.f32.mrf.mxu0
        %1016 = vmatprep.mubr.bf16.mxu0 0
        %1017 = vmatmul.mubr.bf16.gmra.mxu0 %v837
        %v1018 = vpop.f32.mrf.mxu0
        %v1019 = vadd.f32 %v863, %v1018
        %v1020 = vpop.f32.mrf.mxu0
        %v1021 = vpop.f32.mrf.mxu0
        %v1022 = vadd.f32 %v863, %v1021
        %v1023 = vpop.f32.mrf.mxu0
        %1024 = vmatprep.mubr.bf16.mxu0 0
        %1025 = vmatmul.mubr.bf16.gmra.mxu0 %v838
        %v1026 = vpop.f32.mrf.mxu0
        %v1027 = vadd.f32 %v863, %v1026
        %v1028 = vpop.f32.mrf.mxu0
        %v1029 = vpop.f32.mrf.mxu0
        %v1030 = vadd.f32 %v863, %v1029
        %v1031 = vpop.f32.mrf.mxu0
        %1032 = vmatprep.mubr.bf16.mxu0 0
        %1033 = vmatmul.mubr.bf16.gmra.mxu0 %v839
        %v1034 = vpop.f32.mrf.mxu0
        %v1035 = vadd.f32 %v863, %v1034
        %v1036 = vpop.f32.mrf.mxu0
        %v1037 = vpop.f32.mrf.mxu0
        %v1038 = vadd.f32 %v863, %v1037
        %v1039 = vpop.f32.mrf.mxu0
        %1040 = vmatprep.mubr.bf16.mxu0 0
        %1041 = vmatmul.mubr.bf16.gmra.mxu0 %v840
        %v1042 = vpop.f32.mrf.mxu0
        %v1043 = vadd.f32 %v863, %v1042
        %v1044 = vpop.f32.mrf.mxu0
        %v1045 = vpop.f32.mrf.mxu0
        %v1046 = vadd.f32 %v863, %v1045
        %v1047 = vpop.f32.mrf.mxu0
        %1048 = vmatprep.mubr.bf16.mxu0 0
        %1049 = vmatmul.mubr.bf16.gmra.mxu0 %v841
        %v1050 = vpop.f32.mrf.mxu0
        %v1051 = vadd.f32 %v863, %v1050
        %v1052 = vpop.f32.mrf.mxu0
        %v1053 = vpop.f32.mrf.mxu0
        %v1054 = vadd.f32 %v863, %v1053
        %v1055 = vpop.f32.mrf.mxu0
        %1056 = vmatprep.mubr.bf16.mxu0 0
        %1057 = vmatmul.mubr.bf16.gmra.mxu0 %v842
        %v1058 = vpop.f32.mrf.mxu0
        %v1059 = vadd.f32 %v863, %v1058
        %v1060 = vpop.f32.mrf.mxu0
        %v1061 = vpop.f32.mrf.mxu0
        %v1062 = vadd.f32 %v863, %v1061
        %v1063 = vpop.f32.mrf.mxu0
        %1064 = vmatprep.mubr.bf16.mxu0 0
        %1065 = vmatmul.mubr.bf16.gmra.mxu0 %v843
        %v1066 = vpop.f32.mrf.mxu0
        %v1067 = vadd.f32 %v863, %v1066
        %v1068 = vpop.f32.mrf.mxu0
        %v1069 = vpop.f32.mrf.mxu0
        %v1070 = vadd.f32 %v863, %v1069
        %v1071 = vpop.f32.mrf.mxu0
        %1072 = vdwg.mxu0
        %v1073 = vmax.f32 %v947, 0.0
        %v1074 = vmax.f32 %v950, 0.0
        %v1075 = vmax.f32 %v955, 0.0
        %v1076 = vmax.f32 %v958, 0.0
        %v1077 = vmax.f32 %v963, 0.0
        %v1078 = vmax.f32 %v966, 0.0
        %v1079 = vmax.f32 %v971, 0.0
        %v1080 = vmax.f32 %v974, 0.0
        %v1081 = vmax.f32 %v979, 0.0
        %v1082 = vmax.f32 %v982, 0.0
        %v1083 = vmax.f32 %v987, 0.0
        %v1084 = vmax.f32 %v990, 0.0
        %v1085 = vmax.f32 %v995, 0.0
        %v1086 = vmax.f32 %v998, 0.0
        %v1087 = vmax.f32 %v1003, 0.0
        %v1088 = vmax.f32 %v1006, 0.0
        %v1089 = vmax.f32 %v1011, 0.0
        %v1090 = vmax.f32 %v1014, 0.0
        %v1091 = vmax.f32 %v1019, 0.0
        %v1092 = vmax.f32 %v1022, 0.0
        %v1093 = vmax.f32 %v1027, 0.0
        %v1094 = vmax.f32 %v1030, 0.0
        %v1095 = vmax.f32 %v1035, 0.0
        %v1096 = vmax.f32 %v1038, 0.0
        %v1097 = vmax.f32 %v1043, 0.0
        %v1098 = vmax.f32 %v1046, 0.0
        %v1099 = vmax.f32 %v1051, 0.0
        %v1100 = vmax.f32 %v1054, 0.0
        %v1101 = vmax.f32 %v1059, 0.0
        %v1102 = vmax.f32 %v1062, 0.0
        %v1103 = vmax.f32 %v1067, 0.0
        %v1104 = vmax.f32 %v1070, 0.0
        %v1105 = vmul.f32 %v519, %v1073
        %v1106 = vmul.f32 %v520, %v1074
        %v1107 = vmul.f32 %v521, %v1075
        %v1108 = vmul.f32 %v522, %v1076
        %v1109 = vmul.f32 %v523, %v1077
        %v1110 = vmul.f32 %v524, %v1078
        %v1111 = vmul.f32 %v525, %v1079
        %v1112 = vmul.f32 %v526, %v1080
        %v1113 = vmul.f32 %v527, %v1081
        %v1114 = vmul.f32 %v528, %v1082
        %v1115 = vmul.f32 %v529, %v1083
        %v1116 = vmul.f32 %v530, %v1084
        %v1117 = vmul.f32 %v531, %v1085
        %v1118 = vmul.f32 %v532, %v1086
        %v1119 = vmul.f32 %v533, %v1087
        %v1120 = vmul.f32 %v534, %v1088
        %v1121 = vmul.f32 %v535, %v1089
        %v1122 = vmul.f32 %v536, %v1090
        %v1123 = vmul.f32 %v537, %v1091
        %v1124 = vmul.f32 %v538, %v1092
        %v1125 = vmul.f32 %v539, %v1093
        %v1126 = vmul.f32 %v540, %v1094
        %v1127 = vmul.f32 %v541, %v1095
        %v1128 = vmul.f32 %v542, %v1096
        %v1129 = vmul.f32 %v543, %v1097
        %v1130 = vmul.f32 %v544, %v1098
        %v1131 = vmul.f32 %v545, %v1099
        %v1132 = vmul.f32 %v546, %v1100
        %v1133 = vmul.f32 %v547, %v1101
        %v1134 = vmul.f32 %v548, %v1102
        %v1135 = vmul.f32 %v549, %v1103
        %v1136 = vmul.f32 %v550, %v1104
        %s1137 = scalar_lea.vmem [#allocation6], 4
        %v1138 = vld [vmem:[%s1137] sm:$0xf]
        %v1139 = vlaneseq
        %v1140 = vshrl.u32 %v1139, 7
        %v1141 = vsub.s32 0, %v1140
        %v1142 = vrot.slane %v1138, %v1141
        %v1143 = vmul.f32 %v1105, %v1142
        %v1144 = vmul.f32 %v1106, %v1142
        %v1145 = vmul.f32 %v1107, %v1142
        %v1146 = vmul.f32 %v1108, %v1142
        %v1147 = vmul.f32 %v1109, %v1142
        %v1148 = vmul.f32 %v1110, %v1142
        %v1149 = vmul.f32 %v1111, %v1142
        %v1150 = vmul.f32 %v1112, %v1142
        %v1151 = vmul.f32 %v1113, %v1142
        %v1152 = vmul.f32 %v1114, %v1142
        %v1153 = vmul.f32 %v1115, %v1142
        %v1154 = vmul.f32 %v1116, %v1142
        %v1155 = vmul.f32 %v1117, %v1142
        %v1156 = vmul.f32 %v1118, %v1142
        %v1157 = vmul.f32 %v1119, %v1142
        %v1158 = vmul.f32 %v1120, %v1142
        %v1159 = vmul.f32 %v1121, %v1142
        %v1160 = vmul.f32 %v1122, %v1142
        %v1161 = vmul.f32 %v1123, %v1142
        %v1162 = vmul.f32 %v1124, %v1142
        %v1163 = vmul.f32 %v1125, %v1142
        %v1164 = vmul.f32 %v1126, %v1142
        %v1165 = vmul.f32 %v1127, %v1142
        %v1166 = vmul.f32 %v1128, %v1142
        %v1167 = vmul.f32 %v1129, %v1142
        %v1168 = vmul.f32 %v1130, %v1142
        %v1169 = vmul.f32 %v1131, %v1142
        %v1170 = vmul.f32 %v1132, %v1142
        %v1171 = vmul.f32 %v1133, %v1142
        %v1172 = vmul.f32 %v1134, %v1142
        %v1173 = vmul.f32 %v1135, %v1142
        %v1174 = vmul.f32 %v1136, %v1142
        %1175 = vadd.xlane.f32.xlu0 %v1143
        %v1176 = vpop.xlane.xlu0 %1175
        %1177 = vadd.xlane.f32.xlu0 %v1144
        %v1178 = vpop.xlane.xlu0 %1177
        %1179 = vadd.xlane.f32.xlu0 %v1145
        %v1180 = vpop.xlane.xlu0 %1179
        %1181 = vadd.xlane.f32.xlu0 %v1146
        %v1182 = vpop.xlane.xlu0 %1181
        %1183 = vadd.xlane.f32.xlu0 %v1147
        %v1184 = vpop.xlane.xlu0 %1183
        %1185 = vadd.xlane.f32.xlu0 %v1148
        %v1186 = vpop.xlane.xlu0 %1185
        %1187 = vadd.xlane.f32.xlu0 %v1149
        %v1188 = vpop.xlane.xlu0 %1187
        %1189 = vadd.xlane.f32.xlu0 %v1150
        %v1190 = vpop.xlane.xlu0 %1189
        %1191 = vadd.xlane.f32.xlu0 %v1151
        %v1192 = vpop.xlane.xlu0 %1191
        %1193 = vadd.xlane.f32.xlu0 %v1152
        %v1194 = vpop.xlane.xlu0 %1193
        %1195 = vadd.xlane.f32.xlu0 %v1153
        %v1196 = vpop.xlane.xlu0 %1195
        %1197 = vadd.xlane.f32.xlu0 %v1154
        %v1198 = vpop.xlane.xlu0 %1197
        %1199 = vadd.xlane.f32.xlu0 %v1155
        %v1200 = vpop.xlane.xlu0 %1199
        %1201 = vadd.xlane.f32.xlu0 %v1156
        %v1202 = vpop.xlane.xlu0 %1201
        %1203 = vadd.xlane.f32.xlu0 %v1157
        %v1204 = vpop.xlane.xlu0 %1203
        %1205 = vadd.xlane.f32.xlu0 %v1158
        %v1206 = vpop.xlane.xlu0 %1205
        %1207 = vadd.xlane.f32.xlu0 %v1159
        %v1208 = vpop.xlane.xlu0 %1207
        %1209 = vadd.xlane.f32.xlu0 %v1160
        %v1210 = vpop.xlane.xlu0 %1209
        %1211 = vadd.xlane.f32.xlu0 %v1161
        %v1212 = vpop.xlane.xlu0 %1211
        %1213 = vadd.xlane.f32.xlu0 %v1162
        %v1214 = vpop.xlane.xlu0 %1213
        %1215 = vadd.xlane.f32.xlu0 %v1163
        %v1216 = vpop.xlane.xlu0 %1215
        %1217 = vadd.xlane.f32.xlu0 %v1164
        %v1218 = vpop.xlane.xlu0 %1217
        %1219 = vadd.xlane.f32.xlu0 %v1165
        %v1220 = vpop.xlane.xlu0 %1219
        %1221 = vadd.xlane.f32.xlu0 %v1166
        %v1222 = vpop.xlane.xlu0 %1221
        %1223 = vadd.xlane.f32.xlu0 %v1167
        %v1224 = vpop.xlane.xlu0 %1223
        %1225 = vadd.xlane.f32.xlu0 %v1168
        %v1226 = vpop.xlane.xlu0 %1225
        %1227 = vadd.xlane.f32.xlu0 %v1169
        %v1228 = vpop.xlane.xlu0 %1227
        %1229 = vadd.xlane.f32.xlu0 %v1170
        %v1230 = vpop.xlane.xlu0 %1229
        %1231 = vadd.xlane.f32.xlu0 %v1171
        %v1232 = vpop.xlane.xlu0 %1231
        %1233 = vadd.xlane.f32.xlu0 %v1172
        %v1234 = vpop.xlane.xlu0 %1233
        %1235 = vadd.xlane.f32.xlu0 %v1173
        %v1236 = vpop.xlane.xlu0 %1235
        %1237 = vadd.xlane.f32.xlu0 %v1174
        %v1238 = vpop.xlane.xlu0 %1237
        %v1239 = vmul.f32 %v1176, %v318
        %v1240 = vmul.f32 %v1178, %v319
        %v1241 = vmul.f32 %v1180, %v320
        %v1242 = vmul.f32 %v1182, %v321
        %v1243 = vmul.f32 %v1184, %v322
        %v1244 = vmul.f32 %v1186, %v323
        %v1245 = vmul.f32 %v1188, %v324
        %v1246 = vmul.f32 %v1190, %v325
        %v1247 = vmul.f32 %v1192, %v326
        %v1248 = vmul.f32 %v1194, %v327
        %v1249 = vmul.f32 %v1196, %v328
        %v1250 = vmul.f32 %v1198, %v329
        %v1251 = vmul.f32 %v1200, %v330
        %v1252 = vmul.f32 %v1202, %v331
        %v1253 = vmul.f32 %v1204, %v332
        %v1254 = vmul.f32 %v1206, %v333
        %v1255 = vmul.f32 %v1208, %v334
        %v1256 = vmul.f32 %v1210, %v335
        %v1257 = vmul.f32 %v1212, %v336
        %v1258 = vmul.f32 %v1214, %v337
        %v1259 = vmul.f32 %v1216, %v338
        %v1260 = vmul.f32 %v1218, %v339
        %v1261 = vmul.f32 %v1220, %v340
        %v1262 = vmul.f32 %v1222, %v341
        %v1263 = vmul.f32 %v1224, %v342
        %v1264 = vmul.f32 %v1226, %v343
        %v1265 = vmul.f32 %v1228, %v344
        %v1266 = vmul.f32 %v1230, %v345
        %v1267 = vmul.f32 %v1232, %v346
        %v1268 = vmul.f32 %v1234, %v347
        %v1269 = vmul.f32 %v1236, %v348
        %v1270 = vmul.f32 %v1238, %v349
        %v1271 = vadd.f32 %v1105, %v1239
        %v1272 = vadd.f32 %v1106, %v1240
        %v1273 = vadd.f32 %v1107, %v1241
        %v1274 = vadd.f32 %v1108, %v1242
        %v1275 = vadd.f32 %v1109, %v1243
        %v1276 = vadd.f32 %v1110, %v1244
        %v1277 = vadd.f32 %v1111, %v1245
        %v1278 = vadd.f32 %v1112, %v1246
        %v1279 = vadd.f32 %v1113, %v1247
        %v1280 = vadd.f32 %v1114, %v1248
        %v1281 = vadd.f32 %v1115, %v1249
        %v1282 = vadd.f32 %v1116, %v1250
        %v1283 = vadd.f32 %v1117, %v1251
        %v1284 = vadd.f32 %v1118, %v1252
        %v1285 = vadd.f32 %v1119, %v1253
        %v1286 = vadd.f32 %v1120, %v1254
        %v1287 = vadd.f32 %v1121, %v1255
        %v1288 = vadd.f32 %v1122, %v1256
        %v1289 = vadd.f32 %v1123, %v1257
        %v1290 = vadd.f32 %v1124, %v1258
        %v1291 = vadd.f32 %v1125, %v1259
        %v1292 = vadd.f32 %v1126, %v1260
        %v1293 = vadd.f32 %v1127, %v1261
        %v1294 = vadd.f32 %v1128, %v1262
        %v1295 = vadd.f32 %v1129, %v1263
        %v1296 = vadd.f32 %v1130, %v1264
        %v1297 = vadd.f32 %v1131, %v1265
        %v1298 = vadd.f32 %v1132, %v1266
        %v1299 = vadd.f32 %v1133, %v1267
        %v1300 = vadd.f32 %v1134, %v1268
        %v1301 = vadd.f32 %v1135, %v1269
        %v1302 = vadd.f32 %v1136, %v1270
        %v1303 = vlaneseq
        %v1304 = vshrl.u32 %v1303, 7
        %v1305 = vsub.s32 1, %v1304
        %v1306 = vrot.slane %v1138, %v1305
        %v1307 = vadd.f32 %v1271, %v1306
        %v1308 = vadd.f32 %v1272, %v1306
        %v1309 = vadd.f32 %v1273, %v1306
        %v1310 = vadd.f32 %v1274, %v1306
        %v1311 = vadd.f32 %v1275, %v1306
        %v1312 = vadd.f32 %v1276, %v1306
        %v1313 = vadd.f32 %v1277, %v1306
        %v1314 = vadd.f32 %v1278, %v1306
        %v1315 = vadd.f32 %v1279, %v1306
        %v1316 = vadd.f32 %v1280, %v1306
        %v1317 = vadd.f32 %v1281, %v1306
        %v1318 = vadd.f32 %v1282, %v1306
        %v1319 = vadd.f32 %v1283, %v1306
        %v1320 = vadd.f32 %v1284, %v1306
        %v1321 = vadd.f32 %v1285, %v1306
        %v1322 = vadd.f32 %v1286, %v1306
        %v1323 = vadd.f32 %v1287, %v1306
        %v1324 = vadd.f32 %v1288, %v1306
        %v1325 = vadd.f32 %v1289, %v1306
        %v1326 = vadd.f32 %v1290, %v1306
        %v1327 = vadd.f32 %v1291, %v1306
        %v1328 = vadd.f32 %v1292, %v1306
        %v1329 = vadd.f32 %v1293, %v1306
        %v1330 = vadd.f32 %v1294, %v1306
        %v1331 = vadd.f32 %v1295, %v1306
        %v1332 = vadd.f32 %v1296, %v1306
        %v1333 = vadd.f32 %v1297, %v1306
        %v1334 = vadd.f32 %v1298, %v1306
        %v1335 = vadd.f32 %v1299, %v1306
        %v1336 = vadd.f32 %v1300, %v1306
        %v1337 = vadd.f32 %v1301, %v1306
        %v1338 = vadd.f32 %v1302, %v1306
        %v1339 = vpack.c.bf16 %v1106, %v1105
        %v1340 = vpack.c.bf16 %v1108, %v1107
        %v1341 = vpack.c.bf16 %v1110, %v1109
        %v1342 = vpack.c.bf16 %v1112, %v1111
        %v1343 = vpack.c.bf16 %v1114, %v1113
        %v1344 = vpack.c.bf16 %v1116, %v1115
        %v1345 = vpack.c.bf16 %v1118, %v1117
        %v1346 = vpack.c.bf16 %v1120, %v1119
        %v1347 = vpack.c.bf16 %v1122, %v1121
        %v1348 = vpack.c.bf16 %v1124, %v1123
        %v1349 = vpack.c.bf16 %v1126, %v1125
        %v1350 = vpack.c.bf16 %v1128, %v1127
        %v1351 = vpack.c.bf16 %v1130, %v1129
        %v1352 = vpack.c.bf16 %v1132, %v1131
        %v1353 = vpack.c.bf16 %v1134, %v1133
        %v1354 = vpack.c.bf16 %v1136, %v1135
        %s1355 = scalar_lea.vmem [#allocation8], 64
        %v1356 = vld [vmem:[%s1355] sm:$0xf]
        %v1357 = vld [vmem:[%s1355 + $0x4] sm:$0xf]
        %v1358 = vld [vmem:[%s1355 + $0x8] sm:$0xf]
        %v1359 = vld [vmem:[%s1355 + $0xc] sm:$0xf]
        %v1360 = vld [vmem:[%s1355 + $0x10] sm:$0xf]
        %v1361 = vld [vmem:[%s1355 + $0x14] sm:$0xf]
        %v1362 = vld [vmem:[%s1355 + $0x18] sm:$0xf]
        %v1363 = vld [vmem:[%s1355 + $0x1c] sm:$0xf]
        %v1364 = vld [vmem:[%s1355 + $0x20] sm:$0xf]
        %v1365 = vld [vmem:[%s1355 + $0x24] sm:$0xf]
        %v1366 = vld [vmem:[%s1355 + $0x28] sm:$0xf]
        %v1367 = vld [vmem:[%s1355 + $0x2c] sm:$0xf]
        %v1368 = vld [vmem:[%s1355 + $0x30] sm:$0xf]
        %v1369 = vld [vmem:[%s1355 + $0x34] sm:$0xf]
        %v1370 = vld [vmem:[%s1355 + $0x38] sm:$0xf]
        %v1371 = vld [vmem:[%s1355 + $0x3c] sm:$0xf]
        %v1372 = vlaneseq
        %v1373 = vshrl.u32 %v1372, 7
        %v1374 = vsub.s32 2, %v1373
        %v1375 = vrot.slane %v1138, %v1374
        %v1392 = vunpack.c.l.b16 %v1356
        %v1393 = vunpack.c.l.b16 %v1357
        %v1394 = vunpack.c.l.b16 %v1358
        %v1395 = vunpack.c.l.b16 %v1359
        %v1396 = vunpack.c.l.b16 %v1360
        %v1397 = vunpack.c.l.b16 %v1361
        %v1398 = vunpack.c.l.b16 %v1362
        %v1399 = vunpack.c.l.b16 %v1363
        %v1400 = vunpack.c.l.b16 %v1364
        %v1401 = vunpack.c.l.b16 %v1365
        %v1402 = vunpack.c.l.b16 %v1366
        %v1403 = vunpack.c.l.b16 %v1367
        %v1404 = vunpack.c.l.b16 %v1368
        %v1405 = vunpack.c.l.b16 %v1369
        %v1406 = vunpack.c.l.b16 %v1370
        %v1407 = vunpack.c.l.b16 %v1371
        %v1408 = vpack.c.b16 %v1393, %v1392
        %v1409 = vpack.c.b16 %v1395, %v1394
        %v1410 = vpack.c.b16 %v1397, %v1396
        %v1411 = vpack.c.b16 %v1399, %v1398
        %v1412 = vpack.c.b16 %v1401, %v1400
        %v1413 = vpack.c.b16 %v1403, %v1402
        %v1414 = vpack.c.b16 %v1405, %v1404
        %v1415 = vpack.c.b16 %v1407, %v1406
        %1424 = vmatprep.subr.bf16.mxu0 0
        %1425 = vmatpush1.bf16.msra.mxu0 %v1415
        %1426 = vmatprep.subr.bf16.mxu0 0
        %1427 = vmatpush1.bf16.msra.mxu0 %v1414
        %1428 = vmatprep.subr.bf16.mxu0 0
        %1429 = vmatpush1.bf16.msra.mxu0 %v1413
        %1430 = vmatprep.subr.bf16.mxu0 0
        %1431 = vmatpush1.bf16.msra.mxu0 %v1412
        %1432 = vmatprep.subr.bf16.mxu0 0
        %1433 = vmatpush1.bf16.msra.mxu0 %v1411
        %1434 = vmatprep.subr.bf16.mxu0 0
        %1435 = vmatpush1.bf16.msra.mxu0 %v1410
        %1436 = vmatprep.subr.bf16.mxu0 0
        %1437 = vmatpush1.bf16.msra.mxu0 %v1409
        %1438 = vmatprep.subr.bf16.mxu0 0
        %1439 = vmatpush1.bf16.msra.mxu0 %v1408
        %1440 = vmatprep.subr.bf16.mxu0 0
        %1441 = vmatpush2.bf16.msra.mxu0 0
        %1442 = vmatprep.subr.bf16.mxu0 0
        %1443 = vmatpush2.bf16.msra.mxu0 0
        %1444 = vmatprep.subr.bf16.mxu0 0
        %1445 = vmatpush2.bf16.msra.mxu0 0
        %1446 = vmatprep.subr.bf16.mxu0 0
        %1447 = vmatpush2.bf16.msra.mxu0 0
        %1448 = vmatprep.subr.bf16.mxu0 0
        %1449 = vmatpush2.bf16.msra.mxu0 0
        %1450 = vmatprep.subr.bf16.mxu0 0
        %1451 = vmatpush2.bf16.msra.mxu0 0
        %1452 = vmatprep.subr.bf16.mxu0 0
        %1453 = vmatpush2.bf16.msra.mxu0 0
        %1454 = vmatprep.subr.bf16.mxu0 0
        %1455 = vmatpush2.bf16.msra.mxu0 0
        %1456 = vmatprep.mubr.bf16.mxu0 0
        %1457 = vmatmul.mubr.bf16.gmra.mxu0 %v1339
        %v1458 = vpop.f32.mrf.mxu0
        %v1459 = vadd.f32 %v1375, %v1458
        %v1460 = vpop.f32.mrf.mxu0
        %v1461 = vpop.f32.mrf.mxu0
        %v1462 = vadd.f32 %v1375, %v1461
        %v1463 = vpop.f32.mrf.mxu0
        %1464 = vmatprep.mubr.bf16.mxu0 0
        %1465 = vmatmul.mubr.bf16.gmra.mxu0 %v1340
        %v1466 = vpop.f32.mrf.mxu0
        %v1467 = vadd.f32 %v1375, %v1466
        %v1468 = vpop.f32.mrf.mxu0
        %v1469 = vpop.f32.mrf.mxu0
        %v1470 = vadd.f32 %v1375, %v1469
        %v1471 = vpop.f32.mrf.mxu0
        %1472 = vmatprep.mubr.bf16.mxu0 0
        %1473 = vmatmul.mubr.bf16.gmra.mxu0 %v1341
        %v1474 = vpop.f32.mrf.mxu0
        %v1475 = vadd.f32 %v1375, %v1474
        %v1476 = vpop.f32.mrf.mxu0
        %v1477 = vpop.f32.mrf.mxu0
        %v1478 = vadd.f32 %v1375, %v1477
        %v1479 = vpop.f32.mrf.mxu0
        %1480 = vmatprep.mubr.bf16.mxu0 0
        %1481 = vmatmul.mubr.bf16.gmra.mxu0 %v1342
        %v1482 = vpop.f32.mrf.mxu0
        %v1483 = vadd.f32 %v1375, %v1482
        %v1484 = vpop.f32.mrf.mxu0
        %v1485 = vpop.f32.mrf.mxu0
        %v1486 = vadd.f32 %v1375, %v1485
        %v1487 = vpop.f32.mrf.mxu0
        %1488 = vmatprep.mubr.bf16.mxu0 0
        %1489 = vmatmul.mubr.bf16.gmra.mxu0 %v1343
        %v1490 = vpop.f32.mrf.mxu0
        %v1491 = vadd.f32 %v1375, %v1490
        %v1492 = vpop.f32.mrf.mxu0
        %v1493 = vpop.f32.mrf.mxu0
        %v1494 = vadd.f32 %v1375, %v1493
        %v1495 = vpop.f32.mrf.mxu0
        %1496 = vmatprep.mubr.bf16.mxu0 0
        %1497 = vmatmul.mubr.bf16.gmra.mxu0 %v1344
        %v1498 = vpop.f32.mrf.mxu0
        %v1499 = vadd.f32 %v1375, %v1498
        %v1500 = vpop.f32.mrf.mxu0
        %v1501 = vpop.f32.mrf.mxu0
        %v1502 = vadd.f32 %v1375, %v1501
        %v1503 = vpop.f32.mrf.mxu0
        %1504 = vmatprep.mubr.bf16.mxu0 0
        %1505 = vmatmul.mubr.bf16.gmra.mxu0 %v1345
        %v1506 = vpop.f32.mrf.mxu0
        %v1507 = vadd.f32 %v1375, %v1506
        %v1508 = vpop.f32.mrf.mxu0
        %v1509 = vpop.f32.mrf.mxu0
        %v1510 = vadd.f32 %v1375, %v1509
        %v1511 = vpop.f32.mrf.mxu0
        %1512 = vmatprep.mubr.bf16.mxu0 0
        %1513 = vmatmul.mubr.bf16.gmra.mxu0 %v1346
        %v1514 = vpop.f32.mrf.mxu0
        %v1515 = vadd.f32 %v1375, %v1514
        %v1516 = vpop.f32.mrf.mxu0
        %v1517 = vpop.f32.mrf.mxu0
        %v1518 = vadd.f32 %v1375, %v1517
        %v1519 = vpop.f32.mrf.mxu0
        %1520 = vmatprep.mubr.bf16.mxu0 0
        %1521 = vmatmul.mubr.bf16.gmra.mxu0 %v1347
        %v1522 = vpop.f32.mrf.mxu0
        %v1523 = vadd.f32 %v1375, %v1522
        %v1524 = vpop.f32.mrf.mxu0
        %v1525 = vpop.f32.mrf.mxu0
        %v1526 = vadd.f32 %v1375, %v1525
        %v1527 = vpop.f32.mrf.mxu0
        %1528 = vmatprep.mubr.bf16.mxu0 0
        %1529 = vmatmul.mubr.bf16.gmra.mxu0 %v1348
        %v1530 = vpop.f32.mrf.mxu0
        %v1531 = vadd.f32 %v1375, %v1530
        %v1532 = vpop.f32.mrf.mxu0
        %v1533 = vpop.f32.mrf.mxu0
        %v1534 = vadd.f32 %v1375, %v1533
        %v1535 = vpop.f32.mrf.mxu0
        %1536 = vmatprep.mubr.bf16.mxu0 0
        %1537 = vmatmul.mubr.bf16.gmra.mxu0 %v1349
        %v1538 = vpop.f32.mrf.mxu0
        %v1539 = vadd.f32 %v1375, %v1538
        %v1540 = vpop.f32.mrf.mxu0
        %v1541 = vpop.f32.mrf.mxu0
        %v1542 = vadd.f32 %v1375, %v1541
        %v1543 = vpop.f32.mrf.mxu0
        %1544 = vmatprep.mubr.bf16.mxu0 0
        %1545 = vmatmul.mubr.bf16.gmra.mxu0 %v1350
        %v1546 = vpop.f32.mrf.mxu0
        %v1547 = vadd.f32 %v1375, %v1546
        %v1548 = vpop.f32.mrf.mxu0
        %v1549 = vpop.f32.mrf.mxu0
        %v1550 = vadd.f32 %v1375, %v1549
        %v1551 = vpop.f32.mrf.mxu0
        %1552 = vmatprep.mubr.bf16.mxu0 0
        %1553 = vmatmul.mubr.bf16.gmra.mxu0 %v1351
        %v1554 = vpop.f32.mrf.mxu0
        %v1555 = vadd.f32 %v1375, %v1554
        %v1556 = vpop.f32.mrf.mxu0
        %v1557 = vpop.f32.mrf.mxu0
        %v1558 = vadd.f32 %v1375, %v1557
        %v1559 = vpop.f32.mrf.mxu0
        %1560 = vmatprep.mubr.bf16.mxu0 0
        %1561 = vmatmul.mubr.bf16.gmra.mxu0 %v1352
        %v1562 = vpop.f32.mrf.mxu0
        %v1563 = vadd.f32 %v1375, %v1562
        %v1564 = vpop.f32.mrf.mxu0
        %v1565 = vpop.f32.mrf.mxu0
        %v1566 = vadd.f32 %v1375, %v1565
        %v1567 = vpop.f32.mrf.mxu0
        %1568 = vmatprep.mubr.bf16.mxu0 0
        %1569 = vmatmul.mubr.bf16.gmra.mxu0 %v1353
        %v1570 = vpop.f32.mrf.mxu0
        %v1571 = vadd.f32 %v1375, %v1570
        %v1572 = vpop.f32.mrf.mxu0
        %v1573 = vpop.f32.mrf.mxu0
        %v1574 = vadd.f32 %v1375, %v1573
        %v1575 = vpop.f32.mrf.mxu0
        %1576 = vmatprep.mubr.bf16.mxu0 0
        %1577 = vmatmul.mubr.bf16.gmra.mxu0 %v1354
        %v1578 = vpop.f32.mrf.mxu0
        %v1579 = vadd.f32 %v1375, %v1578
        %v1580 = vpop.f32.mrf.mxu0
        %v1581 = vpop.f32.mrf.mxu0
        %v1582 = vadd.f32 %v1375, %v1581
        %v1583 = vpop.f32.mrf.mxu0
        %1584 = vdwg.mxu0
        %v1585 = vmax.f32 %v1459, 0.0
        %v1586 = vmax.f32 %v1462, 0.0
        %v1587 = vmax.f32 %v1467, 0.0
        %v1588 = vmax.f32 %v1470, 0.0
        %v1589 = vmax.f32 %v1475, 0.0
        %v1590 = vmax.f32 %v1478, 0.0
        %v1591 = vmax.f32 %v1483, 0.0
        %v1592 = vmax.f32 %v1486, 0.0
        %v1593 = vmax.f32 %v1491, 0.0
        %v1594 = vmax.f32 %v1494, 0.0
        %v1595 = vmax.f32 %v1499, 0.0
        %v1596 = vmax.f32 %v1502, 0.0
        %v1597 = vmax.f32 %v1507, 0.0
        %v1598 = vmax.f32 %v1510, 0.0
        %v1599 = vmax.f32 %v1515, 0.0
        %v1600 = vmax.f32 %v1518, 0.0
        %v1601 = vmax.f32 %v1523, 0.0
        %v1602 = vmax.f32 %v1526, 0.0
        %v1603 = vmax.f32 %v1531, 0.0
        %v1604 = vmax.f32 %v1534, 0.0
        %v1605 = vmax.f32 %v1539, 0.0
        %v1606 = vmax.f32 %v1542, 0.0
        %v1607 = vmax.f32 %v1547, 0.0
        %v1608 = vmax.f32 %v1550, 0.0
        %v1609 = vmax.f32 %v1555, 0.0
        %v1610 = vmax.f32 %v1558, 0.0
        %v1611 = vmax.f32 %v1563, 0.0
        %v1612 = vmax.f32 %v1566, 0.0
        %v1613 = vmax.f32 %v1571, 0.0
        %v1614 = vmax.f32 %v1574, 0.0
        %v1615 = vmax.f32 %v1579, 0.0
        %v1616 = vmax.f32 %v1582, 0.0
        %v1617 = vpack.c.bf16 %v1586, %v1585
        %v1618 = vpack.c.bf16 %v1588, %v1587
        %v1619 = vpack.c.bf16 %v1590, %v1589
        %v1620 = vpack.c.bf16 %v1592, %v1591
        %v1621 = vpack.c.bf16 %v1594, %v1593
        %v1622 = vpack.c.bf16 %v1596, %v1595
        %v1623 = vpack.c.bf16 %v1598, %v1597
        %v1624 = vpack.c.bf16 %v1600, %v1599
        %v1625 = vpack.c.bf16 %v1602, %v1601
        %v1626 = vpack.c.bf16 %v1604, %v1603
        %v1627 = vpack.c.bf16 %v1606, %v1605
        %v1628 = vpack.c.bf16 %v1608, %v1607
        %v1629 = vpack.c.bf16 %v1610, %v1609
        %v1630 = vpack.c.bf16 %v1612, %v1611
        %v1631 = vpack.c.bf16 %v1614, %v1613
        %v1632 = vpack.c.bf16 %v1616, %v1615
        %s1633 = scalar_lea.vmem [#allocation9], 64
        %v1634 = vld [vmem:[%s1633] sm:$0xf]
        %v1635 = vld [vmem:[%s1633 + $0x4] sm:$0xf]
        %v1636 = vld [vmem:[%s1633 + $0x8] sm:$0xf]
        %v1637 = vld [vmem:[%s1633 + $0xc] sm:$0xf]
        %v1638 = vld [vmem:[%s1633 + $0x10] sm:$0xf]
        %v1639 = vld [vmem:[%s1633 + $0x14] sm:$0xf]
        %v1640 = vld [vmem:[%s1633 + $0x18] sm:$0xf]
        %v1641 = vld [vmem:[%s1633 + $0x1c] sm:$0xf]
        %v1642 = vld [vmem:[%s1633 + $0x20] sm:$0xf]
        %v1643 = vld [vmem:[%s1633 + $0x24] sm:$0xf]
        %v1644 = vld [vmem:[%s1633 + $0x28] sm:$0xf]
        %v1645 = vld [vmem:[%s1633 + $0x2c] sm:$0xf]
        %v1646 = vld [vmem:[%s1633 + $0x30] sm:$0xf]
        %v1647 = vld [vmem:[%s1633 + $0x34] sm:$0xf]
        %v1648 = vld [vmem:[%s1633 + $0x38] sm:$0xf]
        %v1649 = vld [vmem:[%s1633 + $0x3c] sm:$0xf]
        %v1650 = vlaneseq
        %v1651 = vshrl.u32 %v1650, 7
        %v1652 = vsub.s32 3, %v1651
        %v1653 = vrot.slane %v1138, %v1652
        %v1670 = vunpack.c.l.b16 %v1634
        %v1671 = vunpack.c.l.b16 %v1635
        %v1672 = vunpack.c.l.b16 %v1636
        %v1673 = vunpack.c.l.b16 %v1637
        %v1674 = vunpack.c.l.b16 %v1638
        %v1675 = vunpack.c.l.b16 %v1639
        %v1676 = vunpack.c.l.b16 %v1640
        %v1677 = vunpack.c.l.b16 %v1641
        %v1678 = vunpack.c.l.b16 %v1642
        %v1679 = vunpack.c.l.b16 %v1643
        %v1680 = vunpack.c.l.b16 %v1644
        %v1681 = vunpack.c.l.b16 %v1645
        %v1682 = vunpack.c.l.b16 %v1646
        %v1683 = vunpack.c.l.b16 %v1647
        %v1684 = vunpack.c.l.b16 %v1648
        %v1685 = vunpack.c.l.b16 %v1649
        %v1686 = vpack.c.b16 %v1671, %v1670
        %v1687 = vpack.c.b16 %v1673, %v1672
        %v1688 = vpack.c.b16 %v1675, %v1674
        %v1689 = vpack.c.b16 %v1677, %v1676
        %v1690 = vpack.c.b16 %v1679, %v1678
        %v1691 = vpack.c.b16 %v1681, %v1680
        %v1692 = vpack.c.b16 %v1683, %v1682
        %v1693 = vpack.c.b16 %v1685, %v1684
        %1702 = vmatprep.subr.bf16.mxu0 0
        %1703 = vmatpush1.bf16.msra.mxu0 %v1693
        %1704 = vmatprep.subr.bf16.mxu0 0
        %1705 = vmatpush1.bf16.msra.mxu0 %v1692
        %1706 = vmatprep.subr.bf16.mxu0 0
        %1707 = vmatpush1.bf16.msra.mxu0 %v1691
        %1708 = vmatprep.subr.bf16.mxu0 0
        %1709 = vmatpush1.bf16.msra.mxu0 %v1690
        %1710 = vmatprep.subr.bf16.mxu0 0
        %1711 = vmatpush1.bf16.msra.mxu0 %v1689
        %1712 = vmatprep.subr.bf16.mxu0 0
        %1713 = vmatpush1.bf16.msra.mxu0 %v1688
        %1714 = vmatprep.subr.bf16.mxu0 0
        %1715 = vmatpush1.bf16.msra.mxu0 %v1687
        %1716 = vmatprep.subr.bf16.mxu0 0
        %1717 = vmatpush1.bf16.msra.mxu0 %v1686
        %1718 = vmatprep.subr.bf16.mxu0 0
        %1719 = vmatpush2.bf16.msra.mxu0 0
        %1720 = vmatprep.subr.bf16.mxu0 0
        %1721 = vmatpush2.bf16.msra.mxu0 0
        %1722 = vmatprep.subr.bf16.mxu0 0
        %1723 = vmatpush2.bf16.msra.mxu0 0
        %1724 = vmatprep.subr.bf16.mxu0 0
        %1725 = vmatpush2.bf16.msra.mxu0 0
        %1726 = vmatprep.subr.bf16.mxu0 0
        %1727 = vmatpush2.bf16.msra.mxu0 0
        %1728 = vmatprep.subr.bf16.mxu0 0
        %1729 = vmatpush2.bf16.msra.mxu0 0
        %1730 = vmatprep.subr.bf16.mxu0 0
        %1731 = vmatpush2.bf16.msra.mxu0 0
        %1732 = vmatprep.subr.bf16.mxu0 0
        %1733 = vmatpush2.bf16.msra.mxu0 0
        %1734 = vmatprep.mubr.bf16.mxu0 0
        %1735 = vmatmul.mubr.bf16.gmra.mxu0 %v1617
        %v1736 = vpop.f32.mrf.mxu0
        %v1737 = vadd.f32 %v1653, %v1736
        %v1738 = vpop.f32.mrf.mxu0
        %v1739 = vpop.f32.mrf.mxu0
        %v1740 = vadd.f32 %v1653, %v1739
        %v1741 = vpop.f32.mrf.mxu0
        %1742 = vmatprep.mubr.bf16.mxu0 0
        %1743 = vmatmul.mubr.bf16.gmra.mxu0 %v1618
        %v1744 = vpop.f32.mrf.mxu0
        %v1745 = vadd.f32 %v1653, %v1744
        %v1746 = vpop.f32.mrf.mxu0
        %v1747 = vpop.f32.mrf.mxu0
        %v1748 = vadd.f32 %v1653, %v1747
        %v1749 = vpop.f32.mrf.mxu0
        %1750 = vmatprep.mubr.bf16.mxu0 0
        %1751 = vmatmul.mubr.bf16.gmra.mxu0 %v1619
        %v1752 = vpop.f32.mrf.mxu0
        %v1753 = vadd.f32 %v1653, %v1752
        %v1754 = vpop.f32.mrf.mxu0
        %v1755 = vpop.f32.mrf.mxu0
        %v1756 = vadd.f32 %v1653, %v1755
        %v1757 = vpop.f32.mrf.mxu0
        %1758 = vmatprep.mubr.bf16.mxu0 0
        %1759 = vmatmul.mubr.bf16.gmra.mxu0 %v1620
        %v1760 = vpop.f32.mrf.mxu0
        %v1761 = vadd.f32 %v1653, %v1760
        %v1762 = vpop.f32.mrf.mxu0
        %v1763 = vpop.f32.mrf.mxu0
        %v1764 = vadd.f32 %v1653, %v1763
        %v1765 = vpop.f32.mrf.mxu0
        %1766 = vmatprep.mubr.bf16.mxu0 0
        %1767 = vmatmul.mubr.bf16.gmra.mxu0 %v1621
        %v1768 = vpop.f32.mrf.mxu0
        %v1769 = vadd.f32 %v1653, %v1768
        %v1770 = vpop.f32.mrf.mxu0
        %v1771 = vpop.f32.mrf.mxu0
        %v1772 = vadd.f32 %v1653, %v1771
        %v1773 = vpop.f32.mrf.mxu0
        %1774 = vmatprep.mubr.bf16.mxu0 0
        %1775 = vmatmul.mubr.bf16.gmra.mxu0 %v1622
        %v1776 = vpop.f32.mrf.mxu0
        %v1777 = vadd.f32 %v1653, %v1776
        %v1778 = vpop.f32.mrf.mxu0
        %v1779 = vpop.f32.mrf.mxu0
        %v1780 = vadd.f32 %v1653, %v1779
        %v1781 = vpop.f32.mrf.mxu0
        %1782 = vmatprep.mubr.bf16.mxu0 0
        %1783 = vmatmul.mubr.bf16.gmra.mxu0 %v1623
        %v1784 = vpop.f32.mrf.mxu0
        %v1785 = vadd.f32 %v1653, %v1784
        %v1786 = vpop.f32.mrf.mxu0
        %v1787 = vpop.f32.mrf.mxu0
        %v1788 = vadd.f32 %v1653, %v1787
        %v1789 = vpop.f32.mrf.mxu0
        %1790 = vmatprep.mubr.bf16.mxu0 0
        %1791 = vmatmul.mubr.bf16.gmra.mxu0 %v1624
        %v1792 = vpop.f32.mrf.mxu0
        %v1793 = vadd.f32 %v1653, %v1792
        %v1794 = vpop.f32.mrf.mxu0
        %v1795 = vpop.f32.mrf.mxu0
        %v1796 = vadd.f32 %v1653, %v1795
        %v1797 = vpop.f32.mrf.mxu0
        %1798 = vmatprep.mubr.bf16.mxu0 0
        %1799 = vmatmul.mubr.bf16.gmra.mxu0 %v1625
        %v1800 = vpop.f32.mrf.mxu0
        %v1801 = vadd.f32 %v1653, %v1800
        %v1802 = vpop.f32.mrf.mxu0
        %v1803 = vpop.f32.mrf.mxu0
        %v1804 = vadd.f32 %v1653, %v1803
        %v1805 = vpop.f32.mrf.mxu0
        %1806 = vmatprep.mubr.bf16.mxu0 0
        %1807 = vmatmul.mubr.bf16.gmra.mxu0 %v1626
        %v1808 = vpop.f32.mrf.mxu0
        %v1809 = vadd.f32 %v1653, %v1808
        %v1810 = vpop.f32.mrf.mxu0
        %v1811 = vpop.f32.mrf.mxu0
        %v1812 = vadd.f32 %v1653, %v1811
        %v1813 = vpop.f32.mrf.mxu0
        %1814 = vmatprep.mubr.bf16.mxu0 0
        %1815 = vmatmul.mubr.bf16.gmra.mxu0 %v1627
        %v1816 = vpop.f32.mrf.mxu0
        %v1817 = vadd.f32 %v1653, %v1816
        %v1818 = vpop.f32.mrf.mxu0
        %v1819 = vpop.f32.mrf.mxu0
        %v1820 = vadd.f32 %v1653, %v1819
        %v1821 = vpop.f32.mrf.mxu0
        %1822 = vmatprep.mubr.bf16.mxu0 0
        %1823 = vmatmul.mubr.bf16.gmra.mxu0 %v1628
        %v1824 = vpop.f32.mrf.mxu0
        %v1825 = vadd.f32 %v1653, %v1824
        %v1826 = vpop.f32.mrf.mxu0
        %v1827 = vpop.f32.mrf.mxu0
        %v1828 = vadd.f32 %v1653, %v1827
        %v1829 = vpop.f32.mrf.mxu0
        %1830 = vmatprep.mubr.bf16.mxu0 0
        %1831 = vmatmul.mubr.bf16.gmra.mxu0 %v1629
        %v1832 = vpop.f32.mrf.mxu0
        %v1833 = vadd.f32 %v1653, %v1832
        %v1834 = vpop.f32.mrf.mxu0
        %v1835 = vpop.f32.mrf.mxu0
        %v1836 = vadd.f32 %v1653, %v1835
        %v1837 = vpop.f32.mrf.mxu0
        %1838 = vmatprep.mubr.bf16.mxu0 0
        %1839 = vmatmul.mubr.bf16.gmra.mxu0 %v1630
        %v1840 = vpop.f32.mrf.mxu0
        %v1841 = vadd.f32 %v1653, %v1840
        %v1842 = vpop.f32.mrf.mxu0
        %v1843 = vpop.f32.mrf.mxu0
        %v1844 = vadd.f32 %v1653, %v1843
        %v1845 = vpop.f32.mrf.mxu0
        %1846 = vmatprep.mubr.bf16.mxu0 0
        %1847 = vmatmul.mubr.bf16.gmra.mxu0 %v1631
        %v1848 = vpop.f32.mrf.mxu0
        %v1849 = vadd.f32 %v1653, %v1848
        %v1850 = vpop.f32.mrf.mxu0
        %v1851 = vpop.f32.mrf.mxu0
        %v1852 = vadd.f32 %v1653, %v1851
        %v1853 = vpop.f32.mrf.mxu0
        %1854 = vmatprep.mubr.bf16.mxu0 0
        %1855 = vmatmul.mubr.bf16.gmra.mxu0 %v1632
        %v1856 = vpop.f32.mrf.mxu0
        %v1857 = vadd.f32 %v1653, %v1856
        %v1858 = vpop.f32.mrf.mxu0
        %v1859 = vpop.f32.mrf.mxu0
        %v1860 = vadd.f32 %v1653, %v1859
        %v1861 = vpop.f32.mrf.mxu0
        %1862 = vdwg.mxu0
        %v1863 = vmax.f32 %v1737, 0.0
        %v1864 = vmax.f32 %v1740, 0.0
        %v1865 = vmax.f32 %v1745, 0.0
        %v1866 = vmax.f32 %v1748, 0.0
        %v1867 = vmax.f32 %v1753, 0.0
        %v1868 = vmax.f32 %v1756, 0.0
        %v1869 = vmax.f32 %v1761, 0.0
        %v1870 = vmax.f32 %v1764, 0.0
        %v1871 = vmax.f32 %v1769, 0.0
        %v1872 = vmax.f32 %v1772, 0.0
        %v1873 = vmax.f32 %v1777, 0.0
        %v1874 = vmax.f32 %v1780, 0.0
        %v1875 = vmax.f32 %v1785, 0.0
        %v1876 = vmax.f32 %v1788, 0.0
        %v1877 = vmax.f32 %v1793, 0.0
        %v1878 = vmax.f32 %v1796, 0.0
        %v1879 = vmax.f32 %v1801, 0.0
        %v1880 = vmax.f32 %v1804, 0.0
        %v1881 = vmax.f32 %v1809, 0.0
        %v1882 = vmax.f32 %v1812, 0.0
        %v1883 = vmax.f32 %v1817, 0.0
        %v1884 = vmax.f32 %v1820, 0.0
        %v1885 = vmax.f32 %v1825, 0.0
        %v1886 = vmax.f32 %v1828, 0.0
        %v1887 = vmax.f32 %v1833, 0.0
        %v1888 = vmax.f32 %v1836, 0.0
        %v1889 = vmax.f32 %v1841, 0.0
        %v1890 = vmax.f32 %v1844, 0.0
        %v1891 = vmax.f32 %v1849, 0.0
        %v1892 = vmax.f32 %v1852, 0.0
        %v1893 = vmax.f32 %v1857, 0.0
        %v1894 = vmax.f32 %v1860, 0.0
        %v1895 = vmul.f32 %v1307, %v1863
        %v1896 = vmul.f32 %v1308, %v1864
        %v1897 = vmul.f32 %v1309, %v1865
        %v1898 = vmul.f32 %v1310, %v1866
        %v1899 = vmul.f32 %v1311, %v1867
        %v1900 = vmul.f32 %v1312, %v1868
        %v1901 = vmul.f32 %v1313, %v1869
        %v1902 = vmul.f32 %v1314, %v1870
        %v1903 = vmul.f32 %v1315, %v1871
        %v1904 = vmul.f32 %v1316, %v1872
        %v1905 = vmul.f32 %v1317, %v1873
        %v1906 = vmul.f32 %v1318, %v1874
        %v1907 = vmul.f32 %v1319, %v1875
        %v1908 = vmul.f32 %v1320, %v1876
        %v1909 = vmul.f32 %v1321, %v1877
        %v1910 = vmul.f32 %v1322, %v1878
        %v1911 = vmul.f32 %v1323, %v1879
        %v1912 = vmul.f32 %v1324, %v1880
        %v1913 = vmul.f32 %v1325, %v1881
        %v1914 = vmul.f32 %v1326, %v1882
        %v1915 = vmul.f32 %v1327, %v1883
        %v1916 = vmul.f32 %v1328, %v1884
        %v1917 = vmul.f32 %v1329, %v1885
        %v1918 = vmul.f32 %v1330, %v1886
        %v1919 = vmul.f32 %v1331, %v1887
        %v1920 = vmul.f32 %v1332, %v1888
        %v1921 = vmul.f32 %v1333, %v1889
        %v1922 = vmul.f32 %v1334, %v1890
        %v1923 = vmul.f32 %v1335, %v1891
        %v1924 = vmul.f32 %v1336, %v1892
        %v1925 = vmul.f32 %v1337, %v1893
        %v1926 = vmul.f32 %v1338, %v1894
        %v1927 = vld [vmem:[%s4] sm:$0x7]
        %v1928 = vlaneseq
        %v1929 = vshrl.u32 %v1928, 7
        %v1930 = vsub.s32 0, %v1929
        %v1931 = vrot.slane %v1927, %v1930
        %v1932 = vmul.f32 %v1307, %v1931
        %v1933 = vmul.f32 %v1308, %v1931
        %v1934 = vmul.f32 %v1309, %v1931
        %v1935 = vmul.f32 %v1310, %v1931
        %v1936 = vmul.f32 %v1311, %v1931
        %v1937 = vmul.f32 %v1312, %v1931
        %v1938 = vmul.f32 %v1313, %v1931
        %v1939 = vmul.f32 %v1314, %v1931
        %v1940 = vmul.f32 %v1315, %v1931
        %v1941 = vmul.f32 %v1316, %v1931
        %v1942 = vmul.f32 %v1317, %v1931
        %v1943 = vmul.f32 %v1318, %v1931
        %v1944 = vmul.f32 %v1319, %v1931
        %v1945 = vmul.f32 %v1320, %v1931
        %v1946 = vmul.f32 %v1321, %v1931
        %v1947 = vmul.f32 %v1322, %v1931
        %v1948 = vmul.f32 %v1323, %v1931
        %v1949 = vmul.f32 %v1324, %v1931
        %v1950 = vmul.f32 %v1325, %v1931
        %v1951 = vmul.f32 %v1326, %v1931
        %v1952 = vmul.f32 %v1327, %v1931
        %v1953 = vmul.f32 %v1328, %v1931
        %v1954 = vmul.f32 %v1329, %v1931
        %v1955 = vmul.f32 %v1330, %v1931
        %v1956 = vmul.f32 %v1331, %v1931
        %v1957 = vmul.f32 %v1332, %v1931
        %v1958 = vmul.f32 %v1333, %v1931
        %v1959 = vmul.f32 %v1334, %v1931
        %v1960 = vmul.f32 %v1335, %v1931
        %v1961 = vmul.f32 %v1336, %v1931
        %v1962 = vmul.f32 %v1337, %v1931
        %v1963 = vmul.f32 %v1338, %v1931
        %v1964 = vlaneseq
        %v1965 = vshrl.u32 %v1964, 7
        %v1966 = vsub.s32 1, %v1965
        %v1967 = vrot.slane %v1927, %v1966
        %v1968 = vmul.f32 %v1863, %v1967
        %v1969 = vmul.f32 %v1864, %v1967
        %v1970 = vmul.f32 %v1865, %v1967
        %v1971 = vmul.f32 %v1866, %v1967
        %v1972 = vmul.f32 %v1867, %v1967
        %v1973 = vmul.f32 %v1868, %v1967
        %v1974 = vmul.f32 %v1869, %v1967
        %v1975 = vmul.f32 %v1870, %v1967
        %v1976 = vmul.f32 %v1871, %v1967
        %v1977 = vmul.f32 %v1872, %v1967
        %v1978 = vmul.f32 %v1873, %v1967
        %v1979 = vmul.f32 %v1874, %v1967
        %v1980 = vmul.f32 %v1875, %v1967
        %v1981 = vmul.f32 %v1876, %v1967
        %v1982 = vmul.f32 %v1877, %v1967
        %v1983 = vmul.f32 %v1878, %v1967
        %v1984 = vmul.f32 %v1879, %v1967
        %v1985 = vmul.f32 %v1880, %v1967
        %v1986 = vmul.f32 %v1881, %v1967
        %v1987 = vmul.f32 %v1882, %v1967
        %v1988 = vmul.f32 %v1883, %v1967
        %v1989 = vmul.f32 %v1884, %v1967
        %v1990 = vmul.f32 %v1885, %v1967
        %v1991 = vmul.f32 %v1886, %v1967
        %v1992 = vmul.f32 %v1887, %v1967
        %v1993 = vmul.f32 %v1888, %v1967
        %v1994 = vmul.f32 %v1889, %v1967
        %v1995 = vmul.f32 %v1890, %v1967
        %v1996 = vmul.f32 %v1891, %v1967
        %v1997 = vmul.f32 %v1892, %v1967
        %v1998 = vmul.f32 %v1893, %v1967
        %v1999 = vmul.f32 %v1894, %v1967
        %v2000 = vadd.f32 %v1932, %v1968
        %v2001 = vadd.f32 %v1933, %v1969
        %v2002 = vadd.f32 %v1934, %v1970
        %v2003 = vadd.f32 %v1935, %v1971
        %v2004 = vadd.f32 %v1936, %v1972
        %v2005 = vadd.f32 %v1937, %v1973
        %v2006 = vadd.f32 %v1938, %v1974
        %v2007 = vadd.f32 %v1939, %v1975
        %v2008 = vadd.f32 %v1940, %v1976
        %v2009 = vadd.f32 %v1941, %v1977
        %v2010 = vadd.f32 %v1942, %v1978
        %v2011 = vadd.f32 %v1943, %v1979
        %v2012 = vadd.f32 %v1944, %v1980
        %v2013 = vadd.f32 %v1945, %v1981
        %v2014 = vadd.f32 %v1946, %v1982
        %v2015 = vadd.f32 %v1947, %v1983
        %v2016 = vadd.f32 %v1948, %v1984
        %v2017 = vadd.f32 %v1949, %v1985
        %v2018 = vadd.f32 %v1950, %v1986
        %v2019 = vadd.f32 %v1951, %v1987
        %v2020 = vadd.f32 %v1952, %v1988
        %v2021 = vadd.f32 %v1953, %v1989
        %v2022 = vadd.f32 %v1954, %v1990
        %v2023 = vadd.f32 %v1955, %v1991
        %v2024 = vadd.f32 %v1956, %v1992
        %v2025 = vadd.f32 %v1957, %v1993
        %v2026 = vadd.f32 %v1958, %v1994
        %v2027 = vadd.f32 %v1959, %v1995
        %v2028 = vadd.f32 %v1960, %v1996
        %v2029 = vadd.f32 %v1961, %v1997
        %v2030 = vadd.f32 %v1962, %v1998
        %v2031 = vadd.f32 %v1963, %v1999
        %v2032 = vlaneseq
        %v2033 = vshrl.u32 %v2032, 7
        %v2034 = vsub.s32 2, %v2033
        %v2035 = vrot.slane %v1927, %v2034
        %v2036 = vmul.f32 %v1895, %v2035
        %v2037 = vmul.f32 %v1896, %v2035
        %v2038 = vmul.f32 %v1897, %v2035
        %v2039 = vmul.f32 %v1898, %v2035
        %v2040 = vmul.f32 %v1899, %v2035
        %v2041 = vmul.f32 %v1900, %v2035
        %v2042 = vmul.f32 %v1901, %v2035
        %v2043 = vmul.f32 %v1902, %v2035
        %v2044 = vmul.f32 %v1903, %v2035
        %v2045 = vmul.f32 %v1904, %v2035
        %v2046 = vmul.f32 %v1905, %v2035
        %v2047 = vmul.f32 %v1906, %v2035
        %v2048 = vmul.f32 %v1907, %v2035
        %v2049 = vmul.f32 %v1908, %v2035
        %v2050 = vmul.f32 %v1909, %v2035
        %v2051 = vmul.f32 %v1910, %v2035
        %v2052 = vmul.f32 %v1911, %v2035
        %v2053 = vmul.f32 %v1912, %v2035
        %v2054 = vmul.f32 %v1913, %v2035
        %v2055 = vmul.f32 %v1914, %v2035
        %v2056 = vmul.f32 %v1915, %v2035
        %v2057 = vmul.f32 %v1916, %v2035
        %v2058 = vmul.f32 %v1917, %v2035
        %v2059 = vmul.f32 %v1918, %v2035
        %v2060 = vmul.f32 %v1919, %v2035
        %v2061 = vmul.f32 %v1920, %v2035
        %v2062 = vmul.f32 %v1921, %v2035
        %v2063 = vmul.f32 %v1922, %v2035
        %v2064 = vmul.f32 %v1923, %v2035
        %v2065 = vmul.f32 %v1924, %v2035
        %v2066 = vmul.f32 %v1925, %v2035
        %v2067 = vmul.f32 %v1926, %v2035
        %v2068 = vadd.f32 %v2000, %v2036
        %v2069 = vadd.f32 %v2001, %v2037
        %v2070 = vadd.f32 %v2002, %v2038
        %v2071 = vadd.f32 %v2003, %v2039
        %v2072 = vadd.f32 %v2004, %v2040
        %v2073 = vadd.f32 %v2005, %v2041
        %v2074 = vadd.f32 %v2006, %v2042
        %v2075 = vadd.f32 %v2007, %v2043
        %v2076 = vadd.f32 %v2008, %v2044
        %v2077 = vadd.f32 %v2009, %v2045
        %v2078 = vadd.f32 %v2010, %v2046
        %v2079 = vadd.f32 %v2011, %v2047
        %v2080 = vadd.f32 %v2012, %v2048
        %v2081 = vadd.f32 %v2013, %v2049
        %v2082 = vadd.f32 %v2014, %v2050
        %v2083 = vadd.f32 %v2015, %v2051
        %v2084 = vadd.f32 %v2016, %v2052
        %v2085 = vadd.f32 %v2017, %v2053
        %v2086 = vadd.f32 %v2018, %v2054
        %v2087 = vadd.f32 %v2019, %v2055
        %v2088 = vadd.f32 %v2020, %v2056
        %v2089 = vadd.f32 %v2021, %v2057
        %v2090 = vadd.f32 %v2022, %v2058
        %v2091 = vadd.f32 %v2023, %v2059
        %v2092 = vadd.f32 %v2024, %v2060
        %v2093 = vadd.f32 %v2025, %v2061
        %v2094 = vadd.f32 %v2026, %v2062
        %v2095 = vadd.f32 %v2027, %v2063
        %v2096 = vadd.f32 %v2028, %v2064
        %v2097 = vadd.f32 %v2029, %v2065
        %v2098 = vadd.f32 %v2030, %v2066
        %v2099 = vadd.f32 %v2031, %v2067
        %2100 = vadd.xlane.f32.xlu0 %v2068
        %v2101 = vpop.xlane.xlu0 %2100
        %2102 = vadd.xlane.f32.xlu0 %v2069
        %v2103 = vpop.xlane.xlu0 %2102
        %2104 = vadd.xlane.f32.xlu0 %v2070
        %v2105 = vpop.xlane.xlu0 %2104
        %2106 = vadd.xlane.f32.xlu0 %v2071
        %v2107 = vpop.xlane.xlu0 %2106
        %2108 = vadd.xlane.f32.xlu0 %v2072
        %v2109 = vpop.xlane.xlu0 %2108
        %2110 = vadd.xlane.f32.xlu0 %v2073
        %v2111 = vpop.xlane.xlu0 %2110
        %2112 = vadd.xlane.f32.xlu0 %v2074
        %v2113 = vpop.xlane.xlu0 %2112
        %2114 = vadd.xlane.f32.xlu0 %v2075
        %v2115 = vpop.xlane.xlu0 %2114
        %2116 = vadd.xlane.f32.xlu0 %v2076
        %v2117 = vpop.xlane.xlu0 %2116
        %2118 = vadd.xlane.f32.xlu0 %v2077
        %v2119 = vpop.xlane.xlu0 %2118
        %2120 = vadd.xlane.f32.xlu0 %v2078
        %v2121 = vpop.xlane.xlu0 %2120
        %2122 = vadd.xlane.f32.xlu0 %v2079
        %v2123 = vpop.xlane.xlu0 %2122
        %2124 = vadd.xlane.f32.xlu0 %v2080
        %v2125 = vpop.xlane.xlu0 %2124
        %2126 = vadd.xlane.f32.xlu0 %v2081
        %v2127 = vpop.xlane.xlu0 %2126
        %2128 = vadd.xlane.f32.xlu0 %v2082
        %v2129 = vpop.xlane.xlu0 %2128
        %2130 = vadd.xlane.f32.xlu0 %v2083
        %v2131 = vpop.xlane.xlu0 %2130
        %2132 = vadd.xlane.f32.xlu0 %v2084
        %v2133 = vpop.xlane.xlu0 %2132
        %2134 = vadd.xlane.f32.xlu0 %v2085
        %v2135 = vpop.xlane.xlu0 %2134
        %2136 = vadd.xlane.f32.xlu0 %v2086
        %v2137 = vpop.xlane.xlu0 %2136
        %2138 = vadd.xlane.f32.xlu0 %v2087
        %v2139 = vpop.xlane.xlu0 %2138
        %2140 = vadd.xlane.f32.xlu0 %v2088
        %v2141 = vpop.xlane.xlu0 %2140
        %2142 = vadd.xlane.f32.xlu0 %v2089
        %v2143 = vpop.xlane.xlu0 %2142
        %2144 = vadd.xlane.f32.xlu0 %v2090
        %v2145 = vpop.xlane.xlu0 %2144
        %2146 = vadd.xlane.f32.xlu0 %v2091
        %v2147 = vpop.xlane.xlu0 %2146
        %2148 = vadd.xlane.f32.xlu0 %v2092
        %v2149 = vpop.xlane.xlu0 %2148
        %2150 = vadd.xlane.f32.xlu0 %v2093
        %v2151 = vpop.xlane.xlu0 %2150
        %2152 = vadd.xlane.f32.xlu0 %v2094
        %v2153 = vpop.xlane.xlu0 %2152
        %2154 = vadd.xlane.f32.xlu0 %v2095
        %v2155 = vpop.xlane.xlu0 %2154
        %2156 = vadd.xlane.f32.xlu0 %v2096
        %v2157 = vpop.xlane.xlu0 %2156
        %2158 = vadd.xlane.f32.xlu0 %v2097
        %v2159 = vpop.xlane.xlu0 %2158
        %2160 = vadd.xlane.f32.xlu0 %v2098
        %v2161 = vpop.xlane.xlu0 %2160
        %2162 = vadd.xlane.f32.xlu0 %v2099
        %v2163 = vpop.xlane.xlu0 %2162
        %s2164 = sld [smem:[#allocation2]]
        %v2165 = vstv %s2164
        %v2166 = vadd.f32 %v2101, %v2165
        %v2167 = vadd.f32 %v2103, %v2165
        %v2168 = vadd.f32 %v2105, %v2165
        %v2169 = vadd.f32 %v2107, %v2165
        %v2170 = vadd.f32 %v2109, %v2165
        %v2171 = vadd.f32 %v2111, %v2165
        %v2172 = vadd.f32 %v2113, %v2165
        %v2173 = vadd.f32 %v2115, %v2165
        %v2174 = vadd.f32 %v2117, %v2165
        %v2175 = vadd.f32 %v2119, %v2165
        %v2176 = vadd.f32 %v2121, %v2165
        %v2177 = vadd.f32 %v2123, %v2165
        %v2178 = vadd.f32 %v2125, %v2165
        %v2179 = vadd.f32 %v2127, %v2165
        %v2180 = vadd.f32 %v2129, %v2165
        %v2181 = vadd.f32 %v2131, %v2165
        %v2182 = vadd.f32 %v2133, %v2165
        %v2183 = vadd.f32 %v2135, %v2165
        %v2184 = vadd.f32 %v2137, %v2165
        %v2185 = vadd.f32 %v2139, %v2165
        %v2186 = vadd.f32 %v2141, %v2165
        %v2187 = vadd.f32 %v2143, %v2165
        %v2188 = vadd.f32 %v2145, %v2165
        %v2189 = vadd.f32 %v2147, %v2165
        %v2190 = vadd.f32 %v2149, %v2165
        %v2191 = vadd.f32 %v2151, %v2165
        %v2192 = vadd.f32 %v2153, %v2165
        %v2193 = vadd.f32 %v2155, %v2165
        %v2194 = vadd.f32 %v2157, %v2165
        %v2195 = vadd.f32 %v2159, %v2165
        %v2196 = vadd.f32 %v2161, %v2165
        %v2197 = vadd.f32 %v2163, %v2165
        %v2198 = vxor.u32 %v2166, 2147483648
        %v2199 = vxor.u32 %v2167, 2147483648
        %v2200 = vxor.u32 %v2168, 2147483648
        %v2201 = vxor.u32 %v2169, 2147483648
        %v2202 = vxor.u32 %v2170, 2147483648
        %v2203 = vxor.u32 %v2171, 2147483648
        %v2204 = vxor.u32 %v2172, 2147483648
        %v2205 = vxor.u32 %v2173, 2147483648
        %v2206 = vxor.u32 %v2174, 2147483648
        %v2207 = vxor.u32 %v2175, 2147483648
        %v2208 = vxor.u32 %v2176, 2147483648
        %v2209 = vxor.u32 %v2177, 2147483648
        %v2210 = vxor.u32 %v2178, 2147483648
        %v2211 = vxor.u32 %v2179, 2147483648
        %v2212 = vxor.u32 %v2180, 2147483648
        %v2213 = vxor.u32 %v2181, 2147483648
        %v2214 = vxor.u32 %v2182, 2147483648
        %v2215 = vxor.u32 %v2183, 2147483648
        %v2216 = vxor.u32 %v2184, 2147483648
        %v2217 = vxor.u32 %v2185, 2147483648
        %v2218 = vxor.u32 %v2186, 2147483648
        %v2219 = vxor.u32 %v2187, 2147483648
        %v2220 = vxor.u32 %v2188, 2147483648
        %v2221 = vxor.u32 %v2189, 2147483648
        %v2222 = vxor.u32 %v2190, 2147483648
        %v2223 = vxor.u32 %v2191, 2147483648
        %v2224 = vxor.u32 %v2192, 2147483648
        %v2225 = vxor.u32 %v2193, 2147483648
        %v2226 = vxor.u32 %v2194, 2147483648
        %v2227 = vxor.u32 %v2195, 2147483648
        %v2228 = vxor.u32 %v2196, 2147483648
        %v2229 = vxor.u32 %v2197, 2147483648
        %v2230 = vmul.f32 %v2198, 1.442695
        %v2231 = vpow.pop %v2230
        %v2232 = vmul.f32 %v2199, 1.442695
        %v2233 = vpow.pop %v2232
        %v2234 = vmul.f32 %v2200, 1.442695
        %v2235 = vpow.pop %v2234
        %v2236 = vmul.f32 %v2201, 1.442695
        %v2237 = vpow.pop %v2236
        %v2238 = vmul.f32 %v2202, 1.442695
        %v2239 = vpow.pop %v2238
        %v2240 = vmul.f32 %v2203, 1.442695
        %v2241 = vpow.pop %v2240
        %v2242 = vmul.f32 %v2204, 1.442695
        %v2243 = vpow.pop %v2242
        %v2244 = vmul.f32 %v2205, 1.442695
        %v2245 = vpow.pop %v2244
        %v2246 = vmul.f32 %v2206, 1.442695
        %v2247 = vpow.pop %v2246
        %v2248 = vmul.f32 %v2207, 1.442695
        %v2249 = vpow.pop %v2248
        %v2250 = vmul.f32 %v2208, 1.442695
        %v2251 = vpow.pop %v2250
        %v2252 = vmul.f32 %v2209, 1.442695
        %v2253 = vpow.pop %v2252
        %v2254 = vmul.f32 %v2210, 1.442695
        %v2255 = vpow.pop %v2254
        %v2256 = vmul.f32 %v2211, 1.442695
        %v2257 = vpow.pop %v2256
        %v2258 = vmul.f32 %v2212, 1.442695
        %v2259 = vpow.pop %v2258
        %v2260 = vmul.f32 %v2213, 1.442695
        %v2261 = vpow.pop %v2260
        %v2262 = vmul.f32 %v2214, 1.442695
        %v2263 = vpow.pop %v2262
        %v2264 = vmul.f32 %v2215, 1.442695
        %v2265 = vpow.pop %v2264
        %v2266 = vmul.f32 %v2216, 1.442695
        %v2267 = vpow.pop %v2266
        %v2268 = vmul.f32 %v2217, 1.442695
        %v2269 = vpow.pop %v2268
        %v2270 = vmul.f32 %v2218, 1.442695
        %v2271 = vpow.pop %v2270
        %v2272 = vmul.f32 %v2219, 1.442695
        %v2273 = vpow.pop %v2272
        %v2274 = vmul.f32 %v2220, 1.442695
        %v2275 = vpow.pop %v2274
        %v2276 = vmul.f32 %v2221, 1.442695
        %v2277 = vpow.pop %v2276
        %v2278 = vmul.f32 %v2222, 1.442695
        %v2279 = vpow.pop %v2278
        %v2280 = vmul.f32 %v2223, 1.442695
        %v2281 = vpow.pop %v2280
        %v2282 = vmul.f32 %v2224, 1.442695
        %v2283 = vpow.pop %v2282
        %v2284 = vmul.f32 %v2225, 1.442695
        %v2285 = vpow.pop %v2284
        %v2286 = vmul.f32 %v2226, 1.442695
        %v2287 = vpow.pop %v2286
        %v2288 = vmul.f32 %v2227, 1.442695
        %v2289 = vpow.pop %v2288
        %v2290 = vmul.f32 %v2228, 1.442695
        %v2291 = vpow.pop %v2290
        %v2292 = vmul.f32 %v2229, 1.442695
        %v2293 = vpow.pop %v2292
        %v2294 = vadd.f32 %v2231, 1.0
        %v2295 = vadd.f32 %v2233, 1.0
        %v2296 = vadd.f32 %v2235, 1.0
        %v2297 = vadd.f32 %v2237, 1.0
        %v2298 = vadd.f32 %v2239, 1.0
        %v2299 = vadd.f32 %v2241, 1.0
        %v2300 = vadd.f32 %v2243, 1.0
        %v2301 = vadd.f32 %v2245, 1.0
        %v2302 = vadd.f32 %v2247, 1.0
        %v2303 = vadd.f32 %v2249, 1.0
        %v2304 = vadd.f32 %v2251, 1.0
        %v2305 = vadd.f32 %v2253, 1.0
        %v2306 = vadd.f32 %v2255, 1.0
        %v2307 = vadd.f32 %v2257, 1.0
        %v2308 = vadd.f32 %v2259, 1.0
        %v2309 = vadd.f32 %v2261, 1.0
        %v2310 = vadd.f32 %v2263, 1.0
        %v2311 = vadd.f32 %v2265, 1.0
        %v2312 = vadd.f32 %v2267, 1.0
        %v2313 = vadd.f32 %v2269, 1.0
        %v2314 = vadd.f32 %v2271, 1.0
        %v2315 = vadd.f32 %v2273, 1.0
        %v2316 = vadd.f32 %v2275, 1.0
        %v2317 = vadd.f32 %v2277, 1.0
        %v2318 = vadd.f32 %v2279, 1.0
        %v2319 = vadd.f32 %v2281, 1.0
        %v2320 = vadd.f32 %v2283, 1.0
        %v2321 = vadd.f32 %v2285, 1.0
        %v2322 = vadd.f32 %v2287, 1.0
        %v2323 = vadd.f32 %v2289, 1.0
        %v2324 = vadd.f32 %v2291, 1.0
        %v2325 = vadd.f32 %v2293, 1.0
        %v2326 = vrcp.pop %v2294
        %v2327 = vmul.f32 1.0, %v2326
        %v2328 = vrcp.pop %v2295
        %v2329 = vmul.f32 1.0, %v2328
        %v2330 = vrcp.pop %v2296
        %v2331 = vmul.f32 1.0, %v2330
        %v2332 = vrcp.pop %v2297
        %v2333 = vmul.f32 1.0, %v2332
        %v2334 = vrcp.pop %v2298
        %v2335 = vmul.f32 1.0, %v2334
        %v2336 = vrcp.pop %v2299
        %v2337 = vmul.f32 1.0, %v2336
        %v2338 = vrcp.pop %v2300
        %v2339 = vmul.f32 1.0, %v2338
        %v2340 = vrcp.pop %v2301
        %v2341 = vmul.f32 1.0, %v2340
        %v2342 = vrcp.pop %v2302
        %v2343 = vmul.f32 1.0, %v2342
        %v2344 = vrcp.pop %v2303
        %v2345 = vmul.f32 1.0, %v2344
        %v2346 = vrcp.pop %v2304
        %v2347 = vmul.f32 1.0, %v2346
        %v2348 = vrcp.pop %v2305
        %v2349 = vmul.f32 1.0, %v2348
        %v2350 = vrcp.pop %v2306
        %v2351 = vmul.f32 1.0, %v2350
        %v2352 = vrcp.pop %v2307
        %v2353 = vmul.f32 1.0, %v2352
        %v2354 = vrcp.pop %v2308
        %v2355 = vmul.f32 1.0, %v2354
        %v2356 = vrcp.pop %v2309
        %v2357 = vmul.f32 1.0, %v2356
        %v2358 = vrcp.pop %v2310
        %v2359 = vmul.f32 1.0, %v2358
        %v2360 = vrcp.pop %v2311
        %v2361 = vmul.f32 1.0, %v2360
        %v2362 = vrcp.pop %v2312
        %v2363 = vmul.f32 1.0, %v2362
        %v2364 = vrcp.pop %v2313
        %v2365 = vmul.f32 1.0, %v2364
        %v2366 = vrcp.pop %v2314
        %v2367 = vmul.f32 1.0, %v2366
        %v2368 = vrcp.pop %v2315
        %v2369 = vmul.f32 1.0, %v2368
        %v2370 = vrcp.pop %v2316
        %v2371 = vmul.f32 1.0, %v2370
        %v2372 = vrcp.pop %v2317
        %v2373 = vmul.f32 1.0, %v2372
        %v2374 = vrcp.pop %v2318
        %v2375 = vmul.f32 1.0, %v2374
        %v2376 = vrcp.pop %v2319
        %v2377 = vmul.f32 1.0, %v2376
        %v2378 = vrcp.pop %v2320
        %v2379 = vmul.f32 1.0, %v2378
        %v2380 = vrcp.pop %v2321
        %v2381 = vmul.f32 1.0, %v2380
        %v2382 = vrcp.pop %v2322
        %v2383 = vmul.f32 1.0, %v2382
        %v2384 = vrcp.pop %v2323
        %v2385 = vmul.f32 1.0, %v2384
        %v2386 = vrcp.pop %v2324
        %v2387 = vmul.f32 1.0, %v2386
        %v2388 = vrcp.pop %v2325
        %v2389 = vmul.f32 1.0, %v2388
        %v2422 = vlaneseq
        %v2423 = vshrl.u32 %v2422, 7
        %v2424 = vsub.s32 0, %v2423
        %v2425 = vrot.slane %v2327, %v2424
        %v2426 = vlaneseq
        %v2427 = vshrl.u32 %v2426, 7
        %v2428 = vsub.s32 1, %v2427
        %v2429 = vrot.slane %v2327, %v2428
        %v2430 = vlaneseq
        %v2431 = vshrl.u32 %v2430, 7
        %v2432 = vsub.s32 2, %v2431
        %v2433 = vrot.slane %v2327, %v2432
        %v2434 = vlaneseq
        %v2435 = vshrl.u32 %v2434, 7
        %v2436 = vsub.s32 3, %v2435
        %v2437 = vrot.slane %v2327, %v2436
        %v2438 = vlaneseq
        %v2439 = vshrl.u32 %v2438, 7
        %v2440 = vsub.s32 4, %v2439
        %v2441 = vrot.slane %v2327, %v2440
        %v2442 = vlaneseq
        %v2443 = vshrl.u32 %v2442, 7
        %v2444 = vsub.s32 5, %v2443
        %v2445 = vrot.slane %v2327, %v2444
        %v2446 = vlaneseq
        %v2447 = vshrl.u32 %v2446, 7
        %v2448 = vsub.s32 6, %v2447
        %v2449 = vrot.slane %v2327, %v2448
        %v2450 = vlaneseq
        %v2451 = vshrl.u32 %v2450, 7
        %v2452 = vsub.s32 7, %v2451
        %v2453 = vrot.slane %v2327, %v2452
        %v2454 = vlaneseq
        %v2455 = vshrl.u32 %v2454, 7
        %v2456 = vsub.s32 0, %v2455
        %v2457 = vrot.slane %v2329, %v2456
        %v2458 = vlaneseq
        %v2459 = vshrl.u32 %v2458, 7
        %v2460 = vsub.s32 1, %v2459
        %v2461 = vrot.slane %v2329, %v2460
        %v2462 = vlaneseq
        %v2463 = vshrl.u32 %v2462, 7
        %v2464 = vsub.s32 2, %v2463
        %v2465 = vrot.slane %v2329, %v2464
        %v2466 = vlaneseq
        %v2467 = vshrl.u32 %v2466, 7
        %v2468 = vsub.s32 3, %v2467
        %v2469 = vrot.slane %v2329, %v2468
        %v2470 = vlaneseq
        %v2471 = vshrl.u32 %v2470, 7
        %v2472 = vsub.s32 4, %v2471
        %v2473 = vrot.slane %v2329, %v2472
        %v2474 = vlaneseq
        %v2475 = vshrl.u32 %v2474, 7
        %v2476 = vsub.s32 5, %v2475
        %v2477 = vrot.slane %v2329, %v2476
        %v2478 = vlaneseq
        %v2479 = vshrl.u32 %v2478, 7
        %v2480 = vsub.s32 6, %v2479
        %v2481 = vrot.slane %v2329, %v2480
        %v2482 = vlaneseq
        %v2483 = vshrl.u32 %v2482, 7
        %v2484 = vsub.s32 7, %v2483
        %v2485 = vrot.slane %v2329, %v2484
        %v2486 = vlaneseq
        %v2487 = vshrl.u32 %v2486, 7
        %v2488 = vsub.s32 0, %v2487
        %v2489 = vrot.slane %v2331, %v2488
        %v2490 = vlaneseq
        %v2491 = vshrl.u32 %v2490, 7
        %v2492 = vsub.s32 1, %v2491
        %v2493 = vrot.slane %v2331, %v2492
        %v2494 = vlaneseq
        %v2495 = vshrl.u32 %v2494, 7
        %v2496 = vsub.s32 2, %v2495
        %v2497 = vrot.slane %v2331, %v2496
        %v2498 = vlaneseq
        %v2499 = vshrl.u32 %v2498, 7
        %v2500 = vsub.s32 3, %v2499
        %v2501 = vrot.slane %v2331, %v2500
        %v2502 = vlaneseq
        %v2503 = vshrl.u32 %v2502, 7
        %v2504 = vsub.s32 4, %v2503
        %v2505 = vrot.slane %v2331, %v2504
        %v2506 = vlaneseq
        %v2507 = vshrl.u32 %v2506, 7
        %v2508 = vsub.s32 5, %v2507
        %v2509 = vrot.slane %v2331, %v2508
        %v2510 = vlaneseq
        %v2511 = vshrl.u32 %v2510, 7
        %v2512 = vsub.s32 6, %v2511
        %v2513 = vrot.slane %v2331, %v2512
        %v2514 = vlaneseq
        %v2515 = vshrl.u32 %v2514, 7
        %v2516 = vsub.s32 7, %v2515
        %v2517 = vrot.slane %v2331, %v2516
        %v2518 = vlaneseq
        %v2519 = vshrl.u32 %v2518, 7
        %v2520 = vsub.s32 0, %v2519
        %v2521 = vrot.slane %v2333, %v2520
        %v2522 = vlaneseq
        %v2523 = vshrl.u32 %v2522, 7
        %v2524 = vsub.s32 1, %v2523
        %v2525 = vrot.slane %v2333, %v2524
        %v2526 = vlaneseq
        %v2527 = vshrl.u32 %v2526, 7
        %v2528 = vsub.s32 2, %v2527
        %v2529 = vrot.slane %v2333, %v2528
        %v2530 = vlaneseq
        %v2531 = vshrl.u32 %v2530, 7
        %v2532 = vsub.s32 3, %v2531
        %v2533 = vrot.slane %v2333, %v2532
        %v2534 = vlaneseq
        %v2535 = vshrl.u32 %v2534, 7
        %v2536 = vsub.s32 4, %v2535
        %v2537 = vrot.slane %v2333, %v2536
        %v2538 = vlaneseq
        %v2539 = vshrl.u32 %v2538, 7
        %v2540 = vsub.s32 5, %v2539
        %v2541 = vrot.slane %v2333, %v2540
        %v2542 = vlaneseq
        %v2543 = vshrl.u32 %v2542, 7
        %v2544 = vsub.s32 6, %v2543
        %v2545 = vrot.slane %v2333, %v2544
        %v2546 = vlaneseq
        %v2547 = vshrl.u32 %v2546, 7
        %v2548 = vsub.s32 7, %v2547
        %v2549 = vrot.slane %v2333, %v2548
        %v2550 = vlaneseq
        %v2551 = vshrl.u32 %v2550, 7
        %v2552 = vsub.s32 0, %v2551
        %v2553 = vrot.slane %v2335, %v2552
        %v2554 = vlaneseq
        %v2555 = vshrl.u32 %v2554, 7
        %v2556 = vsub.s32 1, %v2555
        %v2557 = vrot.slane %v2335, %v2556
        %v2558 = vlaneseq
        %v2559 = vshrl.u32 %v2558, 7
        %v2560 = vsub.s32 2, %v2559
        %v2561 = vrot.slane %v2335, %v2560
        %v2562 = vlaneseq
        %v2563 = vshrl.u32 %v2562, 7
        %v2564 = vsub.s32 3, %v2563
        %v2565 = vrot.slane %v2335, %v2564
        %v2566 = vlaneseq
        %v2567 = vshrl.u32 %v2566, 7
        %v2568 = vsub.s32 4, %v2567
        %v2569 = vrot.slane %v2335, %v2568
        %v2570 = vlaneseq
        %v2571 = vshrl.u32 %v2570, 7
        %v2572 = vsub.s32 5, %v2571
        %v2573 = vrot.slane %v2335, %v2572
        %v2574 = vlaneseq
        %v2575 = vshrl.u32 %v2574, 7
        %v2576 = vsub.s32 6, %v2575
        %v2577 = vrot.slane %v2335, %v2576
        %v2578 = vlaneseq
        %v2579 = vshrl.u32 %v2578, 7
        %v2580 = vsub.s32 7, %v2579
        %v2581 = vrot.slane %v2335, %v2580
        %v2582 = vlaneseq
        %v2583 = vshrl.u32 %v2582, 7
        %v2584 = vsub.s32 0, %v2583
        %v2585 = vrot.slane %v2337, %v2584
        %v2586 = vlaneseq
        %v2587 = vshrl.u32 %v2586, 7
        %v2588 = vsub.s32 1, %v2587
        %v2589 = vrot.slane %v2337, %v2588
        %v2590 = vlaneseq
        %v2591 = vshrl.u32 %v2590, 7
        %v2592 = vsub.s32 2, %v2591
        %v2593 = vrot.slane %v2337, %v2592
        %v2594 = vlaneseq
        %v2595 = vshrl.u32 %v2594, 7
        %v2596 = vsub.s32 3, %v2595
        %v2597 = vrot.slane %v2337, %v2596
        %v2598 = vlaneseq
        %v2599 = vshrl.u32 %v2598, 7
        %v2600 = vsub.s32 4, %v2599
        %v2601 = vrot.slane %v2337, %v2600
        %v2602 = vlaneseq
        %v2603 = vshrl.u32 %v2602, 7
        %v2604 = vsub.s32 5, %v2603
        %v2605 = vrot.slane %v2337, %v2604
        %v2606 = vlaneseq
        %v2607 = vshrl.u32 %v2606, 7
        %v2608 = vsub.s32 6, %v2607
        %v2609 = vrot.slane %v2337, %v2608
        %v2610 = vlaneseq
        %v2611 = vshrl.u32 %v2610, 7
        %v2612 = vsub.s32 7, %v2611
        %v2613 = vrot.slane %v2337, %v2612
        %v2614 = vlaneseq
        %v2615 = vshrl.u32 %v2614, 7
        %v2616 = vsub.s32 0, %v2615
        %v2617 = vrot.slane %v2339, %v2616
        %v2618 = vlaneseq
        %v2619 = vshrl.u32 %v2618, 7
        %v2620 = vsub.s32 1, %v2619
        %v2621 = vrot.slane %v2339, %v2620
        %v2622 = vlaneseq
        %v2623 = vshrl.u32 %v2622, 7
        %v2624 = vsub.s32 2, %v2623
        %v2625 = vrot.slane %v2339, %v2624
        %v2626 = vlaneseq
        %v2627 = vshrl.u32 %v2626, 7
        %v2628 = vsub.s32 3, %v2627
        %v2629 = vrot.slane %v2339, %v2628
        %v2630 = vlaneseq
        %v2631 = vshrl.u32 %v2630, 7
        %v2632 = vsub.s32 4, %v2631
        %v2633 = vrot.slane %v2339, %v2632
        %v2634 = vlaneseq
        %v2635 = vshrl.u32 %v2634, 7
        %v2636 = vsub.s32 5, %v2635
        %v2637 = vrot.slane %v2339, %v2636
        %v2638 = vlaneseq
        %v2639 = vshrl.u32 %v2638, 7
        %v2640 = vsub.s32 6, %v2639
        %v2641 = vrot.slane %v2339, %v2640
        %v2642 = vlaneseq
        %v2643 = vshrl.u32 %v2642, 7
        %v2644 = vsub.s32 7, %v2643
        %v2645 = vrot.slane %v2339, %v2644
        %v2646 = vlaneseq
        %v2647 = vshrl.u32 %v2646, 7
        %v2648 = vsub.s32 0, %v2647
        %v2649 = vrot.slane %v2341, %v2648
        %v2650 = vlaneseq
        %v2651 = vshrl.u32 %v2650, 7
        %v2652 = vsub.s32 1, %v2651
        %v2653 = vrot.slane %v2341, %v2652
        %v2654 = vlaneseq
        %v2655 = vshrl.u32 %v2654, 7
        %v2656 = vsub.s32 2, %v2655
        %v2657 = vrot.slane %v2341, %v2656
        %v2658 = vlaneseq
        %v2659 = vshrl.u32 %v2658, 7
        %v2660 = vsub.s32 3, %v2659
        %v2661 = vrot.slane %v2341, %v2660
        %v2662 = vlaneseq
        %v2663 = vshrl.u32 %v2662, 7
        %v2664 = vsub.s32 4, %v2663
        %v2665 = vrot.slane %v2341, %v2664
        %v2666 = vlaneseq
        %v2667 = vshrl.u32 %v2666, 7
        %v2668 = vsub.s32 5, %v2667
        %v2669 = vrot.slane %v2341, %v2668
        %v2670 = vlaneseq
        %v2671 = vshrl.u32 %v2670, 7
        %v2672 = vsub.s32 6, %v2671
        %v2673 = vrot.slane %v2341, %v2672
        %v2674 = vlaneseq
        %v2675 = vshrl.u32 %v2674, 7
        %v2676 = vsub.s32 7, %v2675
        %v2677 = vrot.slane %v2341, %v2676
        %v2678 = vlaneseq
        %v2679 = vshrl.u32 %v2678, 7
        %v2680 = vsub.s32 0, %v2679
        %v2681 = vrot.slane %v2343, %v2680
        %v2682 = vlaneseq
        %v2683 = vshrl.u32 %v2682, 7
        %v2684 = vsub.s32 1, %v2683
        %v2685 = vrot.slane %v2343, %v2684
        %v2686 = vlaneseq
        %v2687 = vshrl.u32 %v2686, 7
        %v2688 = vsub.s32 2, %v2687
        %v2689 = vrot.slane %v2343, %v2688
        %v2690 = vlaneseq
        %v2691 = vshrl.u32 %v2690, 7
        %v2692 = vsub.s32 3, %v2691
        %v2693 = vrot.slane %v2343, %v2692
        %v2694 = vlaneseq
        %v2695 = vshrl.u32 %v2694, 7
        %v2696 = vsub.s32 4, %v2695
        %v2697 = vrot.slane %v2343, %v2696
        %v2698 = vlaneseq
        %v2699 = vshrl.u32 %v2698, 7
        %v2700 = vsub.s32 5, %v2699
        %v2701 = vrot.slane %v2343, %v2700
        %v2702 = vlaneseq
        %v2703 = vshrl.u32 %v2702, 7
        %v2704 = vsub.s32 6, %v2703
        %v2705 = vrot.slane %v2343, %v2704
        %v2706 = vlaneseq
        %v2707 = vshrl.u32 %v2706, 7
        %v2708 = vsub.s32 7, %v2707
        %v2709 = vrot.slane %v2343, %v2708
        %v2710 = vlaneseq
        %v2711 = vshrl.u32 %v2710, 7
        %v2712 = vsub.s32 0, %v2711
        %v2713 = vrot.slane %v2345, %v2712
        %v2714 = vlaneseq
        %v2715 = vshrl.u32 %v2714, 7
        %v2716 = vsub.s32 1, %v2715
        %v2717 = vrot.slane %v2345, %v2716
        %v2718 = vlaneseq
        %v2719 = vshrl.u32 %v2718, 7
        %v2720 = vsub.s32 2, %v2719
        %v2721 = vrot.slane %v2345, %v2720
        %v2722 = vlaneseq
        %v2723 = vshrl.u32 %v2722, 7
        %v2724 = vsub.s32 3, %v2723
        %v2725 = vrot.slane %v2345, %v2724
        %v2726 = vlaneseq
        %v2727 = vshrl.u32 %v2726, 7
        %v2728 = vsub.s32 4, %v2727
        %v2729 = vrot.slane %v2345, %v2728
        %v2730 = vlaneseq
        %v2731 = vshrl.u32 %v2730, 7
        %v2732 = vsub.s32 5, %v2731
        %v2733 = vrot.slane %v2345, %v2732
        %v2734 = vlaneseq
        %v2735 = vshrl.u32 %v2734, 7
        %v2736 = vsub.s32 6, %v2735
        %v2737 = vrot.slane %v2345, %v2736
        %v2738 = vlaneseq
        %v2739 = vshrl.u32 %v2738, 7
        %v2740 = vsub.s32 7, %v2739
        %v2741 = vrot.slane %v2345, %v2740
        %v2742 = vlaneseq
        %v2743 = vshrl.u32 %v2742, 7
        %v2744 = vsub.s32 0, %v2743
        %v2745 = vrot.slane %v2347, %v2744
        %v2746 = vlaneseq
        %v2747 = vshrl.u32 %v2746, 7
        %v2748 = vsub.s32 1, %v2747
        %v2749 = vrot.slane %v2347, %v2748
        %v2750 = vlaneseq
        %v2751 = vshrl.u32 %v2750, 7
        %v2752 = vsub.s32 2, %v2751
        %v2753 = vrot.slane %v2347, %v2752
        %v2754 = vlaneseq
        %v2755 = vshrl.u32 %v2754, 7
        %v2756 = vsub.s32 3, %v2755
        %v2757 = vrot.slane %v2347, %v2756
        %v2758 = vlaneseq
        %v2759 = vshrl.u32 %v2758, 7
        %v2760 = vsub.s32 4, %v2759
        %v2761 = vrot.slane %v2347, %v2760
        %v2762 = vlaneseq
        %v2763 = vshrl.u32 %v2762, 7
        %v2764 = vsub.s32 5, %v2763
        %v2765 = vrot.slane %v2347, %v2764
        %v2766 = vlaneseq
        %v2767 = vshrl.u32 %v2766, 7
        %v2768 = vsub.s32 6, %v2767
        %v2769 = vrot.slane %v2347, %v2768
        %v2770 = vlaneseq
        %v2771 = vshrl.u32 %v2770, 7
        %v2772 = vsub.s32 7, %v2771
        %v2773 = vrot.slane %v2347, %v2772
        %v2774 = vlaneseq
        %v2775 = vshrl.u32 %v2774, 7
        %v2776 = vsub.s32 0, %v2775
        %v2777 = vrot.slane %v2349, %v2776
        %v2778 = vlaneseq
        %v2779 = vshrl.u32 %v2778, 7
        %v2780 = vsub.s32 1, %v2779
        %v2781 = vrot.slane %v2349, %v2780
        %v2782 = vlaneseq
        %v2783 = vshrl.u32 %v2782, 7
        %v2784 = vsub.s32 2, %v2783
        %v2785 = vrot.slane %v2349, %v2784
        %v2786 = vlaneseq
        %v2787 = vshrl.u32 %v2786, 7
        %v2788 = vsub.s32 3, %v2787
        %v2789 = vrot.slane %v2349, %v2788
        %v2790 = vlaneseq
        %v2791 = vshrl.u32 %v2790, 7
        %v2792 = vsub.s32 4, %v2791
        %v2793 = vrot.slane %v2349, %v2792
        %v2794 = vlaneseq
        %v2795 = vshrl.u32 %v2794, 7
        %v2796 = vsub.s32 5, %v2795
        %v2797 = vrot.slane %v2349, %v2796
        %v2798 = vlaneseq
        %v2799 = vshrl.u32 %v2798, 7
        %v2800 = vsub.s32 6, %v2799
        %v2801 = vrot.slane %v2349, %v2800
        %v2802 = vlaneseq
        %v2803 = vshrl.u32 %v2802, 7
        %v2804 = vsub.s32 7, %v2803
        %v2805 = vrot.slane %v2349, %v2804
        %v2806 = vlaneseq
        %v2807 = vshrl.u32 %v2806, 7
        %v2808 = vsub.s32 0, %v2807
        %v2809 = vrot.slane %v2351, %v2808
        %v2810 = vlaneseq
        %v2811 = vshrl.u32 %v2810, 7
        %v2812 = vsub.s32 1, %v2811
        %v2813 = vrot.slane %v2351, %v2812
        %v2814 = vlaneseq
        %v2815 = vshrl.u32 %v2814, 7
        %v2816 = vsub.s32 2, %v2815
        %v2817 = vrot.slane %v2351, %v2816
        %v2818 = vlaneseq
        %v2819 = vshrl.u32 %v2818, 7
        %v2820 = vsub.s32 3, %v2819
        %v2821 = vrot.slane %v2351, %v2820
        %v2822 = vlaneseq
        %v2823 = vshrl.u32 %v2822, 7
        %v2824 = vsub.s32 4, %v2823
        %v2825 = vrot.slane %v2351, %v2824
        %v2826 = vlaneseq
        %v2827 = vshrl.u32 %v2826, 7
        %v2828 = vsub.s32 5, %v2827
        %v2829 = vrot.slane %v2351, %v2828
        %v2830 = vlaneseq
        %v2831 = vshrl.u32 %v2830, 7
        %v2832 = vsub.s32 6, %v2831
        %v2833 = vrot.slane %v2351, %v2832
        %v2834 = vlaneseq
        %v2835 = vshrl.u32 %v2834, 7
        %v2836 = vsub.s32 7, %v2835
        %v2837 = vrot.slane %v2351, %v2836
        %v2838 = vlaneseq
        %v2839 = vshrl.u32 %v2838, 7
        %v2840 = vsub.s32 0, %v2839
        %v2841 = vrot.slane %v2353, %v2840
        %v2842 = vlaneseq
        %v2843 = vshrl.u32 %v2842, 7
        %v2844 = vsub.s32 1, %v2843
        %v2845 = vrot.slane %v2353, %v2844
        %v2846 = vlaneseq
        %v2847 = vshrl.u32 %v2846, 7
        %v2848 = vsub.s32 2, %v2847
        %v2849 = vrot.slane %v2353, %v2848
        %v2850 = vlaneseq
        %v2851 = vshrl.u32 %v2850, 7
        %v2852 = vsub.s32 3, %v2851
        %v2853 = vrot.slane %v2353, %v2852
        %v2854 = vlaneseq
        %v2855 = vshrl.u32 %v2854, 7
        %v2856 = vsub.s32 4, %v2855
        %v2857 = vrot.slane %v2353, %v2856
        %v2858 = vlaneseq
        %v2859 = vshrl.u32 %v2858, 7
        %v2860 = vsub.s32 5, %v2859
        %v2861 = vrot.slane %v2353, %v2860
        %v2862 = vlaneseq
        %v2863 = vshrl.u32 %v2862, 7
        %v2864 = vsub.s32 6, %v2863
        %v2865 = vrot.slane %v2353, %v2864
        %v2866 = vlaneseq
        %v2867 = vshrl.u32 %v2866, 7
        %v2868 = vsub.s32 7, %v2867
        %v2869 = vrot.slane %v2353, %v2868
        %v2870 = vlaneseq
        %v2871 = vshrl.u32 %v2870, 7
        %v2872 = vsub.s32 0, %v2871
        %v2873 = vrot.slane %v2355, %v2872
        %v2874 = vlaneseq
        %v2875 = vshrl.u32 %v2874, 7
        %v2876 = vsub.s32 1, %v2875
        %v2877 = vrot.slane %v2355, %v2876
        %v2878 = vlaneseq
        %v2879 = vshrl.u32 %v2878, 7
        %v2880 = vsub.s32 2, %v2879
        %v2881 = vrot.slane %v2355, %v2880
        %v2882 = vlaneseq
        %v2883 = vshrl.u32 %v2882, 7
        %v2884 = vsub.s32 3, %v2883
        %v2885 = vrot.slane %v2355, %v2884
        %v2886 = vlaneseq
        %v2887 = vshrl.u32 %v2886, 7
        %v2888 = vsub.s32 4, %v2887
        %v2889 = vrot.slane %v2355, %v2888
        %v2890 = vlaneseq
        %v2891 = vshrl.u32 %v2890, 7
        %v2892 = vsub.s32 5, %v2891
        %v2893 = vrot.slane %v2355, %v2892
        %v2894 = vlaneseq
        %v2895 = vshrl.u32 %v2894, 7
        %v2896 = vsub.s32 6, %v2895
        %v2897 = vrot.slane %v2355, %v2896
        %v2898 = vlaneseq
        %v2899 = vshrl.u32 %v2898, 7
        %v2900 = vsub.s32 7, %v2899
        %v2901 = vrot.slane %v2355, %v2900
        %v2902 = vlaneseq
        %v2903 = vshrl.u32 %v2902, 7
        %v2904 = vsub.s32 0, %v2903
        %v2905 = vrot.slane %v2357, %v2904
        %v2906 = vlaneseq
        %v2907 = vshrl.u32 %v2906, 7
        %v2908 = vsub.s32 1, %v2907
        %v2909 = vrot.slane %v2357, %v2908
        %v2910 = vlaneseq
        %v2911 = vshrl.u32 %v2910, 7
        %v2912 = vsub.s32 2, %v2911
        %v2913 = vrot.slane %v2357, %v2912
        %v2914 = vlaneseq
        %v2915 = vshrl.u32 %v2914, 7
        %v2916 = vsub.s32 3, %v2915
        %v2917 = vrot.slane %v2357, %v2916
        %v2918 = vlaneseq
        %v2919 = vshrl.u32 %v2918, 7
        %v2920 = vsub.s32 4, %v2919
        %v2921 = vrot.slane %v2357, %v2920
        %v2922 = vlaneseq
        %v2923 = vshrl.u32 %v2922, 7
        %v2924 = vsub.s32 5, %v2923
        %v2925 = vrot.slane %v2357, %v2924
        %v2926 = vlaneseq
        %v2927 = vshrl.u32 %v2926, 7
        %v2928 = vsub.s32 6, %v2927
        %v2929 = vrot.slane %v2357, %v2928
        %v2930 = vlaneseq
        %v2931 = vshrl.u32 %v2930, 7
        %v2932 = vsub.s32 7, %v2931
        %v2933 = vrot.slane %v2357, %v2932
        %v2934 = vlaneseq
        %v2935 = vshrl.u32 %v2934, 7
        %v2936 = vsub.s32 0, %v2935
        %v2937 = vrot.slane %v2359, %v2936
        %v2938 = vlaneseq
        %v2939 = vshrl.u32 %v2938, 7
        %v2940 = vsub.s32 1, %v2939
        %v2941 = vrot.slane %v2359, %v2940
        %v2942 = vlaneseq
        %v2943 = vshrl.u32 %v2942, 7
        %v2944 = vsub.s32 2, %v2943
        %v2945 = vrot.slane %v2359, %v2944
        %v2946 = vlaneseq
        %v2947 = vshrl.u32 %v2946, 7
        %v2948 = vsub.s32 3, %v2947
        %v2949 = vrot.slane %v2359, %v2948
        %v2950 = vlaneseq
        %v2951 = vshrl.u32 %v2950, 7
        %v2952 = vsub.s32 4, %v2951
        %v2953 = vrot.slane %v2359, %v2952
        %v2954 = vlaneseq
        %v2955 = vshrl.u32 %v2954, 7
        %v2956 = vsub.s32 5, %v2955
        %v2957 = vrot.slane %v2359, %v2956
        %v2958 = vlaneseq
        %v2959 = vshrl.u32 %v2958, 7
        %v2960 = vsub.s32 6, %v2959
        %v2961 = vrot.slane %v2359, %v2960
        %v2962 = vlaneseq
        %v2963 = vshrl.u32 %v2962, 7
        %v2964 = vsub.s32 7, %v2963
        %v2965 = vrot.slane %v2359, %v2964
        %v2966 = vlaneseq
        %v2967 = vshrl.u32 %v2966, 7
        %v2968 = vsub.s32 0, %v2967
        %v2969 = vrot.slane %v2361, %v2968
        %v2970 = vlaneseq
        %v2971 = vshrl.u32 %v2970, 7
        %v2972 = vsub.s32 1, %v2971
        %v2973 = vrot.slane %v2361, %v2972
        %v2974 = vlaneseq
        %v2975 = vshrl.u32 %v2974, 7
        %v2976 = vsub.s32 2, %v2975
        %v2977 = vrot.slane %v2361, %v2976
        %v2978 = vlaneseq
        %v2979 = vshrl.u32 %v2978, 7
        %v2980 = vsub.s32 3, %v2979
        %v2981 = vrot.slane %v2361, %v2980
        %v2982 = vlaneseq
        %v2983 = vshrl.u32 %v2982, 7
        %v2984 = vsub.s32 4, %v2983
        %v2985 = vrot.slane %v2361, %v2984
        %v2986 = vlaneseq
        %v2987 = vshrl.u32 %v2986, 7
        %v2988 = vsub.s32 5, %v2987
        %v2989 = vrot.slane %v2361, %v2988
        %v2990 = vlaneseq
        %v2991 = vshrl.u32 %v2990, 7
        %v2992 = vsub.s32 6, %v2991
        %v2993 = vrot.slane %v2361, %v2992
        %v2994 = vlaneseq
        %v2995 = vshrl.u32 %v2994, 7
        %v2996 = vsub.s32 7, %v2995
        %v2997 = vrot.slane %v2361, %v2996
        %v2998 = vlaneseq
        %v2999 = vshrl.u32 %v2998, 7
        %v3000 = vsub.s32 0, %v2999
        %v3001 = vrot.slane %v2363, %v3000
        %v3002 = vlaneseq
        %v3003 = vshrl.u32 %v3002, 7
        %v3004 = vsub.s32 1, %v3003
        %v3005 = vrot.slane %v2363, %v3004
        %v3006 = vlaneseq
        %v3007 = vshrl.u32 %v3006, 7
        %v3008 = vsub.s32 2, %v3007
        %v3009 = vrot.slane %v2363, %v3008
        %v3010 = vlaneseq
        %v3011 = vshrl.u32 %v3010, 7
        %v3012 = vsub.s32 3, %v3011
        %v3013 = vrot.slane %v2363, %v3012
        %v3014 = vlaneseq
        %v3015 = vshrl.u32 %v3014, 7
        %v3016 = vsub.s32 4, %v3015
        %v3017 = vrot.slane %v2363, %v3016
        %v3018 = vlaneseq
        %v3019 = vshrl.u32 %v3018, 7
        %v3020 = vsub.s32 5, %v3019
        %v3021 = vrot.slane %v2363, %v3020
        %v3022 = vlaneseq
        %v3023 = vshrl.u32 %v3022, 7
        %v3024 = vsub.s32 6, %v3023
        %v3025 = vrot.slane %v2363, %v3024
        %v3026 = vlaneseq
        %v3027 = vshrl.u32 %v3026, 7
        %v3028 = vsub.s32 7, %v3027
        %v3029 = vrot.slane %v2363, %v3028
        %v3030 = vlaneseq
        %v3031 = vshrl.u32 %v3030, 7
        %v3032 = vsub.s32 0, %v3031
        %v3033 = vrot.slane %v2365, %v3032
        %v3034 = vlaneseq
        %v3035 = vshrl.u32 %v3034, 7
        %v3036 = vsub.s32 1, %v3035
        %v3037 = vrot.slane %v2365, %v3036
        %v3038 = vlaneseq
        %v3039 = vshrl.u32 %v3038, 7
        %v3040 = vsub.s32 2, %v3039
        %v3041 = vrot.slane %v2365, %v3040
        %v3042 = vlaneseq
        %v3043 = vshrl.u32 %v3042, 7
        %v3044 = vsub.s32 3, %v3043
        %v3045 = vrot.slane %v2365, %v3044
        %v3046 = vlaneseq
        %v3047 = vshrl.u32 %v3046, 7
        %v3048 = vsub.s32 4, %v3047
        %v3049 = vrot.slane %v2365, %v3048
        %v3050 = vlaneseq
        %v3051 = vshrl.u32 %v3050, 7
        %v3052 = vsub.s32 5, %v3051
        %v3053 = vrot.slane %v2365, %v3052
        %v3054 = vlaneseq
        %v3055 = vshrl.u32 %v3054, 7
        %v3056 = vsub.s32 6, %v3055
        %v3057 = vrot.slane %v2365, %v3056
        %v3058 = vlaneseq
        %v3059 = vshrl.u32 %v3058, 7
        %v3060 = vsub.s32 7, %v3059
        %v3061 = vrot.slane %v2365, %v3060
        %v3062 = vlaneseq
        %v3063 = vshrl.u32 %v3062, 7
        %v3064 = vsub.s32 0, %v3063
        %v3065 = vrot.slane %v2367, %v3064
        %v3066 = vlaneseq
        %v3067 = vshrl.u32 %v3066, 7
        %v3068 = vsub.s32 1, %v3067
        %v3069 = vrot.slane %v2367, %v3068
        %v3070 = vlaneseq
        %v3071 = vshrl.u32 %v3070, 7
        %v3072 = vsub.s32 2, %v3071
        %v3073 = vrot.slane %v2367, %v3072
        %v3074 = vlaneseq
        %v3075 = vshrl.u32 %v3074, 7
        %v3076 = vsub.s32 3, %v3075
        %v3077 = vrot.slane %v2367, %v3076
        %v3078 = vlaneseq
        %v3079 = vshrl.u32 %v3078, 7
        %v3080 = vsub.s32 4, %v3079
        %v3081 = vrot.slane %v2367, %v3080
        %v3082 = vlaneseq
        %v3083 = vshrl.u32 %v3082, 7
        %v3084 = vsub.s32 5, %v3083
        %v3085 = vrot.slane %v2367, %v3084
        %v3086 = vlaneseq
        %v3087 = vshrl.u32 %v3086, 7
        %v3088 = vsub.s32 6, %v3087
        %v3089 = vrot.slane %v2367, %v3088
        %v3090 = vlaneseq
        %v3091 = vshrl.u32 %v3090, 7
        %v3092 = vsub.s32 7, %v3091
        %v3093 = vrot.slane %v2367, %v3092
        %v3094 = vlaneseq
        %v3095 = vshrl.u32 %v3094, 7
        %v3096 = vsub.s32 0, %v3095
        %v3097 = vrot.slane %v2369, %v3096
        %v3098 = vlaneseq
        %v3099 = vshrl.u32 %v3098, 7
        %v3100 = vsub.s32 1, %v3099
        %v3101 = vrot.slane %v2369, %v3100
        %v3102 = vlaneseq
        %v3103 = vshrl.u32 %v3102, 7
        %v3104 = vsub.s32 2, %v3103
        %v3105 = vrot.slane %v2369, %v3104
        %v3106 = vlaneseq
        %v3107 = vshrl.u32 %v3106, 7
        %v3108 = vsub.s32 3, %v3107
        %v3109 = vrot.slane %v2369, %v3108
        %v3110 = vlaneseq
        %v3111 = vshrl.u32 %v3110, 7
        %v3112 = vsub.s32 4, %v3111
        %v3113 = vrot.slane %v2369, %v3112
        %v3114 = vlaneseq
        %v3115 = vshrl.u32 %v3114, 7
        %v3116 = vsub.s32 5, %v3115
        %v3117 = vrot.slane %v2369, %v3116
        %v3118 = vlaneseq
        %v3119 = vshrl.u32 %v3118, 7
        %v3120 = vsub.s32 6, %v3119
        %v3121 = vrot.slane %v2369, %v3120
        %v3122 = vlaneseq
        %v3123 = vshrl.u32 %v3122, 7
        %v3124 = vsub.s32 7, %v3123
        %v3125 = vrot.slane %v2369, %v3124
        %v3126 = vlaneseq
        %v3127 = vshrl.u32 %v3126, 7
        %v3128 = vsub.s32 0, %v3127
        %v3129 = vrot.slane %v2371, %v3128
        %v3130 = vlaneseq
        %v3131 = vshrl.u32 %v3130, 7
        %v3132 = vsub.s32 1, %v3131
        %v3133 = vrot.slane %v2371, %v3132
        %v3134 = vlaneseq
        %v3135 = vshrl.u32 %v3134, 7
        %v3136 = vsub.s32 2, %v3135
        %v3137 = vrot.slane %v2371, %v3136
        %v3138 = vlaneseq
        %v3139 = vshrl.u32 %v3138, 7
        %v3140 = vsub.s32 3, %v3139
        %v3141 = vrot.slane %v2371, %v3140
        %v3142 = vlaneseq
        %v3143 = vshrl.u32 %v3142, 7
        %v3144 = vsub.s32 4, %v3143
        %v3145 = vrot.slane %v2371, %v3144
        %v3146 = vlaneseq
        %v3147 = vshrl.u32 %v3146, 7
        %v3148 = vsub.s32 5, %v3147
        %v3149 = vrot.slane %v2371, %v3148
        %v3150 = vlaneseq
        %v3151 = vshrl.u32 %v3150, 7
        %v3152 = vsub.s32 6, %v3151
        %v3153 = vrot.slane %v2371, %v3152
        %v3154 = vlaneseq
        %v3155 = vshrl.u32 %v3154, 7
        %v3156 = vsub.s32 7, %v3155
        %v3157 = vrot.slane %v2371, %v3156
        %v3158 = vlaneseq
        %v3159 = vshrl.u32 %v3158, 7
        %v3160 = vsub.s32 0, %v3159
        %v3161 = vrot.slane %v2373, %v3160
        %v3162 = vlaneseq
        %v3163 = vshrl.u32 %v3162, 7
        %v3164 = vsub.s32 1, %v3163
        %v3165 = vrot.slane %v2373, %v3164
        %v3166 = vlaneseq
        %v3167 = vshrl.u32 %v3166, 7
        %v3168 = vsub.s32 2, %v3167
        %v3169 = vrot.slane %v2373, %v3168
        %v3170 = vlaneseq
        %v3171 = vshrl.u32 %v3170, 7
        %v3172 = vsub.s32 3, %v3171
        %v3173 = vrot.slane %v2373, %v3172
        %v3174 = vlaneseq
        %v3175 = vshrl.u32 %v3174, 7
        %v3176 = vsub.s32 4, %v3175
        %v3177 = vrot.slane %v2373, %v3176
        %v3178 = vlaneseq
        %v3179 = vshrl.u32 %v3178, 7
        %v3180 = vsub.s32 5, %v3179
        %v3181 = vrot.slane %v2373, %v3180
        %v3182 = vlaneseq
        %v3183 = vshrl.u32 %v3182, 7
        %v3184 = vsub.s32 6, %v3183
        %v3185 = vrot.slane %v2373, %v3184
        %v3186 = vlaneseq
        %v3187 = vshrl.u32 %v3186, 7
        %v3188 = vsub.s32 7, %v3187
        %v3189 = vrot.slane %v2373, %v3188
        %v3190 = vlaneseq
        %v3191 = vshrl.u32 %v3190, 7
        %v3192 = vsub.s32 0, %v3191
        %v3193 = vrot.slane %v2375, %v3192
        %v3194 = vlaneseq
        %v3195 = vshrl.u32 %v3194, 7
        %v3196 = vsub.s32 1, %v3195
        %v3197 = vrot.slane %v2375, %v3196
        %v3198 = vlaneseq
        %v3199 = vshrl.u32 %v3198, 7
        %v3200 = vsub.s32 2, %v3199
        %v3201 = vrot.slane %v2375, %v3200
        %v3202 = vlaneseq
        %v3203 = vshrl.u32 %v3202, 7
        %v3204 = vsub.s32 3, %v3203
        %v3205 = vrot.slane %v2375, %v3204
        %v3206 = vlaneseq
        %v3207 = vshrl.u32 %v3206, 7
        %v3208 = vsub.s32 4, %v3207
        %v3209 = vrot.slane %v2375, %v3208
        %v3210 = vlaneseq
        %v3211 = vshrl.u32 %v3210, 7
        %v3212 = vsub.s32 5, %v3211
        %v3213 = vrot.slane %v2375, %v3212
        %v3214 = vlaneseq
        %v3215 = vshrl.u32 %v3214, 7
        %v3216 = vsub.s32 6, %v3215
        %v3217 = vrot.slane %v2375, %v3216
        %v3218 = vlaneseq
        %v3219 = vshrl.u32 %v3218, 7
        %v3220 = vsub.s32 7, %v3219
        %v3221 = vrot.slane %v2375, %v3220
        %v3222 = vlaneseq
        %v3223 = vshrl.u32 %v3222, 7
        %v3224 = vsub.s32 0, %v3223
        %v3225 = vrot.slane %v2377, %v3224
        %v3226 = vlaneseq
        %v3227 = vshrl.u32 %v3226, 7
        %v3228 = vsub.s32 1, %v3227
        %v3229 = vrot.slane %v2377, %v3228
        %v3230 = vlaneseq
        %v3231 = vshrl.u32 %v3230, 7
        %v3232 = vsub.s32 2, %v3231
        %v3233 = vrot.slane %v2377, %v3232
        %v3234 = vlaneseq
        %v3235 = vshrl.u32 %v3234, 7
        %v3236 = vsub.s32 3, %v3235
        %v3237 = vrot.slane %v2377, %v3236
        %v3238 = vlaneseq
        %v3239 = vshrl.u32 %v3238, 7
        %v3240 = vsub.s32 4, %v3239
        %v3241 = vrot.slane %v2377, %v3240
        %v3242 = vlaneseq
        %v3243 = vshrl.u32 %v3242, 7
        %v3244 = vsub.s32 5, %v3243
        %v3245 = vrot.slane %v2377, %v3244
        %v3246 = vlaneseq
        %v3247 = vshrl.u32 %v3246, 7
        %v3248 = vsub.s32 6, %v3247
        %v3249 = vrot.slane %v2377, %v3248
        %v3250 = vlaneseq
        %v3251 = vshrl.u32 %v3250, 7
        %v3252 = vsub.s32 7, %v3251
        %v3253 = vrot.slane %v2377, %v3252
        %v3254 = vlaneseq
        %v3255 = vshrl.u32 %v3254, 7
        %v3256 = vsub.s32 0, %v3255
        %v3257 = vrot.slane %v2379, %v3256
        %v3258 = vlaneseq
        %v3259 = vshrl.u32 %v3258, 7
        %v3260 = vsub.s32 1, %v3259
        %v3261 = vrot.slane %v2379, %v3260
        %v3262 = vlaneseq
        %v3263 = vshrl.u32 %v3262, 7
        %v3264 = vsub.s32 2, %v3263
        %v3265 = vrot.slane %v2379, %v3264
        %v3266 = vlaneseq
        %v3267 = vshrl.u32 %v3266, 7
        %v3268 = vsub.s32 3, %v3267
        %v3269 = vrot.slane %v2379, %v3268
        %v3270 = vlaneseq
        %v3271 = vshrl.u32 %v3270, 7
        %v3272 = vsub.s32 4, %v3271
        %v3273 = vrot.slane %v2379, %v3272
        %v3274 = vlaneseq
        %v3275 = vshrl.u32 %v3274, 7
        %v3276 = vsub.s32 5, %v3275
        %v3277 = vrot.slane %v2379, %v3276
        %v3278 = vlaneseq
        %v3279 = vshrl.u32 %v3278, 7
        %v3280 = vsub.s32 6, %v3279
        %v3281 = vrot.slane %v2379, %v3280
        %v3282 = vlaneseq
        %v3283 = vshrl.u32 %v3282, 7
        %v3284 = vsub.s32 7, %v3283
        %v3285 = vrot.slane %v2379, %v3284
        %v3286 = vlaneseq
        %v3287 = vshrl.u32 %v3286, 7
        %v3288 = vsub.s32 0, %v3287
        %v3289 = vrot.slane %v2381, %v3288
        %v3290 = vlaneseq
        %v3291 = vshrl.u32 %v3290, 7
        %v3292 = vsub.s32 1, %v3291
        %v3293 = vrot.slane %v2381, %v3292
        %v3294 = vlaneseq
        %v3295 = vshrl.u32 %v3294, 7
        %v3296 = vsub.s32 2, %v3295
        %v3297 = vrot.slane %v2381, %v3296
        %v3298 = vlaneseq
        %v3299 = vshrl.u32 %v3298, 7
        %v3300 = vsub.s32 3, %v3299
        %v3301 = vrot.slane %v2381, %v3300
        %v3302 = vlaneseq
        %v3303 = vshrl.u32 %v3302, 7
        %v3304 = vsub.s32 4, %v3303
        %v3305 = vrot.slane %v2381, %v3304
        %v3306 = vlaneseq
        %v3307 = vshrl.u32 %v3306, 7
        %v3308 = vsub.s32 5, %v3307
        %v3309 = vrot.slane %v2381, %v3308
        %v3310 = vlaneseq
        %v3311 = vshrl.u32 %v3310, 7
        %v3312 = vsub.s32 6, %v3311
        %v3313 = vrot.slane %v2381, %v3312
        %v3314 = vlaneseq
        %v3315 = vshrl.u32 %v3314, 7
        %v3316 = vsub.s32 7, %v3315
        %v3317 = vrot.slane %v2381, %v3316
        %v3318 = vlaneseq
        %v3319 = vshrl.u32 %v3318, 7
        %v3320 = vsub.s32 0, %v3319
        %v3321 = vrot.slane %v2383, %v3320
        %v3322 = vlaneseq
        %v3323 = vshrl.u32 %v3322, 7
        %v3324 = vsub.s32 1, %v3323
        %v3325 = vrot.slane %v2383, %v3324
        %v3326 = vlaneseq
        %v3327 = vshrl.u32 %v3326, 7
        %v3328 = vsub.s32 2, %v3327
        %v3329 = vrot.slane %v2383, %v3328
        %v3330 = vlaneseq
        %v3331 = vshrl.u32 %v3330, 7
        %v3332 = vsub.s32 3, %v3331
        %v3333 = vrot.slane %v2383, %v3332
        %v3334 = vlaneseq
        %v3335 = vshrl.u32 %v3334, 7
        %v3336 = vsub.s32 4, %v3335
        %v3337 = vrot.slane %v2383, %v3336
        %v3338 = vlaneseq
        %v3339 = vshrl.u32 %v3338, 7
        %v3340 = vsub.s32 5, %v3339
        %v3341 = vrot.slane %v2383, %v3340
        %v3342 = vlaneseq
        %v3343 = vshrl.u32 %v3342, 7
        %v3344 = vsub.s32 6, %v3343
        %v3345 = vrot.slane %v2383, %v3344
        %v3346 = vlaneseq
        %v3347 = vshrl.u32 %v3346, 7
        %v3348 = vsub.s32 7, %v3347
        %v3349 = vrot.slane %v2383, %v3348
        %v3350 = vlaneseq
        %v3351 = vshrl.u32 %v3350, 7
        %v3352 = vsub.s32 0, %v3351
        %v3353 = vrot.slane %v2385, %v3352
        %v3354 = vlaneseq
        %v3355 = vshrl.u32 %v3354, 7
        %v3356 = vsub.s32 1, %v3355
        %v3357 = vrot.slane %v2385, %v3356
        %v3358 = vlaneseq
        %v3359 = vshrl.u32 %v3358, 7
        %v3360 = vsub.s32 2, %v3359
        %v3361 = vrot.slane %v2385, %v3360
        %v3362 = vlaneseq
        %v3363 = vshrl.u32 %v3362, 7
        %v3364 = vsub.s32 3, %v3363
        %v3365 = vrot.slane %v2385, %v3364
        %v3366 = vlaneseq
        %v3367 = vshrl.u32 %v3366, 7
        %v3368 = vsub.s32 4, %v3367
        %v3369 = vrot.slane %v2385, %v3368
        %v3370 = vlaneseq
        %v3371 = vshrl.u32 %v3370, 7
        %v3372 = vsub.s32 5, %v3371
        %v3373 = vrot.slane %v2385, %v3372
        %v3374 = vlaneseq
        %v3375 = vshrl.u32 %v3374, 7
        %v3376 = vsub.s32 6, %v3375
        %v3377 = vrot.slane %v2385, %v3376
        %v3378 = vlaneseq
        %v3379 = vshrl.u32 %v3378, 7
        %v3380 = vsub.s32 7, %v3379
        %v3381 = vrot.slane %v2385, %v3380
        %v3382 = vlaneseq
        %v3383 = vshrl.u32 %v3382, 7
        %v3384 = vsub.s32 0, %v3383
        %v3385 = vrot.slane %v2387, %v3384
        %v3386 = vlaneseq
        %v3387 = vshrl.u32 %v3386, 7
        %v3388 = vsub.s32 1, %v3387
        %v3389 = vrot.slane %v2387, %v3388
        %v3390 = vlaneseq
        %v3391 = vshrl.u32 %v3390, 7
        %v3392 = vsub.s32 2, %v3391
        %v3393 = vrot.slane %v2387, %v3392
        %v3394 = vlaneseq
        %v3395 = vshrl.u32 %v3394, 7
        %v3396 = vsub.s32 3, %v3395
        %v3397 = vrot.slane %v2387, %v3396
        %v3398 = vlaneseq
        %v3399 = vshrl.u32 %v3398, 7
        %v3400 = vsub.s32 4, %v3399
        %v3401 = vrot.slane %v2387, %v3400
        %v3402 = vlaneseq
        %v3403 = vshrl.u32 %v3402, 7
        %v3404 = vsub.s32 5, %v3403
        %v3405 = vrot.slane %v2387, %v3404
        %v3406 = vlaneseq
        %v3407 = vshrl.u32 %v3406, 7
        %v3408 = vsub.s32 6, %v3407
        %v3409 = vrot.slane %v2387, %v3408
        %v3410 = vlaneseq
        %v3411 = vshrl.u32 %v3410, 7
        %v3412 = vsub.s32 7, %v3411
        %v3413 = vrot.slane %v2387, %v3412
        %v3414 = vlaneseq
        %v3415 = vshrl.u32 %v3414, 7
        %v3416 = vsub.s32 0, %v3415
        %v3417 = vrot.slane %v2389, %v3416
        %v3418 = vlaneseq
        %v3419 = vshrl.u32 %v3418, 7
        %v3420 = vsub.s32 1, %v3419
        %v3421 = vrot.slane %v2389, %v3420
        %v3422 = vlaneseq
        %v3423 = vshrl.u32 %v3422, 7
        %v3424 = vsub.s32 2, %v3423
        %v3425 = vrot.slane %v2389, %v3424
        %v3426 = vlaneseq
        %v3427 = vshrl.u32 %v3426, 7
        %v3428 = vsub.s32 3, %v3427
        %v3429 = vrot.slane %v2389, %v3428
        %v3430 = vlaneseq
        %v3431 = vshrl.u32 %v3430, 7
        %v3432 = vsub.s32 4, %v3431
        %v3433 = vrot.slane %v2389, %v3432
        %v3434 = vlaneseq
        %v3435 = vshrl.u32 %v3434, 7
        %v3436 = vsub.s32 5, %v3435
        %v3437 = vrot.slane %v2389, %v3436
        %v3438 = vlaneseq
        %v3439 = vshrl.u32 %v3438, 7
        %v3440 = vsub.s32 6, %v3439
        %v3441 = vrot.slane %v2389, %v3440
        %v3442 = vlaneseq
        %v3443 = vshrl.u32 %v3442, 7
        %v3444 = vsub.s32 7, %v3443
        %v3445 = vrot.slane %v2389, %v3444
        %v3446 = vcombine.low %v2425, %v2429
        %v3447 = vcombine.low %v2433, %v2437
        %v3448 = vcombine.low %v2441, %v2445
        %v3449 = vcombine.low %v2449, %v2453
        %v3451 = vunpack.c.l.s4 1966171168
        %v3452 = vunpack.c.0.s8 %v3451
        %v3453 = vlaneseq
        %v3454 = vshrl.u32 %v3453, 7
        %v3455 = vsub.s32 %v3452, %v3454
        %v3456 = vrot.slane %v3446, %v3455
        %v3458 = vunpack.c.l.s4 1966171168
        %v3459 = vunpack.c.0.s8 %v3458
        %v3460 = vlaneseq
        %v3461 = vshrl.u32 %v3460, 7
        %v3462 = vsub.s32 %v3459, %v3461
        %v3463 = vrot.slane %v3447, %v3462
        %v3465 = vunpack.c.l.s4 1966171168
        %v3466 = vunpack.c.0.s8 %v3465
        %v3467 = vlaneseq
        %v3468 = vshrl.u32 %v3467, 7
        %v3469 = vsub.s32 %v3466, %v3468
        %v3470 = vrot.slane %v3448, %v3469
        %v3472 = vunpack.c.l.s4 1966171168
        %v3473 = vunpack.c.0.s8 %v3472
        %v3474 = vlaneseq
        %v3475 = vshrl.u32 %v3474, 7
        %v3476 = vsub.s32 %v3473, %v3475
        %v3477 = vrot.slane %v3449, %v3476
        %v3478 = vcombine.low %v3456, %v3463
        %v3479 = vcombine.low %v3470, %v3477
        %v3481 = vunpack.c.l.s4 1966171168
        %v3482 = vunpack.c.0.s8 %v3481
        %v3483 = vlaneseq
        %v3484 = vshrl.u32 %v3483, 7
        %v3485 = vsub.s32 %v3482, %v3484
        %v3486 = vrot.slane %v3478, %v3485
        %v3488 = vunpack.c.l.s4 1966171168
        %v3489 = vunpack.c.0.s8 %v3488
        %v3490 = vlaneseq
        %v3491 = vshrl.u32 %v3490, 7
        %v3492 = vsub.s32 %v3489, %v3491
        %v3493 = vrot.slane %v3479, %v3492
        %v3494 = vcombine.low %v3486, %v3493
        %v3495 = vcombine.low %v2457, %v2461
        %v3496 = vcombine.low %v2465, %v2469
        %v3497 = vcombine.low %v2473, %v2477
        %v3498 = vcombine.low %v2481, %v2485
        %v3500 = vunpack.c.l.s4 1966171168
        %v3501 = vunpack.c.0.s8 %v3500
        %v3502 = vlaneseq
        %v3503 = vshrl.u32 %v3502, 7
        %v3504 = vsub.s32 %v3501, %v3503
        %v3505 = vrot.slane %v3495, %v3504
        %v3507 = vunpack.c.l.s4 1966171168
        %v3508 = vunpack.c.0.s8 %v3507
        %v3509 = vlaneseq
        %v3510 = vshrl.u32 %v3509, 7
        %v3511 = vsub.s32 %v3508, %v3510
        %v3512 = vrot.slane %v3496, %v3511
        %v3514 = vunpack.c.l.s4 1966171168
        %v3515 = vunpack.c.0.s8 %v3514
        %v3516 = vlaneseq
        %v3517 = vshrl.u32 %v3516, 7
        %v3518 = vsub.s32 %v3515, %v3517
        %v3519 = vrot.slane %v3497, %v3518
        %v3521 = vunpack.c.l.s4 1966171168
        %v3522 = vunpack.c.0.s8 %v3521
        %v3523 = vlaneseq
        %v3524 = vshrl.u32 %v3523, 7
        %v3525 = vsub.s32 %v3522, %v3524
        %v3526 = vrot.slane %v3498, %v3525
        %v3527 = vcombine.low %v3505, %v3512
        %v3528 = vcombine.low %v3519, %v3526
        %v3530 = vunpack.c.l.s4 1966171168
        %v3531 = vunpack.c.0.s8 %v3530
        %v3532 = vlaneseq
        %v3533 = vshrl.u32 %v3532, 7
        %v3534 = vsub.s32 %v3531, %v3533
        %v3535 = vrot.slane %v3527, %v3534
        %v3537 = vunpack.c.l.s4 1966171168
        %v3538 = vunpack.c.0.s8 %v3537
        %v3539 = vlaneseq
        %v3540 = vshrl.u32 %v3539, 7
        %v3541 = vsub.s32 %v3538, %v3540
        %v3542 = vrot.slane %v3528, %v3541
        %v3543 = vcombine.low %v3535, %v3542
        %v3544 = vcombine.low %v2489, %v2493
        %v3545 = vcombine.low %v2497, %v2501
        %v3546 = vcombine.low %v2505, %v2509
        %v3547 = vcombine.low %v2513, %v2517
        %v3549 = vunpack.c.l.s4 1966171168
        %v3550 = vunpack.c.0.s8 %v3549
        %v3551 = vlaneseq
        %v3552 = vshrl.u32 %v3551, 7
        %v3553 = vsub.s32 %v3550, %v3552
        %v3554 = vrot.slane %v3544, %v3553
        %v3556 = vunpack.c.l.s4 1966171168
        %v3557 = vunpack.c.0.s8 %v3556
        %v3558 = vlaneseq
        %v3559 = vshrl.u32 %v3558, 7
        %v3560 = vsub.s32 %v3557, %v3559
        %v3561 = vrot.slane %v3545, %v3560
        %v3563 = vunpack.c.l.s4 1966171168
        %v3564 = vunpack.c.0.s8 %v3563
        %v3565 = vlaneseq
        %v3566 = vshrl.u32 %v3565, 7
        %v3567 = vsub.s32 %v3564, %v3566
        %v3568 = vrot.slane %v3546, %v3567
        %v3570 = vunpack.c.l.s4 1966171168
        %v3571 = vunpack.c.0.s8 %v3570
        %v3572 = vlaneseq
        %v3573 = vshrl.u32 %v3572, 7
        %v3574 = vsub.s32 %v3571, %v3573
        %v3575 = vrot.slane %v3547, %v3574
        %v3576 = vcombine.low %v3554, %v3561
        %v3577 = vcombine.low %v3568, %v3575
        %v3579 = vunpack.c.l.s4 1966171168
        %v3580 = vunpack.c.0.s8 %v3579
        %v3581 = vlaneseq
        %v3582 = vshrl.u32 %v3581, 7
        %v3583 = vsub.s32 %v3580, %v3582
        %v3584 = vrot.slane %v3576, %v3583
        %v3586 = vunpack.c.l.s4 1966171168
        %v3587 = vunpack.c.0.s8 %v3586
        %v3588 = vlaneseq
        %v3589 = vshrl.u32 %v3588, 7
        %v3590 = vsub.s32 %v3587, %v3589
        %v3591 = vrot.slane %v3577, %v3590
        %v3592 = vcombine.low %v3584, %v3591
        %v3593 = vcombine.low %v2521, %v2525
        %v3594 = vcombine.low %v2529, %v2533
        %v3595 = vcombine.low %v2537, %v2541
        %v3596 = vcombine.low %v2545, %v2549
        %v3598 = vunpack.c.l.s4 1966171168
        %v3599 = vunpack.c.0.s8 %v3598
        %v3600 = vlaneseq
        %v3601 = vshrl.u32 %v3600, 7
        %v3602 = vsub.s32 %v3599, %v3601
        %v3603 = vrot.slane %v3593, %v3602
        %v3605 = vunpack.c.l.s4 1966171168
        %v3606 = vunpack.c.0.s8 %v3605
        %v3607 = vlaneseq
        %v3608 = vshrl.u32 %v3607, 7
        %v3609 = vsub.s32 %v3606, %v3608
        %v3610 = vrot.slane %v3594, %v3609
        %v3612 = vunpack.c.l.s4 1966171168
        %v3613 = vunpack.c.0.s8 %v3612
        %v3614 = vlaneseq
        %v3615 = vshrl.u32 %v3614, 7
        %v3616 = vsub.s32 %v3613, %v3615
        %v3617 = vrot.slane %v3595, %v3616
        %v3619 = vunpack.c.l.s4 1966171168
        %v3620 = vunpack.c.0.s8 %v3619
        %v3621 = vlaneseq
        %v3622 = vshrl.u32 %v3621, 7
        %v3623 = vsub.s32 %v3620, %v3622
        %v3624 = vrot.slane %v3596, %v3623
        %v3625 = vcombine.low %v3603, %v3610
        %v3626 = vcombine.low %v3617, %v3624
        %v3628 = vunpack.c.l.s4 1966171168
        %v3629 = vunpack.c.0.s8 %v3628
        %v3630 = vlaneseq
        %v3631 = vshrl.u32 %v3630, 7
        %v3632 = vsub.s32 %v3629, %v3631
        %v3633 = vrot.slane %v3625, %v3632
        %v3635 = vunpack.c.l.s4 1966171168
        %v3636 = vunpack.c.0.s8 %v3635
        %v3637 = vlaneseq
        %v3638 = vshrl.u32 %v3637, 7
        %v3639 = vsub.s32 %v3636, %v3638
        %v3640 = vrot.slane %v3626, %v3639
        %v3641 = vcombine.low %v3633, %v3640
        %v3642 = vcombine.low %v2553, %v2557
        %v3643 = vcombine.low %v2561, %v2565
        %v3644 = vcombine.low %v2569, %v2573
        %v3645 = vcombine.low %v2577, %v2581
        %v3647 = vunpack.c.l.s4 1966171168
        %v3648 = vunpack.c.0.s8 %v3647
        %v3649 = vlaneseq
        %v3650 = vshrl.u32 %v3649, 7
        %v3651 = vsub.s32 %v3648, %v3650
        %v3652 = vrot.slane %v3642, %v3651
        %v3654 = vunpack.c.l.s4 1966171168
        %v3655 = vunpack.c.0.s8 %v3654
        %v3656 = vlaneseq
        %v3657 = vshrl.u32 %v3656, 7
        %v3658 = vsub.s32 %v3655, %v3657
        %v3659 = vrot.slane %v3643, %v3658
        %v3661 = vunpack.c.l.s4 1966171168
        %v3662 = vunpack.c.0.s8 %v3661
        %v3663 = vlaneseq
        %v3664 = vshrl.u32 %v3663, 7
        %v3665 = vsub.s32 %v3662, %v3664
        %v3666 = vrot.slane %v3644, %v3665
        %v3668 = vunpack.c.l.s4 1966171168
        %v3669 = vunpack.c.0.s8 %v3668
        %v3670 = vlaneseq
        %v3671 = vshrl.u32 %v3670, 7
        %v3672 = vsub.s32 %v3669, %v3671
        %v3673 = vrot.slane %v3645, %v3672
        %v3674 = vcombine.low %v3652, %v3659
        %v3675 = vcombine.low %v3666, %v3673
        %v3677 = vunpack.c.l.s4 1966171168
        %v3678 = vunpack.c.0.s8 %v3677
        %v3679 = vlaneseq
        %v3680 = vshrl.u32 %v3679, 7
        %v3681 = vsub.s32 %v3678, %v3680
        %v3682 = vrot.slane %v3674, %v3681
        %v3684 = vunpack.c.l.s4 1966171168
        %v3685 = vunpack.c.0.s8 %v3684
        %v3686 = vlaneseq
        %v3687 = vshrl.u32 %v3686, 7
        %v3688 = vsub.s32 %v3685, %v3687
        %v3689 = vrot.slane %v3675, %v3688
        %v3690 = vcombine.low %v3682, %v3689
        %v3691 = vcombine.low %v2585, %v2589
        %v3692 = vcombine.low %v2593, %v2597
        %v3693 = vcombine.low %v2601, %v2605
        %v3694 = vcombine.low %v2609, %v2613
        %v3696 = vunpack.c.l.s4 1966171168
        %v3697 = vunpack.c.0.s8 %v3696
        %v3698 = vlaneseq
        %v3699 = vshrl.u32 %v3698, 7
        %v3700 = vsub.s32 %v3697, %v3699
        %v3701 = vrot.slane %v3691, %v3700
        %v3703 = vunpack.c.l.s4 1966171168
        %v3704 = vunpack.c.0.s8 %v3703
        %v3705 = vlaneseq
        %v3706 = vshrl.u32 %v3705, 7
        %v3707 = vsub.s32 %v3704, %v3706
        %v3708 = vrot.slane %v3692, %v3707
        %v3710 = vunpack.c.l.s4 1966171168
        %v3711 = vunpack.c.0.s8 %v3710
        %v3712 = vlaneseq
        %v3713 = vshrl.u32 %v3712, 7
        %v3714 = vsub.s32 %v3711, %v3713
        %v3715 = vrot.slane %v3693, %v3714
        %v3717 = vunpack.c.l.s4 1966171168
        %v3718 = vunpack.c.0.s8 %v3717
        %v3719 = vlaneseq
        %v3720 = vshrl.u32 %v3719, 7
        %v3721 = vsub.s32 %v3718, %v3720
        %v3722 = vrot.slane %v3694, %v3721
        %v3723 = vcombine.low %v3701, %v3708
        %v3724 = vcombine.low %v3715, %v3722
        %v3726 = vunpack.c.l.s4 1966171168
        %v3727 = vunpack.c.0.s8 %v3726
        %v3728 = vlaneseq
        %v3729 = vshrl.u32 %v3728, 7
        %v3730 = vsub.s32 %v3727, %v3729
        %v3731 = vrot.slane %v3723, %v3730
        %v3733 = vunpack.c.l.s4 1966171168
        %v3734 = vunpack.c.0.s8 %v3733
        %v3735 = vlaneseq
        %v3736 = vshrl.u32 %v3735, 7
        %v3737 = vsub.s32 %v3734, %v3736
        %v3738 = vrot.slane %v3724, %v3737
        %v3739 = vcombine.low %v3731, %v3738
        %v3740 = vcombine.low %v2617, %v2621
        %v3741 = vcombine.low %v2625, %v2629
        %v3742 = vcombine.low %v2633, %v2637
        %v3743 = vcombine.low %v2641, %v2645
        %v3745 = vunpack.c.l.s4 1966171168
        %v3746 = vunpack.c.0.s8 %v3745
        %v3747 = vlaneseq
        %v3748 = vshrl.u32 %v3747, 7
        %v3749 = vsub.s32 %v3746, %v3748
        %v3750 = vrot.slane %v3740, %v3749
        %v3752 = vunpack.c.l.s4 1966171168
        %v3753 = vunpack.c.0.s8 %v3752
        %v3754 = vlaneseq
        %v3755 = vshrl.u32 %v3754, 7
        %v3756 = vsub.s32 %v3753, %v3755
        %v3757 = vrot.slane %v3741, %v3756
        %v3759 = vunpack.c.l.s4 1966171168
        %v3760 = vunpack.c.0.s8 %v3759
        %v3761 = vlaneseq
        %v3762 = vshrl.u32 %v3761, 7
        %v3763 = vsub.s32 %v3760, %v3762
        %v3764 = vrot.slane %v3742, %v3763
        %v3766 = vunpack.c.l.s4 1966171168
        %v3767 = vunpack.c.0.s8 %v3766
        %v3768 = vlaneseq
        %v3769 = vshrl.u32 %v3768, 7
        %v3770 = vsub.s32 %v3767, %v3769
        %v3771 = vrot.slane %v3743, %v3770
        %v3772 = vcombine.low %v3750, %v3757
        %v3773 = vcombine.low %v3764, %v3771
        %v3775 = vunpack.c.l.s4 1966171168
        %v3776 = vunpack.c.0.s8 %v3775
        %v3777 = vlaneseq
        %v3778 = vshrl.u32 %v3777, 7
        %v3779 = vsub.s32 %v3776, %v3778
        %v3780 = vrot.slane %v3772, %v3779
        %v3782 = vunpack.c.l.s4 1966171168
        %v3783 = vunpack.c.0.s8 %v3782
        %v3784 = vlaneseq
        %v3785 = vshrl.u32 %v3784, 7
        %v3786 = vsub.s32 %v3783, %v3785
        %v3787 = vrot.slane %v3773, %v3786
        %v3788 = vcombine.low %v3780, %v3787
        %v3789 = vcombine.low %v2649, %v2653
        %v3790 = vcombine.low %v2657, %v2661
        %v3791 = vcombine.low %v2665, %v2669
        %v3792 = vcombine.low %v2673, %v2677
        %v3794 = vunpack.c.l.s4 1966171168
        %v3795 = vunpack.c.0.s8 %v3794
        %v3796 = vlaneseq
        %v3797 = vshrl.u32 %v3796, 7
        %v3798 = vsub.s32 %v3795, %v3797
        %v3799 = vrot.slane %v3789, %v3798
        %v3801 = vunpack.c.l.s4 1966171168
        %v3802 = vunpack.c.0.s8 %v3801
        %v3803 = vlaneseq
        %v3804 = vshrl.u32 %v3803, 7
        %v3805 = vsub.s32 %v3802, %v3804
        %v3806 = vrot.slane %v3790, %v3805
        %v3808 = vunpack.c.l.s4 1966171168
        %v3809 = vunpack.c.0.s8 %v3808
        %v3810 = vlaneseq
        %v3811 = vshrl.u32 %v3810, 7
        %v3812 = vsub.s32 %v3809, %v3811
        %v3813 = vrot.slane %v3791, %v3812
        %v3815 = vunpack.c.l.s4 1966171168
        %v3816 = vunpack.c.0.s8 %v3815
        %v3817 = vlaneseq
        %v3818 = vshrl.u32 %v3817, 7
        %v3819 = vsub.s32 %v3816, %v3818
        %v3820 = vrot.slane %v3792, %v3819
        %v3821 = vcombine.low %v3799, %v3806
        %v3822 = vcombine.low %v3813, %v3820
        %v3824 = vunpack.c.l.s4 1966171168
        %v3825 = vunpack.c.0.s8 %v3824
        %v3826 = vlaneseq
        %v3827 = vshrl.u32 %v3826, 7
        %v3828 = vsub.s32 %v3825, %v3827
        %v3829 = vrot.slane %v3821, %v3828
        %v3831 = vunpack.c.l.s4 1966171168
        %v3832 = vunpack.c.0.s8 %v3831
        %v3833 = vlaneseq
        %v3834 = vshrl.u32 %v3833, 7
        %v3835 = vsub.s32 %v3832, %v3834
        %v3836 = vrot.slane %v3822, %v3835
        %v3837 = vcombine.low %v3829, %v3836
        %v3838 = vcombine.low %v2681, %v2685
        %v3839 = vcombine.low %v2689, %v2693
        %v3840 = vcombine.low %v2697, %v2701
        %v3841 = vcombine.low %v2705, %v2709
        %v3843 = vunpack.c.l.s4 1966171168
        %v3844 = vunpack.c.0.s8 %v3843
        %v3845 = vlaneseq
        %v3846 = vshrl.u32 %v3845, 7
        %v3847 = vsub.s32 %v3844, %v3846
        %v3848 = vrot.slane %v3838, %v3847
        %v3850 = vunpack.c.l.s4 1966171168
        %v3851 = vunpack.c.0.s8 %v3850
        %v3852 = vlaneseq
        %v3853 = vshrl.u32 %v3852, 7
        %v3854 = vsub.s32 %v3851, %v3853
        %v3855 = vrot.slane %v3839, %v3854
        %v3857 = vunpack.c.l.s4 1966171168
        %v3858 = vunpack.c.0.s8 %v3857
        %v3859 = vlaneseq
        %v3860 = vshrl.u32 %v3859, 7
        %v3861 = vsub.s32 %v3858, %v3860
        %v3862 = vrot.slane %v3840, %v3861
        %v3864 = vunpack.c.l.s4 1966171168
        %v3865 = vunpack.c.0.s8 %v3864
        %v3866 = vlaneseq
        %v3867 = vshrl.u32 %v3866, 7
        %v3868 = vsub.s32 %v3865, %v3867
        %v3869 = vrot.slane %v3841, %v3868
        %v3870 = vcombine.low %v3848, %v3855
        %v3871 = vcombine.low %v3862, %v3869
        %v3873 = vunpack.c.l.s4 1966171168
        %v3874 = vunpack.c.0.s8 %v3873
        %v3875 = vlaneseq
        %v3876 = vshrl.u32 %v3875, 7
        %v3877 = vsub.s32 %v3874, %v3876
        %v3878 = vrot.slane %v3870, %v3877
        %v3880 = vunpack.c.l.s4 1966171168
        %v3881 = vunpack.c.0.s8 %v3880
        %v3882 = vlaneseq
        %v3883 = vshrl.u32 %v3882, 7
        %v3884 = vsub.s32 %v3881, %v3883
        %v3885 = vrot.slane %v3871, %v3884
        %v3886 = vcombine.low %v3878, %v3885
        %v3887 = vcombine.low %v2713, %v2717
        %v3888 = vcombine.low %v2721, %v2725
        %v3889 = vcombine.low %v2729, %v2733
        %v3890 = vcombine.low %v2737, %v2741
        %v3892 = vunpack.c.l.s4 1966171168
        %v3893 = vunpack.c.0.s8 %v3892
        %v3894 = vlaneseq
        %v3895 = vshrl.u32 %v3894, 7
        %v3896 = vsub.s32 %v3893, %v3895
        %v3897 = vrot.slane %v3887, %v3896
        %v3899 = vunpack.c.l.s4 1966171168
        %v3900 = vunpack.c.0.s8 %v3899
        %v3901 = vlaneseq
        %v3902 = vshrl.u32 %v3901, 7
        %v3903 = vsub.s32 %v3900, %v3902
        %v3904 = vrot.slane %v3888, %v3903
        %v3906 = vunpack.c.l.s4 1966171168
        %v3907 = vunpack.c.0.s8 %v3906
        %v3908 = vlaneseq
        %v3909 = vshrl.u32 %v3908, 7
        %v3910 = vsub.s32 %v3907, %v3909
        %v3911 = vrot.slane %v3889, %v3910
        %v3913 = vunpack.c.l.s4 1966171168
        %v3914 = vunpack.c.0.s8 %v3913
        %v3915 = vlaneseq
        %v3916 = vshrl.u32 %v3915, 7
        %v3917 = vsub.s32 %v3914, %v3916
        %v3918 = vrot.slane %v3890, %v3917
        %v3919 = vcombine.low %v3897, %v3904
        %v3920 = vcombine.low %v3911, %v3918
        %v3922 = vunpack.c.l.s4 1966171168
        %v3923 = vunpack.c.0.s8 %v3922
        %v3924 = vlaneseq
        %v3925 = vshrl.u32 %v3924, 7
        %v3926 = vsub.s32 %v3923, %v3925
        %v3927 = vrot.slane %v3919, %v3926
        %v3929 = vunpack.c.l.s4 1966171168
        %v3930 = vunpack.c.0.s8 %v3929
        %v3931 = vlaneseq
        %v3932 = vshrl.u32 %v3931, 7
        %v3933 = vsub.s32 %v3930, %v3932
        %v3934 = vrot.slane %v3920, %v3933
        %v3935 = vcombine.low %v3927, %v3934
        %v3936 = vcombine.low %v2745, %v2749
        %v3937 = vcombine.low %v2753, %v2757
        %v3938 = vcombine.low %v2761, %v2765
        %v3939 = vcombine.low %v2769, %v2773
        %v3941 = vunpack.c.l.s4 1966171168
        %v3942 = vunpack.c.0.s8 %v3941
        %v3943 = vlaneseq
        %v3944 = vshrl.u32 %v3943, 7
        %v3945 = vsub.s32 %v3942, %v3944
        %v3946 = vrot.slane %v3936, %v3945
        %v3948 = vunpack.c.l.s4 1966171168
        %v3949 = vunpack.c.0.s8 %v3948
        %v3950 = vlaneseq
        %v3951 = vshrl.u32 %v3950, 7
        %v3952 = vsub.s32 %v3949, %v3951
        %v3953 = vrot.slane %v3937, %v3952
        %v3955 = vunpack.c.l.s4 1966171168
        %v3956 = vunpack.c.0.s8 %v3955
        %v3957 = vlaneseq
        %v3958 = vshrl.u32 %v3957, 7
        %v3959 = vsub.s32 %v3956, %v3958
        %v3960 = vrot.slane %v3938, %v3959
        %v3962 = vunpack.c.l.s4 1966171168
        %v3963 = vunpack.c.0.s8 %v3962
        %v3964 = vlaneseq
        %v3965 = vshrl.u32 %v3964, 7
        %v3966 = vsub.s32 %v3963, %v3965
        %v3967 = vrot.slane %v3939, %v3966
        %v3968 = vcombine.low %v3946, %v3953
        %v3969 = vcombine.low %v3960, %v3967
        %v3971 = vunpack.c.l.s4 1966171168
        %v3972 = vunpack.c.0.s8 %v3971
        %v3973 = vlaneseq
        %v3974 = vshrl.u32 %v3973, 7
        %v3975 = vsub.s32 %v3972, %v3974
        %v3976 = vrot.slane %v3968, %v3975
        %v3978 = vunpack.c.l.s4 1966171168
        %v3979 = vunpack.c.0.s8 %v3978
        %v3980 = vlaneseq
        %v3981 = vshrl.u32 %v3980, 7
        %v3982 = vsub.s32 %v3979, %v3981
        %v3983 = vrot.slane %v3969, %v3982
        %v3984 = vcombine.low %v3976, %v3983
        %v3985 = vcombine.low %v2777, %v2781
        %v3986 = vcombine.low %v2785, %v2789
        %v3987 = vcombine.low %v2793, %v2797
        %v3988 = vcombine.low %v2801, %v2805
        %v3990 = vunpack.c.l.s4 1966171168
        %v3991 = vunpack.c.0.s8 %v3990
        %v3992 = vlaneseq
        %v3993 = vshrl.u32 %v3992, 7
        %v3994 = vsub.s32 %v3991, %v3993
        %v3995 = vrot.slane %v3985, %v3994
        %v3997 = vunpack.c.l.s4 1966171168
        %v3998 = vunpack.c.0.s8 %v3997
        %v3999 = vlaneseq
        %v4000 = vshrl.u32 %v3999, 7
        %v4001 = vsub.s32 %v3998, %v4000
        %v4002 = vrot.slane %v3986, %v4001
        %v4004 = vunpack.c.l.s4 1966171168
        %v4005 = vunpack.c.0.s8 %v4004
        %v4006 = vlaneseq
        %v4007 = vshrl.u32 %v4006, 7
        %v4008 = vsub.s32 %v4005, %v4007
        %v4009 = vrot.slane %v3987, %v4008
        %v4011 = vunpack.c.l.s4 1966171168
        %v4012 = vunpack.c.0.s8 %v4011
        %v4013 = vlaneseq
        %v4014 = vshrl.u32 %v4013, 7
        %v4015 = vsub.s32 %v4012, %v4014
        %v4016 = vrot.slane %v3988, %v4015
        %v4017 = vcombine.low %v3995, %v4002
        %v4018 = vcombine.low %v4009, %v4016
        %v4020 = vunpack.c.l.s4 1966171168
        %v4021 = vunpack.c.0.s8 %v4020
        %v4022 = vlaneseq
        %v4023 = vshrl.u32 %v4022, 7
        %v4024 = vsub.s32 %v4021, %v4023
        %v4025 = vrot.slane %v4017, %v4024
        %v4027 = vunpack.c.l.s4 1966171168
        %v4028 = vunpack.c.0.s8 %v4027
        %v4029 = vlaneseq
        %v4030 = vshrl.u32 %v4029, 7
        %v4031 = vsub.s32 %v4028, %v4030
        %v4032 = vrot.slane %v4018, %v4031
        %v4033 = vcombine.low %v4025, %v4032
        %v4034 = vcombine.low %v2809, %v2813
        %v4035 = vcombine.low %v2817, %v2821
        %v4036 = vcombine.low %v2825, %v2829
        %v4037 = vcombine.low %v2833, %v2837
        %v4039 = vunpack.c.l.s4 1966171168
        %v4040 = vunpack.c.0.s8 %v4039
        %v4041 = vlaneseq
        %v4042 = vshrl.u32 %v4041, 7
        %v4043 = vsub.s32 %v4040, %v4042
        %v4044 = vrot.slane %v4034, %v4043
        %v4046 = vunpack.c.l.s4 1966171168
        %v4047 = vunpack.c.0.s8 %v4046
        %v4048 = vlaneseq
        %v4049 = vshrl.u32 %v4048, 7
        %v4050 = vsub.s32 %v4047, %v4049
        %v4051 = vrot.slane %v4035, %v4050
        %v4053 = vunpack.c.l.s4 1966171168
        %v4054 = vunpack.c.0.s8 %v4053
        %v4055 = vlaneseq
        %v4056 = vshrl.u32 %v4055, 7
        %v4057 = vsub.s32 %v4054, %v4056
        %v4058 = vrot.slane %v4036, %v4057
        %v4060 = vunpack.c.l.s4 1966171168
        %v4061 = vunpack.c.0.s8 %v4060
        %v4062 = vlaneseq
        %v4063 = vshrl.u32 %v4062, 7
        %v4064 = vsub.s32 %v4061, %v4063
        %v4065 = vrot.slane %v4037, %v4064
        %v4066 = vcombine.low %v4044, %v4051
        %v4067 = vcombine.low %v4058, %v4065
        %v4069 = vunpack.c.l.s4 1966171168
        %v4070 = vunpack.c.0.s8 %v4069
        %v4071 = vlaneseq
        %v4072 = vshrl.u32 %v4071, 7
        %v4073 = vsub.s32 %v4070, %v4072
        %v4074 = vrot.slane %v4066, %v4073
        %v4076 = vunpack.c.l.s4 1966171168
        %v4077 = vunpack.c.0.s8 %v4076
        %v4078 = vlaneseq
        %v4079 = vshrl.u32 %v4078, 7
        %v4080 = vsub.s32 %v4077, %v4079
        %v4081 = vrot.slane %v4067, %v4080
        %v4082 = vcombine.low %v4074, %v4081
        %v4083 = vcombine.low %v2841, %v2845
        %v4084 = vcombine.low %v2849, %v2853
        %v4085 = vcombine.low %v2857, %v2861
        %v4086 = vcombine.low %v2865, %v2869
        %v4088 = vunpack.c.l.s4 1966171168
        %v4089 = vunpack.c.0.s8 %v4088
        %v4090 = vlaneseq
        %v4091 = vshrl.u32 %v4090, 7
        %v4092 = vsub.s32 %v4089, %v4091
        %v4093 = vrot.slane %v4083, %v4092
        %v4095 = vunpack.c.l.s4 1966171168
        %v4096 = vunpack.c.0.s8 %v4095
        %v4097 = vlaneseq
        %v4098 = vshrl.u32 %v4097, 7
        %v4099 = vsub.s32 %v4096, %v4098
        %v4100 = vrot.slane %v4084, %v4099
        %v4102 = vunpack.c.l.s4 1966171168
        %v4103 = vunpack.c.0.s8 %v4102
        %v4104 = vlaneseq
        %v4105 = vshrl.u32 %v4104, 7
        %v4106 = vsub.s32 %v4103, %v4105
        %v4107 = vrot.slane %v4085, %v4106
        %v4109 = vunpack.c.l.s4 1966171168
        %v4110 = vunpack.c.0.s8 %v4109
        %v4111 = vlaneseq
        %v4112 = vshrl.u32 %v4111, 7
        %v4113 = vsub.s32 %v4110, %v4112
        %v4114 = vrot.slane %v4086, %v4113
        %v4115 = vcombine.low %v4093, %v4100
        %v4116 = vcombine.low %v4107, %v4114
        %v4118 = vunpack.c.l.s4 1966171168
        %v4119 = vunpack.c.0.s8 %v4118
        %v4120 = vlaneseq
        %v4121 = vshrl.u32 %v4120, 7
        %v4122 = vsub.s32 %v4119, %v4121
        %v4123 = vrot.slane %v4115, %v4122
        %v4125 = vunpack.c.l.s4 1966171168
        %v4126 = vunpack.c.0.s8 %v4125
        %v4127 = vlaneseq
        %v4128 = vshrl.u32 %v4127, 7
        %v4129 = vsub.s32 %v4126, %v4128
        %v4130 = vrot.slane %v4116, %v4129
        %v4131 = vcombine.low %v4123, %v4130
        %v4132 = vcombine.low %v2873, %v2877
        %v4133 = vcombine.low %v2881, %v2885
        %v4134 = vcombine.low %v2889, %v2893
        %v4135 = vcombine.low %v2897, %v2901
        %v4137 = vunpack.c.l.s4 1966171168
        %v4138 = vunpack.c.0.s8 %v4137
        %v4139 = vlaneseq
        %v4140 = vshrl.u32 %v4139, 7
        %v4141 = vsub.s32 %v4138, %v4140
        %v4142 = vrot.slane %v4132, %v4141
        %v4144 = vunpack.c.l.s4 1966171168
        %v4145 = vunpack.c.0.s8 %v4144
        %v4146 = vlaneseq
        %v4147 = vshrl.u32 %v4146, 7
        %v4148 = vsub.s32 %v4145, %v4147
        %v4149 = vrot.slane %v4133, %v4148
        %v4151 = vunpack.c.l.s4 1966171168
        %v4152 = vunpack.c.0.s8 %v4151
        %v4153 = vlaneseq
        %v4154 = vshrl.u32 %v4153, 7
        %v4155 = vsub.s32 %v4152, %v4154
        %v4156 = vrot.slane %v4134, %v4155
        %v4158 = vunpack.c.l.s4 1966171168
        %v4159 = vunpack.c.0.s8 %v4158
        %v4160 = vlaneseq
        %v4161 = vshrl.u32 %v4160, 7
        %v4162 = vsub.s32 %v4159, %v4161
        %v4163 = vrot.slane %v4135, %v4162
        %v4164 = vcombine.low %v4142, %v4149
        %v4165 = vcombine.low %v4156, %v4163
        %v4167 = vunpack.c.l.s4 1966171168
        %v4168 = vunpack.c.0.s8 %v4167
        %v4169 = vlaneseq
        %v4170 = vshrl.u32 %v4169, 7
        %v4171 = vsub.s32 %v4168, %v4170
        %v4172 = vrot.slane %v4164, %v4171
        %v4174 = vunpack.c.l.s4 1966171168
        %v4175 = vunpack.c.0.s8 %v4174
        %v4176 = vlaneseq
        %v4177 = vshrl.u32 %v4176, 7
        %v4178 = vsub.s32 %v4175, %v4177
        %v4179 = vrot.slane %v4165, %v4178
        %v4180 = vcombine.low %v4172, %v4179
        %v4181 = vcombine.low %v2905, %v2909
        %v4182 = vcombine.low %v2913, %v2917
        %v4183 = vcombine.low %v2921, %v2925
        %v4184 = vcombine.low %v2929, %v2933
        %v4186 = vunpack.c.l.s4 1966171168
        %v4187 = vunpack.c.0.s8 %v4186
        %v4188 = vlaneseq
        %v4189 = vshrl.u32 %v4188, 7
        %v4190 = vsub.s32 %v4187, %v4189
        %v4191 = vrot.slane %v4181, %v4190
        %v4193 = vunpack.c.l.s4 1966171168
        %v4194 = vunpack.c.0.s8 %v4193
        %v4195 = vlaneseq
        %v4196 = vshrl.u32 %v4195, 7
        %v4197 = vsub.s32 %v4194, %v4196
        %v4198 = vrot.slane %v4182, %v4197
        %v4200 = vunpack.c.l.s4 1966171168
        %v4201 = vunpack.c.0.s8 %v4200
        %v4202 = vlaneseq
        %v4203 = vshrl.u32 %v4202, 7
        %v4204 = vsub.s32 %v4201, %v4203
        %v4205 = vrot.slane %v4183, %v4204
        %v4207 = vunpack.c.l.s4 1966171168
        %v4208 = vunpack.c.0.s8 %v4207
        %v4209 = vlaneseq
        %v4210 = vshrl.u32 %v4209, 7
        %v4211 = vsub.s32 %v4208, %v4210
        %v4212 = vrot.slane %v4184, %v4211
        %v4213 = vcombine.low %v4191, %v4198
        %v4214 = vcombine.low %v4205, %v4212
        %v4216 = vunpack.c.l.s4 1966171168
        %v4217 = vunpack.c.0.s8 %v4216
        %v4218 = vlaneseq
        %v4219 = vshrl.u32 %v4218, 7
        %v4220 = vsub.s32 %v4217, %v4219
        %v4221 = vrot.slane %v4213, %v4220
        %v4223 = vunpack.c.l.s4 1966171168
        %v4224 = vunpack.c.0.s8 %v4223
        %v4225 = vlaneseq
        %v4226 = vshrl.u32 %v4225, 7
        %v4227 = vsub.s32 %v4224, %v4226
        %v4228 = vrot.slane %v4214, %v4227
        %v4229 = vcombine.low %v4221, %v4228
        %v4230 = vcombine.low %v2937, %v2941
        %v4231 = vcombine.low %v2945, %v2949
        %v4232 = vcombine.low %v2953, %v2957
        %v4233 = vcombine.low %v2961, %v2965
        %v4235 = vunpack.c.l.s4 1966171168
        %v4236 = vunpack.c.0.s8 %v4235
        %v4237 = vlaneseq
        %v4238 = vshrl.u32 %v4237, 7
        %v4239 = vsub.s32 %v4236, %v4238
        %v4240 = vrot.slane %v4230, %v4239
        %v4242 = vunpack.c.l.s4 1966171168
        %v4243 = vunpack.c.0.s8 %v4242
        %v4244 = vlaneseq
        %v4245 = vshrl.u32 %v4244, 7
        %v4246 = vsub.s32 %v4243, %v4245
        %v4247 = vrot.slane %v4231, %v4246
        %v4249 = vunpack.c.l.s4 1966171168
        %v4250 = vunpack.c.0.s8 %v4249
        %v4251 = vlaneseq
        %v4252 = vshrl.u32 %v4251, 7
        %v4253 = vsub.s32 %v4250, %v4252
        %v4254 = vrot.slane %v4232, %v4253
        %v4256 = vunpack.c.l.s4 1966171168
        %v4257 = vunpack.c.0.s8 %v4256
        %v4258 = vlaneseq
        %v4259 = vshrl.u32 %v4258, 7
        %v4260 = vsub.s32 %v4257, %v4259
        %v4261 = vrot.slane %v4233, %v4260
        %v4262 = vcombine.low %v4240, %v4247
        %v4263 = vcombine.low %v4254, %v4261
        %v4265 = vunpack.c.l.s4 1966171168
        %v4266 = vunpack.c.0.s8 %v4265
        %v4267 = vlaneseq
        %v4268 = vshrl.u32 %v4267, 7
        %v4269 = vsub.s32 %v4266, %v4268
        %v4270 = vrot.slane %v4262, %v4269
        %v4272 = vunpack.c.l.s4 1966171168
        %v4273 = vunpack.c.0.s8 %v4272
        %v4274 = vlaneseq
        %v4275 = vshrl.u32 %v4274, 7
        %v4276 = vsub.s32 %v4273, %v4275
        %v4277 = vrot.slane %v4263, %v4276
        %v4278 = vcombine.low %v4270, %v4277
        %v4279 = vcombine.low %v2969, %v2973
        %v4280 = vcombine.low %v2977, %v2981
        %v4281 = vcombine.low %v2985, %v2989
        %v4282 = vcombine.low %v2993, %v2997
        %v4284 = vunpack.c.l.s4 1966171168
        %v4285 = vunpack.c.0.s8 %v4284
        %v4286 = vlaneseq
        %v4287 = vshrl.u32 %v4286, 7
        %v4288 = vsub.s32 %v4285, %v4287
        %v4289 = vrot.slane %v4279, %v4288
        %v4291 = vunpack.c.l.s4 1966171168
        %v4292 = vunpack.c.0.s8 %v4291
        %v4293 = vlaneseq
        %v4294 = vshrl.u32 %v4293, 7
        %v4295 = vsub.s32 %v4292, %v4294
        %v4296 = vrot.slane %v4280, %v4295
        %v4298 = vunpack.c.l.s4 1966171168
        %v4299 = vunpack.c.0.s8 %v4298
        %v4300 = vlaneseq
        %v4301 = vshrl.u32 %v4300, 7
        %v4302 = vsub.s32 %v4299, %v4301
        %v4303 = vrot.slane %v4281, %v4302
        %v4305 = vunpack.c.l.s4 1966171168
        %v4306 = vunpack.c.0.s8 %v4305
        %v4307 = vlaneseq
        %v4308 = vshrl.u32 %v4307, 7
        %v4309 = vsub.s32 %v4306, %v4308
        %v4310 = vrot.slane %v4282, %v4309
        %v4311 = vcombine.low %v4289, %v4296
        %v4312 = vcombine.low %v4303, %v4310
        %v4314 = vunpack.c.l.s4 1966171168
        %v4315 = vunpack.c.0.s8 %v4314
        %v4316 = vlaneseq
        %v4317 = vshrl.u32 %v4316, 7
        %v4318 = vsub.s32 %v4315, %v4317
        %v4319 = vrot.slane %v4311, %v4318
        %v4321 = vunpack.c.l.s4 1966171168
        %v4322 = vunpack.c.0.s8 %v4321
        %v4323 = vlaneseq
        %v4324 = vshrl.u32 %v4323, 7
        %v4325 = vsub.s32 %v4322, %v4324
        %v4326 = vrot.slane %v4312, %v4325
        %v4327 = vcombine.low %v4319, %v4326
        %v4328 = vcombine.low %v3001, %v3005
        %v4329 = vcombine.low %v3009, %v3013
        %v4330 = vcombine.low %v3017, %v3021
        %v4331 = vcombine.low %v3025, %v3029
        %v4333 = vunpack.c.l.s4 1966171168
        %v4334 = vunpack.c.0.s8 %v4333
        %v4335 = vlaneseq
        %v4336 = vshrl.u32 %v4335, 7
        %v4337 = vsub.s32 %v4334, %v4336
        %v4338 = vrot.slane %v4328, %v4337
        %v4340 = vunpack.c.l.s4 1966171168
        %v4341 = vunpack.c.0.s8 %v4340
        %v4342 = vlaneseq
        %v4343 = vshrl.u32 %v4342, 7
        %v4344 = vsub.s32 %v4341, %v4343
        %v4345 = vrot.slane %v4329, %v4344
        %v4347 = vunpack.c.l.s4 1966171168
        %v4348 = vunpack.c.0.s8 %v4347
        %v4349 = vlaneseq
        %v4350 = vshrl.u32 %v4349, 7
        %v4351 = vsub.s32 %v4348, %v4350
        %v4352 = vrot.slane %v4330, %v4351
        %v4354 = vunpack.c.l.s4 1966171168
        %v4355 = vunpack.c.0.s8 %v4354
        %v4356 = vlaneseq
        %v4357 = vshrl.u32 %v4356, 7
        %v4358 = vsub.s32 %v4355, %v4357
        %v4359 = vrot.slane %v4331, %v4358
        %v4360 = vcombine.low %v4338, %v4345
        %v4361 = vcombine.low %v4352, %v4359
        %v4363 = vunpack.c.l.s4 1966171168
        %v4364 = vunpack.c.0.s8 %v4363
        %v4365 = vlaneseq
        %v4366 = vshrl.u32 %v4365, 7
        %v4367 = vsub.s32 %v4364, %v4366
        %v4368 = vrot.slane %v4360, %v4367
        %v4370 = vunpack.c.l.s4 1966171168
        %v4371 = vunpack.c.0.s8 %v4370
        %v4372 = vlaneseq
        %v4373 = vshrl.u32 %v4372, 7
        %v4374 = vsub.s32 %v4371, %v4373
        %v4375 = vrot.slane %v4361, %v4374
        %v4376 = vcombine.low %v4368, %v4375
        %v4377 = vcombine.low %v3033, %v3037
        %v4378 = vcombine.low %v3041, %v3045
        %v4379 = vcombine.low %v3049, %v3053
        %v4380 = vcombine.low %v3057, %v3061
        %v4382 = vunpack.c.l.s4 1966171168
        %v4383 = vunpack.c.0.s8 %v4382
        %v4384 = vlaneseq
        %v4385 = vshrl.u32 %v4384, 7
        %v4386 = vsub.s32 %v4383, %v4385
        %v4387 = vrot.slane %v4377, %v4386
        %v4389 = vunpack.c.l.s4 1966171168
        %v4390 = vunpack.c.0.s8 %v4389
        %v4391 = vlaneseq
        %v4392 = vshrl.u32 %v4391, 7
        %v4393 = vsub.s32 %v4390, %v4392
        %v4394 = vrot.slane %v4378, %v4393
        %v4396 = vunpack.c.l.s4 1966171168
        %v4397 = vunpack.c.0.s8 %v4396
        %v4398 = vlaneseq
        %v4399 = vshrl.u32 %v4398, 7
        %v4400 = vsub.s32 %v4397, %v4399
        %v4401 = vrot.slane %v4379, %v4400
        %v4403 = vunpack.c.l.s4 1966171168
        %v4404 = vunpack.c.0.s8 %v4403
        %v4405 = vlaneseq
        %v4406 = vshrl.u32 %v4405, 7
        %v4407 = vsub.s32 %v4404, %v4406
        %v4408 = vrot.slane %v4380, %v4407
        %v4409 = vcombine.low %v4387, %v4394
        %v4410 = vcombine.low %v4401, %v4408
        %v4412 = vunpack.c.l.s4 1966171168
        %v4413 = vunpack.c.0.s8 %v4412
        %v4414 = vlaneseq
        %v4415 = vshrl.u32 %v4414, 7
        %v4416 = vsub.s32 %v4413, %v4415
        %v4417 = vrot.slane %v4409, %v4416
        %v4419 = vunpack.c.l.s4 1966171168
        %v4420 = vunpack.c.0.s8 %v4419
        %v4421 = vlaneseq
        %v4422 = vshrl.u32 %v4421, 7
        %v4423 = vsub.s32 %v4420, %v4422
        %v4424 = vrot.slane %v4410, %v4423
        %v4425 = vcombine.low %v4417, %v4424
        %v4426 = vcombine.low %v3065, %v3069
        %v4427 = vcombine.low %v3073, %v3077
        %v4428 = vcombine.low %v3081, %v3085
        %v4429 = vcombine.low %v3089, %v3093
        %v4431 = vunpack.c.l.s4 1966171168
        %v4432 = vunpack.c.0.s8 %v4431
        %v4433 = vlaneseq
        %v4434 = vshrl.u32 %v4433, 7
        %v4435 = vsub.s32 %v4432, %v4434
        %v4436 = vrot.slane %v4426, %v4435
        %v4438 = vunpack.c.l.s4 1966171168
        %v4439 = vunpack.c.0.s8 %v4438
        %v4440 = vlaneseq
        %v4441 = vshrl.u32 %v4440, 7
        %v4442 = vsub.s32 %v4439, %v4441
        %v4443 = vrot.slane %v4427, %v4442
        %v4445 = vunpack.c.l.s4 1966171168
        %v4446 = vunpack.c.0.s8 %v4445
        %v4447 = vlaneseq
        %v4448 = vshrl.u32 %v4447, 7
        %v4449 = vsub.s32 %v4446, %v4448
        %v4450 = vrot.slane %v4428, %v4449
        %v4452 = vunpack.c.l.s4 1966171168
        %v4453 = vunpack.c.0.s8 %v4452
        %v4454 = vlaneseq
        %v4455 = vshrl.u32 %v4454, 7
        %v4456 = vsub.s32 %v4453, %v4455
        %v4457 = vrot.slane %v4429, %v4456
        %v4458 = vcombine.low %v4436, %v4443
        %v4459 = vcombine.low %v4450, %v4457
        %v4461 = vunpack.c.l.s4 1966171168
        %v4462 = vunpack.c.0.s8 %v4461
        %v4463 = vlaneseq
        %v4464 = vshrl.u32 %v4463, 7
        %v4465 = vsub.s32 %v4462, %v4464
        %v4466 = vrot.slane %v4458, %v4465
        %v4468 = vunpack.c.l.s4 1966171168
        %v4469 = vunpack.c.0.s8 %v4468
        %v4470 = vlaneseq
        %v4471 = vshrl.u32 %v4470, 7
        %v4472 = vsub.s32 %v4469, %v4471
        %v4473 = vrot.slane %v4459, %v4472
        %v4474 = vcombine.low %v4466, %v4473
        %v4475 = vcombine.low %v3097, %v3101
        %v4476 = vcombine.low %v3105, %v3109
        %v4477 = vcombine.low %v3113, %v3117
        %v4478 = vcombine.low %v3121, %v3125
        %v4480 = vunpack.c.l.s4 1966171168
        %v4481 = vunpack.c.0.s8 %v4480
        %v4482 = vlaneseq
        %v4483 = vshrl.u32 %v4482, 7
        %v4484 = vsub.s32 %v4481, %v4483
        %v4485 = vrot.slane %v4475, %v4484
        %v4487 = vunpack.c.l.s4 1966171168
        %v4488 = vunpack.c.0.s8 %v4487
        %v4489 = vlaneseq
        %v4490 = vshrl.u32 %v4489, 7
        %v4491 = vsub.s32 %v4488, %v4490
        %v4492 = vrot.slane %v4476, %v4491
        %v4494 = vunpack.c.l.s4 1966171168
        %v4495 = vunpack.c.0.s8 %v4494
        %v4496 = vlaneseq
        %v4497 = vshrl.u32 %v4496, 7
        %v4498 = vsub.s32 %v4495, %v4497
        %v4499 = vrot.slane %v4477, %v4498
        %v4501 = vunpack.c.l.s4 1966171168
        %v4502 = vunpack.c.0.s8 %v4501
        %v4503 = vlaneseq
        %v4504 = vshrl.u32 %v4503, 7
        %v4505 = vsub.s32 %v4502, %v4504
        %v4506 = vrot.slane %v4478, %v4505
        %v4507 = vcombine.low %v4485, %v4492
        %v4508 = vcombine.low %v4499, %v4506
        %v4510 = vunpack.c.l.s4 1966171168
        %v4511 = vunpack.c.0.s8 %v4510
        %v4512 = vlaneseq
        %v4513 = vshrl.u32 %v4512, 7
        %v4514 = vsub.s32 %v4511, %v4513
        %v4515 = vrot.slane %v4507, %v4514
        %v4517 = vunpack.c.l.s4 1966171168
        %v4518 = vunpack.c.0.s8 %v4517
        %v4519 = vlaneseq
        %v4520 = vshrl.u32 %v4519, 7
        %v4521 = vsub.s32 %v4518, %v4520
        %v4522 = vrot.slane %v4508, %v4521
        %v4523 = vcombine.low %v4515, %v4522
        %v4524 = vcombine.low %v3129, %v3133
        %v4525 = vcombine.low %v3137, %v3141
        %v4526 = vcombine.low %v3145, %v3149
        %v4527 = vcombine.low %v3153, %v3157
        %v4529 = vunpack.c.l.s4 1966171168
        %v4530 = vunpack.c.0.s8 %v4529
        %v4531 = vlaneseq
        %v4532 = vshrl.u32 %v4531, 7
        %v4533 = vsub.s32 %v4530, %v4532
        %v4534 = vrot.slane %v4524, %v4533
        %v4536 = vunpack.c.l.s4 1966171168
        %v4537 = vunpack.c.0.s8 %v4536
        %v4538 = vlaneseq
        %v4539 = vshrl.u32 %v4538, 7
        %v4540 = vsub.s32 %v4537, %v4539
        %v4541 = vrot.slane %v4525, %v4540
        %v4543 = vunpack.c.l.s4 1966171168
        %v4544 = vunpack.c.0.s8 %v4543
        %v4545 = vlaneseq
        %v4546 = vshrl.u32 %v4545, 7
        %v4547 = vsub.s32 %v4544, %v4546
        %v4548 = vrot.slane %v4526, %v4547
        %v4550 = vunpack.c.l.s4 1966171168
        %v4551 = vunpack.c.0.s8 %v4550
        %v4552 = vlaneseq
        %v4553 = vshrl.u32 %v4552, 7
        %v4554 = vsub.s32 %v4551, %v4553
        %v4555 = vrot.slane %v4527, %v4554
        %v4556 = vcombine.low %v4534, %v4541
        %v4557 = vcombine.low %v4548, %v4555
        %v4559 = vunpack.c.l.s4 1966171168
        %v4560 = vunpack.c.0.s8 %v4559
        %v4561 = vlaneseq
        %v4562 = vshrl.u32 %v4561, 7
        %v4563 = vsub.s32 %v4560, %v4562
        %v4564 = vrot.slane %v4556, %v4563
        %v4566 = vunpack.c.l.s4 1966171168
        %v4567 = vunpack.c.0.s8 %v4566
        %v4568 = vlaneseq
        %v4569 = vshrl.u32 %v4568, 7
        %v4570 = vsub.s32 %v4567, %v4569
        %v4571 = vrot.slane %v4557, %v4570
        %v4572 = vcombine.low %v4564, %v4571
        %v4573 = vcombine.low %v3161, %v3165
        %v4574 = vcombine.low %v3169, %v3173
        %v4575 = vcombine.low %v3177, %v3181
        %v4576 = vcombine.low %v3185, %v3189
        %v4578 = vunpack.c.l.s4 1966171168
        %v4579 = vunpack.c.0.s8 %v4578
        %v4580 = vlaneseq
        %v4581 = vshrl.u32 %v4580, 7
        %v4582 = vsub.s32 %v4579, %v4581
        %v4583 = vrot.slane %v4573, %v4582
        %v4585 = vunpack.c.l.s4 1966171168
        %v4586 = vunpack.c.0.s8 %v4585
        %v4587 = vlaneseq
        %v4588 = vshrl.u32 %v4587, 7
        %v4589 = vsub.s32 %v4586, %v4588
        %v4590 = vrot.slane %v4574, %v4589
        %v4592 = vunpack.c.l.s4 1966171168
        %v4593 = vunpack.c.0.s8 %v4592
        %v4594 = vlaneseq
        %v4595 = vshrl.u32 %v4594, 7
        %v4596 = vsub.s32 %v4593, %v4595
        %v4597 = vrot.slane %v4575, %v4596
        %v4599 = vunpack.c.l.s4 1966171168
        %v4600 = vunpack.c.0.s8 %v4599
        %v4601 = vlaneseq
        %v4602 = vshrl.u32 %v4601, 7
        %v4603 = vsub.s32 %v4600, %v4602
        %v4604 = vrot.slane %v4576, %v4603
        %v4605 = vcombine.low %v4583, %v4590
        %v4606 = vcombine.low %v4597, %v4604
        %v4608 = vunpack.c.l.s4 1966171168
        %v4609 = vunpack.c.0.s8 %v4608
        %v4610 = vlaneseq
        %v4611 = vshrl.u32 %v4610, 7
        %v4612 = vsub.s32 %v4609, %v4611
        %v4613 = vrot.slane %v4605, %v4612
        %v4615 = vunpack.c.l.s4 1966171168
        %v4616 = vunpack.c.0.s8 %v4615
        %v4617 = vlaneseq
        %v4618 = vshrl.u32 %v4617, 7
        %v4619 = vsub.s32 %v4616, %v4618
        %v4620 = vrot.slane %v4606, %v4619
        %v4621 = vcombine.low %v4613, %v4620
        %v4622 = vcombine.low %v3193, %v3197
        %v4623 = vcombine.low %v3201, %v3205
        %v4624 = vcombine.low %v3209, %v3213
        %v4625 = vcombine.low %v3217, %v3221
        %v4627 = vunpack.c.l.s4 1966171168
        %v4628 = vunpack.c.0.s8 %v4627
        %v4629 = vlaneseq
        %v4630 = vshrl.u32 %v4629, 7
        %v4631 = vsub.s32 %v4628, %v4630
        %v4632 = vrot.slane %v4622, %v4631
        %v4634 = vunpack.c.l.s4 1966171168
        %v4635 = vunpack.c.0.s8 %v4634
        %v4636 = vlaneseq
        %v4637 = vshrl.u32 %v4636, 7
        %v4638 = vsub.s32 %v4635, %v4637
        %v4639 = vrot.slane %v4623, %v4638
        %v4641 = vunpack.c.l.s4 1966171168
        %v4642 = vunpack.c.0.s8 %v4641
        %v4643 = vlaneseq
        %v4644 = vshrl.u32 %v4643, 7
        %v4645 = vsub.s32 %v4642, %v4644
        %v4646 = vrot.slane %v4624, %v4645
        %v4648 = vunpack.c.l.s4 1966171168
        %v4649 = vunpack.c.0.s8 %v4648
        %v4650 = vlaneseq
        %v4651 = vshrl.u32 %v4650, 7
        %v4652 = vsub.s32 %v4649, %v4651
        %v4653 = vrot.slane %v4625, %v4652
        %v4654 = vcombine.low %v4632, %v4639
        %v4655 = vcombine.low %v4646, %v4653
        %v4657 = vunpack.c.l.s4 1966171168
        %v4658 = vunpack.c.0.s8 %v4657
        %v4659 = vlaneseq
        %v4660 = vshrl.u32 %v4659, 7
        %v4661 = vsub.s32 %v4658, %v4660
        %v4662 = vrot.slane %v4654, %v4661
        %v4664 = vunpack.c.l.s4 1966171168
        %v4665 = vunpack.c.0.s8 %v4664
        %v4666 = vlaneseq
        %v4667 = vshrl.u32 %v4666, 7
        %v4668 = vsub.s32 %v4665, %v4667
        %v4669 = vrot.slane %v4655, %v4668
        %v4670 = vcombine.low %v4662, %v4669
        %v4671 = vcombine.low %v3225, %v3229
        %v4672 = vcombine.low %v3233, %v3237
        %v4673 = vcombine.low %v3241, %v3245
        %v4674 = vcombine.low %v3249, %v3253
        %v4676 = vunpack.c.l.s4 1966171168
        %v4677 = vunpack.c.0.s8 %v4676
        %v4678 = vlaneseq
        %v4679 = vshrl.u32 %v4678, 7
        %v4680 = vsub.s32 %v4677, %v4679
        %v4681 = vrot.slane %v4671, %v4680
        %v4683 = vunpack.c.l.s4 1966171168
        %v4684 = vunpack.c.0.s8 %v4683
        %v4685 = vlaneseq
        %v4686 = vshrl.u32 %v4685, 7
        %v4687 = vsub.s32 %v4684, %v4686
        %v4688 = vrot.slane %v4672, %v4687
        %v4690 = vunpack.c.l.s4 1966171168
        %v4691 = vunpack.c.0.s8 %v4690
        %v4692 = vlaneseq
        %v4693 = vshrl.u32 %v4692, 7
        %v4694 = vsub.s32 %v4691, %v4693
        %v4695 = vrot.slane %v4673, %v4694
        %v4697 = vunpack.c.l.s4 1966171168
        %v4698 = vunpack.c.0.s8 %v4697
        %v4699 = vlaneseq
        %v4700 = vshrl.u32 %v4699, 7
        %v4701 = vsub.s32 %v4698, %v4700
        %v4702 = vrot.slane %v4674, %v4701
        %v4703 = vcombine.low %v4681, %v4688
        %v4704 = vcombine.low %v4695, %v4702
        %v4706 = vunpack.c.l.s4 1966171168
        %v4707 = vunpack.c.0.s8 %v4706
        %v4708 = vlaneseq
        %v4709 = vshrl.u32 %v4708, 7
        %v4710 = vsub.s32 %v4707, %v4709
        %v4711 = vrot.slane %v4703, %v4710
        %v4713 = vunpack.c.l.s4 1966171168
        %v4714 = vunpack.c.0.s8 %v4713
        %v4715 = vlaneseq
        %v4716 = vshrl.u32 %v4715, 7
        %v4717 = vsub.s32 %v4714, %v4716
        %v4718 = vrot.slane %v4704, %v4717
        %v4719 = vcombine.low %v4711, %v4718
        %v4720 = vcombine.low %v3257, %v3261
        %v4721 = vcombine.low %v3265, %v3269
        %v4722 = vcombine.low %v3273, %v3277
        %v4723 = vcombine.low %v3281, %v3285
        %v4725 = vunpack.c.l.s4 1966171168
        %v4726 = vunpack.c.0.s8 %v4725
        %v4727 = vlaneseq
        %v4728 = vshrl.u32 %v4727, 7
        %v4729 = vsub.s32 %v4726, %v4728
        %v4730 = vrot.slane %v4720, %v4729
        %v4732 = vunpack.c.l.s4 1966171168
        %v4733 = vunpack.c.0.s8 %v4732
        %v4734 = vlaneseq
        %v4735 = vshrl.u32 %v4734, 7
        %v4736 = vsub.s32 %v4733, %v4735
        %v4737 = vrot.slane %v4721, %v4736
        %v4739 = vunpack.c.l.s4 1966171168
        %v4740 = vunpack.c.0.s8 %v4739
        %v4741 = vlaneseq
        %v4742 = vshrl.u32 %v4741, 7
        %v4743 = vsub.s32 %v4740, %v4742
        %v4744 = vrot.slane %v4722, %v4743
        %v4746 = vunpack.c.l.s4 1966171168
        %v4747 = vunpack.c.0.s8 %v4746
        %v4748 = vlaneseq
        %v4749 = vshrl.u32 %v4748, 7
        %v4750 = vsub.s32 %v4747, %v4749
        %v4751 = vrot.slane %v4723, %v4750
        %v4752 = vcombine.low %v4730, %v4737
        %v4753 = vcombine.low %v4744, %v4751
        %v4755 = vunpack.c.l.s4 1966171168
        %v4756 = vunpack.c.0.s8 %v4755
        %v4757 = vlaneseq
        %v4758 = vshrl.u32 %v4757, 7
        %v4759 = vsub.s32 %v4756, %v4758
        %v4760 = vrot.slane %v4752, %v4759
        %v4762 = vunpack.c.l.s4 1966171168
        %v4763 = vunpack.c.0.s8 %v4762
        %v4764 = vlaneseq
        %v4765 = vshrl.u32 %v4764, 7
        %v4766 = vsub.s32 %v4763, %v4765
        %v4767 = vrot.slane %v4753, %v4766
        %v4768 = vcombine.low %v4760, %v4767
        %v4769 = vcombine.low %v3289, %v3293
        %v4770 = vcombine.low %v3297, %v3301
        %v4771 = vcombine.low %v3305, %v3309
        %v4772 = vcombine.low %v3313, %v3317
        %v4774 = vunpack.c.l.s4 1966171168
        %v4775 = vunpack.c.0.s8 %v4774
        %v4776 = vlaneseq
        %v4777 = vshrl.u32 %v4776, 7
        %v4778 = vsub.s32 %v4775, %v4777
        %v4779 = vrot.slane %v4769, %v4778
        %v4781 = vunpack.c.l.s4 1966171168
        %v4782 = vunpack.c.0.s8 %v4781
        %v4783 = vlaneseq
        %v4784 = vshrl.u32 %v4783, 7
        %v4785 = vsub.s32 %v4782, %v4784
        %v4786 = vrot.slane %v4770, %v4785
        %v4788 = vunpack.c.l.s4 1966171168
        %v4789 = vunpack.c.0.s8 %v4788
        %v4790 = vlaneseq
        %v4791 = vshrl.u32 %v4790, 7
        %v4792 = vsub.s32 %v4789, %v4791
        %v4793 = vrot.slane %v4771, %v4792
        %v4795 = vunpack.c.l.s4 1966171168
        %v4796 = vunpack.c.0.s8 %v4795
        %v4797 = vlaneseq
        %v4798 = vshrl.u32 %v4797, 7
        %v4799 = vsub.s32 %v4796, %v4798
        %v4800 = vrot.slane %v4772, %v4799
        %v4801 = vcombine.low %v4779, %v4786
        %v4802 = vcombine.low %v4793, %v4800
        %v4804 = vunpack.c.l.s4 1966171168
        %v4805 = vunpack.c.0.s8 %v4804
        %v4806 = vlaneseq
        %v4807 = vshrl.u32 %v4806, 7
        %v4808 = vsub.s32 %v4805, %v4807
        %v4809 = vrot.slane %v4801, %v4808
        %v4811 = vunpack.c.l.s4 1966171168
        %v4812 = vunpack.c.0.s8 %v4811
        %v4813 = vlaneseq
        %v4814 = vshrl.u32 %v4813, 7
        %v4815 = vsub.s32 %v4812, %v4814
        %v4816 = vrot.slane %v4802, %v4815
        %v4817 = vcombine.low %v4809, %v4816
        %v4818 = vcombine.low %v3321, %v3325
        %v4819 = vcombine.low %v3329, %v3333
        %v4820 = vcombine.low %v3337, %v3341
        %v4821 = vcombine.low %v3345, %v3349
        %v4823 = vunpack.c.l.s4 1966171168
        %v4824 = vunpack.c.0.s8 %v4823
        %v4825 = vlaneseq
        %v4826 = vshrl.u32 %v4825, 7
        %v4827 = vsub.s32 %v4824, %v4826
        %v4828 = vrot.slane %v4818, %v4827
        %v4830 = vunpack.c.l.s4 1966171168
        %v4831 = vunpack.c.0.s8 %v4830
        %v4832 = vlaneseq
        %v4833 = vshrl.u32 %v4832, 7
        %v4834 = vsub.s32 %v4831, %v4833
        %v4835 = vrot.slane %v4819, %v4834
        %v4837 = vunpack.c.l.s4 1966171168
        %v4838 = vunpack.c.0.s8 %v4837
        %v4839 = vlaneseq
        %v4840 = vshrl.u32 %v4839, 7
        %v4841 = vsub.s32 %v4838, %v4840
        %v4842 = vrot.slane %v4820, %v4841
        %v4844 = vunpack.c.l.s4 1966171168
        %v4845 = vunpack.c.0.s8 %v4844
        %v4846 = vlaneseq
        %v4847 = vshrl.u32 %v4846, 7
        %v4848 = vsub.s32 %v4845, %v4847
        %v4849 = vrot.slane %v4821, %v4848
        %v4850 = vcombine.low %v4828, %v4835
        %v4851 = vcombine.low %v4842, %v4849
        %v4853 = vunpack.c.l.s4 1966171168
        %v4854 = vunpack.c.0.s8 %v4853
        %v4855 = vlaneseq
        %v4856 = vshrl.u32 %v4855, 7
        %v4857 = vsub.s32 %v4854, %v4856
        %v4858 = vrot.slane %v4850, %v4857
        %v4860 = vunpack.c.l.s4 1966171168
        %v4861 = vunpack.c.0.s8 %v4860
        %v4862 = vlaneseq
        %v4863 = vshrl.u32 %v4862, 7
        %v4864 = vsub.s32 %v4861, %v4863
        %v4865 = vrot.slane %v4851, %v4864
        %v4866 = vcombine.low %v4858, %v4865
        %v4867 = vcombine.low %v3353, %v3357
        %v4868 = vcombine.low %v3361, %v3365
        %v4869 = vcombine.low %v3369, %v3373
        %v4870 = vcombine.low %v3377, %v3381
        %v4872 = vunpack.c.l.s4 1966171168
        %v4873 = vunpack.c.0.s8 %v4872
        %v4874 = vlaneseq
        %v4875 = vshrl.u32 %v4874, 7
        %v4876 = vsub.s32 %v4873, %v4875
        %v4877 = vrot.slane %v4867, %v4876
        %v4879 = vunpack.c.l.s4 1966171168
        %v4880 = vunpack.c.0.s8 %v4879
        %v4881 = vlaneseq
        %v4882 = vshrl.u32 %v4881, 7
        %v4883 = vsub.s32 %v4880, %v4882
        %v4884 = vrot.slane %v4868, %v4883
        %v4886 = vunpack.c.l.s4 1966171168
        %v4887 = vunpack.c.0.s8 %v4886
        %v4888 = vlaneseq
        %v4889 = vshrl.u32 %v4888, 7
        %v4890 = vsub.s32 %v4887, %v4889
        %v4891 = vrot.slane %v4869, %v4890
        %v4893 = vunpack.c.l.s4 1966171168
        %v4894 = vunpack.c.0.s8 %v4893
        %v4895 = vlaneseq
        %v4896 = vshrl.u32 %v4895, 7
        %v4897 = vsub.s32 %v4894, %v4896
        %v4898 = vrot.slane %v4870, %v4897
        %v4899 = vcombine.low %v4877, %v4884
        %v4900 = vcombine.low %v4891, %v4898
        %v4902 = vunpack.c.l.s4 1966171168
        %v4903 = vunpack.c.0.s8 %v4902
        %v4904 = vlaneseq
        %v4905 = vshrl.u32 %v4904, 7
        %v4906 = vsub.s32 %v4903, %v4905
        %v4907 = vrot.slane %v4899, %v4906
        %v4909 = vunpack.c.l.s4 1966171168
        %v4910 = vunpack.c.0.s8 %v4909
        %v4911 = vlaneseq
        %v4912 = vshrl.u32 %v4911, 7
        %v4913 = vsub.s32 %v4910, %v4912
        %v4914 = vrot.slane %v4900, %v4913
        %v4915 = vcombine.low %v4907, %v4914
        %v4916 = vcombine.low %v3385, %v3389
        %v4917 = vcombine.low %v3393, %v3397
        %v4918 = vcombine.low %v3401, %v3405
        %v4919 = vcombine.low %v3409, %v3413
        %v4921 = vunpack.c.l.s4 1966171168
        %v4922 = vunpack.c.0.s8 %v4921
        %v4923 = vlaneseq
        %v4924 = vshrl.u32 %v4923, 7
        %v4925 = vsub.s32 %v4922, %v4924
        %v4926 = vrot.slane %v4916, %v4925
        %v4928 = vunpack.c.l.s4 1966171168
        %v4929 = vunpack.c.0.s8 %v4928
        %v4930 = vlaneseq
        %v4931 = vshrl.u32 %v4930, 7
        %v4932 = vsub.s32 %v4929, %v4931
        %v4933 = vrot.slane %v4917, %v4932
        %v4935 = vunpack.c.l.s4 1966171168
        %v4936 = vunpack.c.0.s8 %v4935
        %v4937 = vlaneseq
        %v4938 = vshrl.u32 %v4937, 7
        %v4939 = vsub.s32 %v4936, %v4938
        %v4940 = vrot.slane %v4918, %v4939
        %v4942 = vunpack.c.l.s4 1966171168
        %v4943 = vunpack.c.0.s8 %v4942
        %v4944 = vlaneseq
        %v4945 = vshrl.u32 %v4944, 7
        %v4946 = vsub.s32 %v4943, %v4945
        %v4947 = vrot.slane %v4919, %v4946
        %v4948 = vcombine.low %v4926, %v4933
        %v4949 = vcombine.low %v4940, %v4947
        %v4951 = vunpack.c.l.s4 1966171168
        %v4952 = vunpack.c.0.s8 %v4951
        %v4953 = vlaneseq
        %v4954 = vshrl.u32 %v4953, 7
        %v4955 = vsub.s32 %v4952, %v4954
        %v4956 = vrot.slane %v4948, %v4955
        %v4958 = vunpack.c.l.s4 1966171168
        %v4959 = vunpack.c.0.s8 %v4958
        %v4960 = vlaneseq
        %v4961 = vshrl.u32 %v4960, 7
        %v4962 = vsub.s32 %v4959, %v4961
        %v4963 = vrot.slane %v4949, %v4962
        %v4964 = vcombine.low %v4956, %v4963
        %v4965 = vcombine.low %v3417, %v3421
        %v4966 = vcombine.low %v3425, %v3429
        %v4967 = vcombine.low %v3433, %v3437
        %v4968 = vcombine.low %v3441, %v3445
        %v4970 = vunpack.c.l.s4 1966171168
        %v4971 = vunpack.c.0.s8 %v4970
        %v4972 = vlaneseq
        %v4973 = vshrl.u32 %v4972, 7
        %v4974 = vsub.s32 %v4971, %v4973
        %v4975 = vrot.slane %v4965, %v4974
        %v4977 = vunpack.c.l.s4 1966171168
        %v4978 = vunpack.c.0.s8 %v4977
        %v4979 = vlaneseq
        %v4980 = vshrl.u32 %v4979, 7
        %v4981 = vsub.s32 %v4978, %v4980
        %v4982 = vrot.slane %v4966, %v4981
        %v4984 = vunpack.c.l.s4 1966171168
        %v4985 = vunpack.c.0.s8 %v4984
        %v4986 = vlaneseq
        %v4987 = vshrl.u32 %v4986, 7
        %v4988 = vsub.s32 %v4985, %v4987
        %v4989 = vrot.slane %v4967, %v4988
        %v4991 = vunpack.c.l.s4 1966171168
        %v4992 = vunpack.c.0.s8 %v4991
        %v4993 = vlaneseq
        %v4994 = vshrl.u32 %v4993, 7
        %v4995 = vsub.s32 %v4992, %v4994
        %v4996 = vrot.slane %v4968, %v4995
        %v4997 = vcombine.low %v4975, %v4982
        %v4998 = vcombine.low %v4989, %v4996
        %v5000 = vunpack.c.l.s4 1966171168
        %v5001 = vunpack.c.0.s8 %v5000
        %v5002 = vlaneseq
        %v5003 = vshrl.u32 %v5002, 7
        %v5004 = vsub.s32 %v5001, %v5003
        %v5005 = vrot.slane %v4997, %v5004
        %v5007 = vunpack.c.l.s4 1966171168
        %v5008 = vunpack.c.0.s8 %v5007
        %v5009 = vlaneseq
        %v5010 = vshrl.u32 %v5009, 7
        %v5011 = vsub.s32 %v5008, %v5010
        %v5012 = vrot.slane %v4998, %v5011
        %v5013 = vcombine.low %v5005, %v5012
        %5014 = vset.pattern.permute.xlu0 0
        %5015 = vperm.xlu0 %5014, %v3494
        %v5016 = vpop.permute.xlu0 %5015
        %5017 = vset.pattern.permute.xlu0 0
        %5018 = vperm.xlu0 %5017, %v3543
        %v5019 = vpop.permute.xlu0 %5018
        %5020 = vset.pattern.permute.xlu0 0
        %5021 = vperm.xlu0 %5020, %v3592
        %v5022 = vpop.permute.xlu0 %5021
        %5023 = vset.pattern.permute.xlu0 0
        %5024 = vperm.xlu0 %5023, %v3641
        %v5025 = vpop.permute.xlu0 %5024
        %5026 = vset.pattern.permute.xlu0 0
        %5027 = vperm.xlu0 %5026, %v3690
        %v5028 = vpop.permute.xlu0 %5027
        %5029 = vset.pattern.permute.xlu0 0
        %5030 = vperm.xlu0 %5029, %v3739
        %v5031 = vpop.permute.xlu0 %5030
        %5032 = vset.pattern.permute.xlu0 0
        %5033 = vperm.xlu0 %5032, %v3788
        %v5034 = vpop.permute.xlu0 %5033
        %5035 = vset.pattern.permute.xlu0 0
        %5036 = vperm.xlu0 %5035, %v3837
        %v5037 = vpop.permute.xlu0 %5036
        %5038 = vset.pattern.permute.xlu0 0
        %5039 = vperm.xlu0 %5038, %v3886
        %v5040 = vpop.permute.xlu0 %5039
        %5041 = vset.pattern.permute.xlu0 0
        %5042 = vperm.xlu0 %5041, %v3935
        %v5043 = vpop.permute.xlu0 %5042
        %5044 = vset.pattern.permute.xlu0 0
        %5045 = vperm.xlu0 %5044, %v3984
        %v5046 = vpop.permute.xlu0 %5045
        %5047 = vset.pattern.permute.xlu0 0
        %5048 = vperm.xlu0 %5047, %v4033
        %v5049 = vpop.permute.xlu0 %5048
        %5050 = vset.pattern.permute.xlu0 0
        %5051 = vperm.xlu0 %5050, %v4082
        %v5052 = vpop.permute.xlu0 %5051
        %5053 = vset.pattern.permute.xlu0 0
        %5054 = vperm.xlu0 %5053, %v4131
        %v5055 = vpop.permute.xlu0 %5054
        %5056 = vset.pattern.permute.xlu0 0
        %5057 = vperm.xlu0 %5056, %v4180
        %v5058 = vpop.permute.xlu0 %5057
        %5059 = vset.pattern.permute.xlu0 0
        %5060 = vperm.xlu0 %5059, %v4229
        %v5061 = vpop.permute.xlu0 %5060
        %5062 = vset.pattern.permute.xlu0 0
        %5063 = vperm.xlu0 %5062, %v4278
        %v5064 = vpop.permute.xlu0 %5063
        %5065 = vset.pattern.permute.xlu0 0
        %5066 = vperm.xlu0 %5065, %v4327
        %v5067 = vpop.permute.xlu0 %5066
        %5068 = vset.pattern.permute.xlu0 0
        %5069 = vperm.xlu0 %5068, %v4376
        %v5070 = vpop.permute.xlu0 %5069
        %5071 = vset.pattern.permute.xlu0 0
        %5072 = vperm.xlu0 %5071, %v4425
        %v5073 = vpop.permute.xlu0 %5072
        %5074 = vset.pattern.permute.xlu0 0
        %5075 = vperm.xlu0 %5074, %v4474
        %v5076 = vpop.permute.xlu0 %5075
        %5077 = vset.pattern.permute.xlu0 0
        %5078 = vperm.xlu0 %5077, %v4523
        %v5079 = vpop.permute.xlu0 %5078
        %5080 = vset.pattern.permute.xlu0 0
        %5081 = vperm.xlu0 %5080, %v4572
        %v5082 = vpop.permute.xlu0 %5081
        %5083 = vset.pattern.permute.xlu0 0
        %5084 = vperm.xlu0 %5083, %v4621
        %v5085 = vpop.permute.xlu0 %5084
        %5086 = vset.pattern.permute.xlu0 0
        %5087 = vperm.xlu0 %5086, %v4670
        %v5088 = vpop.permute.xlu0 %5087
        %5089 = vset.pattern.permute.xlu0 0
        %5090 = vperm.xlu0 %5089, %v4719
        %v5091 = vpop.permute.xlu0 %5090
        %5092 = vset.pattern.permute.xlu0 0
        %5093 = vperm.xlu0 %5092, %v4768
        %v5094 = vpop.permute.xlu0 %5093
        %5095 = vset.pattern.permute.xlu0 0
        %5096 = vperm.xlu0 %5095, %v4817
        %v5097 = vpop.permute.xlu0 %5096
        %5098 = vset.pattern.permute.xlu0 0
        %5099 = vperm.xlu0 %5098, %v4866
        %v5100 = vpop.permute.xlu0 %5099
        %5101 = vset.pattern.permute.xlu0 0
        %5102 = vperm.xlu0 %5101, %v4915
        %v5103 = vpop.permute.xlu0 %5102
        %5104 = vset.pattern.permute.xlu0 0
        %5105 = vperm.xlu0 %5104, %v4964
        %v5106 = vpop.permute.xlu0 %5105
        %5107 = vset.pattern.permute.xlu0 0
        %5108 = vperm.xlu0 %5107, %v5013
        %v5109 = vpop.permute.xlu0 %5108
        %v5110 = vlaneseq
        %v5111 = vand.u32 %v5110, 127
        %v5112 = vlaneseq
        %v5113 = vshrl.u32 %v5112, 7
        %v5114 = vsub.s32 %v5111, %v5113
        %v5115 = vrot.slane %v5016, %v5114
        %v5116 = vadd.s32 %v5111, 4294967288
        %v5117 = vlaneseq
        %v5118 = vshrl.u32 %v5117, 7
        %v5119 = vsub.s32 %v5116, %v5118
        %v5120 = vrot.slane %v5019, %v5119
        %vm5121 = vcmask 130112
        %v5122 = vsel %vm5121, %v5120, %v5115
        %v5123 = vadd.s32 %v5111, 4294967280
        %v5124 = vlaneseq
        %v5125 = vshrl.u32 %v5124, 7
        %v5126 = vsub.s32 %v5123, %v5125
        %v5127 = vrot.slane %v5022, %v5126
        %vm5128 = vcmask 195712
        %v5129 = vsel %vm5128, %v5127, %v5122
        %v5130 = vadd.s32 %v5111, 4294967272
        %v5131 = vlaneseq
        %v5132 = vshrl.u32 %v5131, 7
        %v5133 = vsub.s32 %v5130, %v5132
        %v5134 = vrot.slane %v5025, %v5133
        %vm5135 = vcmask 261312
        %v5136 = vsel %vm5135, %v5134, %v5129
        %v5137 = vadd.s32 %v5111, 4294967264
        %v5138 = vlaneseq
        %v5139 = vshrl.u32 %v5138, 7
        %v5140 = vsub.s32 %v5137, %v5139
        %v5141 = vrot.slane %v5028, %v5140
        %vm5142 = vcmask 326912
        %v5143 = vsel %vm5142, %v5141, %v5136
        %v5144 = vadd.s32 %v5111, 4294967256
        %v5145 = vlaneseq
        %v5146 = vshrl.u32 %v5145, 7
        %v5147 = vsub.s32 %v5144, %v5146
        %v5148 = vrot.slane %v5031, %v5147
        %vm5149 = vcmask 392512
        %v5150 = vsel %vm5149, %v5148, %v5143
        %v5151 = vadd.s32 %v5111, 4294967248
        %v5152 = vlaneseq
        %v5153 = vshrl.u32 %v5152, 7
        %v5154 = vsub.s32 %v5151, %v5153
        %v5155 = vrot.slane %v5034, %v5154
        %vm5156 = vcmask 458112
        %v5157 = vsel %vm5156, %v5155, %v5150
        %v5158 = vadd.s32 %v5111, 4294967240
        %v5159 = vlaneseq
        %v5160 = vshrl.u32 %v5159, 7
        %v5161 = vsub.s32 %v5158, %v5160
        %v5162 = vrot.slane %v5037, %v5161
        %vm5163 = vcmask 523712
        %v5164 = vsel %vm5163, %v5162, %v5157
        %v5165 = vadd.s32 %v5111, 4294967232
        %v5166 = vlaneseq
        %v5167 = vshrl.u32 %v5166, 7
        %v5168 = vsub.s32 %v5165, %v5167
        %v5169 = vrot.slane %v5040, %v5168
        %vm5170 = vcmask 589312
        %v5171 = vsel %vm5170, %v5169, %v5164
        %v5172 = vadd.s32 %v5111, 4294967224
        %v5173 = vlaneseq
        %v5174 = vshrl.u32 %v5173, 7
        %v5175 = vsub.s32 %v5172, %v5174
        %v5176 = vrot.slane %v5043, %v5175
        %vm5177 = vcmask 654912
        %v5178 = vsel %vm5177, %v5176, %v5171
        %v5179 = vadd.s32 %v5111, 4294967216
        %v5180 = vlaneseq
        %v5181 = vshrl.u32 %v5180, 7
        %v5182 = vsub.s32 %v5179, %v5181
        %v5183 = vrot.slane %v5046, %v5182
        %vm5184 = vcmask 720512
        %v5185 = vsel %vm5184, %v5183, %v5178
        %v5186 = vadd.s32 %v5111, 4294967208
        %v5187 = vlaneseq
        %v5188 = vshrl.u32 %v5187, 7
        %v5189 = vsub.s32 %v5186, %v5188
        %v5190 = vrot.slane %v5049, %v5189
        %vm5191 = vcmask 786112
        %v5192 = vsel %vm5191, %v5190, %v5185
        %v5193 = vadd.s32 %v5111, 4294967200
        %v5194 = vlaneseq
        %v5195 = vshrl.u32 %v5194, 7
        %v5196 = vsub.s32 %v5193, %v5195
        %v5197 = vrot.slane %v5052, %v5196
        %vm5198 = vcmask 851712
        %v5199 = vsel %vm5198, %v5197, %v5192
        %v5200 = vadd.s32 %v5111, 4294967192
        %v5201 = vlaneseq
        %v5202 = vshrl.u32 %v5201, 7
        %v5203 = vsub.s32 %v5200, %v5202
        %v5204 = vrot.slane %v5055, %v5203
        %vm5205 = vcmask 917312
        %v5206 = vsel %vm5205, %v5204, %v5199
        %v5207 = vadd.s32 %v5111, 4294967184
        %v5208 = vlaneseq
        %v5209 = vshrl.u32 %v5208, 7
        %v5210 = vsub.s32 %v5207, %v5209
        %v5211 = vrot.slane %v5058, %v5210
        %vm5212 = vcmask 982912
        %v5213 = vsel %vm5212, %v5211, %v5206
        %v5214 = vadd.s32 %v5111, 4294967176
        %v5215 = vlaneseq
        %v5216 = vshrl.u32 %v5215, 7
        %v5217 = vsub.s32 %v5214, %v5216
        %v5218 = vrot.slane %v5061, %v5217
        %vm5219 = vcmask 1048512
        %v5220 = vsel %vm5219, %v5218, %v5213
        %v5221 = vlaneseq
        %v5222 = vshrl.u32 %v5221, 7
        %v5223 = vsub.s32 %v5111, %v5222
        %v5224 = vrot.slane %v5064, %v5223
        %v5225 = vlaneseq
        %v5226 = vshrl.u32 %v5225, 7
        %v5227 = vsub.s32 %v5116, %v5226
        %v5228 = vrot.slane %v5067, %v5227
        %v5229 = vsel %vm5121, %v5228, %v5224
        %v5230 = vlaneseq
        %v5231 = vshrl.u32 %v5230, 7
        %v5232 = vsub.s32 %v5123, %v5231
        %v5233 = vrot.slane %v5070, %v5232
        %v5234 = vsel %vm5128, %v5233, %v5229
        %v5235 = vlaneseq
        %v5236 = vshrl.u32 %v5235, 7
        %v5237 = vsub.s32 %v5130, %v5236
        %v5238 = vrot.slane %v5073, %v5237
        %v5239 = vsel %vm5135, %v5238, %v5234
        %v5240 = vlaneseq
        %v5241 = vshrl.u32 %v5240, 7
        %v5242 = vsub.s32 %v5137, %v5241
        %v5243 = vrot.slane %v5076, %v5242
        %v5244 = vsel %vm5142, %v5243, %v5239
        %v5245 = vlaneseq
        %v5246 = vshrl.u32 %v5245, 7
        %v5247 = vsub.s32 %v5144, %v5246
        %v5248 = vrot.slane %v5079, %v5247
        %v5249 = vsel %vm5149, %v5248, %v5244
        %v5250 = vlaneseq
        %v5251 = vshrl.u32 %v5250, 7
        %v5252 = vsub.s32 %v5151, %v5251
        %v5253 = vrot.slane %v5082, %v5252
        %v5254 = vsel %vm5156, %v5253, %v5249
        %v5255 = vlaneseq
        %v5256 = vshrl.u32 %v5255, 7
        %v5257 = vsub.s32 %v5158, %v5256
        %v5258 = vrot.slane %v5085, %v5257
        %v5259 = vsel %vm5163, %v5258, %v5254
        %v5260 = vlaneseq
        %v5261 = vshrl.u32 %v5260, 7
        %v5262 = vsub.s32 %v5165, %v5261
        %v5263 = vrot.slane %v5088, %v5262
        %v5264 = vsel %vm5170, %v5263, %v5259
        %v5265 = vlaneseq
        %v5266 = vshrl.u32 %v5265, 7
        %v5267 = vsub.s32 %v5172, %v5266
        %v5268 = vrot.slane %v5091, %v5267
        %v5269 = vsel %vm5177, %v5268, %v5264
        %v5270 = vlaneseq
        %v5271 = vshrl.u32 %v5270, 7
        %v5272 = vsub.s32 %v5179, %v5271
        %v5273 = vrot.slane %v5094, %v5272
        %v5274 = vsel %vm5184, %v5273, %v5269
        %v5275 = vlaneseq
        %v5276 = vshrl.u32 %v5275, 7
        %v5277 = vsub.s32 %v5186, %v5276
        %v5278 = vrot.slane %v5097, %v5277
        %v5279 = vsel %vm5191, %v5278, %v5274
        %v5280 = vlaneseq
        %v5281 = vshrl.u32 %v5280, 7
        %v5282 = vsub.s32 %v5193, %v5281
        %v5283 = vrot.slane %v5100, %v5282
        %v5284 = vsel %vm5198, %v5283, %v5279
        %v5285 = vlaneseq
        %v5286 = vshrl.u32 %v5285, 7
        %v5287 = vsub.s32 %v5200, %v5286
        %v5288 = vrot.slane %v5103, %v5287
        %v5289 = vsel %vm5205, %v5288, %v5284
        %v5290 = vlaneseq
        %v5291 = vshrl.u32 %v5290, 7
        %v5292 = vsub.s32 %v5207, %v5291
        %v5293 = vrot.slane %v5106, %v5292
        %v5294 = vsel %vm5212, %v5293, %v5289
        %v5295 = vlaneseq
        %v5296 = vshrl.u32 %v5295, 7
        %v5297 = vsub.s32 %v5214, %v5296
        %v5298 = vrot.slane %v5109, %v5297
        %v5299 = vsel %vm5219, %v5298, %v5294
        %v5300 = vcombine.low %v5220, %v5299
        %v5302 = vunpack.c.l.s4 1966171168
        %v5303 = vunpack.c.0.s8 %v5302
        %v5304 = vlaneseq
        %v5305 = vshrl.u32 %v5304, 7
        %v5306 = vsub.s32 %v5303, %v5305
        %v5307 = vrot.slane %v5300, %v5306
        %v5309 = vunpack.c.l.s4 1966171168
        %v5310 = vunpack.c.0.s8 %v5309
        %v5311 = vlaneseq
        %v5312 = vshrl.u32 %v5311, 7
        %v5313 = vsub.s32 %v5310, %v5312
        %v5314 = vrot.slane %v5307, %v5313
        %v5316 = vlaneseq
        %vm5317 = vcmp.ge.s32.totalorder %v5316, 0
        %vm5318 = vcmp.lt.s32.totalorder %v5316, 256
        %vm5319 = vmand %vm5317, %vm5318
        %5320 = vst.msk [vmem:[%s314] sm:$0x3] %vm5319, %v5314
        %s5321 = sand.u32 %s165, 1
        %s5322 = scalar_lea.sflag [#allocation5], %s5321
        %s5323 = sand.u32 %s165, 1
        %s5324 = smul.addr %s5323, 2
        %s5325 = scalar_lea.vmem [#allocation11], %s5324
        // Predicated region
        $region61: #{tpu_custom_call.1} parent=43 // pred_check
          %p5326 = pneg %p175
        $region62: #{tpu_custom_call.1} parent=43 // pred_check_branch
          %5328 = sbr.rel (%p5326) target = $region64
        $region63: #{tpu_custom_call.1} parent=43 // pred_region
          %s5329 = smul.u32 2, %s26
          %s5331 = ssub.s32 32, 32
          %5332 = vsyncadd %s5322, %s5331
          %s5333 = smul.addr %s5329, 16
          %s5334 = scalar_lea.hbm %s6, %s5333
          %s5336 = sshll.u32 %s5325, 4
          %s5337 = int_to_ptr.vmem [resolvable:$true] %s5336
          %5339 = dma.vmem_to_hbm [thread:$0]  %s5337, 32, %s5334, %s5322
        $region64: #{tpu_custom_call.1} parent=43 // pred_fallthru
          _
      $region44: #{tpu_custom_call.1} parent=5 // pred_fallthru
        _
      %p5340 = scmp.le.s32.totalorder 2, %s21
      // Predicated region
      $region65: #{tpu_custom_call.1} parent=5 // pred_check
        %p5341 = pneg %p5340
      $region66: #{tpu_custom_call.1} parent=5 // pred_check_branch
        %5343 = sbr.rel (%p5341) target = $region68
      $region67: #{tpu_custom_call.1} parent=5 // pred_region
        %s5344 = ssub.s32 %s21, 2
        // Predicated region
        $region69: #{tpu_custom_call.1} parent=67 // pred_check
          %p5345 = pneg %p181
        $region70: #{tpu_custom_call.1} parent=67 // pred_check_branch
          %5347 = sbr.rel (%p5345) target = $region72
        $region71: #{tpu_custom_call.1} parent=67 // pred_region
          %s5348 = sand.u32 %s166, 1
          %s5349 = scalar_lea.sflag [#allocation5], %s5348
          %s5350 = sand.u32 %s166, 1
          %s5351 = smul.addr %s5350, 2
          %s5352 = scalar_lea.vmem [#allocation11], %s5351
          %5353 = dma.done %s5349, 32
        $region72: #{tpu_custom_call.1} parent=67 // pred_fallthru
          _
      $region68: #{tpu_custom_call.1} parent=5 // pred_fallthru
        _
    $region6: #{tpu_custom_call.1} parent=1 // loop_footer
      %s25 = sadd.s32 1, %s21
    $region7: #{tpu_custom_call.1} parent=1 // loop_footer_branch
      %20 = sbr.rel target = $region3
    $region8: #{tpu_custom_call.1} parent=1 // loop_exit
      _
    %5354 = vsyncpa [#allocation4], 1
    %s5355 = scalar_lea.sflag [#allocation4], 1
    %5356 = vsyncpa %s5355, 1
    %5357 = vsyncpa [#allocation7], 1
    %5358 = vsyncpa [#allocation10], 1
    %5359 = vsyncpa [#allocation5], 1
    %s5360 = scalar_lea.sflag [#allocation5], 1
    %5361 = vsyncpa %s5360, 1

// kernel: tpu_custom_call.1
$region0: #{tpu_custom_call.1}
  #allocation0 [shape = 'u32[]', space=smem, size = 0x4, offset = 0x4, fixed_abs, tag = 'smem constant byte address 0x4 - core index']
  #allocation1 [shape = 'u32[144,128]{1,0:T(1,128)}', space=vmem, size = 0x12000, scoped, tag = 'internal scratch']
  #allocation2 [shape = 'f32[1,1]{1,0:T(1,128)S(6)}', space=smem, size = 0x200, scoped, tag = 'scoped memory for tpu_custom_call.1']
  %s0 = inlined_call_operand.hbm [shape: f32[512,128], index: 0, kind: input, shape index: {}]
  %s1 = inlined_call_operand.hbm [shape: f32[2,4,128], index: 1, kind: input, shape index: {}]
  %s2 = inlined_call_operand.hbm [shape: bf16[2,128,128], index: 2, kind: input, shape index: {}]
  %s3 = inlined_call_operand.hbm [shape: bf16[2,128,128], index: 3, kind: input, shape index: {}]
  %s4 = inlined_call_operand.vmem [shape: f32[3,128], index: 4, kind: input, shape index: {}]
  %s5 = inlined_call_operand.<no memory space> [shape: f32[1,1], index: 5, kind: input, shape index: {}]
  %s6 = inlined_call_operand.hbm [shape: f32[1,512], index: 6, kind: output, shape index: {}]
  %s7 = sld [smem:[#allocation0]]
  $region73: #{tpu_custom_call.1} parent=0
    _
  %s9 = ssub.s32 1, %s7
  %s10 = scalar_select 0, %s9, %s7
  %11 = sst [smem:[#allocation2]] %s5
  $region1: #{tpu_custom_call.1} parent=0
    #allocation3 [shape = 'u8[262144]{0}', space=vmem, size = 0x40000, scoped, tag = 'input window, operand 0']
    #allocation4 [shape = 's32[2]{0}', space=sflag, size = 0x8, scoped, tag = 'scoped memory for tpu_custom_call.1']
    #allocation5 [shape = 's32[2]{0}', space=sflag, size = 0x8, scoped, tag = 'scoped memory for tpu_custom_call.1']
    #allocation6 [shape = 'u8[4096]{0}', space=vmem, size = 0x1000, scoped, tag = 'input window, operand 1, single buffered']
    #allocation7 [shape = 's32[1]{0}', space=sflag, size = 0x4, scoped, tag = 'scoped memory for tpu_custom_call.1']
    #allocation8 [shape = 'u8[65536]{0}', space=vmem, size = 0x10000, scoped, tag = 'input window, operand 2, single buffered']
    #allocation9 [shape = 'u8[65536]{0}', space=vmem, size = 0x10000, scoped, tag = 'input window, operand 3, single buffered']
    #allocation10 [shape = 's32[1]{0}', space=sflag, size = 0x4, scoped, tag = 'scoped memory for tpu_custom_call.1']
    #allocation11 [shape = 'u8[2048]{0}', space=vmem, size = 0x800, scoped, tag = 'output window, operand 0']
    %12 = vsyncpa [#allocation4], 0
    %s13 = scalar_lea.sflag [#allocation4], 1
    %14 = vsyncpa %s13, 0
    %15 = vsyncpa [#allocation7], 0
    %16 = vsyncpa [#allocation10], 0
    %17 = vsyncpa [#allocation5], 0
    %s18 = scalar_lea.sflag [#allocation5], 1
    %19 = vsyncpa %s18, 0
    loop: start=0, step=1, limit=4
    $region2: #{tpu_custom_call.1} parent=1 // loop_pre_header
      _
    $region3: #{tpu_custom_call.1} parent=1 // loop_header
      %s21 = sphi 0, %s25
      %p22 = scmp.ge.s32.totalorder %s21, 4
      %s31 = sphi 0, %s33
      %s34 = sphi 0, %s31
      %s35 = sphi 0, %s34
      %s51 = sphi 0, %s35
      %s55 = sphi 0, %s55
      %s57 = sphi 0, %s55
      %s58 = sphi 0, %s57
      %s72 = sphi 0, %s58
      %s76 = sphi 0, %s76
      %s78 = sphi 0, %s76
      %s79 = sphi 0, %s78
      %s93 = sphi 0, %s79
      %s97 = sphi 0, %s97
      %s99 = sphi 0, %s97
      %s100 = sphi 0, %s99
      %s114 = sphi 0, %s100
      %s118 = sphi 0, %s118
      %s120 = sphi 0, %s118
      %s121 = sphi 0, %s120
      %s135 = sphi 0, %s121
      %s139 = sphi 0, %s139
      %s141 = sphi 0, %s139
      %s142 = sphi 0, %s141
      %s156 = sphi 0, %s142
      %s162 = sphi 0, %s164
      %s165 = sphi 0, %s162
      %s166 = sphi 0, %s165
      %s182 = sphi 0, %s166
    $region4: #{tpu_custom_call.1} parent=1 // loop_header_branch
      %24 = sbr.rel (%p22) target = $region8
    $region5: #{tpu_custom_call.1} parent=1 // loop_body
      %s26 = ssub.s32 %s21, 1
      %s27 = ssub.s32 %s21, 2
      %s28 = sadd.s32 %s21, 1
      %s29 = ssub.s32 %s21, %s28
      %p30 = scmp.eq.s32.totalorder %s29, 0
      %s32 = sadd.s32 %s31, 1
      %s33 = scalar_select %p30, %s31, %s32
      %p36 = pneg %p30
      %p37 = scmp.eq.s32.totalorder %s21, 1
      %p38 = por %p36, %p37
      %p39 = scmp.ne.s32.totalorder %s31, %s34
      %p40 = scmp.eq.s32.totalorder %s21, 0
      %p41 = por %p39, %p40
      %p42 = scmp.ne.s32.totalorder %s31, %s34
      %p43 = scmp.eq.s32.totalorder %s26, 1
      %p44 = por %p42, %p43
      %p45 = scmp.ne.s32.totalorder %s34, %s35
      %p46 = scmp.eq.s32.totalorder %s26, 0
      %p47 = por %p45, %p46
      %p48 = scmp.ne.s32.totalorder %s34, %s35
      %p49 = scmp.eq.s32.totalorder %s27, 1
      %p50 = por %p48, %p49
      %p52 = scmp.ne.s32.totalorder %s35, %s51
      %p53 = scmp.eq.s32.totalorder %s27, 0
      %p54 = por %p52, %p53
      %s56 = sadd.s32 %s55, 1
      %p59 = scmp.eq.s32.totalorder %s21, 1
      %p60 = scmp.ne.s32.totalorder %s55, %s57
      %p61 = scmp.eq.s32.totalorder %s21, 0
      %p62 = por %p60, %p61
      %p63 = scmp.ne.s32.totalorder %s55, %s57
      %p64 = scmp.eq.s32.totalorder %s26, 1
      %p65 = por %p63, %p64
      %p66 = scmp.ne.s32.totalorder %s57, %s58
      %p67 = scmp.eq.s32.totalorder %s26, 0
      %p68 = por %p66, %p67
      %p69 = scmp.ne.s32.totalorder %s57, %s58
      %p70 = scmp.eq.s32.totalorder %s27, 1
      %p71 = por %p69, %p70
      %p73 = scmp.ne.s32.totalorder %s58, %s72
      %p74 = scmp.eq.s32.totalorder %s27, 0
      %p75 = por %p73, %p74
      %s77 = sadd.s32 %s76, 1
      %p80 = scmp.eq.s32.totalorder %s21, 1
      %p81 = scmp.ne.s32.totalorder %s76, %s78
      %p82 = scmp.eq.s32.totalorder %s21, 0
      %p83 = por %p81, %p82
      %p84 = scmp.ne.s32.totalorder %s76, %s78
      %p85 = scmp.eq.s32.totalorder %s26, 1
      %p86 = por %p84, %p85
      %p87 = scmp.ne.s32.totalorder %s78, %s79
      %p88 = scmp.eq.s32.totalorder %s26, 0
      %p89 = por %p87, %p88
      %p90 = scmp.ne.s32.totalorder %s78, %s79
      %p91 = scmp.eq.s32.totalorder %s27, 1
      %p92 = por %p90, %p91
      %p94 = scmp.ne.s32.totalorder %s79, %s93
      %p95 = scmp.eq.s32.totalorder %s27, 0
      %p96 = por %p94, %p95
      %s98 = sadd.s32 %s97, 1
      %p101 = scmp.eq.s32.totalorder %s21, 1
      %p102 = scmp.ne.s32.totalorder %s97, %s99
      %p103 = scmp.eq.s32.totalorder %s21, 0
      %p104 = por %p102, %p103
      %p105 = scmp.ne.s32.totalorder %s97, %s99
      %p106 = scmp.eq.s32.totalorder %s26, 1
      %p107 = por %p105, %p106
      %p108 = scmp.ne.s32.totalorder %s99, %s100
      %p109 = scmp.eq.s32.totalorder %s26, 0
      %p110 = por %p108, %p109
      %p111 = scmp.ne.s32.totalorder %s99, %s100
      %p112 = scmp.eq.s32.totalorder %s27, 1
      %p113 = por %p111, %p112
      %p115 = scmp.ne.s32.totalorder %s100, %s114
      %p116 = scmp.eq.s32.totalorder %s27, 0
      %p117 = por %p115, %p116
      %s119 = sadd.s32 %s118, 1
      %p122 = scmp.eq.s32.totalorder %s21, 1
      %p123 = scmp.ne.s32.totalorder %s118, %s120
      %p124 = scmp.eq.s32.totalorder %s21, 0
      %p125 = por %p123, %p124
      %p126 = scmp.ne.s32.totalorder %s118, %s120
      %p127 = scmp.eq.s32.totalorder %s26, 1
      %p128 = por %p126, %p127
      %p129 = scmp.ne.s32.totalorder %s120, %s121
      %p130 = scmp.eq.s32.totalorder %s26, 0
      %p131 = por %p129, %p130
      %p132 = scmp.ne.s32.totalorder %s120, %s121
      %p133 = scmp.eq.s32.totalorder %s27, 1
      %p134 = por %p132, %p133
      %p136 = scmp.ne.s32.totalorder %s121, %s135
      %p137 = scmp.eq.s32.totalorder %s27, 0
      %p138 = por %p136, %p137
      %s140 = sadd.s32 %s139, 1
      %p143 = scmp.eq.s32.totalorder %s21, 1
      %p144 = scmp.ne.s32.totalorder %s139, %s141
      %p145 = scmp.eq.s32.totalorder %s21, 0
      %p146 = por %p144, %p145
      %p147 = scmp.ne.s32.totalorder %s139, %s141
      %p148 = scmp.eq.s32.totalorder %s26, 1
      %p149 = por %p147, %p148
      %p150 = scmp.ne.s32.totalorder %s141, %s142
      %p151 = scmp.eq.s32.totalorder %s26, 0
      %p152 = por %p150, %p151
      %p153 = scmp.ne.s32.totalorder %s141, %s142
      %p154 = scmp.eq.s32.totalorder %s27, 1
      %p155 = por %p153, %p154
      %p157 = scmp.ne.s32.totalorder %s142, %s156
      %p158 = scmp.eq.s32.totalorder %s27, 0
      %p159 = por %p157, %p158
      %s160 = ssub.s32 %s21, %s28
      %p161 = scmp.eq.s32.totalorder %s160, 0
      %s163 = sadd.s32 %s162, 1
      %s164 = scalar_select %p161, %s162, %s163
      %p167 = pneg %p161
      %p168 = scmp.eq.s32.totalorder %s21, 1
      %p169 = por %p167, %p168
      %p170 = scmp.ne.s32.totalorder %s162, %s165
      %p171 = scmp.eq.s32.totalorder %s21, 0
      %p172 = por %p170, %p171
      %p173 = scmp.ne.s32.totalorder %s162, %s165
      %p174 = scmp.eq.s32.totalorder %s26, 1
      %p175 = por %p173, %p174
      %p176 = scmp.ne.s32.totalorder %s165, %s166
      %p177 = scmp.eq.s32.totalorder %s26, 0
      %p178 = por %p176, %p177
      %p179 = scmp.ne.s32.totalorder %s165, %s166
      %p180 = scmp.eq.s32.totalorder %s27, 1
      %p181 = por %p179, %p180
      %p183 = scmp.ne.s32.totalorder %s166, %s182
      %p184 = scmp.eq.s32.totalorder %s27, 0
      %p185 = por %p183, %p184
      %p186 = scmp.le.s32.totalorder 1, %s21
      %p187 = scmp.lt.s32.totalorder %s21, 3
      %p188 = pnand %p186, %p187
      %p189 = pneg %p188
      // Predicated region
      $region9: #{tpu_custom_call.1} parent=5 // pred_check
        _
      $region10: #{tpu_custom_call.1} parent=5 // pred_check_branch
        %191 = sbr.rel (%p188) target = $region12
      $region11: #{tpu_custom_call.1} parent=5 // pred_region
        %s192 = ssub.s32 %s21, 1
        // Predicated region
        $region13: #{tpu_custom_call.1} parent=11 // pred_check
          %p193 = pneg %p68
        $region14: #{tpu_custom_call.1} parent=11 // pred_check_branch
          %195 = sbr.rel (%p193) target = $region16
        $region15: #{tpu_custom_call.1} parent=11 // pred_region
          %s197 = ssub.s32 128, 128
          %198 = vsyncadd [#allocation7], %s197
          %s199 = sshll.u32 [#allocation6], 4
          %s200 = int_to_ptr.vmem [resolvable:$true] %s199
          %205 = dma.hbm_to_vmem [thread:$0]  %s1, 128, %s200, [#allocation7], 64, 64, 4
        $region16: #{tpu_custom_call.1} parent=11 // pred_fallthru
          _
        // Predicated region
        $region17: #{tpu_custom_call.1} parent=11 // pred_check
          %p206 = pneg %p89
        $region18: #{tpu_custom_call.1} parent=11 // pred_check_branch
          %208 = sbr.rel (%p206) target = $region20
        $region19: #{tpu_custom_call.1} parent=11 // pred_region
          %s210 = ssub.s32 2048, 2048
          %211 = vsyncadd [#allocation7], %s210
          %s212 = sshll.u32 [#allocation8], 4
          %s213 = int_to_ptr.vmem [resolvable:$true] %s212
          %218 = dma.hbm_to_vmem [thread:$0]  %s2, 2048, %s213, [#allocation7], 64, 64, 4
        $region20: #{tpu_custom_call.1} parent=11 // pred_fallthru
          _
        // Predicated region
        $region21: #{tpu_custom_call.1} parent=11 // pred_check
          %p219 = pneg %p110
        $region22: #{tpu_custom_call.1} parent=11 // pred_check_branch
          %221 = sbr.rel (%p219) target = $region24
        $region23: #{tpu_custom_call.1} parent=11 // pred_region
          %s223 = ssub.s32 2048, 2048
          %224 = vsyncadd [#allocation10], %s223
          %s225 = sshll.u32 [#allocation9], 4
          %s226 = int_to_ptr.vmem [resolvable:$true] %s225
          %231 = dma.hbm_to_vmem [thread:$0]  %s3, 2048, %s226, [#allocation10], 64, 64, 4
        $region24: #{tpu_custom_call.1} parent=11 // pred_fallthru
          _
        // Predicated region
        $region25: #{tpu_custom_call.1} parent=11 // pred_check
          %p232 = pneg %p131
        $region26: #{tpu_custom_call.1} parent=11 // pred_check_branch
          %234 = sbr.rel (%p232) target = $region28
        $region27: #{tpu_custom_call.1} parent=11 // pred_region
          _
        $region28: #{tpu_custom_call.1} parent=11 // pred_fallthru
          _
        // Predicated region
        $region29: #{tpu_custom_call.1} parent=11 // pred_check
          %p235 = pneg %p152
        $region30: #{tpu_custom_call.1} parent=11 // pred_check_branch
          %237 = sbr.rel (%p235) target = $region32
        $region31: #{tpu_custom_call.1} parent=11 // pred_region
          _
        $region32: #{tpu_custom_call.1} parent=11 // pred_fallthru
          _
      $region12: #{tpu_custom_call.1} parent=5 // pred_fallthru
        _
      %p238 = scmp.lt.s32.totalorder %s21, 2
      // Predicated region
      $region33: #{tpu_custom_call.1} parent=5 // pred_check
        %p239 = pneg %p238
      $region34: #{tpu_custom_call.1} parent=5 // pred_check_branch
        %241 = sbr.rel (%p239) target = $region36
      $region35: #{tpu_custom_call.1} parent=5 // pred_region
        // Predicated region
        $region37: #{tpu_custom_call.1} parent=35 // pred_check
          %p242 = pneg %p41
        $region38: #{tpu_custom_call.1} parent=35 // pred_check_branch
          %244 = sbr.rel (%p242) target = $region40
        $region39: #{tpu_custom_call.1} parent=35 // pred_region
          %s245 = sand.u32 %s31, 1
          %s246 = scalar_lea.sflag [#allocation4], %s245
          %s247 = sand.u32 %s31, 1
          %s248 = smul.addr %s247, 256
          %s249 = scalar_lea.vmem [#allocation3], %s248
          %s250 = smul.u32 32, %s21
          %s252 = ssub.s32 4096, 4096
          %253 = vsyncadd %s246, %s252
          %s254 = smul.addr %s250, 128
          %s255 = scalar_lea.hbm %s0, %s254
          %s256 = sshll.u32 %s249, 4
          %s257 = int_to_ptr.vmem [resolvable:$true] %s256
          %262 = dma.hbm_to_vmem [thread:$0]  %s255, 4096, %s257, %s246, 128, 128, 8
        $region40: #{tpu_custom_call.1} parent=35 // pred_fallthru
          _
      $region36: #{tpu_custom_call.1} parent=5 // pred_fallthru
        _
      %p263 = scmp.le.s32.totalorder 1, %s21
      %p264 = scmp.lt.s32.totalorder %s21, 3
      %p265 = pnand %p263, %p264
      %p266 = pneg %p265
      // Predicated region
      $region41: #{tpu_custom_call.1} parent=5 // pred_check
        _
      $region42: #{tpu_custom_call.1} parent=5 // pred_check_branch
        %268 = sbr.rel (%p265) target = $region44
      $region43: #{tpu_custom_call.1} parent=5 // pred_region
        %s269 = ssub.s32 %s21, 1
        %s270 = sand.u32 %s34, 1
        %s271 = scalar_lea.sflag [#allocation4], %s270
        %s272 = sand.u32 %s34, 1
        %s273 = smul.addr %s272, 256
        %s274 = scalar_lea.vmem [#allocation3], %s273
        // Predicated region
        $region45: #{tpu_custom_call.1} parent=43 // pred_check
          %p275 = pneg %p47
        $region46: #{tpu_custom_call.1} parent=43 // pred_check_branch
          %277 = sbr.rel (%p275) target = $region48
        $region47: #{tpu_custom_call.1} parent=43 // pred_region
          %278 = dma.done %s271, 4096
        $region48: #{tpu_custom_call.1} parent=43 // pred_fallthru
          _
        // Predicated region
        $region49: #{tpu_custom_call.1} parent=43 // pred_check
          %p279 = pneg %p68
        $region50: #{tpu_custom_call.1} parent=43 // pred_check_branch
          %281 = sbr.rel (%p279) target = $region52
        $region51: #{tpu_custom_call.1} parent=43 // pred_region
          %282 = dma.done [#allocation7], 128
        $region52: #{tpu_custom_call.1} parent=43 // pred_fallthru
          _
        // Predicated region
        $region53: #{tpu_custom_call.1} parent=43 // pred_check
          %p283 = pneg %p89
        $region54: #{tpu_custom_call.1} parent=43 // pred_check_branch
          %285 = sbr.rel (%p283) target = $region56
        $region55: #{tpu_custom_call.1} parent=43 // pred_region
          %286 = dma.done [#allocation7], 2048
        $region56: #{tpu_custom_call.1} parent=43 // pred_fallthru
          _
        // Predicated region
        $region57: #{tpu_custom_call.1} parent=43 // pred_check
          %p287 = pneg %p110
        $region58: #{tpu_custom_call.1} parent=43 // pred_check_branch
          %289 = sbr.rel (%p287) target = $region60
        $region59: #{tpu_custom_call.1} parent=43 // pred_region
          %290 = dma.done [#allocation10], 2048
        $region60: #{tpu_custom_call.1} parent=43 // pred_fallthru
          _
        %s291 = sand.u32 %s34, 1
        %s292 = scalar_lea.sflag [#allocation4], %s291
        %s293 = sand.u32 %s34, 1
        %s294 = smul.addr %s293, 256
        %s295 = scalar_lea.vmem [#allocation3], %s294
        %p296 = pneg %p47
        %p297 = pneg %p44
        %p298 = pneg %p68
        %p299 = pneg %p65
        %p300 = pneg %p89
        %p301 = pneg %p86
        %p302 = pneg %p110
        %p303 = pneg %p107
        %p304 = pneg %p131
        %p305 = pneg %p128
        %p306 = pneg %p152
        %p307 = pneg %p149
        %p308 = pneg %p178
        %p309 = pneg %p175
        %s310 = sand.u32 %s165, 1
        %s311 = scalar_lea.sflag [#allocation5], %s310
        %s312 = sand.u32 %s165, 1
        %s313 = smul.addr %s312, 2
        %s314 = scalar_lea.vmem [#allocation11], %s313
        %s315 = smul.u32 32, %s26
        %s316 = smul.u32 2, %s26
        %v318 = vld [vmem:[%s274] sm:$0xff]
        %v319 = vld [vmem:[%s274 + $0x8] sm:$0xff]
        %v320 = vld [vmem:[%s274 + $0x10] sm:$0xff]
        %v321 = vld [vmem:[%s274 + $0x18] sm:$0xff]
        %v322 = vld [vmem:[%s274 + $0x20] sm:$0xff]
        %v323 = vld [vmem:[%s274 + $0x28] sm:$0xff]
        %v324 = vld [vmem:[%s274 + $0x30] sm:$0xff]
        %v325 = vld [vmem:[%s274 + $0x38] sm:$0xff]
        %v326 = vld [vmem:[%s274 + $0x40] sm:$0xff]
        %v327 = vld [vmem:[%s274 + $0x48] sm:$0xff]
        %v328 = vld [vmem:[%s274 + $0x50] sm:$0xff]
        %v329 = vld [vmem:[%s274 + $0x58] sm:$0xff]
        %v330 = vld [vmem:[%s274 + $0x60] sm:$0xff]
        %v331 = vld [vmem:[%s274 + $0x68] sm:$0xff]
        %v332 = vld [vmem:[%s274 + $0x70] sm:$0xff]
        %v333 = vld [vmem:[%s274 + $0x78] sm:$0xff]
        %v334 = vld [vmem:[%s274 + $0x80] sm:$0xff]
        %v335 = vld [vmem:[%s274 + $0x88] sm:$0xff]
        %v336 = vld [vmem:[%s274 + $0x90] sm:$0xff]
        %v337 = vld [vmem:[%s274 + $0x98] sm:$0xff]
        %v338 = vld [vmem:[%s274 + $0xa0] sm:$0xff]
        %v339 = vld [vmem:[%s274 + $0xa8] sm:$0xff]
        %v340 = vld [vmem:[%s274 + $0xb0] sm:$0xff]
        %v341 = vld [vmem:[%s274 + $0xb8] sm:$0xff]
        %v342 = vld [vmem:[%s274 + $0xc0] sm:$0xff]
        %v343 = vld [vmem:[%s274 + $0xc8] sm:$0xff]
        %v344 = vld [vmem:[%s274 + $0xd0] sm:$0xff]
        %v345 = vld [vmem:[%s274 + $0xd8] sm:$0xff]
        %v346 = vld [vmem:[%s274 + $0xe0] sm:$0xff]
        %v347 = vld [vmem:[%s274 + $0xe8] sm:$0xff]
        %v348 = vld [vmem:[%s274 + $0xf0] sm:$0xff]
        %v349 = vld [vmem:[%s274 + $0xf8] sm:$0xff]
        %v350 = vld [vmem:[#allocation6] sm:$0xf]
        %v351 = vlaneseq
        %v352 = vshrl.u32 %v351, 7
        %v353 = vsub.s32 0, %v352
        %v354 = vrot.slane %v350, %v353
        %v355 = vmul.f32 %v318, %v354
        %v356 = vmul.f32 %v319, %v354
        %v357 = vmul.f32 %v320, %v354
        %v358 = vmul.f32 %v321, %v354
        %v359 = vmul.f32 %v322, %v354
        %v360 = vmul.f32 %v323, %v354
        %v361 = vmul.f32 %v324, %v354
        %v362 = vmul.f32 %v325, %v354
        %v363 = vmul.f32 %v326, %v354
        %v364 = vmul.f32 %v327, %v354
        %v365 = vmul.f32 %v328, %v354
        %v366 = vmul.f32 %v329, %v354
        %v367 = vmul.f32 %v330, %v354
        %v368 = vmul.f32 %v331, %v354
        %v369 = vmul.f32 %v332, %v354
        %v370 = vmul.f32 %v333, %v354
        %v371 = vmul.f32 %v334, %v354
        %v372 = vmul.f32 %v335, %v354
        %v373 = vmul.f32 %v336, %v354
        %v374 = vmul.f32 %v337, %v354
        %v375 = vmul.f32 %v338, %v354
        %v376 = vmul.f32 %v339, %v354
        %v377 = vmul.f32 %v340, %v354
        %v378 = vmul.f32 %v341, %v354
        %v379 = vmul.f32 %v342, %v354
        %v380 = vmul.f32 %v343, %v354
        %v381 = vmul.f32 %v344, %v354
        %v382 = vmul.f32 %v345, %v354
        %v383 = vmul.f32 %v346, %v354
        %v384 = vmul.f32 %v347, %v354
        %v385 = vmul.f32 %v348, %v354
        %v386 = vmul.f32 %v349, %v354
        %387 = vadd.xlane.f32.xlu0 %v355
        %v388 = vpop.xlane.xlu0 %387
        %389 = vadd.xlane.f32.xlu0 %v356
        %v390 = vpop.xlane.xlu0 %389
        %391 = vadd.xlane.f32.xlu0 %v357
        %v392 = vpop.xlane.xlu0 %391
        %393 = vadd.xlane.f32.xlu0 %v358
        %v394 = vpop.xlane.xlu0 %393
        %395 = vadd.xlane.f32.xlu0 %v359
        %v396 = vpop.xlane.xlu0 %395
        %397 = vadd.xlane.f32.xlu0 %v360
        %v398 = vpop.xlane.xlu0 %397
        %399 = vadd.xlane.f32.xlu0 %v361
        %v400 = vpop.xlane.xlu0 %399
        %401 = vadd.xlane.f32.xlu0 %v362
        %v402 = vpop.xlane.xlu0 %401
        %403 = vadd.xlane.f32.xlu0 %v363
        %v404 = vpop.xlane.xlu0 %403
        %405 = vadd.xlane.f32.xlu0 %v364
        %v406 = vpop.xlane.xlu0 %405
        %407 = vadd.xlane.f32.xlu0 %v365
        %v408 = vpop.xlane.xlu0 %407
        %409 = vadd.xlane.f32.xlu0 %v366
        %v410 = vpop.xlane.xlu0 %409
        %411 = vadd.xlane.f32.xlu0 %v367
        %v412 = vpop.xlane.xlu0 %411
        %413 = vadd.xlane.f32.xlu0 %v368
        %v414 = vpop.xlane.xlu0 %413
        %415 = vadd.xlane.f32.xlu0 %v369
        %v416 = vpop.xlane.xlu0 %415
        %417 = vadd.xlane.f32.xlu0 %v370
        %v418 = vpop.xlane.xlu0 %417
        %419 = vadd.xlane.f32.xlu0 %v371
        %v420 = vpop.xlane.xlu0 %419
        %421 = vadd.xlane.f32.xlu0 %v372
        %v422 = vpop.xlane.xlu0 %421
        %423 = vadd.xlane.f32.xlu0 %v373
        %v424 = vpop.xlane.xlu0 %423
        %425 = vadd.xlane.f32.xlu0 %v374
        %v426 = vpop.xlane.xlu0 %425
        %427 = vadd.xlane.f32.xlu0 %v375
        %v428 = vpop.xlane.xlu0 %427
        %429 = vadd.xlane.f32.xlu0 %v376
        %v430 = vpop.xlane.xlu0 %429
        %431 = vadd.xlane.f32.xlu0 %v377
        %v432 = vpop.xlane.xlu0 %431
        %433 = vadd.xlane.f32.xlu0 %v378
        %v434 = vpop.xlane.xlu0 %433
        %435 = vadd.xlane.f32.xlu0 %v379
        %v436 = vpop.xlane.xlu0 %435
        %437 = vadd.xlane.f32.xlu0 %v380
        %v438 = vpop.xlane.xlu0 %437
        %439 = vadd.xlane.f32.xlu0 %v381
        %v440 = vpop.xlane.xlu0 %439
        %441 = vadd.xlane.f32.xlu0 %v382
        %v442 = vpop.xlane.xlu0 %441
        %443 = vadd.xlane.f32.xlu0 %v383
        %v444 = vpop.xlane.xlu0 %443
        %445 = vadd.xlane.f32.xlu0 %v384
        %v446 = vpop.xlane.xlu0 %445
        %447 = vadd.xlane.f32.xlu0 %v385
        %v448 = vpop.xlane.xlu0 %447
        %449 = vadd.xlane.f32.xlu0 %v386
        %v450 = vpop.xlane.xlu0 %449
        %v451 = vmul.f32 %v388, %v318
        %v452 = vmul.f32 %v390, %v319
        %v453 = vmul.f32 %v392, %v320
        %v454 = vmul.f32 %v394, %v321
        %v455 = vmul.f32 %v396, %v322
        %v456 = vmul.f32 %v398, %v323
        %v457 = vmul.f32 %v400, %v324
        %v458 = vmul.f32 %v402, %v325
        %v459 = vmul.f32 %v404, %v326
        %v460 = vmul.f32 %v406, %v327
        %v461 = vmul.f32 %v408, %v328
        %v462 = vmul.f32 %v410, %v329
        %v463 = vmul.f32 %v412, %v330
        %v464 = vmul.f32 %v414, %v331
        %v465 = vmul.f32 %v416, %v332
        %v466 = vmul.f32 %v418, %v333
        %v467 = vmul.f32 %v420, %v334
        %v468 = vmul.f32 %v422, %v335
        %v469 = vmul.f32 %v424, %v336
        %v470 = vmul.f32 %v426, %v337
        %v471 = vmul.f32 %v428, %v338
        %v472 = vmul.f32 %v430, %v339
        %v473 = vmul.f32 %v432, %v340
        %v474 = vmul.f32 %v434, %v341
        %v475 = vmul.f32 %v436, %v342
        %v476 = vmul.f32 %v438, %v343
        %v477 = vmul.f32 %v440, %v344
        %v478 = vmul.f32 %v442, %v345
        %v479 = vmul.f32 %v444, %v346
        %v480 = vmul.f32 %v446, %v347
        %v481 = vmul.f32 %v448, %v348
        %v482 = vmul.f32 %v450, %v349
        %v483 = vadd.f32 %v318, %v451
        %v484 = vadd.f32 %v319, %v452
        %v485 = vadd.f32 %v320, %v453
        %v486 = vadd.f32 %v321, %v454
        %v487 = vadd.f32 %v322, %v455
        %v488 = vadd.f32 %v323, %v456
        %v489 = vadd.f32 %v324, %v457
        %v490 = vadd.f32 %v325, %v458
        %v491 = vadd.f32 %v326, %v459
        %v492 = vadd.f32 %v327, %v460
        %v493 = vadd.f32 %v328, %v461
        %v494 = vadd.f32 %v329, %v462
        %v495 = vadd.f32 %v330, %v463
        %v496 = vadd.f32 %v331, %v464
        %v497 = vadd.f32 %v332, %v465
        %v498 = vadd.f32 %v333, %v466
        %v499 = vadd.f32 %v334, %v467
        %v500 = vadd.f32 %v335, %v468
        %v501 = vadd.f32 %v336, %v469
        %v502 = vadd.f32 %v337, %v470
        %v503 = vadd.f32 %v338, %v471
        %v504 = vadd.f32 %v339, %v472
        %v505 = vadd.f32 %v340, %v473
        %v506 = vadd.f32 %v341, %v474
        %v507 = vadd.f32 %v342, %v475
        %v508 = vadd.f32 %v343, %v476
        %v509 = vadd.f32 %v344, %v477
        %v510 = vadd.f32 %v345, %v478
        %v511 = vadd.f32 %v346, %v479
        %v512 = vadd.f32 %v347, %v480
        %v513 = vadd.f32 %v348, %v481
        %v514 = vadd.f32 %v349, %v482
        %v515 = vlaneseq
        %v516 = vshrl.u32 %v515, 7
        %v517 = vsub.s32 1, %v516
        %v518 = vrot.slane %v350, %v517
        %v519 = vadd.f32 %v483, %v518
        %v520 = vadd.f32 %v484, %v518
        %v521 = vadd.f32 %v485, %v518
        %v522 = vadd.f32 %v486, %v518
        %v523 = vadd.f32 %v487, %v518
        %v524 = vadd.f32 %v488, %v518
        %v525 = vadd.f32 %v489, %v518
        %v526 = vadd.f32 %v490, %v518
        %v527 = vadd.f32 %v491, %v518
        %v528 = vadd.f32 %v492, %v518
        %v529 = vadd.f32 %v493, %v518
        %v530 = vadd.f32 %v494, %v518
        %v531 = vadd.f32 %v495, %v518
        %v532 = vadd.f32 %v496, %v518
        %v533 = vadd.f32 %v497, %v518
        %v534 = vadd.f32 %v498, %v518
        %v535 = vadd.f32 %v499, %v518
        %v536 = vadd.f32 %v500, %v518
        %v537 = vadd.f32 %v501, %v518
        %v538 = vadd.f32 %v502, %v518
        %v539 = vadd.f32 %v503, %v518
        %v540 = vadd.f32 %v504, %v518
        %v541 = vadd.f32 %v505, %v518
        %v542 = vadd.f32 %v506, %v518
        %v543 = vadd.f32 %v507, %v518
        %v544 = vadd.f32 %v508, %v518
        %v545 = vadd.f32 %v509, %v518
        %v546 = vadd.f32 %v510, %v518
        %v547 = vadd.f32 %v511, %v518
        %v548 = vadd.f32 %v512, %v518
        %v549 = vadd.f32 %v513, %v518
        %v550 = vadd.f32 %v514, %v518
        %v551 = vpack.c.bf16 %v319, %v318
        %v552 = vpack.c.bf16 %v321, %v320
        %v553 = vpack.c.bf16 %v323, %v322
        %v554 = vpack.c.bf16 %v325, %v324
        %v555 = vpack.c.bf16 %v327, %v326
        %v556 = vpack.c.bf16 %v329, %v328
        %v557 = vpack.c.bf16 %v331, %v330
        %v558 = vpack.c.bf16 %v333, %v332
        %v559 = vpack.c.bf16 %v335, %v334
        %v560 = vpack.c.bf16 %v337, %v336
        %v561 = vpack.c.bf16 %v339, %v338
        %v562 = vpack.c.bf16 %v341, %v340
        %v563 = vpack.c.bf16 %v343, %v342
        %v564 = vpack.c.bf16 %v345, %v344
        %v565 = vpack.c.bf16 %v347, %v346
        %v566 = vpack.c.bf16 %v349, %v348
        %v567 = vld [vmem:[#allocation8] sm:$0xf]
        %v568 = vld [vmem:[#allocation8 + $0x4] sm:$0xf]
        %v569 = vld [vmem:[#allocation8 + $0x8] sm:$0xf]
        %v570 = vld [vmem:[#allocation8 + $0xc] sm:$0xf]
        %v571 = vld [vmem:[#allocation8 + $0x10] sm:$0xf]
        %v572 = vld [vmem:[#allocation8 + $0x14] sm:$0xf]
        %v573 = vld [vmem:[#allocation8 + $0x18] sm:$0xf]
        %v574 = vld [vmem:[#allocation8 + $0x1c] sm:$0xf]
        %v575 = vld [vmem:[#allocation8 + $0x20] sm:$0xf]
        %v576 = vld [vmem:[#allocation8 + $0x24] sm:$0xf]
        %v577 = vld [vmem:[#allocation8 + $0x28] sm:$0xf]
        %v578 = vld [vmem:[#allocation8 + $0x2c] sm:$0xf]
        %v579 = vld [vmem:[#allocation8 + $0x30] sm:$0xf]
        %v580 = vld [vmem:[#allocation8 + $0x34] sm:$0xf]
        %v581 = vld [vmem:[#allocation8 + $0x38] sm:$0xf]
        %v582 = vld [vmem:[#allocation8 + $0x3c] sm:$0xf]
        %v583 = vlaneseq
        %v584 = vshrl.u32 %v583, 7
        %v585 = vsub.s32 2, %v584
        %v586 = vrot.slane %v350, %v585
        %v603 = vunpack.c.l.b16 %v567
        %v604 = vunpack.c.l.b16 %v568
        %v605 = vunpack.c.l.b16 %v569
        %v606 = vunpack.c.l.b16 %v570
        %v607 = vunpack.c.l.b16 %v571
        %v608 = vunpack.c.l.b16 %v572
        %v609 = vunpack.c.l.b16 %v573
        %v610 = vunpack.c.l.b16 %v574
        %v611 = vunpack.c.l.b16 %v575
        %v612 = vunpack.c.l.b16 %v576
        %v613 = vunpack.c.l.b16 %v577
        %v614 = vunpack.c.l.b16 %v578
        %v615 = vunpack.c.l.b16 %v579
        %v616 = vunpack.c.l.b16 %v580
        %v617 = vunpack.c.l.b16 %v581
        %v618 = vunpack.c.l.b16 %v582
        %v619 = vpack.c.b16 %v604, %v603
        %v620 = vpack.c.b16 %v606, %v605
        %v621 = vpack.c.b16 %v608, %v607
        %v622 = vpack.c.b16 %v610, %v609
        %v623 = vpack.c.b16 %v612, %v611
        %v624 = vpack.c.b16 %v614, %v613
        %v625 = vpack.c.b16 %v616, %v615
        %v626 = vpack.c.b16 %v618, %v617
        %635 = vmatprep.subr.bf16.mxu0 0
        %636 = vmatpush1.bf16.msra.mxu0 %v626
        %637 = vmatprep.subr.bf16.mxu0 0
        %638 = vmatpush1.bf16.msra.mxu0 %v625
        %639 = vmatprep.subr.bf16.mxu0 0
        %640 = vmatpush1.bf16.msra.mxu0 %v624
        %641 = vmatprep.subr.bf16.mxu0 0
        %642 = vmatpush1.bf16.msra.mxu0 %v623
        %643 = vmatprep.subr.bf16.mxu0 0
        %644 = vmatpush1.bf16.msra.mxu0 %v622
        %645 = vmatprep.subr.bf16.mxu0 0
        %646 = vmatpush1.bf16.msra.mxu0 %v621
        %647 = vmatprep.subr.bf16.mxu0 0
        %648 = vmatpush1.bf16.msra.mxu0 %v620
        %649 = vmatprep.subr.bf16.mxu0 0
        %650 = vmatpush1.bf16.msra.mxu0 %v619
        %651 = vmatprep.subr.bf16.mxu0 0
        %652 = vmatpush2.bf16.msra.mxu0 0
        %653 = vmatprep.subr.bf16.mxu0 0
        %654 = vmatpush2.bf16.msra.mxu0 0
        %655 = vmatprep.subr.bf16.mxu0 0
        %656 = vmatpush2.bf16.msra.mxu0 0
        %657 = vmatprep.subr.bf16.mxu0 0
        %658 = vmatpush2.bf16.msra.mxu0 0
        %659 = vmatprep.subr.bf16.mxu0 0
        %660 = vmatpush2.bf16.msra.mxu0 0
        %661 = vmatprep.subr.bf16.mxu0 0
        %662 = vmatpush2.bf16.msra.mxu0 0
        %663 = vmatprep.subr.bf16.mxu0 0
        %664 = vmatpush2.bf16.msra.mxu0 0
        %665 = vmatprep.subr.bf16.mxu0 0
        %666 = vmatpush2.bf16.msra.mxu0 0
        %667 = vmatprep.mubr.bf16.mxu0 0
        %668 = vmatmul.mubr.bf16.gmra.mxu0 %v551
        %v669 = vpop.f32.mrf.mxu0
        %v670 = vadd.f32 %v586, %v669
        %v671 = vpop.f32.mrf.mxu0
        %v672 = vpop.f32.mrf.mxu0
        %v673 = vadd.f32 %v586, %v672
        %v674 = vpop.f32.mrf.mxu0
        %675 = vmatprep.mubr.bf16.mxu0 0
        %676 = vmatmul.mubr.bf16.gmra.mxu0 %v552
        %v677 = vpop.f32.mrf.mxu0
        %v678 = vadd.f32 %v586, %v677
        %v679 = vpop.f32.mrf.mxu0
        %v680 = vpop.f32.mrf.mxu0
        %v681 = vadd.f32 %v586, %v680
        %v682 = vpop.f32.mrf.mxu0
        %683 = vmatprep.mubr.bf16.mxu0 0
        %684 = vmatmul.mubr.bf16.gmra.mxu0 %v553
        %v685 = vpop.f32.mrf.mxu0
        %v686 = vadd.f32 %v586, %v685
        %v687 = vpop.f32.mrf.mxu0
        %v688 = vpop.f32.mrf.mxu0
        %v689 = vadd.f32 %v586, %v688
        %v690 = vpop.f32.mrf.mxu0
        %691 = vmatprep.mubr.bf16.mxu0 0
        %692 = vmatmul.mubr.bf16.gmra.mxu0 %v554
        %v693 = vpop.f32.mrf.mxu0
        %v694 = vadd.f32 %v586, %v693
        %v695 = vpop.f32.mrf.mxu0
        %v696 = vpop.f32.mrf.mxu0
        %v697 = vadd.f32 %v586, %v696
        %v698 = vpop.f32.mrf.mxu0
        %699 = vmatprep.mubr.bf16.mxu0 0
        %700 = vmatmul.mubr.bf16.gmra.mxu0 %v555
        %v701 = vpop.f32.mrf.mxu0
        %v702 = vadd.f32 %v586, %v701
        %v703 = vpop.f32.mrf.mxu0
        %v704 = vpop.f32.mrf.mxu0
        %v705 = vadd.f32 %v586, %v704
        %v706 = vpop.f32.mrf.mxu0
        %707 = vmatprep.mubr.bf16.mxu0 0
        %708 = vmatmul.mubr.bf16.gmra.mxu0 %v556
        %v709 = vpop.f32.mrf.mxu0
        %v710 = vadd.f32 %v586, %v709
        %v711 = vpop.f32.mrf.mxu0
        %v712 = vpop.f32.mrf.mxu0
        %v713 = vadd.f32 %v586, %v712
        %v714 = vpop.f32.mrf.mxu0
        %715 = vmatprep.mubr.bf16.mxu0 0
        %716 = vmatmul.mubr.bf16.gmra.mxu0 %v557
        %v717 = vpop.f32.mrf.mxu0
        %v718 = vadd.f32 %v586, %v717
        %v719 = vpop.f32.mrf.mxu0
        %v720 = vpop.f32.mrf.mxu0
        %v721 = vadd.f32 %v586, %v720
        %v722 = vpop.f32.mrf.mxu0
        %723 = vmatprep.mubr.bf16.mxu0 0
        %724 = vmatmul.mubr.bf16.gmra.mxu0 %v558
        %v725 = vpop.f32.mrf.mxu0
        %v726 = vadd.f32 %v586, %v725
        %v727 = vpop.f32.mrf.mxu0
        %v728 = vpop.f32.mrf.mxu0
        %v729 = vadd.f32 %v586, %v728
        %v730 = vpop.f32.mrf.mxu0
        %731 = vmatprep.mubr.bf16.mxu0 0
        %732 = vmatmul.mubr.bf16.gmra.mxu0 %v559
        %v733 = vpop.f32.mrf.mxu0
        %v734 = vadd.f32 %v586, %v733
        %v735 = vpop.f32.mrf.mxu0
        %v736 = vpop.f32.mrf.mxu0
        %v737 = vadd.f32 %v586, %v736
        %v738 = vpop.f32.mrf.mxu0
        %739 = vmatprep.mubr.bf16.mxu0 0
        %740 = vmatmul.mubr.bf16.gmra.mxu0 %v560
        %v741 = vpop.f32.mrf.mxu0
        %v742 = vadd.f32 %v586, %v741
        %v743 = vpop.f32.mrf.mxu0
        %v744 = vpop.f32.mrf.mxu0
        %v745 = vadd.f32 %v586, %v744
        %v746 = vpop.f32.mrf.mxu0
        %747 = vmatprep.mubr.bf16.mxu0 0
        %748 = vmatmul.mubr.bf16.gmra.mxu0 %v561
        %v749 = vpop.f32.mrf.mxu0
        %v750 = vadd.f32 %v586, %v749
        %v751 = vpop.f32.mrf.mxu0
        %v752 = vpop.f32.mrf.mxu0
        %v753 = vadd.f32 %v586, %v752
        %v754 = vpop.f32.mrf.mxu0
        %755 = vmatprep.mubr.bf16.mxu0 0
        %756 = vmatmul.mubr.bf16.gmra.mxu0 %v562
        %v757 = vpop.f32.mrf.mxu0
        %v758 = vadd.f32 %v586, %v757
        %v759 = vpop.f32.mrf.mxu0
        %v760 = vpop.f32.mrf.mxu0
        %v761 = vadd.f32 %v586, %v760
        %v762 = vpop.f32.mrf.mxu0
        %763 = vmatprep.mubr.bf16.mxu0 0
        %764 = vmatmul.mubr.bf16.gmra.mxu0 %v563
        %v765 = vpop.f32.mrf.mxu0
        %v766 = vadd.f32 %v586, %v765
        %v767 = vpop.f32.mrf.mxu0
        %v768 = vpop.f32.mrf.mxu0
        %v769 = vadd.f32 %v586, %v768
        %v770 = vpop.f32.mrf.mxu0
        %771 = vmatprep.mubr.bf16.mxu0 0
        %772 = vmatmul.mubr.bf16.gmra.mxu0 %v564
        %v773 = vpop.f32.mrf.mxu0
        %v774 = vadd.f32 %v586, %v773
        %v775 = vpop.f32.mrf.mxu0
        %v776 = vpop.f32.mrf.mxu0
        %v777 = vadd.f32 %v586, %v776
        %v778 = vpop.f32.mrf.mxu0
        %779 = vmatprep.mubr.bf16.mxu0 0
        %780 = vmatmul.mubr.bf16.gmra.mxu0 %v565
        %v781 = vpop.f32.mrf.mxu0
        %v782 = vadd.f32 %v586, %v781
        %v783 = vpop.f32.mrf.mxu0
        %v784 = vpop.f32.mrf.mxu0
        %v785 = vadd.f32 %v586, %v784
        %v786 = vpop.f32.mrf.mxu0
        %787 = vmatprep.mubr.bf16.mxu0 0
        %788 = vmatmul.mubr.bf16.gmra.mxu0 %v566
        %v789 = vpop.f32.mrf.mxu0
        %v790 = vadd.f32 %v586, %v789
        %v791 = vpop.f32.mrf.mxu0
        %v792 = vpop.f32.mrf.mxu0
        %v793 = vadd.f32 %v586, %v792
        %v794 = vpop.f32.mrf.mxu0
        %795 = vdwg.mxu0
        %v796 = vmax.f32 %v670, 0.0
        %v797 = vmax.f32 %v673, 0.0
        %v798 = vmax.f32 %v678, 0.0
        %v799 = vmax.f32 %v681, 0.0
        %v800 = vmax.f32 %v686, 0.0
        %v801 = vmax.f32 %v689, 0.0
        %v802 = vmax.f32 %v694, 0.0
        %v803 = vmax.f32 %v697, 0.0
        %v804 = vmax.f32 %v702, 0.0
        %v805 = vmax.f32 %v705, 0.0
        %v806 = vmax.f32 %v710, 0.0
        %v807 = vmax.f32 %v713, 0.0
        %v808 = vmax.f32 %v718, 0.0
        %v809 = vmax.f32 %v721, 0.0
        %v810 = vmax.f32 %v726, 0.0
        %v811 = vmax.f32 %v729, 0.0
        %v812 = vmax.f32 %v734, 0.0
        %v813 = vmax.f32 %v737, 0.0
        %v814 = vmax.f32 %v742, 0.0
        %v815 = vmax.f32 %v745, 0.0
        %v816 = vmax.f32 %v750, 0.0
        %v817 = vmax.f32 %v753, 0.0
        %v818 = vmax.f32 %v758, 0.0
        %v819 = vmax.f32 %v761, 0.0
        %v820 = vmax.f32 %v766, 0.0
        %v821 = vmax.f32 %v769, 0.0
        %v822 = vmax.f32 %v774, 0.0
        %v823 = vmax.f32 %v777, 0.0
        %v824 = vmax.f32 %v782, 0.0
        %v825 = vmax.f32 %v785, 0.0
        %v826 = vmax.f32 %v790, 0.0
        %v827 = vmax.f32 %v793, 0.0
        %v828 = vpack.c.bf16 %v797, %v796
        %v829 = vpack.c.bf16 %v799, %v798
        %v830 = vpack.c.bf16 %v801, %v800
        %v831 = vpack.c.bf16 %v803, %v802
        %v832 = vpack.c.bf16 %v805, %v804
        %v833 = vpack.c.bf16 %v807, %v806
        %v834 = vpack.c.bf16 %v809, %v808
        %v835 = vpack.c.bf16 %v811, %v810
        %v836 = vpack.c.bf16 %v813, %v812
        %v837 = vpack.c.bf16 %v815, %v814
        %v838 = vpack.c.bf16 %v817, %v816
        %v839 = vpack.c.bf16 %v819, %v818
        %v840 = vpack.c.bf16 %v821, %v820
        %v841 = vpack.c.bf16 %v823, %v822
        %v842 = vpack.c.bf16 %v825, %v824
        %v843 = vpack.c.bf16 %v827, %v826
        %v844 = vld [vmem:[#allocation9] sm:$0xf]
        %v845 = vld [vmem:[#allocation9 + $0x4] sm:$0xf]
        %v846 = vld [vmem:[#allocation9 + $0x8] sm:$0xf]
        %v847 = vld [vmem:[#allocation9 + $0xc] sm:$0xf]
        %v848 = vld [vmem:[#allocation9 + $0x10] sm:$0xf]
        %v849 = vld [vmem:[#allocation9 + $0x14] sm:$0xf]
        %v850 = vld [vmem:[#allocation9 + $0x18] sm:$0xf]
        %v851 = vld [vmem:[#allocation9 + $0x1c] sm:$0xf]
        %v852 = vld [vmem:[#allocation9 + $0x20] sm:$0xf]
        %v853 = vld [vmem:[#allocation9 + $0x24] sm:$0xf]
        %v854 = vld [vmem:[#allocation9 + $0x28] sm:$0xf]
        %v855 = vld [vmem:[#allocation9 + $0x2c] sm:$0xf]
        %v856 = vld [vmem:[#allocation9 + $0x30] sm:$0xf]
        %v857 = vld [vmem:[#allocation9 + $0x34] sm:$0xf]
        %v858 = vld [vmem:[#allocation9 + $0x38] sm:$0xf]
        %v859 = vld [vmem:[#allocation9 + $0x3c] sm:$0xf]
        %v860 = vlaneseq
        %v861 = vshrl.u32 %v860, 7
        %v862 = vsub.s32 3, %v861
        %v863 = vrot.slane %v350, %v862
        %v880 = vunpack.c.l.b16 %v844
        %v881 = vunpack.c.l.b16 %v845
        %v882 = vunpack.c.l.b16 %v846
        %v883 = vunpack.c.l.b16 %v847
        %v884 = vunpack.c.l.b16 %v848
        %v885 = vunpack.c.l.b16 %v849
        %v886 = vunpack.c.l.b16 %v850
        %v887 = vunpack.c.l.b16 %v851
        %v888 = vunpack.c.l.b16 %v852
        %v889 = vunpack.c.l.b16 %v853
        %v890 = vunpack.c.l.b16 %v854
        %v891 = vunpack.c.l.b16 %v855
        %v892 = vunpack.c.l.b16 %v856
        %v893 = vunpack.c.l.b16 %v857
        %v894 = vunpack.c.l.b16 %v858
        %v895 = vunpack.c.l.b16 %v859
        %v896 = vpack.c.b16 %v881, %v880
        %v897 = vpack.c.b16 %v883, %v882
        %v898 = vpack.c.b16 %v885, %v884
        %v899 = vpack.c.b16 %v887, %v886
        %v900 = vpack.c.b16 %v889, %v888
        %v901 = vpack.c.b16 %v891, %v890
        %v902 = vpack.c.b16 %v893, %v892
        %v903 = vpack.c.b16 %v895, %v894
        %912 = vmatprep.subr.bf16.mxu0 0
        %913 = vmatpush1.bf16.msra.mxu0 %v903
        %914 = vmatprep.subr.bf16.mxu0 0
        %915 = vmatpush1.bf16.msra.mxu0 %v902
        %916 = vmatprep.subr.bf16.mxu0 0
        %917 = vmatpush1.bf16.msra.mxu0 %v901
        %918 = vmatprep.subr.bf16.mxu0 0
        %919 = vmatpush1.bf16.msra.mxu0 %v900
        %920 = vmatprep.subr.bf16.mxu0 0
        %921 = vmatpush1.bf16.msra.mxu0 %v899
        %922 = vmatprep.subr.bf16.mxu0 0
        %923 = vmatpush1.bf16.msra.mxu0 %v898
        %924 = vmatprep.subr.bf16.mxu0 0
        %925 = vmatpush1.bf16.msra.mxu0 %v897
        %926 = vmatprep.subr.bf16.mxu0 0
        %927 = vmatpush1.bf16.msra.mxu0 %v896
        %928 = vmatprep.subr.bf16.mxu0 0
        %929 = vmatpush2.bf16.msra.mxu0 0
        %930 = vmatprep.subr.bf16.mxu0 0
        %931 = vmatpush2.bf16.msra.mxu0 0
        %932 = vmatprep.subr.bf16.mxu0 0
        %933 = vmatpush2.bf16.msra.mxu0 0
        %934 = vmatprep.subr.bf16.mxu0 0
        %935 = vmatpush2.bf16.msra.mxu0 0
        %936 = vmatprep.subr.bf16.mxu0 0
        %937 = vmatpush2.bf16.msra.mxu0 0
        %938 = vmatprep.subr.bf16.mxu0 0
        %939 = vmatpush2.bf16.msra.mxu0 0
        %940 = vmatprep.subr.bf16.mxu0 0
        %941 = vmatpush2.bf16.msra.mxu0 0
        %942 = vmatprep.subr.bf16.mxu0 0
        %943 = vmatpush2.bf16.msra.mxu0 0
        %944 = vmatprep.mubr.bf16.mxu0 0
        %945 = vmatmul.mubr.bf16.gmra.mxu0 %v828
        %v946 = vpop.f32.mrf.mxu0
        %v947 = vadd.f32 %v863, %v946
        %v948 = vpop.f32.mrf.mxu0
        %v949 = vpop.f32.mrf.mxu0
        %v950 = vadd.f32 %v863, %v949
        %v951 = vpop.f32.mrf.mxu0
        %952 = vmatprep.mubr.bf16.mxu0 0
        %953 = vmatmul.mubr.bf16.gmra.mxu0 %v829
        %v954 = vpop.f32.mrf.mxu0
        %v955 = vadd.f32 %v863, %v954
        %v956 = vpop.f32.mrf.mxu0
        %v957 = vpop.f32.mrf.mxu0
        %v958 = vadd.f32 %v863, %v957
        %v959 = vpop.f32.mrf.mxu0
        %960 = vmatprep.mubr.bf16.mxu0 0
        %961 = vmatmul.mubr.bf16.gmra.mxu0 %v830
        %v962 = vpop.f32.mrf.mxu0
        %v963 = vadd.f32 %v863, %v962
        %v964 = vpop.f32.mrf.mxu0
        %v965 = vpop.f32.mrf.mxu0
        %v966 = vadd.f32 %v863, %v965
        %v967 = vpop.f32.mrf.mxu0
        %968 = vmatprep.mubr.bf16.mxu0 0
        %969 = vmatmul.mubr.bf16.gmra.mxu0 %v831
        %v970 = vpop.f32.mrf.mxu0
        %v971 = vadd.f32 %v863, %v970
        %v972 = vpop.f32.mrf.mxu0
        %v973 = vpop.f32.mrf.mxu0
        %v974 = vadd.f32 %v863, %v973
        %v975 = vpop.f32.mrf.mxu0
        %976 = vmatprep.mubr.bf16.mxu0 0
        %977 = vmatmul.mubr.bf16.gmra.mxu0 %v832
        %v978 = vpop.f32.mrf.mxu0
        %v979 = vadd.f32 %v863, %v978
        %v980 = vpop.f32.mrf.mxu0
        %v981 = vpop.f32.mrf.mxu0
        %v982 = vadd.f32 %v863, %v981
        %v983 = vpop.f32.mrf.mxu0
        %984 = vmatprep.mubr.bf16.mxu0 0
        %985 = vmatmul.mubr.bf16.gmra.mxu0 %v833
        %v986 = vpop.f32.mrf.mxu0
        %v987 = vadd.f32 %v863, %v986
        %v988 = vpop.f32.mrf.mxu0
        %v989 = vpop.f32.mrf.mxu0
        %v990 = vadd.f32 %v863, %v989
        %v991 = vpop.f32.mrf.mxu0
        %992 = vmatprep.mubr.bf16.mxu0 0
        %993 = vmatmul.mubr.bf16.gmra.mxu0 %v834
        %v994 = vpop.f32.mrf.mxu0
        %v995 = vadd.f32 %v863, %v994
        %v996 = vpop.f32.mrf.mxu0
        %v997 = vpop.f32.mrf.mxu0
        %v998 = vadd.f32 %v863, %v997
        %v999 = vpop.f32.mrf.mxu0
        %1000 = vmatprep.mubr.bf16.mxu0 0
        %1001 = vmatmul.mubr.bf16.gmra.mxu0 %v835
        %v1002 = vpop.f32.mrf.mxu0
        %v1003 = vadd.f32 %v863, %v1002
        %v1004 = vpop.f32.mrf.mxu0
        %v1005 = vpop.f32.mrf.mxu0
        %v1006 = vadd.f32 %v863, %v1005
        %v1007 = vpop.f32.mrf.mxu0
        %1008 = vmatprep.mubr.bf16.mxu0 0
        %1009 = vmatmul.mubr.bf16.gmra.mxu0 %v836
        %v1010 = vpop.f32.mrf.mxu0
        %v1011 = vadd.f32 %v863, %v1010
        %v1012 = vpop.f32.mrf.mxu0
        %v1013 = vpop.f32.mrf.mxu0
        %v1014 = vadd.f32 %v863, %v1013
        %v1015 = vpop.f32.mrf.mxu0
        %1016 = vmatprep.mubr.bf16.mxu0 0
        %1017 = vmatmul.mubr.bf16.gmra.mxu0 %v837
        %v1018 = vpop.f32.mrf.mxu0
        %v1019 = vadd.f32 %v863, %v1018
        %v1020 = vpop.f32.mrf.mxu0
        %v1021 = vpop.f32.mrf.mxu0
        %v1022 = vadd.f32 %v863, %v1021
        %v1023 = vpop.f32.mrf.mxu0
        %1024 = vmatprep.mubr.bf16.mxu0 0
        %1025 = vmatmul.mubr.bf16.gmra.mxu0 %v838
        %v1026 = vpop.f32.mrf.mxu0
        %v1027 = vadd.f32 %v863, %v1026
        %v1028 = vpop.f32.mrf.mxu0
        %v1029 = vpop.f32.mrf.mxu0
        %v1030 = vadd.f32 %v863, %v1029
        %v1031 = vpop.f32.mrf.mxu0
        %1032 = vmatprep.mubr.bf16.mxu0 0
        %1033 = vmatmul.mubr.bf16.gmra.mxu0 %v839
        %v1034 = vpop.f32.mrf.mxu0
        %v1035 = vadd.f32 %v863, %v1034
        %v1036 = vpop.f32.mrf.mxu0
        %v1037 = vpop.f32.mrf.mxu0
        %v1038 = vadd.f32 %v863, %v1037
        %v1039 = vpop.f32.mrf.mxu0
        %1040 = vmatprep.mubr.bf16.mxu0 0
        %1041 = vmatmul.mubr.bf16.gmra.mxu0 %v840
        %v1042 = vpop.f32.mrf.mxu0
        %v1043 = vadd.f32 %v863, %v1042
        %v1044 = vpop.f32.mrf.mxu0
        %v1045 = vpop.f32.mrf.mxu0
        %v1046 = vadd.f32 %v863, %v1045
        %v1047 = vpop.f32.mrf.mxu0
        %1048 = vmatprep.mubr.bf16.mxu0 0
        %1049 = vmatmul.mubr.bf16.gmra.mxu0 %v841
        %v1050 = vpop.f32.mrf.mxu0
        %v1051 = vadd.f32 %v863, %v1050
        %v1052 = vpop.f32.mrf.mxu0
        %v1053 = vpop.f32.mrf.mxu0
        %v1054 = vadd.f32 %v863, %v1053
        %v1055 = vpop.f32.mrf.mxu0
        %1056 = vmatprep.mubr.bf16.mxu0 0
        %1057 = vmatmul.mubr.bf16.gmra.mxu0 %v842
        %v1058 = vpop.f32.mrf.mxu0
        %v1059 = vadd.f32 %v863, %v1058
        %v1060 = vpop.f32.mrf.mxu0
        %v1061 = vpop.f32.mrf.mxu0
        %v1062 = vadd.f32 %v863, %v1061
        %v1063 = vpop.f32.mrf.mxu0
        %1064 = vmatprep.mubr.bf16.mxu0 0
        %1065 = vmatmul.mubr.bf16.gmra.mxu0 %v843
        %v1066 = vpop.f32.mrf.mxu0
        %v1067 = vadd.f32 %v863, %v1066
        %v1068 = vpop.f32.mrf.mxu0
        %v1069 = vpop.f32.mrf.mxu0
        %v1070 = vadd.f32 %v863, %v1069
        %v1071 = vpop.f32.mrf.mxu0
        %1072 = vdwg.mxu0
        %v1073 = vmax.f32 %v947, 0.0
        %v1074 = vmax.f32 %v950, 0.0
        %v1075 = vmax.f32 %v955, 0.0
        %v1076 = vmax.f32 %v958, 0.0
        %v1077 = vmax.f32 %v963, 0.0
        %v1078 = vmax.f32 %v966, 0.0
        %v1079 = vmax.f32 %v971, 0.0
        %v1080 = vmax.f32 %v974, 0.0
        %v1081 = vmax.f32 %v979, 0.0
        %v1082 = vmax.f32 %v982, 0.0
        %v1083 = vmax.f32 %v987, 0.0
        %v1084 = vmax.f32 %v990, 0.0
        %v1085 = vmax.f32 %v995, 0.0
        %v1086 = vmax.f32 %v998, 0.0
        %v1087 = vmax.f32 %v1003, 0.0
        %v1088 = vmax.f32 %v1006, 0.0
        %v1089 = vmax.f32 %v1011, 0.0
        %v1090 = vmax.f32 %v1014, 0.0
        %v1091 = vmax.f32 %v1019, 0.0
        %v1092 = vmax.f32 %v1022, 0.0
        %v1093 = vmax.f32 %v1027, 0.0
        %v1094 = vmax.f32 %v1030, 0.0
        %v1095 = vmax.f32 %v1035, 0.0
        %v1096 = vmax.f32 %v1038, 0.0
        %v1097 = vmax.f32 %v1043, 0.0
        %v1098 = vmax.f32 %v1046, 0.0
        %v1099 = vmax.f32 %v1051, 0.0
        %v1100 = vmax.f32 %v1054, 0.0
        %v1101 = vmax.f32 %v1059, 0.0
        %v1102 = vmax.f32 %v1062, 0.0
        %v1103 = vmax.f32 %v1067, 0.0
        %v1104 = vmax.f32 %v1070, 0.0
        %v1105 = vmul.f32 %v519, %v1073
        %v1106 = vmul.f32 %v520, %v1074
        %v1107 = vmul.f32 %v521, %v1075
        %v1108 = vmul.f32 %v522, %v1076
        %v1109 = vmul.f32 %v523, %v1077
        %v1110 = vmul.f32 %v524, %v1078
        %v1111 = vmul.f32 %v525, %v1079
        %v1112 = vmul.f32 %v526, %v1080
        %v1113 = vmul.f32 %v527, %v1081
        %v1114 = vmul.f32 %v528, %v1082
        %v1115 = vmul.f32 %v529, %v1083
        %v1116 = vmul.f32 %v530, %v1084
        %v1117 = vmul.f32 %v531, %v1085
        %v1118 = vmul.f32 %v532, %v1086
        %v1119 = vmul.f32 %v533, %v1087
        %v1120 = vmul.f32 %v534, %v1088
        %v1121 = vmul.f32 %v535, %v1089
        %v1122 = vmul.f32 %v536, %v1090
        %v1123 = vmul.f32 %v537, %v1091
        %v1124 = vmul.f32 %v538, %v1092
        %v1125 = vmul.f32 %v539, %v1093
        %v1126 = vmul.f32 %v540, %v1094
        %v1127 = vmul.f32 %v541, %v1095
        %v1128 = vmul.f32 %v542, %v1096
        %v1129 = vmul.f32 %v543, %v1097
        %v1130 = vmul.f32 %v544, %v1098
        %v1131 = vmul.f32 %v545, %v1099
        %v1132 = vmul.f32 %v546, %v1100
        %v1133 = vmul.f32 %v547, %v1101
        %v1134 = vmul.f32 %v548, %v1102
        %v1135 = vmul.f32 %v549, %v1103
        %v1136 = vmul.f32 %v550, %v1104
        %s1137 = scalar_lea.vmem [#allocation6], 4
        %v1138 = vld [vmem:[%s1137] sm:$0xf]
        %v1139 = vlaneseq
        %v1140 = vshrl.u32 %v1139, 7
        %v1141 = vsub.s32 0, %v1140
        %v1142 = vrot.slane %v1138, %v1141
        %v1143 = vmul.f32 %v1105, %v1142
        %v1144 = vmul.f32 %v1106, %v1142
        %v1145 = vmul.f32 %v1107, %v1142
        %v1146 = vmul.f32 %v1108, %v1142
        %v1147 = vmul.f32 %v1109, %v1142
        %v1148 = vmul.f32 %v1110, %v1142
        %v1149 = vmul.f32 %v1111, %v1142
        %v1150 = vmul.f32 %v1112, %v1142
        %v1151 = vmul.f32 %v1113, %v1142
        %v1152 = vmul.f32 %v1114, %v1142
        %v1153 = vmul.f32 %v1115, %v1142
        %v1154 = vmul.f32 %v1116, %v1142
        %v1155 = vmul.f32 %v1117, %v1142
        %v1156 = vmul.f32 %v1118, %v1142
        %v1157 = vmul.f32 %v1119, %v1142
        %v1158 = vmul.f32 %v1120, %v1142
        %v1159 = vmul.f32 %v1121, %v1142
        %v1160 = vmul.f32 %v1122, %v1142
        %v1161 = vmul.f32 %v1123, %v1142
        %v1162 = vmul.f32 %v1124, %v1142
        %v1163 = vmul.f32 %v1125, %v1142
        %v1164 = vmul.f32 %v1126, %v1142
        %v1165 = vmul.f32 %v1127, %v1142
        %v1166 = vmul.f32 %v1128, %v1142
        %v1167 = vmul.f32 %v1129, %v1142
        %v1168 = vmul.f32 %v1130, %v1142
        %v1169 = vmul.f32 %v1131, %v1142
        %v1170 = vmul.f32 %v1132, %v1142
        %v1171 = vmul.f32 %v1133, %v1142
        %v1172 = vmul.f32 %v1134, %v1142
        %v1173 = vmul.f32 %v1135, %v1142
        %v1174 = vmul.f32 %v1136, %v1142
        %1175 = vadd.xlane.f32.xlu0 %v1143
        %v1176 = vpop.xlane.xlu0 %1175
        %1177 = vadd.xlane.f32.xlu0 %v1144
        %v1178 = vpop.xlane.xlu0 %1177
        %1179 = vadd.xlane.f32.xlu0 %v1145
        %v1180 = vpop.xlane.xlu0 %1179
        %1181 = vadd.xlane.f32.xlu0 %v1146
        %v1182 = vpop.xlane.xlu0 %1181
        %1183 = vadd.xlane.f32.xlu0 %v1147
        %v1184 = vpop.xlane.xlu0 %1183
        %1185 = vadd.xlane.f32.xlu0 %v1148
        %v1186 = vpop.xlane.xlu0 %1185
        %1187 = vadd.xlane.f32.xlu0 %v1149
        %v1188 = vpop.xlane.xlu0 %1187
        %1189 = vadd.xlane.f32.xlu0 %v1150
        %v1190 = vpop.xlane.xlu0 %1189
        %1191 = vadd.xlane.f32.xlu0 %v1151
        %v1192 = vpop.xlane.xlu0 %1191
        %1193 = vadd.xlane.f32.xlu0 %v1152
        %v1194 = vpop.xlane.xlu0 %1193
        %1195 = vadd.xlane.f32.xlu0 %v1153
        %v1196 = vpop.xlane.xlu0 %1195
        %1197 = vadd.xlane.f32.xlu0 %v1154
        %v1198 = vpop.xlane.xlu0 %1197
        %1199 = vadd.xlane.f32.xlu0 %v1155
        %v1200 = vpop.xlane.xlu0 %1199
        %1201 = vadd.xlane.f32.xlu0 %v1156
        %v1202 = vpop.xlane.xlu0 %1201
        %1203 = vadd.xlane.f32.xlu0 %v1157
        %v1204 = vpop.xlane.xlu0 %1203
        %1205 = vadd.xlane.f32.xlu0 %v1158
        %v1206 = vpop.xlane.xlu0 %1205
        %1207 = vadd.xlane.f32.xlu0 %v1159
        %v1208 = vpop.xlane.xlu0 %1207
        %1209 = vadd.xlane.f32.xlu0 %v1160
        %v1210 = vpop.xlane.xlu0 %1209
        %1211 = vadd.xlane.f32.xlu0 %v1161
        %v1212 = vpop.xlane.xlu0 %1211
        %1213 = vadd.xlane.f32.xlu0 %v1162
        %v1214 = vpop.xlane.xlu0 %1213
        %1215 = vadd.xlane.f32.xlu0 %v1163
        %v1216 = vpop.xlane.xlu0 %1215
        %1217 = vadd.xlane.f32.xlu0 %v1164
        %v1218 = vpop.xlane.xlu0 %1217
        %1219 = vadd.xlane.f32.xlu0 %v1165
        %v1220 = vpop.xlane.xlu0 %1219
        %1221 = vadd.xlane.f32.xlu0 %v1166
        %v1222 = vpop.xlane.xlu0 %1221
        %1223 = vadd.xlane.f32.xlu0 %v1167
        %v1224 = vpop.xlane.xlu0 %1223
        %1225 = vadd.xlane.f32.xlu0 %v1168
        %v1226 = vpop.xlane.xlu0 %1225
        %1227 = vadd.xlane.f32.xlu0 %v1169
        %v1228 = vpop.xlane.xlu0 %1227
        %1229 = vadd.xlane.f32.xlu0 %v1170
        %v1230 = vpop.xlane.xlu0 %1229
        %1231 = vadd.xlane.f32.xlu0 %v1171
        %v1232 = vpop.xlane.xlu0 %1231
        %1233 = vadd.xlane.f32.xlu0 %v1172
        %v1234 = vpop.xlane.xlu0 %1233
        %1235 = vadd.xlane.f32.xlu0 %v1173
        %v1236 = vpop.xlane.xlu0 %1235
        %1237 = vadd.xlane.f32.xlu0 %v1174
        %v1238 = vpop.xlane.xlu0 %1237
        %v1239 = vmul.f32 %v1176, %v318
        %v1240 = vmul.f32 %v1178, %v319
        %v1241 = vmul.f32 %v1180, %v320
        %v1242 = vmul.f32 %v1182, %v321
        %v1243 = vmul.f32 %v1184, %v322
        %v1244 = vmul.f32 %v1186, %v323
        %v1245 = vmul.f32 %v1188, %v324
        %v1246 = vmul.f32 %v1190, %v325
        %v1247 = vmul.f32 %v1192, %v326
        %v1248 = vmul.f32 %v1194, %v327
        %v1249 = vmul.f32 %v1196, %v328
        %v1250 = vmul.f32 %v1198, %v329
        %v1251 = vmul.f32 %v1200, %v330
        %v1252 = vmul.f32 %v1202, %v331
        %v1253 = vmul.f32 %v1204, %v332
        %v1254 = vmul.f32 %v1206, %v333
        %v1255 = vmul.f32 %v1208, %v334
        %v1256 = vmul.f32 %v1210, %v335
        %v1257 = vmul.f32 %v1212, %v336
        %v1258 = vmul.f32 %v1214, %v337
        %v1259 = vmul.f32 %v1216, %v338
        %v1260 = vmul.f32 %v1218, %v339
        %v1261 = vmul.f32 %v1220, %v340
        %v1262 = vmul.f32 %v1222, %v341
        %v1263 = vmul.f32 %v1224, %v342
        %v1264 = vmul.f32 %v1226, %v343
        %v1265 = vmul.f32 %v1228, %v344
        %v1266 = vmul.f32 %v1230, %v345
        %v1267 = vmul.f32 %v1232, %v346
        %v1268 = vmul.f32 %v1234, %v347
        %v1269 = vmul.f32 %v1236, %v348
        %v1270 = vmul.f32 %v1238, %v349
        %v1271 = vadd.f32 %v1105, %v1239
        %v1272 = vadd.f32 %v1106, %v1240
        %v1273 = vadd.f32 %v1107, %v1241
        %v1274 = vadd.f32 %v1108, %v1242
        %v1275 = vadd.f32 %v1109, %v1243
        %v1276 = vadd.f32 %v1110, %v1244
        %v1277 = vadd.f32 %v1111, %v1245
        %v1278 = vadd.f32 %v1112, %v1246
        %v1279 = vadd.f32 %v1113, %v1247
        %v1280 = vadd.f32 %v1114, %v1248
        %v1281 = vadd.f32 %v1115, %v1249
        %v1282 = vadd.f32 %v1116, %v1250
        %v1283 = vadd.f32 %v1117, %v1251
        %v1284 = vadd.f32 %v1118, %v1252
        %v1285 = vadd.f32 %v1119, %v1253
        %v1286 = vadd.f32 %v1120, %v1254
        %v1287 = vadd.f32 %v1121, %v1255
        %v1288 = vadd.f32 %v1122, %v1256
        %v1289 = vadd.f32 %v1123, %v1257
        %v1290 = vadd.f32 %v1124, %v1258
        %v1291 = vadd.f32 %v1125, %v1259
        %v1292 = vadd.f32 %v1126, %v1260
        %v1293 = vadd.f32 %v1127, %v1261
        %v1294 = vadd.f32 %v1128, %v1262
        %v1295 = vadd.f32 %v1129, %v1263
        %v1296 = vadd.f32 %v1130, %v1264
        %v1297 = vadd.f32 %v1131, %v1265
        %v1298 = vadd.f32 %v1132, %v1266
        %v1299 = vadd.f32 %v1133, %v1267
        %v1300 = vadd.f32 %v1134, %v1268
        %v1301 = vadd.f32 %v1135, %v1269
        %v1302 = vadd.f32 %v1136, %v1270
        %v1303 = vlaneseq
        %v1304 = vshrl.u32 %v1303, 7
        %v1305 = vsub.s32 1, %v1304
        %v1306 = vrot.slane %v1138, %v1305
        %v1307 = vadd.f32 %v1271, %v1306
        %v1308 = vadd.f32 %v1272, %v1306
        %v1309 = vadd.f32 %v1273, %v1306
        %v1310 = vadd.f32 %v1274, %v1306
        %v1311 = vadd.f32 %v1275, %v1306
        %v1312 = vadd.f32 %v1276, %v1306
        %v1313 = vadd.f32 %v1277, %v1306
        %v1314 = vadd.f32 %v1278, %v1306
        %v1315 = vadd.f32 %v1279, %v1306
        %v1316 = vadd.f32 %v1280, %v1306
        %v1317 = vadd.f32 %v1281, %v1306
        %v1318 = vadd.f32 %v1282, %v1306
        %v1319 = vadd.f32 %v1283, %v1306
        %v1320 = vadd.f32 %v1284, %v1306
        %v1321 = vadd.f32 %v1285, %v1306
        %v1322 = vadd.f32 %v1286, %v1306
        %v1323 = vadd.f32 %v1287, %v1306
        %v1324 = vadd.f32 %v1288, %v1306
        %v1325 = vadd.f32 %v1289, %v1306
        %v1326 = vadd.f32 %v1290, %v1306
        %v1327 = vadd.f32 %v1291, %v1306
        %v1328 = vadd.f32 %v1292, %v1306
        %v1329 = vadd.f32 %v1293, %v1306
        %v1330 = vadd.f32 %v1294, %v1306
        %v1331 = vadd.f32 %v1295, %v1306
        %v1332 = vadd.f32 %v1296, %v1306
        %v1333 = vadd.f32 %v1297, %v1306
        %v1334 = vadd.f32 %v1298, %v1306
        %v1335 = vadd.f32 %v1299, %v1306
        %v1336 = vadd.f32 %v1300, %v1306
        %v1337 = vadd.f32 %v1301, %v1306
        %v1338 = vadd.f32 %v1302, %v1306
        %v1339 = vpack.c.bf16 %v1106, %v1105
        %v1340 = vpack.c.bf16 %v1108, %v1107
        %v1341 = vpack.c.bf16 %v1110, %v1109
        %v1342 = vpack.c.bf16 %v1112, %v1111
        %v1343 = vpack.c.bf16 %v1114, %v1113
        %v1344 = vpack.c.bf16 %v1116, %v1115
        %v1345 = vpack.c.bf16 %v1118, %v1117
        %v1346 = vpack.c.bf16 %v1120, %v1119
        %v1347 = vpack.c.bf16 %v1122, %v1121
        %v1348 = vpack.c.bf16 %v1124, %v1123
        %v1349 = vpack.c.bf16 %v1126, %v1125
        %v1350 = vpack.c.bf16 %v1128, %v1127
        %v1351 = vpack.c.bf16 %v1130, %v1129
        %v1352 = vpack.c.bf16 %v1132, %v1131
        %v1353 = vpack.c.bf16 %v1134, %v1133
        %v1354 = vpack.c.bf16 %v1136, %v1135
        %s1355 = scalar_lea.vmem [#allocation8], 64
        %v1356 = vld [vmem:[%s1355] sm:$0xf]
        %v1357 = vld [vmem:[%s1355 + $0x4] sm:$0xf]
        %v1358 = vld [vmem:[%s1355 + $0x8] sm:$0xf]
        %v1359 = vld [vmem:[%s1355 + $0xc] sm:$0xf]
        %v1360 = vld [vmem:[%s1355 + $0x10] sm:$0xf]
        %v1361 = vld [vmem:[%s1355 + $0x14] sm:$0xf]
        %v1362 = vld [vmem:[%s1355 + $0x18] sm:$0xf]
        %v1363 = vld [vmem:[%s1355 + $0x1c] sm:$0xf]
        %v1364 = vld [vmem:[%s1355 + $0x20] sm:$0xf]
        %v1365 = vld [vmem:[%s1355 + $0x24] sm:$0xf]
        %v1366 = vld [vmem:[%s1355 + $0x28] sm:$0xf]
        %v1367 = vld [vmem:[%s1355 + $0x2c] sm:$0xf]
        %v1368 = vld [vmem:[%s1355 + $0x30] sm:$0xf]
        %v1369 = vld [vmem:[%s1355 + $0x34] sm:$0xf]
        %v1370 = vld [vmem:[%s1355 + $0x38] sm:$0xf]
        %v1371 = vld [vmem:[%s1355 + $0x3c] sm:$0xf]
        %v1372 = vlaneseq
        %v1373 = vshrl.u32 %v1372, 7
        %v1374 = vsub.s32 2, %v1373
        %v1375 = vrot.slane %v1138, %v1374
        %v1392 = vunpack.c.l.b16 %v1356
        %v1393 = vunpack.c.l.b16 %v1357
        %v1394 = vunpack.c.l.b16 %v1358
        %v1395 = vunpack.c.l.b16 %v1359
        %v1396 = vunpack.c.l.b16 %v1360
        %v1397 = vunpack.c.l.b16 %v1361
        %v1398 = vunpack.c.l.b16 %v1362
        %v1399 = vunpack.c.l.b16 %v1363
        %v1400 = vunpack.c.l.b16 %v1364
        %v1401 = vunpack.c.l.b16 %v1365
        %v1402 = vunpack.c.l.b16 %v1366
        %v1403 = vunpack.c.l.b16 %v1367
        %v1404 = vunpack.c.l.b16 %v1368
        %v1405 = vunpack.c.l.b16 %v1369
        %v1406 = vunpack.c.l.b16 %v1370
        %v1407 = vunpack.c.l.b16 %v1371
        %v1408 = vpack.c.b16 %v1393, %v1392
        %v1409 = vpack.c.b16 %v1395, %v1394
        %v1410 = vpack.c.b16 %v1397, %v1396
        %v1411 = vpack.c.b16 %v1399, %v1398
        %v1412 = vpack.c.b16 %v1401, %v1400
        %v1413 = vpack.c.b16 %v1403, %v1402
        %v1414 = vpack.c.b16 %v1405, %v1404
        %v1415 = vpack.c.b16 %v1407, %v1406
        %1424 = vmatprep.subr.bf16.mxu0 0
        %1425 = vmatpush1.bf16.msra.mxu0 %v1415
        %1426 = vmatprep.subr.bf16.mxu0 0
        %1427 = vmatpush1.bf16.msra.mxu0 %v1414
        %1428 = vmatprep.subr.bf16.mxu0 0
        %1429 = vmatpush1.bf16.msra.mxu0 %v1413
        %1430 = vmatprep.subr.bf16.mxu0 0
        %1431 = vmatpush1.bf16.msra.mxu0 %v1412
        %1432 = vmatprep.subr.bf16.mxu0 0
        %1433 = vmatpush1.bf16.msra.mxu0 %v1411
        %1434 = vmatprep.subr.bf16.mxu0 0
        %1435 = vmatpush1.bf16.msra.mxu0 %v1410
        %1436 = vmatprep.subr.bf16.mxu0 0
        %1437 = vmatpush1.bf16.msra.mxu0 %v1409
        %1438 = vmatprep.subr.bf16.mxu0 0
        %1439 = vmatpush1.bf16.msra.mxu0 %v1408
        %1440 = vmatprep.subr.bf16.mxu0 0
        %1441 = vmatpush2.bf16.msra.mxu0 0
        %1442 = vmatprep.subr.bf16.mxu0 0
        %1443 = vmatpush2.bf16.msra.mxu0 0
        %1444 = vmatprep.subr.bf16.mxu0 0
        %1445 = vmatpush2.bf16.msra.mxu0 0
        %1446 = vmatprep.subr.bf16.mxu0 0
        %1447 = vmatpush2.bf16.msra.mxu0 0
        %1448 = vmatprep.subr.bf16.mxu0 0
        %1449 = vmatpush2.bf16.msra.mxu0 0
        %1450 = vmatprep.subr.bf16.mxu0 0
        %1451 = vmatpush2.bf16.msra.mxu0 0
        %1452 = vmatprep.subr.bf16.mxu0 0
        %1453 = vmatpush2.bf16.msra.mxu0 0
        %1454 = vmatprep.subr.bf16.mxu0 0
        %1455 = vmatpush2.bf16.msra.mxu0 0
        %1456 = vmatprep.mubr.bf16.mxu0 0
        %1457 = vmatmul.mubr.bf16.gmra.mxu0 %v1339
        %v1458 = vpop.f32.mrf.mxu0
        %v1459 = vadd.f32 %v1375, %v1458
        %v1460 = vpop.f32.mrf.mxu0
        %v1461 = vpop.f32.mrf.mxu0
        %v1462 = vadd.f32 %v1375, %v1461
        %v1463 = vpop.f32.mrf.mxu0
        %1464 = vmatprep.mubr.bf16.mxu0 0
        %1465 = vmatmul.mubr.bf16.gmra.mxu0 %v1340
        %v1466 = vpop.f32.mrf.mxu0
        %v1467 = vadd.f32 %v1375, %v1466
        %v1468 = vpop.f32.mrf.mxu0
        %v1469 = vpop.f32.mrf.mxu0
        %v1470 = vadd.f32 %v1375, %v1469
        %v1471 = vpop.f32.mrf.mxu0
        %1472 = vmatprep.mubr.bf16.mxu0 0
        %1473 = vmatmul.mubr.bf16.gmra.mxu0 %v1341
        %v1474 = vpop.f32.mrf.mxu0
        %v1475 = vadd.f32 %v1375, %v1474
        %v1476 = vpop.f32.mrf.mxu0
        %v1477 = vpop.f32.mrf.mxu0
        %v1478 = vadd.f32 %v1375, %v1477
        %v1479 = vpop.f32.mrf.mxu0
        %1480 = vmatprep.mubr.bf16.mxu0 0
        %1481 = vmatmul.mubr.bf16.gmra.mxu0 %v1342
        %v1482 = vpop.f32.mrf.mxu0
        %v1483 = vadd.f32 %v1375, %v1482
        %v1484 = vpop.f32.mrf.mxu0
        %v1485 = vpop.f32.mrf.mxu0
        %v1486 = vadd.f32 %v1375, %v1485
        %v1487 = vpop.f32.mrf.mxu0
        %1488 = vmatprep.mubr.bf16.mxu0 0
        %1489 = vmatmul.mubr.bf16.gmra.mxu0 %v1343
        %v1490 = vpop.f32.mrf.mxu0
        %v1491 = vadd.f32 %v1375, %v1490
        %v1492 = vpop.f32.mrf.mxu0
        %v1493 = vpop.f32.mrf.mxu0
        %v1494 = vadd.f32 %v1375, %v1493
        %v1495 = vpop.f32.mrf.mxu0
        %1496 = vmatprep.mubr.bf16.mxu0 0
        %1497 = vmatmul.mubr.bf16.gmra.mxu0 %v1344
        %v1498 = vpop.f32.mrf.mxu0
        %v1499 = vadd.f32 %v1375, %v1498
        %v1500 = vpop.f32.mrf.mxu0
        %v1501 = vpop.f32.mrf.mxu0
        %v1502 = vadd.f32 %v1375, %v1501
        %v1503 = vpop.f32.mrf.mxu0
        %1504 = vmatprep.mubr.bf16.mxu0 0
        %1505 = vmatmul.mubr.bf16.gmra.mxu0 %v1345
        %v1506 = vpop.f32.mrf.mxu0
        %v1507 = vadd.f32 %v1375, %v1506
        %v1508 = vpop.f32.mrf.mxu0
        %v1509 = vpop.f32.mrf.mxu0
        %v1510 = vadd.f32 %v1375, %v1509
        %v1511 = vpop.f32.mrf.mxu0
        %1512 = vmatprep.mubr.bf16.mxu0 0
        %1513 = vmatmul.mubr.bf16.gmra.mxu0 %v1346
        %v1514 = vpop.f32.mrf.mxu0
        %v1515 = vadd.f32 %v1375, %v1514
        %v1516 = vpop.f32.mrf.mxu0
        %v1517 = vpop.f32.mrf.mxu0
        %v1518 = vadd.f32 %v1375, %v1517
        %v1519 = vpop.f32.mrf.mxu0
        %1520 = vmatprep.mubr.bf16.mxu0 0
        %1521 = vmatmul.mubr.bf16.gmra.mxu0 %v1347
        %v1522 = vpop.f32.mrf.mxu0
        %v1523 = vadd.f32 %v1375, %v1522
        %v1524 = vpop.f32.mrf.mxu0
        %v1525 = vpop.f32.mrf.mxu0
        %v1526 = vadd.f32 %v1375, %v1525
        %v1527 = vpop.f32.mrf.mxu0
        %1528 = vmatprep.mubr.bf16.mxu0 0
        %1529 = vmatmul.mubr.bf16.gmra.mxu0 %v1348
        %v1530 = vpop.f32.mrf.mxu0
        %v1531 = vadd.f32 %v1375, %v1530
        %v1532 = vpop.f32.mrf.mxu0
        %v1533 = vpop.f32.mrf.mxu0
        %v1534 = vadd.f32 %v1375, %v1533
        %v1535 = vpop.f32.mrf.mxu0
        %1536 = vmatprep.mubr.bf16.mxu0 0
        %1537 = vmatmul.mubr.bf16.gmra.mxu0 %v1349
        %v1538 = vpop.f32.mrf.mxu0
        %v1539 = vadd.f32 %v1375, %v1538
        %v1540 = vpop.f32.mrf.mxu0
        %v1541 = vpop.f32.mrf.mxu0
        %v1542 = vadd.f32 %v1375, %v1541
        %v1543 = vpop.f32.mrf.mxu0
        %1544 = vmatprep.mubr.bf16.mxu0 0
        %1545 = vmatmul.mubr.bf16.gmra.mxu0 %v1350
        %v1546 = vpop.f32.mrf.mxu0
        %v1547 = vadd.f32 %v1375, %v1546
        %v1548 = vpop.f32.mrf.mxu0
        %v1549 = vpop.f32.mrf.mxu0
        %v1550 = vadd.f32 %v1375, %v1549
        %v1551 = vpop.f32.mrf.mxu0
        %1552 = vmatprep.mubr.bf16.mxu0 0
        %1553 = vmatmul.mubr.bf16.gmra.mxu0 %v1351
        %v1554 = vpop.f32.mrf.mxu0
        %v1555 = vadd.f32 %v1375, %v1554
        %v1556 = vpop.f32.mrf.mxu0
        %v1557 = vpop.f32.mrf.mxu0
        %v1558 = vadd.f32 %v1375, %v1557
        %v1559 = vpop.f32.mrf.mxu0
        %1560 = vmatprep.mubr.bf16.mxu0 0
        %1561 = vmatmul.mubr.bf16.gmra.mxu0 %v1352
        %v1562 = vpop.f32.mrf.mxu0
        %v1563 = vadd.f32 %v1375, %v1562
        %v1564 = vpop.f32.mrf.mxu0
        %v1565 = vpop.f32.mrf.mxu0
        %v1566 = vadd.f32 %v1375, %v1565
        %v1567 = vpop.f32.mrf.mxu0
        %1568 = vmatprep.mubr.bf16.mxu0 0
        %1569 = vmatmul.mubr.bf16.gmra.mxu0 %v1353
        %v1570 = vpop.f32.mrf.mxu0
        %v1571 = vadd.f32 %v1375, %v1570
        %v1572 = vpop.f32.mrf.mxu0
        %v1573 = vpop.f32.mrf.mxu0
        %v1574 = vadd.f32 %v1375, %v1573
        %v1575 = vpop.f32.mrf.mxu0
        %1576 = vmatprep.mubr.bf16.mxu0 0
        %1577 = vmatmul.mubr.bf16.gmra.mxu0 %v1354
        %v1578 = vpop.f32.mrf.mxu0
        %v1579 = vadd.f32 %v1375, %v1578
        %v1580 = vpop.f32.mrf.mxu0
        %v1581 = vpop.f32.mrf.mxu0
        %v1582 = vadd.f32 %v1375, %v1581
        %v1583 = vpop.f32.mrf.mxu0
        %1584 = vdwg.mxu0
        %v1585 = vmax.f32 %v1459, 0.0
        %v1586 = vmax.f32 %v1462, 0.0
        %v1587 = vmax.f32 %v1467, 0.0
        %v1588 = vmax.f32 %v1470, 0.0
        %v1589 = vmax.f32 %v1475, 0.0
        %v1590 = vmax.f32 %v1478, 0.0
        %v1591 = vmax.f32 %v1483, 0.0
        %v1592 = vmax.f32 %v1486, 0.0
        %v1593 = vmax.f32 %v1491, 0.0
        %v1594 = vmax.f32 %v1494, 0.0
        %v1595 = vmax.f32 %v1499, 0.0
        %v1596 = vmax.f32 %v1502, 0.0
        %v1597 = vmax.f32 %v1507, 0.0
        %v1598 = vmax.f32 %v1510, 0.0
        %v1599 = vmax.f32 %v1515, 0.0
        %v1600 = vmax.f32 %v1518, 0.0
        %v1601 = vmax.f32 %v1523, 0.0
        %v1602 = vmax.f32 %v1526, 0.0
        %v1603 = vmax.f32 %v1531, 0.0
        %v1604 = vmax.f32 %v1534, 0.0
        %v1605 = vmax.f32 %v1539, 0.0
        %v1606 = vmax.f32 %v1542, 0.0
        %v1607 = vmax.f32 %v1547, 0.0
        %v1608 = vmax.f32 %v1550, 0.0
        %v1609 = vmax.f32 %v1555, 0.0
        %v1610 = vmax.f32 %v1558, 0.0
        %v1611 = vmax.f32 %v1563, 0.0
        %v1612 = vmax.f32 %v1566, 0.0
        %v1613 = vmax.f32 %v1571, 0.0
        %v1614 = vmax.f32 %v1574, 0.0
        %v1615 = vmax.f32 %v1579, 0.0
        %v1616 = vmax.f32 %v1582, 0.0
        %v1617 = vpack.c.bf16 %v1586, %v1585
        %v1618 = vpack.c.bf16 %v1588, %v1587
        %v1619 = vpack.c.bf16 %v1590, %v1589
        %v1620 = vpack.c.bf16 %v1592, %v1591
        %v1621 = vpack.c.bf16 %v1594, %v1593
        %v1622 = vpack.c.bf16 %v1596, %v1595
        %v1623 = vpack.c.bf16 %v1598, %v1597
        %v1624 = vpack.c.bf16 %v1600, %v1599
        %v1625 = vpack.c.bf16 %v1602, %v1601
        %v1626 = vpack.c.bf16 %v1604, %v1603
        %v1627 = vpack.c.bf16 %v1606, %v1605
        %v1628 = vpack.c.bf16 %v1608, %v1607
        %v1629 = vpack.c.bf16 %v1610, %v1609
        %v1630 = vpack.c.bf16 %v1612, %v1611
        %v1631 = vpack.c.bf16 %v1614, %v1613
        %v1632 = vpack.c.bf16 %v1616, %v1615
        %s1633 = scalar_lea.vmem [#allocation9], 64
        %v1634 = vld [vmem:[%s1633] sm:$0xf]
        %v1635 = vld [vmem:[%s1633 + $0x4] sm:$0xf]
        %v1636 = vld [vmem:[%s1633 + $0x8] sm:$0xf]
        %v1637 = vld [vmem:[%s1633 + $0xc] sm:$0xf]
        %v1638 = vld [vmem:[%s1633 + $0x10] sm:$0xf]
        %v1639 = vld [vmem:[%s1633 + $0x14] sm:$0xf]
        %v1640 = vld [vmem:[%s1633 + $0x18] sm:$0xf]
        %v1641 = vld [vmem:[%s1633 + $0x1c] sm:$0xf]
        %v1642 = vld [vmem:[%s1633 + $0x20] sm:$0xf]
        %v1643 = vld [vmem:[%s1633 + $0x24] sm:$0xf]
        %v1644 = vld [vmem:[%s1633 + $0x28] sm:$0xf]
        %v1645 = vld [vmem:[%s1633 + $0x2c] sm:$0xf]
        %v1646 = vld [vmem:[%s1633 + $0x30] sm:$0xf]
        %v1647 = vld [vmem:[%s1633 + $0x34] sm:$0xf]
        %v1648 = vld [vmem:[%s1633 + $0x38] sm:$0xf]
        %v1649 = vld [vmem:[%s1633 + $0x3c] sm:$0xf]
        %v1650 = vlaneseq
        %v1651 = vshrl.u32 %v1650, 7
        %v1652 = vsub.s32 3, %v1651
        %v1653 = vrot.slane %v1138, %v1652
        %v1670 = vunpack.c.l.b16 %v1634
        %v1671 = vunpack.c.l.b16 %v1635
        %v1672 = vunpack.c.l.b16 %v1636
        %v1673 = vunpack.c.l.b16 %v1637
        %v1674 = vunpack.c.l.b16 %v1638
        %v1675 = vunpack.c.l.b16 %v1639
        %v1676 = vunpack.c.l.b16 %v1640
        %v1677 = vunpack.c.l.b16 %v1641
        %v1678 = vunpack.c.l.b16 %v1642
        %v1679 = vunpack.c.l.b16 %v1643
        %v1680 = vunpack.c.l.b16 %v1644
        %v1681 = vunpack.c.l.b16 %v1645
        %v1682 = vunpack.c.l.b16 %v1646
        %v1683 = vunpack.c.l.b16 %v1647
        %v1684 = vunpack.c.l.b16 %v1648
        %v1685 = vunpack.c.l.b16 %v1649
        %v1686 = vpack.c.b16 %v1671, %v1670
        %v1687 = vpack.c.b16 %v1673, %v1672
        %v1688 = vpack.c.b16 %v1675, %v1674
        %v1689 = vpack.c.b16 %v1677, %v1676
        %v1690 = vpack.c.b16 %v1679, %v1678
        %v1691 = vpack.c.b16 %v1681, %v1680
        %v1692 = vpack.c.b16 %v1683, %v1682
        %v1693 = vpack.c.b16 %v1685, %v1684
        %1702 = vmatprep.subr.bf16.mxu0 0
        %1703 = vmatpush1.bf16.msra.mxu0 %v1693
        %1704 = vmatprep.subr.bf16.mxu0 0
        %1705 = vmatpush1.bf16.msra.mxu0 %v1692
        %1706 = vmatprep.subr.bf16.mxu0 0
        %1707 = vmatpush1.bf16.msra.mxu0 %v1691
        %1708 = vmatprep.subr.bf16.mxu0 0
        %1709 = vmatpush1.bf16.msra.mxu0 %v1690
        %1710 = vmatprep.subr.bf16.mxu0 0
        %1711 = vmatpush1.bf16.msra.mxu0 %v1689
        %1712 = vmatprep.subr.bf16.mxu0 0
        %1713 = vmatpush1.bf16.msra.mxu0 %v1688
        %1714 = vmatprep.subr.bf16.mxu0 0
        %1715 = vmatpush1.bf16.msra.mxu0 %v1687
        %1716 = vmatprep.subr.bf16.mxu0 0
        %1717 = vmatpush1.bf16.msra.mxu0 %v1686
        %1718 = vmatprep.subr.bf16.mxu0 0
        %1719 = vmatpush2.bf16.msra.mxu0 0
        %1720 = vmatprep.subr.bf16.mxu0 0
        %1721 = vmatpush2.bf16.msra.mxu0 0
        %1722 = vmatprep.subr.bf16.mxu0 0
        %1723 = vmatpush2.bf16.msra.mxu0 0
        %1724 = vmatprep.subr.bf16.mxu0 0
        %1725 = vmatpush2.bf16.msra.mxu0 0
        %1726 = vmatprep.subr.bf16.mxu0 0
        %1727 = vmatpush2.bf16.msra.mxu0 0
        %1728 = vmatprep.subr.bf16.mxu0 0
        %1729 = vmatpush2.bf16.msra.mxu0 0
        %1730 = vmatprep.subr.bf16.mxu0 0
        %1731 = vmatpush2.bf16.msra.mxu0 0
        %1732 = vmatprep.subr.bf16.mxu0 0
        %1733 = vmatpush2.bf16.msra.mxu0 0
        %1734 = vmatprep.mubr.bf16.mxu0 0
        %1735 = vmatmul.mubr.bf16.gmra.mxu0 %v1617
        %v1736 = vpop.f32.mrf.mxu0
        %v1737 = vadd.f32 %v1653, %v1736
        %v1738 = vpop.f32.mrf.mxu0
        %v1739 = vpop.f32.mrf.mxu0
        %v1740 = vadd.f32 %v1653, %v1739
        %v1741 = vpop.f32.mrf.mxu0
        %1742 = vmatprep.mubr.bf16.mxu0 0
        %1743 = vmatmul.mubr.bf16.gmra.mxu0 %v1618
        %v1744 = vpop.f32.mrf.mxu0
        %v1745 = vadd.f32 %v1653, %v1744
        %v1746 = vpop.f32.mrf.mxu0
        %v1747 = vpop.f32.mrf.mxu0
        %v1748 = vadd.f32 %v1653, %v1747
        %v1749 = vpop.f32.mrf.mxu0
        %1750 = vmatprep.mubr.bf16.mxu0 0
        %1751 = vmatmul.mubr.bf16.gmra.mxu0 %v1619
        %v1752 = vpop.f32.mrf.mxu0
        %v1753 = vadd.f32 %v1653, %v1752
        %v1754 = vpop.f32.mrf.mxu0
        %v1755 = vpop.f32.mrf.mxu0
        %v1756 = vadd.f32 %v1653, %v1755
        %v1757 = vpop.f32.mrf.mxu0
        %1758 = vmatprep.mubr.bf16.mxu0 0
        %1759 = vmatmul.mubr.bf16.gmra.mxu0 %v1620
        %v1760 = vpop.f32.mrf.mxu0
        %v1761 = vadd.f32 %v1653, %v1760
        %v1762 = vpop.f32.mrf.mxu0
        %v1763 = vpop.f32.mrf.mxu0
        %v1764 = vadd.f32 %v1653, %v1763
        %v1765 = vpop.f32.mrf.mxu0
        %1766 = vmatprep.mubr.bf16.mxu0 0
        %1767 = vmatmul.mubr.bf16.gmra.mxu0 %v1621
        %v1768 = vpop.f32.mrf.mxu0
        %v1769 = vadd.f32 %v1653, %v1768
        %v1770 = vpop.f32.mrf.mxu0
        %v1771 = vpop.f32.mrf.mxu0
        %v1772 = vadd.f32 %v1653, %v1771
        %v1773 = vpop.f32.mrf.mxu0
        %1774 = vmatprep.mubr.bf16.mxu0 0
        %1775 = vmatmul.mubr.bf16.gmra.mxu0 %v1622
        %v1776 = vpop.f32.mrf.mxu0
        %v1777 = vadd.f32 %v1653, %v1776
        %v1778 = vpop.f32.mrf.mxu0
        %v1779 = vpop.f32.mrf.mxu0
        %v1780 = vadd.f32 %v1653, %v1779
        %v1781 = vpop.f32.mrf.mxu0
        %1782 = vmatprep.mubr.bf16.mxu0 0
        %1783 = vmatmul.mubr.bf16.gmra.mxu0 %v1623
        %v1784 = vpop.f32.mrf.mxu0
        %v1785 = vadd.f32 %v1653, %v1784
        %v1786 = vpop.f32.mrf.mxu0
        %v1787 = vpop.f32.mrf.mxu0
        %v1788 = vadd.f32 %v1653, %v1787
        %v1789 = vpop.f32.mrf.mxu0
        %1790 = vmatprep.mubr.bf16.mxu0 0
        %1791 = vmatmul.mubr.bf16.gmra.mxu0 %v1624
        %v1792 = vpop.f32.mrf.mxu0
        %v1793 = vadd.f32 %v1653, %v1792
        %v1794 = vpop.f32.mrf.mxu0
        %v1795 = vpop.f32.mrf.mxu0
        %v1796 = vadd.f32 %v1653, %v1795
        %v1797 = vpop.f32.mrf.mxu0
        %1798 = vmatprep.mubr.bf16.mxu0 0
        %1799 = vmatmul.mubr.bf16.gmra.mxu0 %v1625
        %v1800 = vpop.f32.mrf.mxu0
        %v1801 = vadd.f32 %v1653, %v1800
        %v1802 = vpop.f32.mrf.mxu0
        %v1803 = vpop.f32.mrf.mxu0
        %v1804 = vadd.f32 %v1653, %v1803
        %v1805 = vpop.f32.mrf.mxu0
        %1806 = vmatprep.mubr.bf16.mxu0 0
        %1807 = vmatmul.mubr.bf16.gmra.mxu0 %v1626
        %v1808 = vpop.f32.mrf.mxu0
        %v1809 = vadd.f32 %v1653, %v1808
        %v1810 = vpop.f32.mrf.mxu0
        %v1811 = vpop.f32.mrf.mxu0
        %v1812 = vadd.f32 %v1653, %v1811
        %v1813 = vpop.f32.mrf.mxu0
        %1814 = vmatprep.mubr.bf16.mxu0 0
        %1815 = vmatmul.mubr.bf16.gmra.mxu0 %v1627
        %v1816 = vpop.f32.mrf.mxu0
        %v1817 = vadd.f32 %v1653, %v1816
        %v1818 = vpop.f32.mrf.mxu0
        %v1819 = vpop.f32.mrf.mxu0
        %v1820 = vadd.f32 %v1653, %v1819
        %v1821 = vpop.f32.mrf.mxu0
        %1822 = vmatprep.mubr.bf16.mxu0 0
        %1823 = vmatmul.mubr.bf16.gmra.mxu0 %v1628
        %v1824 = vpop.f32.mrf.mxu0
        %v1825 = vadd.f32 %v1653, %v1824
        %v1826 = vpop.f32.mrf.mxu0
        %v1827 = vpop.f32.mrf.mxu0
        %v1828 = vadd.f32 %v1653, %v1827
        %v1829 = vpop.f32.mrf.mxu0
        %1830 = vmatprep.mubr.bf16.mxu0 0
        %1831 = vmatmul.mubr.bf16.gmra.mxu0 %v1629
        %v1832 = vpop.f32.mrf.mxu0
        %v1833 = vadd.f32 %v1653, %v1832
        %v1834 = vpop.f32.mrf.mxu0
        %v1835 = vpop.f32.mrf.mxu0
        %v1836 = vadd.f32 %v1653, %v1835
        %v1837 = vpop.f32.mrf.mxu0
        %1838 = vmatprep.mubr.bf16.mxu0 0
        %1839 = vmatmul.mubr.bf16.gmra.mxu0 %v1630
        %v1840 = vpop.f32.mrf.mxu0
        %v1841 = vadd.f32 %v1653, %v1840
        %v1842 = vpop.f32.mrf.mxu0
        %v1843 = vpop.f32.mrf.mxu0
        %v1844 = vadd.f32 %v1653, %v1843
        %v1845 = vpop.f32.mrf.mxu0
        %1846 = vmatprep.mubr.bf16.mxu0 0
        %1847 = vmatmul.mubr.bf16.gmra.mxu0 %v1631
        %v1848 = vpop.f32.mrf.mxu0
        %v1849 = vadd.f32 %v1653, %v1848
        %v1850 = vpop.f32.mrf.mxu0
        %v1851 = vpop.f32.mrf.mxu0
        %v1852 = vadd.f32 %v1653, %v1851
        %v1853 = vpop.f32.mrf.mxu0
        %1854 = vmatprep.mubr.bf16.mxu0 0
        %1855 = vmatmul.mubr.bf16.gmra.mxu0 %v1632
        %v1856 = vpop.f32.mrf.mxu0
        %v1857 = vadd.f32 %v1653, %v1856
        %v1858 = vpop.f32.mrf.mxu0
        %v1859 = vpop.f32.mrf.mxu0
        %v1860 = vadd.f32 %v1653, %v1859
        %v1861 = vpop.f32.mrf.mxu0
        %1862 = vdwg.mxu0
        %v1863 = vmax.f32 %v1737, 0.0
        %v1864 = vmax.f32 %v1740, 0.0
        %v1865 = vmax.f32 %v1745, 0.0
        %v1866 = vmax.f32 %v1748, 0.0
        %v1867 = vmax.f32 %v1753, 0.0
        %v1868 = vmax.f32 %v1756, 0.0
        %v1869 = vmax.f32 %v1761, 0.0
        %v1870 = vmax.f32 %v1764, 0.0
        %v1871 = vmax.f32 %v1769, 0.0
        %v1872 = vmax.f32 %v1772, 0.0
        %v1873 = vmax.f32 %v1777, 0.0
        %v1874 = vmax.f32 %v1780, 0.0
        %v1875 = vmax.f32 %v1785, 0.0
        %v1876 = vmax.f32 %v1788, 0.0
        %v1877 = vmax.f32 %v1793, 0.0
        %v1878 = vmax.f32 %v1796, 0.0
        %v1879 = vmax.f32 %v1801, 0.0
        %v1880 = vmax.f32 %v1804, 0.0
        %v1881 = vmax.f32 %v1809, 0.0
        %v1882 = vmax.f32 %v1812, 0.0
        %v1883 = vmax.f32 %v1817, 0.0
        %v1884 = vmax.f32 %v1820, 0.0
        %v1885 = vmax.f32 %v1825, 0.0
        %v1886 = vmax.f32 %v1828, 0.0
        %v1887 = vmax.f32 %v1833, 0.0
        %v1888 = vmax.f32 %v1836, 0.0
        %v1889 = vmax.f32 %v1841, 0.0
        %v1890 = vmax.f32 %v1844, 0.0
        %v1891 = vmax.f32 %v1849, 0.0
        %v1892 = vmax.f32 %v1852, 0.0
        %v1893 = vmax.f32 %v1857, 0.0
        %v1894 = vmax.f32 %v1860, 0.0
        %v1895 = vmul.f32 %v1307, %v1863
        %v1896 = vmul.f32 %v1308, %v1864
        %v1897 = vmul.f32 %v1309, %v1865
        %v1898 = vmul.f32 %v1310, %v1866
        %v1899 = vmul.f32 %v1311, %v1867
        %v1900 = vmul.f32 %v1312, %v1868
        %v1901 = vmul.f32 %v1313, %v1869
        %v1902 = vmul.f32 %v1314, %v1870
        %v1903 = vmul.f32 %v1315, %v1871
        %v1904 = vmul.f32 %v1316, %v1872
        %v1905 = vmul.f32 %v1317, %v1873
        %v1906 = vmul.f32 %v1318, %v1874
        %v1907 = vmul.f32 %v1319, %v1875
        %v1908 = vmul.f32 %v1320, %v1876
        %v1909 = vmul.f32 %v1321, %v1877
        %v1910 = vmul.f32 %v1322, %v1878
        %v1911 = vmul.f32 %v1323, %v1879
        %v1912 = vmul.f32 %v1324, %v1880
        %v1913 = vmul.f32 %v1325, %v1881
        %v1914 = vmul.f32 %v1326, %v1882
        %v1915 = vmul.f32 %v1327, %v1883
        %v1916 = vmul.f32 %v1328, %v1884
        %v1917 = vmul.f32 %v1329, %v1885
        %v1918 = vmul.f32 %v1330, %v1886
        %v1919 = vmul.f32 %v1331, %v1887
        %v1920 = vmul.f32 %v1332, %v1888
        %v1921 = vmul.f32 %v1333, %v1889
        %v1922 = vmul.f32 %v1334, %v1890
        %v1923 = vmul.f32 %v1335, %v1891
        %v1924 = vmul.f32 %v1336, %v1892
        %v1925 = vmul.f32 %v1337, %v1893
        %v1926 = vmul.f32 %v1338, %v1894
        %v1927 = vld [vmem:[%s4] sm:$0x7]
        %v1928 = vlaneseq
        %v1929 = vshrl.u32 %v1928, 7
        %v1930 = vsub.s32 0, %v1929
        %v1931 = vrot.slane %v1927, %v1930
        %v1932 = vmul.f32 %v1307, %v1931
        %v1933 = vmul.f32 %v1308, %v1931
        %v1934 = vmul.f32 %v1309, %v1931
        %v1935 = vmul.f32 %v1310, %v1931
        %v1936 = vmul.f32 %v1311, %v1931
        %v1937 = vmul.f32 %v1312, %v1931
        %v1938 = vmul.f32 %v1313, %v1931
        %v1939 = vmul.f32 %v1314, %v1931
        %v1940 = vmul.f32 %v1315, %v1931
        %v1941 = vmul.f32 %v1316, %v1931
        %v1942 = vmul.f32 %v1317, %v1931
        %v1943 = vmul.f32 %v1318, %v1931
        %v1944 = vmul.f32 %v1319, %v1931
        %v1945 = vmul.f32 %v1320, %v1931
        %v1946 = vmul.f32 %v1321, %v1931
        %v1947 = vmul.f32 %v1322, %v1931
        %v1948 = vmul.f32 %v1323, %v1931
        %v1949 = vmul.f32 %v1324, %v1931
        %v1950 = vmul.f32 %v1325, %v1931
        %v1951 = vmul.f32 %v1326, %v1931
        %v1952 = vmul.f32 %v1327, %v1931
        %v1953 = vmul.f32 %v1328, %v1931
        %v1954 = vmul.f32 %v1329, %v1931
        %v1955 = vmul.f32 %v1330, %v1931
        %v1956 = vmul.f32 %v1331, %v1931
        %v1957 = vmul.f32 %v1332, %v1931
        %v1958 = vmul.f32 %v1333, %v1931
        %v1959 = vmul.f32 %v1334, %v1931
        %v1960 = vmul.f32 %v1335, %v1931
        %v1961 = vmul.f32 %v1336, %v1931
        %v1962 = vmul.f32 %v1337, %v1931
        %v1963 = vmul.f32 %v1338, %v1931
        %v1964 = vlaneseq
        %v1965 = vshrl.u32 %v1964, 7
        %v1966 = vsub.s32 1, %v1965
        %v1967 = vrot.slane %v1927, %v1966
        %v1968 = vmul.f32 %v1863, %v1967
        %v1969 = vmul.f32 %v1864, %v1967
        %v1970 = vmul.f32 %v1865, %v1967
        %v1971 = vmul.f32 %v1866, %v1967
        %v1972 = vmul.f32 %v1867, %v1967
        %v1973 = vmul.f32 %v1868, %v1967
        %v1974 = vmul.f32 %v1869, %v1967
        %v1975 = vmul.f32 %v1870, %v1967
        %v1976 = vmul.f32 %v1871, %v1967
        %v1977 = vmul.f32 %v1872, %v1967
        %v1978 = vmul.f32 %v1873, %v1967
        %v1979 = vmul.f32 %v1874, %v1967
        %v1980 = vmul.f32 %v1875, %v1967
        %v1981 = vmul.f32 %v1876, %v1967
        %v1982 = vmul.f32 %v1877, %v1967
        %v1983 = vmul.f32 %v1878, %v1967
        %v1984 = vmul.f32 %v1879, %v1967
        %v1985 = vmul.f32 %v1880, %v1967
        %v1986 = vmul.f32 %v1881, %v1967
        %v1987 = vmul.f32 %v1882, %v1967
        %v1988 = vmul.f32 %v1883, %v1967
        %v1989 = vmul.f32 %v1884, %v1967
        %v1990 = vmul.f32 %v1885, %v1967
        %v1991 = vmul.f32 %v1886, %v1967
        %v1992 = vmul.f32 %v1887, %v1967
        %v1993 = vmul.f32 %v1888, %v1967
        %v1994 = vmul.f32 %v1889, %v1967
        %v1995 = vmul.f32 %v1890, %v1967
        %v1996 = vmul.f32 %v1891, %v1967
        %v1997 = vmul.f32 %v1892, %v1967
        %v1998 = vmul.f32 %v1893, %v1967
        %v1999 = vmul.f32 %v1894, %v1967
        %v2000 = vadd.f32 %v1932, %v1968
        %v2001 = vadd.f32 %v1933, %v1969
        %v2002 = vadd.f32 %v1934, %v1970
        %v2003 = vadd.f32 %v1935, %v1971
        %v2004 = vadd.f32 %v1936, %v1972
        %v2005 = vadd.f32 %v1937, %v1973
        %v2006 = vadd.f32 %v1938, %v1974
        %v2007 = vadd.f32 %v1939, %v1975
        %v2008 = vadd.f32 %v1940, %v1976
        %v2009 = vadd.f32 %v1941, %v1977
        %v2010 = vadd.f32 %v1942, %v1978
        %v2011 = vadd.f32 %v1943, %v1979
        %v2012 = vadd.f32 %v1944, %v1980
        %v2013 = vadd.f32 %v1945, %v1981
        %v2014 = vadd.f32 %v1946, %v1982
        %v2015 = vadd.f32 %v1947, %v1983
        %v2016 = vadd.f32 %v1948, %v1984
        %v2017 = vadd.f32 %v1949, %v1985
        %v2018 = vadd.f32 %v1950, %v1986
        %v2019 = vadd.f32 %v1951, %v1987
        %v2020 = vadd.f32 %v1952, %v1988
        %v2021 = vadd.f32 %v1953, %v1989
        %v2022 = vadd.f32 %v1954, %v1990
        %v2023 = vadd.f32 %v1955, %v1991
        %v2024 = vadd.f32 %v1956, %v1992
        %v2025 = vadd.f32 %v1957, %v1993
        %v2026 = vadd.f32 %v1958, %v1994
        %v2027 = vadd.f32 %v1959, %v1995
        %v2028 = vadd.f32 %v1960, %v1996
        %v2029 = vadd.f32 %v1961, %v1997
        %v2030 = vadd.f32 %v1962, %v1998
        %v2031 = vadd.f32 %v1963, %v1999
        %v2032 = vlaneseq
        %v2033 = vshrl.u32 %v2032, 7
        %v2034 = vsub.s32 2, %v2033
        %v2035 = vrot.slane %v1927, %v2034
        %v2036 = vmul.f32 %v1895, %v2035
        %v2037 = vmul.f32 %v1896, %v2035
        %v2038 = vmul.f32 %v1897, %v2035
        %v2039 = vmul.f32 %v1898, %v2035
        %v2040 = vmul.f32 %v1899, %v2035
        %v2041 = vmul.f32 %v1900, %v2035
        %v2042 = vmul.f32 %v1901, %v2035
        %v2043 = vmul.f32 %v1902, %v2035
        %v2044 = vmul.f32 %v1903, %v2035
        %v2045 = vmul.f32 %v1904, %v2035
        %v2046 = vmul.f32 %v1905, %v2035
        %v2047 = vmul.f32 %v1906, %v2035
        %v2048 = vmul.f32 %v1907, %v2035
        %v2049 = vmul.f32 %v1908, %v2035
        %v2050 = vmul.f32 %v1909, %v2035
        %v2051 = vmul.f32 %v1910, %v2035
        %v2052 = vmul.f32 %v1911, %v2035
        %v2053 = vmul.f32 %v1912, %v2035
        %v2054 = vmul.f32 %v1913, %v2035
        %v2055 = vmul.f32 %v1914, %v2035
        %v2056 = vmul.f32 %v1915, %v2035
        %v2057 = vmul.f32 %v1916, %v2035
        %v2058 = vmul.f32 %v1917, %v2035
        %v2059 = vmul.f32 %v1918, %v2035
        %v2060 = vmul.f32 %v1919, %v2035
        %v2061 = vmul.f32 %v1920, %v2035
        %v2062 = vmul.f32 %v1921, %v2035
        %v2063 = vmul.f32 %v1922, %v2035
        %v2064 = vmul.f32 %v1923, %v2035
        %v2065 = vmul.f32 %v1924, %v2035
        %v2066 = vmul.f32 %v1925, %v2035
        %v2067 = vmul.f32 %v1926, %v2035
        %v2068 = vadd.f32 %v2000, %v2036
        %v2069 = vadd.f32 %v2001, %v2037
        %v2070 = vadd.f32 %v2002, %v2038
        %v2071 = vadd.f32 %v2003, %v2039
        %v2072 = vadd.f32 %v2004, %v2040
        %v2073 = vadd.f32 %v2005, %v2041
        %v2074 = vadd.f32 %v2006, %v2042
        %v2075 = vadd.f32 %v2007, %v2043
        %v2076 = vadd.f32 %v2008, %v2044
        %v2077 = vadd.f32 %v2009, %v2045
        %v2078 = vadd.f32 %v2010, %v2046
        %v2079 = vadd.f32 %v2011, %v2047
        %v2080 = vadd.f32 %v2012, %v2048
        %v2081 = vadd.f32 %v2013, %v2049
        %v2082 = vadd.f32 %v2014, %v2050
        %v2083 = vadd.f32 %v2015, %v2051
        %v2084 = vadd.f32 %v2016, %v2052
        %v2085 = vadd.f32 %v2017, %v2053
        %v2086 = vadd.f32 %v2018, %v2054
        %v2087 = vadd.f32 %v2019, %v2055
        %v2088 = vadd.f32 %v2020, %v2056
        %v2089 = vadd.f32 %v2021, %v2057
        %v2090 = vadd.f32 %v2022, %v2058
        %v2091 = vadd.f32 %v2023, %v2059
        %v2092 = vadd.f32 %v2024, %v2060
        %v2093 = vadd.f32 %v2025, %v2061
        %v2094 = vadd.f32 %v2026, %v2062
        %v2095 = vadd.f32 %v2027, %v2063
        %v2096 = vadd.f32 %v2028, %v2064
        %v2097 = vadd.f32 %v2029, %v2065
        %v2098 = vadd.f32 %v2030, %v2066
        %v2099 = vadd.f32 %v2031, %v2067
        %2100 = vadd.xlane.f32.xlu0 %v2068
        %v2101 = vpop.xlane.xlu0 %2100
        %2102 = vadd.xlane.f32.xlu0 %v2069
        %v2103 = vpop.xlane.xlu0 %2102
        %2104 = vadd.xlane.f32.xlu0 %v2070
        %v2105 = vpop.xlane.xlu0 %2104
        %2106 = vadd.xlane.f32.xlu0 %v2071
        %v2107 = vpop.xlane.xlu0 %2106
        %2108 = vadd.xlane.f32.xlu0 %v2072
        %v2109 = vpop.xlane.xlu0 %2108
        %2110 = vadd.xlane.f32.xlu0 %v2073
        %v2111 = vpop.xlane.xlu0 %2110
        %2112 = vadd.xlane.f32.xlu0 %v2074
        %v2113 = vpop.xlane.xlu0 %2112
        %2114 = vadd.xlane.f32.xlu0 %v2075
        %v2115 = vpop.xlane.xlu0 %2114
        %2116 = vadd.xlane.f32.xlu0 %v2076
        %v2117 = vpop.xlane.xlu0 %2116
        %2118 = vadd.xlane.f32.xlu0 %v2077
        %v2119 = vpop.xlane.xlu0 %2118
        %2120 = vadd.xlane.f32.xlu0 %v2078
        %v2121 = vpop.xlane.xlu0 %2120
        %2122 = vadd.xlane.f32.xlu0 %v2079
        %v2123 = vpop.xlane.xlu0 %2122
        %2124 = vadd.xlane.f32.xlu0 %v2080
        %v2125 = vpop.xlane.xlu0 %2124
        %2126 = vadd.xlane.f32.xlu0 %v2081
        %v2127 = vpop.xlane.xlu0 %2126
        %2128 = vadd.xlane.f32.xlu0 %v2082
        %v2129 = vpop.xlane.xlu0 %2128
        %2130 = vadd.xlane.f32.xlu0 %v2083
        %v2131 = vpop.xlane.xlu0 %2130
        %2132 = vadd.xlane.f32.xlu0 %v2084
        %v2133 = vpop.xlane.xlu0 %2132
        %2134 = vadd.xlane.f32.xlu0 %v2085
        %v2135 = vpop.xlane.xlu0 %2134
        %2136 = vadd.xlane.f32.xlu0 %v2086
        %v2137 = vpop.xlane.xlu0 %2136
        %2138 = vadd.xlane.f32.xlu0 %v2087
        %v2139 = vpop.xlane.xlu0 %2138
        %2140 = vadd.xlane.f32.xlu0 %v2088
        %v2141 = vpop.xlane.xlu0 %2140
        %2142 = vadd.xlane.f32.xlu0 %v2089
        %v2143 = vpop.xlane.xlu0 %2142
        %2144 = vadd.xlane.f32.xlu0 %v2090
        %v2145 = vpop.xlane.xlu0 %2144
        %2146 = vadd.xlane.f32.xlu0 %v2091
        %v2147 = vpop.xlane.xlu0 %2146
        %2148 = vadd.xlane.f32.xlu0 %v2092
        %v2149 = vpop.xlane.xlu0 %2148
        %2150 = vadd.xlane.f32.xlu0 %v2093
        %v2151 = vpop.xlane.xlu0 %2150
        %2152 = vadd.xlane.f32.xlu0 %v2094
        %v2153 = vpop.xlane.xlu0 %2152
        %2154 = vadd.xlane.f32.xlu0 %v2095
        %v2155 = vpop.xlane.xlu0 %2154
        %2156 = vadd.xlane.f32.xlu0 %v2096
        %v2157 = vpop.xlane.xlu0 %2156
        %2158 = vadd.xlane.f32.xlu0 %v2097
        %v2159 = vpop.xlane.xlu0 %2158
        %2160 = vadd.xlane.f32.xlu0 %v2098
        %v2161 = vpop.xlane.xlu0 %2160
        %2162 = vadd.xlane.f32.xlu0 %v2099
        %v2163 = vpop.xlane.xlu0 %2162
        %s2164 = sld [smem:[#allocation2]]
        %v2165 = vstv %s2164
        %v2166 = vadd.f32 %v2101, %v2165
        %v2167 = vadd.f32 %v2103, %v2165
        %v2168 = vadd.f32 %v2105, %v2165
        %v2169 = vadd.f32 %v2107, %v2165
        %v2170 = vadd.f32 %v2109, %v2165
        %v2171 = vadd.f32 %v2111, %v2165
        %v2172 = vadd.f32 %v2113, %v2165
        %v2173 = vadd.f32 %v2115, %v2165
        %v2174 = vadd.f32 %v2117, %v2165
        %v2175 = vadd.f32 %v2119, %v2165
        %v2176 = vadd.f32 %v2121, %v2165
        %v2177 = vadd.f32 %v2123, %v2165
        %v2178 = vadd.f32 %v2125, %v2165
        %v2179 = vadd.f32 %v2127, %v2165
        %v2180 = vadd.f32 %v2129, %v2165
        %v2181 = vadd.f32 %v2131, %v2165
        %v2182 = vadd.f32 %v2133, %v2165
        %v2183 = vadd.f32 %v2135, %v2165
        %v2184 = vadd.f32 %v2137, %v2165
        %v2185 = vadd.f32 %v2139, %v2165
        %v2186 = vadd.f32 %v2141, %v2165
        %v2187 = vadd.f32 %v2143, %v2165
        %v2188 = vadd.f32 %v2145, %v2165
        %v2189 = vadd.f32 %v2147, %v2165
        %v2190 = vadd.f32 %v2149, %v2165
        %v2191 = vadd.f32 %v2151, %v2165
        %v2192 = vadd.f32 %v2153, %v2165
        %v2193 = vadd.f32 %v2155, %v2165
        %v2194 = vadd.f32 %v2157, %v2165
        %v2195 = vadd.f32 %v2159, %v2165
        %v2196 = vadd.f32 %v2161, %v2165
        %v2197 = vadd.f32 %v2163, %v2165
        %v2198 = vxor.u32 %v2166, 2147483648
        %v2199 = vxor.u32 %v2167, 2147483648
        %v2200 = vxor.u32 %v2168, 2147483648
        %v2201 = vxor.u32 %v2169, 2147483648
        %v2202 = vxor.u32 %v2170, 2147483648
        %v2203 = vxor.u32 %v2171, 2147483648
        %v2204 = vxor.u32 %v2172, 2147483648
        %v2205 = vxor.u32 %v2173, 2147483648
        %v2206 = vxor.u32 %v2174, 2147483648
        %v2207 = vxor.u32 %v2175, 2147483648
        %v2208 = vxor.u32 %v2176, 2147483648
        %v2209 = vxor.u32 %v2177, 2147483648
        %v2210 = vxor.u32 %v2178, 2147483648
        %v2211 = vxor.u32 %v2179, 2147483648
        %v2212 = vxor.u32 %v2180, 2147483648
        %v2213 = vxor.u32 %v2181, 2147483648
        %v2214 = vxor.u32 %v2182, 2147483648
        %v2215 = vxor.u32 %v2183, 2147483648
        %v2216 = vxor.u32 %v2184, 2147483648
        %v2217 = vxor.u32 %v2185, 2147483648
        %v2218 = vxor.u32 %v2186, 2147483648
        %v2219 = vxor.u32 %v2187, 2147483648
        %v2220 = vxor.u32 %v2188, 2147483648
        %v2221 = vxor.u32 %v2189, 2147483648
        %v2222 = vxor.u32 %v2190, 2147483648
        %v2223 = vxor.u32 %v2191, 2147483648
        %v2224 = vxor.u32 %v2192, 2147483648
        %v2225 = vxor.u32 %v2193, 2147483648
        %v2226 = vxor.u32 %v2194, 2147483648
        %v2227 = vxor.u32 %v2195, 2147483648
        %v2228 = vxor.u32 %v2196, 2147483648
        %v2229 = vxor.u32 %v2197, 2147483648
        %v2230 = vmul.f32 %v2198, 1.442695
        %v2231 = vpow.pop %v2230
        %v2232 = vmul.f32 %v2199, 1.442695
        %v2233 = vpow.pop %v2232
        %v2234 = vmul.f32 %v2200, 1.442695
        %v2235 = vpow.pop %v2234
        %v2236 = vmul.f32 %v2201, 1.442695
        %v2237 = vpow.pop %v2236
        %v2238 = vmul.f32 %v2202, 1.442695
        %v2239 = vpow.pop %v2238
        %v2240 = vmul.f32 %v2203, 1.442695
        %v2241 = vpow.pop %v2240
        %v2242 = vmul.f32 %v2204, 1.442695
        %v2243 = vpow.pop %v2242
        %v2244 = vmul.f32 %v2205, 1.442695
        %v2245 = vpow.pop %v2244
        %v2246 = vmul.f32 %v2206, 1.442695
        %v2247 = vpow.pop %v2246
        %v2248 = vmul.f32 %v2207, 1.442695
        %v2249 = vpow.pop %v2248
        %v2250 = vmul.f32 %v2208, 1.442695
        %v2251 = vpow.pop %v2250
        %v2252 = vmul.f32 %v2209, 1.442695
        %v2253 = vpow.pop %v2252
        %v2254 = vmul.f32 %v2210, 1.442695
        %v2255 = vpow.pop %v2254
        %v2256 = vmul.f32 %v2211, 1.442695
        %v2257 = vpow.pop %v2256
        %v2258 = vmul.f32 %v2212, 1.442695
        %v2259 = vpow.pop %v2258
        %v2260 = vmul.f32 %v2213, 1.442695
        %v2261 = vpow.pop %v2260
        %v2262 = vmul.f32 %v2214, 1.442695
        %v2263 = vpow.pop %v2262
        %v2264 = vmul.f32 %v2215, 1.442695
        %v2265 = vpow.pop %v2264
        %v2266 = vmul.f32 %v2216, 1.442695
        %v2267 = vpow.pop %v2266
        %v2268 = vmul.f32 %v2217, 1.442695
        %v2269 = vpow.pop %v2268
        %v2270 = vmul.f32 %v2218, 1.442695
        %v2271 = vpow.pop %v2270
        %v2272 = vmul.f32 %v2219, 1.442695
        %v2273 = vpow.pop %v2272
        %v2274 = vmul.f32 %v2220, 1.442695
        %v2275 = vpow.pop %v2274
        %v2276 = vmul.f32 %v2221, 1.442695
        %v2277 = vpow.pop %v2276
        %v2278 = vmul.f32 %v2222, 1.442695
        %v2279 = vpow.pop %v2278
        %v2280 = vmul.f32 %v2223, 1.442695
        %v2281 = vpow.pop %v2280
        %v2282 = vmul.f32 %v2224, 1.442695
        %v2283 = vpow.pop %v2282
        %v2284 = vmul.f32 %v2225, 1.442695
        %v2285 = vpow.pop %v2284
        %v2286 = vmul.f32 %v2226, 1.442695
        %v2287 = vpow.pop %v2286
        %v2288 = vmul.f32 %v2227, 1.442695
        %v2289 = vpow.pop %v2288
        %v2290 = vmul.f32 %v2228, 1.442695
        %v2291 = vpow.pop %v2290
        %v2292 = vmul.f32 %v2229, 1.442695
        %v2293 = vpow.pop %v2292
        %v2294 = vadd.f32 %v2231, 1.0
        %v2295 = vadd.f32 %v2233, 1.0
        %v2296 = vadd.f32 %v2235, 1.0
        %v2297 = vadd.f32 %v2237, 1.0
        %v2298 = vadd.f32 %v2239, 1.0
        %v2299 = vadd.f32 %v2241, 1.0
        %v2300 = vadd.f32 %v2243, 1.0
        %v2301 = vadd.f32 %v2245, 1.0
        %v2302 = vadd.f32 %v2247, 1.0
        %v2303 = vadd.f32 %v2249, 1.0
        %v2304 = vadd.f32 %v2251, 1.0
        %v2305 = vadd.f32 %v2253, 1.0
        %v2306 = vadd.f32 %v2255, 1.0
        %v2307 = vadd.f32 %v2257, 1.0
        %v2308 = vadd.f32 %v2259, 1.0
        %v2309 = vadd.f32 %v2261, 1.0
        %v2310 = vadd.f32 %v2263, 1.0
        %v2311 = vadd.f32 %v2265, 1.0
        %v2312 = vadd.f32 %v2267, 1.0
        %v2313 = vadd.f32 %v2269, 1.0
        %v2314 = vadd.f32 %v2271, 1.0
        %v2315 = vadd.f32 %v2273, 1.0
        %v2316 = vadd.f32 %v2275, 1.0
        %v2317 = vadd.f32 %v2277, 1.0
        %v2318 = vadd.f32 %v2279, 1.0
        %v2319 = vadd.f32 %v2281, 1.0
        %v2320 = vadd.f32 %v2283, 1.0
        %v2321 = vadd.f32 %v2285, 1.0
        %v2322 = vadd.f32 %v2287, 1.0
        %v2323 = vadd.f32 %v2289, 1.0
        %v2324 = vadd.f32 %v2291, 1.0
        %v2325 = vadd.f32 %v2293, 1.0
        %v2326 = vrcp.pop %v2294
        %v2327 = vmul.f32 1.0, %v2326
        %v2328 = vrcp.pop %v2295
        %v2329 = vmul.f32 1.0, %v2328
        %v2330 = vrcp.pop %v2296
        %v2331 = vmul.f32 1.0, %v2330
        %v2332 = vrcp.pop %v2297
        %v2333 = vmul.f32 1.0, %v2332
        %v2334 = vrcp.pop %v2298
        %v2335 = vmul.f32 1.0, %v2334
        %v2336 = vrcp.pop %v2299
        %v2337 = vmul.f32 1.0, %v2336
        %v2338 = vrcp.pop %v2300
        %v2339 = vmul.f32 1.0, %v2338
        %v2340 = vrcp.pop %v2301
        %v2341 = vmul.f32 1.0, %v2340
        %v2342 = vrcp.pop %v2302
        %v2343 = vmul.f32 1.0, %v2342
        %v2344 = vrcp.pop %v2303
        %v2345 = vmul.f32 1.0, %v2344
        %v2346 = vrcp.pop %v2304
        %v2347 = vmul.f32 1.0, %v2346
        %v2348 = vrcp.pop %v2305
        %v2349 = vmul.f32 1.0, %v2348
        %v2350 = vrcp.pop %v2306
        %v2351 = vmul.f32 1.0, %v2350
        %v2352 = vrcp.pop %v2307
        %v2353 = vmul.f32 1.0, %v2352
        %v2354 = vrcp.pop %v2308
        %v2355 = vmul.f32 1.0, %v2354
        %v2356 = vrcp.pop %v2309
        %v2357 = vmul.f32 1.0, %v2356
        %v2358 = vrcp.pop %v2310
        %v2359 = vmul.f32 1.0, %v2358
        %v2360 = vrcp.pop %v2311
        %v2361 = vmul.f32 1.0, %v2360
        %v2362 = vrcp.pop %v2312
        %v2363 = vmul.f32 1.0, %v2362
        %v2364 = vrcp.pop %v2313
        %v2365 = vmul.f32 1.0, %v2364
        %v2366 = vrcp.pop %v2314
        %v2367 = vmul.f32 1.0, %v2366
        %v2368 = vrcp.pop %v2315
        %v2369 = vmul.f32 1.0, %v2368
        %v2370 = vrcp.pop %v2316
        %v2371 = vmul.f32 1.0, %v2370
        %v2372 = vrcp.pop %v2317
        %v2373 = vmul.f32 1.0, %v2372
        %v2374 = vrcp.pop %v2318
        %v2375 = vmul.f32 1.0, %v2374
        %v2376 = vrcp.pop %v2319
        %v2377 = vmul.f32 1.0, %v2376
        %v2378 = vrcp.pop %v2320
        %v2379 = vmul.f32 1.0, %v2378
        %v2380 = vrcp.pop %v2321
        %v2381 = vmul.f32 1.0, %v2380
        %v2382 = vrcp.pop %v2322
        %v2383 = vmul.f32 1.0, %v2382
        %v2384 = vrcp.pop %v2323
        %v2385 = vmul.f32 1.0, %v2384
        %v2386 = vrcp.pop %v2324
        %v2387 = vmul.f32 1.0, %v2386
        %v2388 = vrcp.pop %v2325
        %v2389 = vmul.f32 1.0, %v2388
        %v2422 = vlaneseq
        %v2423 = vshrl.u32 %v2422, 7
        %v2424 = vsub.s32 0, %v2423
        %v2425 = vrot.slane %v2327, %v2424
        %v2426 = vlaneseq
        %v2427 = vshrl.u32 %v2426, 7
        %v2428 = vsub.s32 1, %v2427
        %v2429 = vrot.slane %v2327, %v2428
        %v2430 = vlaneseq
        %v2431 = vshrl.u32 %v2430, 7
        %v2432 = vsub.s32 2, %v2431
        %v2433 = vrot.slane %v2327, %v2432
        %v2434 = vlaneseq
        %v2435 = vshrl.u32 %v2434, 7
        %v2436 = vsub.s32 3, %v2435
        %v2437 = vrot.slane %v2327, %v2436
        %v2438 = vlaneseq
        %v2439 = vshrl.u32 %v2438, 7
        %v2440 = vsub.s32 4, %v2439
        %v2441 = vrot.slane %v2327, %v2440
        %v2442 = vlaneseq
        %v2443 = vshrl.u32 %v2442, 7
        %v2444 = vsub.s32 5, %v2443
        %v2445 = vrot.slane %v2327, %v2444
        %v2446 = vlaneseq
        %v2447 = vshrl.u32 %v2446, 7
        %v2448 = vsub.s32 6, %v2447
        %v2449 = vrot.slane %v2327, %v2448
        %v2450 = vlaneseq
        %v2451 = vshrl.u32 %v2450, 7
        %v2452 = vsub.s32 7, %v2451
        %v2453 = vrot.slane %v2327, %v2452
        %v2454 = vlaneseq
        %v2455 = vshrl.u32 %v2454, 7
        %v2456 = vsub.s32 0, %v2455
        %v2457 = vrot.slane %v2329, %v2456
        %v2458 = vlaneseq
        %v2459 = vshrl.u32 %v2458, 7
        %v2460 = vsub.s32 1, %v2459
        %v2461 = vrot.slane %v2329, %v2460
        %v2462 = vlaneseq
        %v2463 = vshrl.u32 %v2462, 7
        %v2464 = vsub.s32 2, %v2463
        %v2465 = vrot.slane %v2329, %v2464
        %v2466 = vlaneseq
        %v2467 = vshrl.u32 %v2466, 7
        %v2468 = vsub.s32 3, %v2467
        %v2469 = vrot.slane %v2329, %v2468
        %v2470 = vlaneseq
        %v2471 = vshrl.u32 %v2470, 7
        %v2472 = vsub.s32 4, %v2471
        %v2473 = vrot.slane %v2329, %v2472
        %v2474 = vlaneseq
        %v2475 = vshrl.u32 %v2474, 7
        %v2476 = vsub.s32 5, %v2475
        %v2477 = vrot.slane %v2329, %v2476
        %v2478 = vlaneseq
        %v2479 = vshrl.u32 %v2478, 7
        %v2480 = vsub.s32 6, %v2479
        %v2481 = vrot.slane %v2329, %v2480
        %v2482 = vlaneseq
        %v2483 = vshrl.u32 %v2482, 7
        %v2484 = vsub.s32 7, %v2483
        %v2485 = vrot.slane %v2329, %v2484
        %v2486 = vlaneseq
        %v2487 = vshrl.u32 %v2486, 7
        %v2488 = vsub.s32 0, %v2487
        %v2489 = vrot.slane %v2331, %v2488
        %v2490 = vlaneseq
        %v2491 = vshrl.u32 %v2490, 7
        %v2492 = vsub.s32 1, %v2491
        %v2493 = vrot.slane %v2331, %v2492
        %v2494 = vlaneseq
        %v2495 = vshrl.u32 %v2494, 7
        %v2496 = vsub.s32 2, %v2495
        %v2497 = vrot.slane %v2331, %v2496
        %v2498 = vlaneseq
        %v2499 = vshrl.u32 %v2498, 7
        %v2500 = vsub.s32 3, %v2499
        %v2501 = vrot.slane %v2331, %v2500
        %v2502 = vlaneseq
        %v2503 = vshrl.u32 %v2502, 7
        %v2504 = vsub.s32 4, %v2503
        %v2505 = vrot.slane %v2331, %v2504
        %v2506 = vlaneseq
        %v2507 = vshrl.u32 %v2506, 7
        %v2508 = vsub.s32 5, %v2507
        %v2509 = vrot.slane %v2331, %v2508
        %v2510 = vlaneseq
        %v2511 = vshrl.u32 %v2510, 7
        %v2512 = vsub.s32 6, %v2511
        %v2513 = vrot.slane %v2331, %v2512
        %v2514 = vlaneseq
        %v2515 = vshrl.u32 %v2514, 7
        %v2516 = vsub.s32 7, %v2515
        %v2517 = vrot.slane %v2331, %v2516
        %v2518 = vlaneseq
        %v2519 = vshrl.u32 %v2518, 7
        %v2520 = vsub.s32 0, %v2519
        %v2521 = vrot.slane %v2333, %v2520
        %v2522 = vlaneseq
        %v2523 = vshrl.u32 %v2522, 7
        %v2524 = vsub.s32 1, %v2523
        %v2525 = vrot.slane %v2333, %v2524
        %v2526 = vlaneseq
        %v2527 = vshrl.u32 %v2526, 7
        %v2528 = vsub.s32 2, %v2527
        %v2529 = vrot.slane %v2333, %v2528
        %v2530 = vlaneseq
        %v2531 = vshrl.u32 %v2530, 7
        %v2532 = vsub.s32 3, %v2531
        %v2533 = vrot.slane %v2333, %v2532
        %v2534 = vlaneseq
        %v2535 = vshrl.u32 %v2534, 7
        %v2536 = vsub.s32 4, %v2535
        %v2537 = vrot.slane %v2333, %v2536
        %v2538 = vlaneseq
        %v2539 = vshrl.u32 %v2538, 7
        %v2540 = vsub.s32 5, %v2539
        %v2541 = vrot.slane %v2333, %v2540
        %v2542 = vlaneseq
        %v2543 = vshrl.u32 %v2542, 7
        %v2544 = vsub.s32 6, %v2543
        %v2545 = vrot.slane %v2333, %v2544
        %v2546 = vlaneseq
        %v2547 = vshrl.u32 %v2546, 7
        %v2548 = vsub.s32 7, %v2547
        %v2549 = vrot.slane %v2333, %v2548
        %v2550 = vlaneseq
        %v2551 = vshrl.u32 %v2550, 7
        %v2552 = vsub.s32 0, %v2551
        %v2553 = vrot.slane %v2335, %v2552
        %v2554 = vlaneseq
        %v2555 = vshrl.u32 %v2554, 7
        %v2556 = vsub.s32 1, %v2555
        %v2557 = vrot.slane %v2335, %v2556
        %v2558 = vlaneseq
        %v2559 = vshrl.u32 %v2558, 7
        %v2560 = vsub.s32 2, %v2559
        %v2561 = vrot.slane %v2335, %v2560
        %v2562 = vlaneseq
        %v2563 = vshrl.u32 %v2562, 7
        %v2564 = vsub.s32 3, %v2563
        %v2565 = vrot.slane %v2335, %v2564
        %v2566 = vlaneseq
        %v2567 = vshrl.u32 %v2566, 7
        %v2568 = vsub.s32 4, %v2567
        %v2569 = vrot.slane %v2335, %v2568
        %v2570 = vlaneseq
        %v2571 = vshrl.u32 %v2570, 7
        %v2572 = vsub.s32 5, %v2571
        %v2573 = vrot.slane %v2335, %v2572
        %v2574 = vlaneseq
        %v2575 = vshrl.u32 %v2574, 7
        %v2576 = vsub.s32 6, %v2575
        %v2577 = vrot.slane %v2335, %v2576
        %v2578 = vlaneseq
        %v2579 = vshrl.u32 %v2578, 7
        %v2580 = vsub.s32 7, %v2579
        %v2581 = vrot.slane %v2335, %v2580
        %v2582 = vlaneseq
        %v2583 = vshrl.u32 %v2582, 7
        %v2584 = vsub.s32 0, %v2583
        %v2585 = vrot.slane %v2337, %v2584
        %v2586 = vlaneseq
        %v2587 = vshrl.u32 %v2586, 7
        %v2588 = vsub.s32 1, %v2587
        %v2589 = vrot.slane %v2337, %v2588
        %v2590 = vlaneseq
        %v2591 = vshrl.u32 %v2590, 7
        %v2592 = vsub.s32 2, %v2591
        %v2593 = vrot.slane %v2337, %v2592
        %v2594 = vlaneseq
        %v2595 = vshrl.u32 %v2594, 7
        %v2596 = vsub.s32 3, %v2595
        %v2597 = vrot.slane %v2337, %v2596
        %v2598 = vlaneseq
        %v2599 = vshrl.u32 %v2598, 7
        %v2600 = vsub.s32 4, %v2599
        %v2601 = vrot.slane %v2337, %v2600
        %v2602 = vlaneseq
        %v2603 = vshrl.u32 %v2602, 7
        %v2604 = vsub.s32 5, %v2603
        %v2605 = vrot.slane %v2337, %v2604
        %v2606 = vlaneseq
        %v2607 = vshrl.u32 %v2606, 7
        %v2608 = vsub.s32 6, %v2607
        %v2609 = vrot.slane %v2337, %v2608
        %v2610 = vlaneseq
        %v2611 = vshrl.u32 %v2610, 7
        %v2612 = vsub.s32 7, %v2611
        %v2613 = vrot.slane %v2337, %v2612
        %v2614 = vlaneseq
        %v2615 = vshrl.u32 %v2614, 7
        %v2616 = vsub.s32 0, %v2615
        %v2617 = vrot.slane %v2339, %v2616
        %v2618 = vlaneseq
        %v2619 = vshrl.u32 %v2618, 7
        %v2620 = vsub.s32 1, %v2619
        %v2621 = vrot.slane %v2339, %v2620
        %v2622 = vlaneseq
        %v2623 = vshrl.u32 %v2622, 7
        %v2624 = vsub.s32 2, %v2623
        %v2625 = vrot.slane %v2339, %v2624
        %v2626 = vlaneseq
        %v2627 = vshrl.u32 %v2626, 7
        %v2628 = vsub.s32 3, %v2627
        %v2629 = vrot.slane %v2339, %v2628
        %v2630 = vlaneseq
        %v2631 = vshrl.u32 %v2630, 7
        %v2632 = vsub.s32 4, %v2631
        %v2633 = vrot.slane %v2339, %v2632
        %v2634 = vlaneseq
        %v2635 = vshrl.u32 %v2634, 7
        %v2636 = vsub.s32 5, %v2635
        %v2637 = vrot.slane %v2339, %v2636
        %v2638 = vlaneseq
        %v2639 = vshrl.u32 %v2638, 7
        %v2640 = vsub.s32 6, %v2639
        %v2641 = vrot.slane %v2339, %v2640
        %v2642 = vlaneseq
        %v2643 = vshrl.u32 %v2642, 7
        %v2644 = vsub.s32 7, %v2643
        %v2645 = vrot.slane %v2339, %v2644
        %v2646 = vlaneseq
        %v2647 = vshrl.u32 %v2646, 7
        %v2648 = vsub.s32 0, %v2647
        %v2649 = vrot.slane %v2341, %v2648
        %v2650 = vlaneseq
        %v2651 = vshrl.u32 %v2650, 7
        %v2652 = vsub.s32 1, %v2651
        %v2653 = vrot.slane %v2341, %v2652
        %v2654 = vlaneseq
        %v2655 = vshrl.u32 %v2654, 7
        %v2656 = vsub.s32 2, %v2655
        %v2657 = vrot.slane %v2341, %v2656
        %v2658 = vlaneseq
        %v2659 = vshrl.u32 %v2658, 7
        %v2660 = vsub.s32 3, %v2659
        %v2661 = vrot.slane %v2341, %v2660
        %v2662 = vlaneseq
        %v2663 = vshrl.u32 %v2662, 7
        %v2664 = vsub.s32 4, %v2663
        %v2665 = vrot.slane %v2341, %v2664
        %v2666 = vlaneseq
        %v2667 = vshrl.u32 %v2666, 7
        %v2668 = vsub.s32 5, %v2667
        %v2669 = vrot.slane %v2341, %v2668
        %v2670 = vlaneseq
        %v2671 = vshrl.u32 %v2670, 7
        %v2672 = vsub.s32 6, %v2671
        %v2673 = vrot.slane %v2341, %v2672
        %v2674 = vlaneseq
        %v2675 = vshrl.u32 %v2674, 7
        %v2676 = vsub.s32 7, %v2675
        %v2677 = vrot.slane %v2341, %v2676
        %v2678 = vlaneseq
        %v2679 = vshrl.u32 %v2678, 7
        %v2680 = vsub.s32 0, %v2679
        %v2681 = vrot.slane %v2343, %v2680
        %v2682 = vlaneseq
        %v2683 = vshrl.u32 %v2682, 7
        %v2684 = vsub.s32 1, %v2683
        %v2685 = vrot.slane %v2343, %v2684
        %v2686 = vlaneseq
        %v2687 = vshrl.u32 %v2686, 7
        %v2688 = vsub.s32 2, %v2687
        %v2689 = vrot.slane %v2343, %v2688
        %v2690 = vlaneseq
        %v2691 = vshrl.u32 %v2690, 7
        %v2692 = vsub.s32 3, %v2691
        %v2693 = vrot.slane %v2343, %v2692
        %v2694 = vlaneseq
        %v2695 = vshrl.u32 %v2694, 7
        %v2696 = vsub.s32 4, %v2695
        %v2697 = vrot.slane %v2343, %v2696
        %v2698 = vlaneseq
        %v2699 = vshrl.u32 %v2698, 7
        %v2700 = vsub.s32 5, %v2699
        %v2701 = vrot.slane %v2343, %v2700
        %v2702 = vlaneseq
        %v2703 = vshrl.u32 %v2702, 7
        %v2704 = vsub.s32 6, %v2703
        %v2705 = vrot.slane %v2343, %v2704
        %v2706 = vlaneseq
        %v2707 = vshrl.u32 %v2706, 7
        %v2708 = vsub.s32 7, %v2707
        %v2709 = vrot.slane %v2343, %v2708
        %v2710 = vlaneseq
        %v2711 = vshrl.u32 %v2710, 7
        %v2712 = vsub.s32 0, %v2711
        %v2713 = vrot.slane %v2345, %v2712
        %v2714 = vlaneseq
        %v2715 = vshrl.u32 %v2714, 7
        %v2716 = vsub.s32 1, %v2715
        %v2717 = vrot.slane %v2345, %v2716
        %v2718 = vlaneseq
        %v2719 = vshrl.u32 %v2718, 7
        %v2720 = vsub.s32 2, %v2719
        %v2721 = vrot.slane %v2345, %v2720
        %v2722 = vlaneseq
        %v2723 = vshrl.u32 %v2722, 7
        %v2724 = vsub.s32 3, %v2723
        %v2725 = vrot.slane %v2345, %v2724
        %v2726 = vlaneseq
        %v2727 = vshrl.u32 %v2726, 7
        %v2728 = vsub.s32 4, %v2727
        %v2729 = vrot.slane %v2345, %v2728
        %v2730 = vlaneseq
        %v2731 = vshrl.u32 %v2730, 7
        %v2732 = vsub.s32 5, %v2731
        %v2733 = vrot.slane %v2345, %v2732
        %v2734 = vlaneseq
        %v2735 = vshrl.u32 %v2734, 7
        %v2736 = vsub.s32 6, %v2735
        %v2737 = vrot.slane %v2345, %v2736
        %v2738 = vlaneseq
        %v2739 = vshrl.u32 %v2738, 7
        %v2740 = vsub.s32 7, %v2739
        %v2741 = vrot.slane %v2345, %v2740
        %v2742 = vlaneseq
        %v2743 = vshrl.u32 %v2742, 7
        %v2744 = vsub.s32 0, %v2743
        %v2745 = vrot.slane %v2347, %v2744
        %v2746 = vlaneseq
        %v2747 = vshrl.u32 %v2746, 7
        %v2748 = vsub.s32 1, %v2747
        %v2749 = vrot.slane %v2347, %v2748
        %v2750 = vlaneseq
        %v2751 = vshrl.u32 %v2750, 7
        %v2752 = vsub.s32 2, %v2751
        %v2753 = vrot.slane %v2347, %v2752
        %v2754 = vlaneseq
        %v2755 = vshrl.u32 %v2754, 7
        %v2756 = vsub.s32 3, %v2755
        %v2757 = vrot.slane %v2347, %v2756
        %v2758 = vlaneseq
        %v2759 = vshrl.u32 %v2758, 7
        %v2760 = vsub.s32 4, %v2759
        %v2761 = vrot.slane %v2347, %v2760
        %v2762 = vlaneseq
        %v2763 = vshrl.u32 %v2762, 7
        %v2764 = vsub.s32 5, %v2763
        %v2765 = vrot.slane %v2347, %v2764
        %v2766 = vlaneseq
        %v2767 = vshrl.u32 %v2766, 7
        %v2768 = vsub.s32 6, %v2767
        %v2769 = vrot.slane %v2347, %v2768
        %v2770 = vlaneseq
        %v2771 = vshrl.u32 %v2770, 7
        %v2772 = vsub.s32 7, %v2771
        %v2773 = vrot.slane %v2347, %v2772
        %v2774 = vlaneseq
        %v2775 = vshrl.u32 %v2774, 7
        %v2776 = vsub.s32 0, %v2775
        %v2777 = vrot.slane %v2349, %v2776
        %v2778 = vlaneseq
        %v2779 = vshrl.u32 %v2778, 7
        %v2780 = vsub.s32 1, %v2779
        %v2781 = vrot.slane %v2349, %v2780
        %v2782 = vlaneseq
        %v2783 = vshrl.u32 %v2782, 7
        %v2784 = vsub.s32 2, %v2783
        %v2785 = vrot.slane %v2349, %v2784
        %v2786 = vlaneseq
        %v2787 = vshrl.u32 %v2786, 7
        %v2788 = vsub.s32 3, %v2787
        %v2789 = vrot.slane %v2349, %v2788
        %v2790 = vlaneseq
        %v2791 = vshrl.u32 %v2790, 7
        %v2792 = vsub.s32 4, %v2791
        %v2793 = vrot.slane %v2349, %v2792
        %v2794 = vlaneseq
        %v2795 = vshrl.u32 %v2794, 7
        %v2796 = vsub.s32 5, %v2795
        %v2797 = vrot.slane %v2349, %v2796
        %v2798 = vlaneseq
        %v2799 = vshrl.u32 %v2798, 7
        %v2800 = vsub.s32 6, %v2799
        %v2801 = vrot.slane %v2349, %v2800
        %v2802 = vlaneseq
        %v2803 = vshrl.u32 %v2802, 7
        %v2804 = vsub.s32 7, %v2803
        %v2805 = vrot.slane %v2349, %v2804
        %v2806 = vlaneseq
        %v2807 = vshrl.u32 %v2806, 7
        %v2808 = vsub.s32 0, %v2807
        %v2809 = vrot.slane %v2351, %v2808
        %v2810 = vlaneseq
        %v2811 = vshrl.u32 %v2810, 7
        %v2812 = vsub.s32 1, %v2811
        %v2813 = vrot.slane %v2351, %v2812
        %v2814 = vlaneseq
        %v2815 = vshrl.u32 %v2814, 7
        %v2816 = vsub.s32 2, %v2815
        %v2817 = vrot.slane %v2351, %v2816
        %v2818 = vlaneseq
        %v2819 = vshrl.u32 %v2818, 7
        %v2820 = vsub.s32 3, %v2819
        %v2821 = vrot.slane %v2351, %v2820
        %v2822 = vlaneseq
        %v2823 = vshrl.u32 %v2822, 7
        %v2824 = vsub.s32 4, %v2823
        %v2825 = vrot.slane %v2351, %v2824
        %v2826 = vlaneseq
        %v2827 = vshrl.u32 %v2826, 7
        %v2828 = vsub.s32 5, %v2827
        %v2829 = vrot.slane %v2351, %v2828
        %v2830 = vlaneseq
        %v2831 = vshrl.u32 %v2830, 7
        %v2832 = vsub.s32 6, %v2831
        %v2833 = vrot.slane %v2351, %v2832
        %v2834 = vlaneseq
        %v2835 = vshrl.u32 %v2834, 7
        %v2836 = vsub.s32 7, %v2835
        %v2837 = vrot.slane %v2351, %v2836
        %v2838 = vlaneseq
        %v2839 = vshrl.u32 %v2838, 7
        %v2840 = vsub.s32 0, %v2839
        %v2841 = vrot.slane %v2353, %v2840
        %v2842 = vlaneseq
        %v2843 = vshrl.u32 %v2842, 7
        %v2844 = vsub.s32 1, %v2843
        %v2845 = vrot.slane %v2353, %v2844
        %v2846 = vlaneseq
        %v2847 = vshrl.u32 %v2846, 7
        %v2848 = vsub.s32 2, %v2847
        %v2849 = vrot.slane %v2353, %v2848
        %v2850 = vlaneseq
        %v2851 = vshrl.u32 %v2850, 7
        %v2852 = vsub.s32 3, %v2851
        %v2853 = vrot.slane %v2353, %v2852
        %v2854 = vlaneseq
        %v2855 = vshrl.u32 %v2854, 7
        %v2856 = vsub.s32 4, %v2855
        %v2857 = vrot.slane %v2353, %v2856
        %v2858 = vlaneseq
        %v2859 = vshrl.u32 %v2858, 7
        %v2860 = vsub.s32 5, %v2859
        %v2861 = vrot.slane %v2353, %v2860
        %v2862 = vlaneseq
        %v2863 = vshrl.u32 %v2862, 7
        %v2864 = vsub.s32 6, %v2863
        %v2865 = vrot.slane %v2353, %v2864
        %v2866 = vlaneseq
        %v2867 = vshrl.u32 %v2866, 7
        %v2868 = vsub.s32 7, %v2867
        %v2869 = vrot.slane %v2353, %v2868
        %v2870 = vlaneseq
        %v2871 = vshrl.u32 %v2870, 7
        %v2872 = vsub.s32 0, %v2871
        %v2873 = vrot.slane %v2355, %v2872
        %v2874 = vlaneseq
        %v2875 = vshrl.u32 %v2874, 7
        %v2876 = vsub.s32 1, %v2875
        %v2877 = vrot.slane %v2355, %v2876
        %v2878 = vlaneseq
        %v2879 = vshrl.u32 %v2878, 7
        %v2880 = vsub.s32 2, %v2879
        %v2881 = vrot.slane %v2355, %v2880
        %v2882 = vlaneseq
        %v2883 = vshrl.u32 %v2882, 7
        %v2884 = vsub.s32 3, %v2883
        %v2885 = vrot.slane %v2355, %v2884
        %v2886 = vlaneseq
        %v2887 = vshrl.u32 %v2886, 7
        %v2888 = vsub.s32 4, %v2887
        %v2889 = vrot.slane %v2355, %v2888
        %v2890 = vlaneseq
        %v2891 = vshrl.u32 %v2890, 7
        %v2892 = vsub.s32 5, %v2891
        %v2893 = vrot.slane %v2355, %v2892
        %v2894 = vlaneseq
        %v2895 = vshrl.u32 %v2894, 7
        %v2896 = vsub.s32 6, %v2895
        %v2897 = vrot.slane %v2355, %v2896
        %v2898 = vlaneseq
        %v2899 = vshrl.u32 %v2898, 7
        %v2900 = vsub.s32 7, %v2899
        %v2901 = vrot.slane %v2355, %v2900
        %v2902 = vlaneseq
        %v2903 = vshrl.u32 %v2902, 7
        %v2904 = vsub.s32 0, %v2903
        %v2905 = vrot.slane %v2357, %v2904
        %v2906 = vlaneseq
        %v2907 = vshrl.u32 %v2906, 7
        %v2908 = vsub.s32 1, %v2907
        %v2909 = vrot.slane %v2357, %v2908
        %v2910 = vlaneseq
        %v2911 = vshrl.u32 %v2910, 7
        %v2912 = vsub.s32 2, %v2911
        %v2913 = vrot.slane %v2357, %v2912
        %v2914 = vlaneseq
        %v2915 = vshrl.u32 %v2914, 7
        %v2916 = vsub.s32 3, %v2915
        %v2917 = vrot.slane %v2357, %v2916
        %v2918 = vlaneseq
        %v2919 = vshrl.u32 %v2918, 7
        %v2920 = vsub.s32 4, %v2919
        %v2921 = vrot.slane %v2357, %v2920
        %v2922 = vlaneseq
        %v2923 = vshrl.u32 %v2922, 7
        %v2924 = vsub.s32 5, %v2923
        %v2925 = vrot.slane %v2357, %v2924
        %v2926 = vlaneseq
        %v2927 = vshrl.u32 %v2926, 7
        %v2928 = vsub.s32 6, %v2927
        %v2929 = vrot.slane %v2357, %v2928
        %v2930 = vlaneseq
        %v2931 = vshrl.u32 %v2930, 7
        %v2932 = vsub.s32 7, %v2931
        %v2933 = vrot.slane %v2357, %v2932
        %v2934 = vlaneseq
        %v2935 = vshrl.u32 %v2934, 7
        %v2936 = vsub.s32 0, %v2935
        %v2937 = vrot.slane %v2359, %v2936
        %v2938 = vlaneseq
        %v2939 = vshrl.u32 %v2938, 7
        %v2940 = vsub.s32 1, %v2939
        %v2941 = vrot.slane %v2359, %v2940
        %v2942 = vlaneseq
        %v2943 = vshrl.u32 %v2942, 7
        %v2944 = vsub.s32 2, %v2943
        %v2945 = vrot.slane %v2359, %v2944
        %v2946 = vlaneseq
        %v2947 = vshrl.u32 %v2946, 7
        %v2948 = vsub.s32 3, %v2947
        %v2949 = vrot.slane %v2359, %v2948
        %v2950 = vlaneseq
        %v2951 = vshrl.u32 %v2950, 7
        %v2952 = vsub.s32 4, %v2951
        %v2953 = vrot.slane %v2359, %v2952
        %v2954 = vlaneseq
        %v2955 = vshrl.u32 %v2954, 7
        %v2956 = vsub.s32 5, %v2955
        %v2957 = vrot.slane %v2359, %v2956
        %v2958 = vlaneseq
        %v2959 = vshrl.u32 %v2958, 7
        %v2960 = vsub.s32 6, %v2959
        %v2961 = vrot.slane %v2359, %v2960
        %v2962 = vlaneseq
        %v2963 = vshrl.u32 %v2962, 7
        %v2964 = vsub.s32 7, %v2963
        %v2965 = vrot.slane %v2359, %v2964
        %v2966 = vlaneseq
        %v2967 = vshrl.u32 %v2966, 7
        %v2968 = vsub.s32 0, %v2967
        %v2969 = vrot.slane %v2361, %v2968
        %v2970 = vlaneseq
        %v2971 = vshrl.u32 %v2970, 7
        %v2972 = vsub.s32 1, %v2971
        %v2973 = vrot.slane %v2361, %v2972
        %v2974 = vlaneseq
        %v2975 = vshrl.u32 %v2974, 7
        %v2976 = vsub.s32 2, %v2975
        %v2977 = vrot.slane %v2361, %v2976
        %v2978 = vlaneseq
        %v2979 = vshrl.u32 %v2978, 7
        %v2980 = vsub.s32 3, %v2979
        %v2981 = vrot.slane %v2361, %v2980
        %v2982 = vlaneseq
        %v2983 = vshrl.u32 %v2982, 7
        %v2984 = vsub.s32 4, %v2983
        %v2985 = vrot.slane %v2361, %v2984
        %v2986 = vlaneseq
        %v2987 = vshrl.u32 %v2986, 7
        %v2988 = vsub.s32 5, %v2987
        %v2989 = vrot.slane %v2361, %v2988
        %v2990 = vlaneseq
        %v2991 = vshrl.u32 %v2990, 7
        %v2992 = vsub.s32 6, %v2991
        %v2993 = vrot.slane %v2361, %v2992
        %v2994 = vlaneseq
        %v2995 = vshrl.u32 %v2994, 7
        %v2996 = vsub.s32 7, %v2995
        %v2997 = vrot.slane %v2361, %v2996
        %v2998 = vlaneseq
        %v2999 = vshrl.u32 %v2998, 7
        %v3000 = vsub.s32 0, %v2999
        %v3001 = vrot.slane %v2363, %v3000
        %v3002 = vlaneseq
        %v3003 = vshrl.u32 %v3002, 7
        %v3004 = vsub.s32 1, %v3003
        %v3005 = vrot.slane %v2363, %v3004
        %v3006 = vlaneseq
        %v3007 = vshrl.u32 %v3006, 7
        %v3008 = vsub.s32 2, %v3007
        %v3009 = vrot.slane %v2363, %v3008
        %v3010 = vlaneseq
        %v3011 = vshrl.u32 %v3010, 7
        %v3012 = vsub.s32 3, %v3011
        %v3013 = vrot.slane %v2363, %v3012
        %v3014 = vlaneseq
        %v3015 = vshrl.u32 %v3014, 7
        %v3016 = vsub.s32 4, %v3015
        %v3017 = vrot.slane %v2363, %v3016
        %v3018 = vlaneseq
        %v3019 = vshrl.u32 %v3018, 7
        %v3020 = vsub.s32 5, %v3019
        %v3021 = vrot.slane %v2363, %v3020
        %v3022 = vlaneseq
        %v3023 = vshrl.u32 %v3022, 7
        %v3024 = vsub.s32 6, %v3023
        %v3025 = vrot.slane %v2363, %v3024
        %v3026 = vlaneseq
        %v3027 = vshrl.u32 %v3026, 7
        %v3028 = vsub.s32 7, %v3027
        %v3029 = vrot.slane %v2363, %v3028
        %v3030 = vlaneseq
        %v3031 = vshrl.u32 %v3030, 7
        %v3032 = vsub.s32 0, %v3031
        %v3033 = vrot.slane %v2365, %v3032
        %v3034 = vlaneseq
        %v3035 = vshrl.u32 %v3034, 7
        %v3036 = vsub.s32 1, %v3035
        %v3037 = vrot.slane %v2365, %v3036
        %v3038 = vlaneseq
        %v3039 = vshrl.u32 %v3038, 7
        %v3040 = vsub.s32 2, %v3039
        %v3041 = vrot.slane %v2365, %v3040
        %v3042 = vlaneseq
        %v3043 = vshrl.u32 %v3042, 7
        %v3044 = vsub.s32 3, %v3043
        %v3045 = vrot.slane %v2365, %v3044
        %v3046 = vlaneseq
        %v3047 = vshrl.u32 %v3046, 7
        %v3048 = vsub.s32 4, %v3047
        %v3049 = vrot.slane %v2365, %v3048
        %v3050 = vlaneseq
        %v3051 = vshrl.u32 %v3050, 7
        %v3052 = vsub.s32 5, %v3051
        %v3053 = vrot.slane %v2365, %v3052
        %v3054 = vlaneseq
        %v3055 = vshrl.u32 %v3054, 7
        %v3056 = vsub.s32 6, %v3055
        %v3057 = vrot.slane %v2365, %v3056
        %v3058 = vlaneseq
        %v3059 = vshrl.u32 %v3058, 7
        %v3060 = vsub.s32 7, %v3059
        %v3061 = vrot.slane %v2365, %v3060
        %v3062 = vlaneseq
        %v3063 = vshrl.u32 %v3062, 7
        %v3064 = vsub.s32 0, %v3063
        %v3065 = vrot.slane %v2367, %v3064
        %v3066 = vlaneseq
        %v3067 = vshrl.u32 %v3066, 7
        %v3068 = vsub.s32 1, %v3067
        %v3069 = vrot.slane %v2367, %v3068
        %v3070 = vlaneseq
        %v3071 = vshrl.u32 %v3070, 7
        %v3072 = vsub.s32 2, %v3071
        %v3073 = vrot.slane %v2367, %v3072
        %v3074 = vlaneseq
        %v3075 = vshrl.u32 %v3074, 7
        %v3076 = vsub.s32 3, %v3075
        %v3077 = vrot.slane %v2367, %v3076
        %v3078 = vlaneseq
        %v3079 = vshrl.u32 %v3078, 7
        %v3080 = vsub.s32 4, %v3079
        %v3081 = vrot.slane %v2367, %v3080
        %v3082 = vlaneseq
        %v3083 = vshrl.u32 %v3082, 7
        %v3084 = vsub.s32 5, %v3083
        %v3085 = vrot.slane %v2367, %v3084
        %v3086 = vlaneseq
        %v3087 = vshrl.u32 %v3086, 7
        %v3088 = vsub.s32 6, %v3087
        %v3089 = vrot.slane %v2367, %v3088
        %v3090 = vlaneseq
        %v3091 = vshrl.u32 %v3090, 7
        %v3092 = vsub.s32 7, %v3091
        %v3093 = vrot.slane %v2367, %v3092
        %v3094 = vlaneseq
        %v3095 = vshrl.u32 %v3094, 7
        %v3096 = vsub.s32 0, %v3095
        %v3097 = vrot.slane %v2369, %v3096
        %v3098 = vlaneseq
        %v3099 = vshrl.u32 %v3098, 7
        %v3100 = vsub.s32 1, %v3099
        %v3101 = vrot.slane %v2369, %v3100
        %v3102 = vlaneseq
        %v3103 = vshrl.u32 %v3102, 7
        %v3104 = vsub.s32 2, %v3103
        %v3105 = vrot.slane %v2369, %v3104
        %v3106 = vlaneseq
        %v3107 = vshrl.u32 %v3106, 7
        %v3108 = vsub.s32 3, %v3107
        %v3109 = vrot.slane %v2369, %v3108
        %v3110 = vlaneseq
        %v3111 = vshrl.u32 %v3110, 7
        %v3112 = vsub.s32 4, %v3111
        %v3113 = vrot.slane %v2369, %v3112
        %v3114 = vlaneseq
        %v3115 = vshrl.u32 %v3114, 7
        %v3116 = vsub.s32 5, %v3115
        %v3117 = vrot.slane %v2369, %v3116
        %v3118 = vlaneseq
        %v3119 = vshrl.u32 %v3118, 7
        %v3120 = vsub.s32 6, %v3119
        %v3121 = vrot.slane %v2369, %v3120
        %v3122 = vlaneseq
        %v3123 = vshrl.u32 %v3122, 7
        %v3124 = vsub.s32 7, %v3123
        %v3125 = vrot.slane %v2369, %v3124
        %v3126 = vlaneseq
        %v3127 = vshrl.u32 %v3126, 7
        %v3128 = vsub.s32 0, %v3127
        %v3129 = vrot.slane %v2371, %v3128
        %v3130 = vlaneseq
        %v3131 = vshrl.u32 %v3130, 7
        %v3132 = vsub.s32 1, %v3131
        %v3133 = vrot.slane %v2371, %v3132
        %v3134 = vlaneseq
        %v3135 = vshrl.u32 %v3134, 7
        %v3136 = vsub.s32 2, %v3135
        %v3137 = vrot.slane %v2371, %v3136
        %v3138 = vlaneseq
        %v3139 = vshrl.u32 %v3138, 7
        %v3140 = vsub.s32 3, %v3139
        %v3141 = vrot.slane %v2371, %v3140
        %v3142 = vlaneseq
        %v3143 = vshrl.u32 %v3142, 7
        %v3144 = vsub.s32 4, %v3143
        %v3145 = vrot.slane %v2371, %v3144
        %v3146 = vlaneseq
        %v3147 = vshrl.u32 %v3146, 7
        %v3148 = vsub.s32 5, %v3147
        %v3149 = vrot.slane %v2371, %v3148
        %v3150 = vlaneseq
        %v3151 = vshrl.u32 %v3150, 7
        %v3152 = vsub.s32 6, %v3151
        %v3153 = vrot.slane %v2371, %v3152
        %v3154 = vlaneseq
        %v3155 = vshrl.u32 %v3154, 7
        %v3156 = vsub.s32 7, %v3155
        %v3157 = vrot.slane %v2371, %v3156
        %v3158 = vlaneseq
        %v3159 = vshrl.u32 %v3158, 7
        %v3160 = vsub.s32 0, %v3159
        %v3161 = vrot.slane %v2373, %v3160
        %v3162 = vlaneseq
        %v3163 = vshrl.u32 %v3162, 7
        %v3164 = vsub.s32 1, %v3163
        %v3165 = vrot.slane %v2373, %v3164
        %v3166 = vlaneseq
        %v3167 = vshrl.u32 %v3166, 7
        %v3168 = vsub.s32 2, %v3167
        %v3169 = vrot.slane %v2373, %v3168
        %v3170 = vlaneseq
        %v3171 = vshrl.u32 %v3170, 7
        %v3172 = vsub.s32 3, %v3171
        %v3173 = vrot.slane %v2373, %v3172
        %v3174 = vlaneseq
        %v3175 = vshrl.u32 %v3174, 7
        %v3176 = vsub.s32 4, %v3175
        %v3177 = vrot.slane %v2373, %v3176
        %v3178 = vlaneseq
        %v3179 = vshrl.u32 %v3178, 7
        %v3180 = vsub.s32 5, %v3179
        %v3181 = vrot.slane %v2373, %v3180
        %v3182 = vlaneseq
        %v3183 = vshrl.u32 %v3182, 7
        %v3184 = vsub.s32 6, %v3183
        %v3185 = vrot.slane %v2373, %v3184
        %v3186 = vlaneseq
        %v3187 = vshrl.u32 %v3186, 7
        %v3188 = vsub.s32 7, %v3187
        %v3189 = vrot.slane %v2373, %v3188
        %v3190 = vlaneseq
        %v3191 = vshrl.u32 %v3190, 7
        %v3192 = vsub.s32 0, %v3191
        %v3193 = vrot.slane %v2375, %v3192
        %v3194 = vlaneseq
        %v3195 = vshrl.u32 %v3194, 7
        %v3196 = vsub.s32 1, %v3195
        %v3197 = vrot.slane %v2375, %v3196
        %v3198 = vlaneseq
        %v3199 = vshrl.u32 %v3198, 7
        %v3200 = vsub.s32 2, %v3199
        %v3201 = vrot.slane %v2375, %v3200
        %v3202 = vlaneseq
        %v3203 = vshrl.u32 %v3202, 7
        %v3204 = vsub.s32 3, %v3203
        %v3205 = vrot.slane %v2375, %v3204
        %v3206 = vlaneseq
        %v3207 = vshrl.u32 %v3206, 7
        %v3208 = vsub.s32 4, %v3207
        %v3209 = vrot.slane %v2375, %v3208
        %v3210 = vlaneseq
        %v3211 = vshrl.u32 %v3210, 7
        %v3212 = vsub.s32 5, %v3211
        %v3213 = vrot.slane %v2375, %v3212
        %v3214 = vlaneseq
        %v3215 = vshrl.u32 %v3214, 7
        %v3216 = vsub.s32 6, %v3215
        %v3217 = vrot.slane %v2375, %v3216
        %v3218 = vlaneseq
        %v3219 = vshrl.u32 %v3218, 7
        %v3220 = vsub.s32 7, %v3219
        %v3221 = vrot.slane %v2375, %v3220
        %v3222 = vlaneseq
        %v3223 = vshrl.u32 %v3222, 7
        %v3224 = vsub.s32 0, %v3223
        %v3225 = vrot.slane %v2377, %v3224
        %v3226 = vlaneseq
        %v3227 = vshrl.u32 %v3226, 7
        %v3228 = vsub.s32 1, %v3227
        %v3229 = vrot.slane %v2377, %v3228
        %v3230 = vlaneseq
        %v3231 = vshrl.u32 %v3230, 7
        %v3232 = vsub.s32 2, %v3231
        %v3233 = vrot.slane %v2377, %v3232
        %v3234 = vlaneseq
        %v3235 = vshrl.u32 %v3234, 7
        %v3236 = vsub.s32 3, %v3235
        %v3237 = vrot.slane %v2377, %v3236
        %v3238 = vlaneseq
        %v3239 = vshrl.u32 %v3238, 7
        %v3240 = vsub.s32 4, %v3239
        %v3241 = vrot.slane %v2377, %v3240
        %v3242 = vlaneseq
        %v3243 = vshrl.u32 %v3242, 7
        %v3244 = vsub.s32 5, %v3243
        %v3245 = vrot.slane %v2377, %v3244
        %v3246 = vlaneseq
        %v3247 = vshrl.u32 %v3246, 7
        %v3248 = vsub.s32 6, %v3247
        %v3249 = vrot.slane %v2377, %v3248
        %v3250 = vlaneseq
        %v3251 = vshrl.u32 %v3250, 7
        %v3252 = vsub.s32 7, %v3251
        %v3253 = vrot.slane %v2377, %v3252
        %v3254 = vlaneseq
        %v3255 = vshrl.u32 %v3254, 7
        %v3256 = vsub.s32 0, %v3255
        %v3257 = vrot.slane %v2379, %v3256
        %v3258 = vlaneseq
        %v3259 = vshrl.u32 %v3258, 7
        %v3260 = vsub.s32 1, %v3259
        %v3261 = vrot.slane %v2379, %v3260
        %v3262 = vlaneseq
        %v3263 = vshrl.u32 %v3262, 7
        %v3264 = vsub.s32 2, %v3263
        %v3265 = vrot.slane %v2379, %v3264
        %v3266 = vlaneseq
        %v3267 = vshrl.u32 %v3266, 7
        %v3268 = vsub.s32 3, %v3267
        %v3269 = vrot.slane %v2379, %v3268
        %v3270 = vlaneseq
        %v3271 = vshrl.u32 %v3270, 7
        %v3272 = vsub.s32 4, %v3271
        %v3273 = vrot.slane %v2379, %v3272
        %v3274 = vlaneseq
        %v3275 = vshrl.u32 %v3274, 7
        %v3276 = vsub.s32 5, %v3275
        %v3277 = vrot.slane %v2379, %v3276
        %v3278 = vlaneseq
        %v3279 = vshrl.u32 %v3278, 7
        %v3280 = vsub.s32 6, %v3279
        %v3281 = vrot.slane %v2379, %v3280
        %v3282 = vlaneseq
        %v3283 = vshrl.u32 %v3282, 7
        %v3284 = vsub.s32 7, %v3283
        %v3285 = vrot.slane %v2379, %v3284
        %v3286 = vlaneseq
        %v3287 = vshrl.u32 %v3286, 7
        %v3288 = vsub.s32 0, %v3287
        %v3289 = vrot.slane %v2381, %v3288
        %v3290 = vlaneseq
        %v3291 = vshrl.u32 %v3290, 7
        %v3292 = vsub.s32 1, %v3291
        %v3293 = vrot.slane %v2381, %v3292
        %v3294 = vlaneseq
        %v3295 = vshrl.u32 %v3294, 7
        %v3296 = vsub.s32 2, %v3295
        %v3297 = vrot.slane %v2381, %v3296
        %v3298 = vlaneseq
        %v3299 = vshrl.u32 %v3298, 7
        %v3300 = vsub.s32 3, %v3299
        %v3301 = vrot.slane %v2381, %v3300
        %v3302 = vlaneseq
        %v3303 = vshrl.u32 %v3302, 7
        %v3304 = vsub.s32 4, %v3303
        %v3305 = vrot.slane %v2381, %v3304
        %v3306 = vlaneseq
        %v3307 = vshrl.u32 %v3306, 7
        %v3308 = vsub.s32 5, %v3307
        %v3309 = vrot.slane %v2381, %v3308
        %v3310 = vlaneseq
        %v3311 = vshrl.u32 %v3310, 7
        %v3312 = vsub.s32 6, %v3311
        %v3313 = vrot.slane %v2381, %v3312
        %v3314 = vlaneseq
        %v3315 = vshrl.u32 %v3314, 7
        %v3316 = vsub.s32 7, %v3315
        %v3317 = vrot.slane %v2381, %v3316
        %v3318 = vlaneseq
        %v3319 = vshrl.u32 %v3318, 7
        %v3320 = vsub.s32 0, %v3319
        %v3321 = vrot.slane %v2383, %v3320
        %v3322 = vlaneseq
        %v3323 = vshrl.u32 %v3322, 7
        %v3324 = vsub.s32 1, %v3323
        %v3325 = vrot.slane %v2383, %v3324
        %v3326 = vlaneseq
        %v3327 = vshrl.u32 %v3326, 7
        %v3328 = vsub.s32 2, %v3327
        %v3329 = vrot.slane %v2383, %v3328
        %v3330 = vlaneseq
        %v3331 = vshrl.u32 %v3330, 7
        %v3332 = vsub.s32 3, %v3331
        %v3333 = vrot.slane %v2383, %v3332
        %v3334 = vlaneseq
        %v3335 = vshrl.u32 %v3334, 7
        %v3336 = vsub.s32 4, %v3335
        %v3337 = vrot.slane %v2383, %v3336
        %v3338 = vlaneseq
        %v3339 = vshrl.u32 %v3338, 7
        %v3340 = vsub.s32 5, %v3339
        %v3341 = vrot.slane %v2383, %v3340
        %v3342 = vlaneseq
        %v3343 = vshrl.u32 %v3342, 7
        %v3344 = vsub.s32 6, %v3343
        %v3345 = vrot.slane %v2383, %v3344
        %v3346 = vlaneseq
        %v3347 = vshrl.u32 %v3346, 7
        %v3348 = vsub.s32 7, %v3347
        %v3349 = vrot.slane %v2383, %v3348
        %v3350 = vlaneseq
        %v3351 = vshrl.u32 %v3350, 7
        %v3352 = vsub.s32 0, %v3351
        %v3353 = vrot.slane %v2385, %v3352
        %v3354 = vlaneseq
        %v3355 = vshrl.u32 %v3354, 7
        %v3356 = vsub.s32 1, %v3355
        %v3357 = vrot.slane %v2385, %v3356
        %v3358 = vlaneseq
        %v3359 = vshrl.u32 %v3358, 7
        %v3360 = vsub.s32 2, %v3359
        %v3361 = vrot.slane %v2385, %v3360
        %v3362 = vlaneseq
        %v3363 = vshrl.u32 %v3362, 7
        %v3364 = vsub.s32 3, %v3363
        %v3365 = vrot.slane %v2385, %v3364
        %v3366 = vlaneseq
        %v3367 = vshrl.u32 %v3366, 7
        %v3368 = vsub.s32 4, %v3367
        %v3369 = vrot.slane %v2385, %v3368
        %v3370 = vlaneseq
        %v3371 = vshrl.u32 %v3370, 7
        %v3372 = vsub.s32 5, %v3371
        %v3373 = vrot.slane %v2385, %v3372
        %v3374 = vlaneseq
        %v3375 = vshrl.u32 %v3374, 7
        %v3376 = vsub.s32 6, %v3375
        %v3377 = vrot.slane %v2385, %v3376
        %v3378 = vlaneseq
        %v3379 = vshrl.u32 %v3378, 7
        %v3380 = vsub.s32 7, %v3379
        %v3381 = vrot.slane %v2385, %v3380
        %v3382 = vlaneseq
        %v3383 = vshrl.u32 %v3382, 7
        %v3384 = vsub.s32 0, %v3383
        %v3385 = vrot.slane %v2387, %v3384
        %v3386 = vlaneseq
        %v3387 = vshrl.u32 %v3386, 7
        %v3388 = vsub.s32 1, %v3387
        %v3389 = vrot.slane %v2387, %v3388
        %v3390 = vlaneseq
        %v3391 = vshrl.u32 %v3390, 7
        %v3392 = vsub.s32 2, %v3391
        %v3393 = vrot.slane %v2387, %v3392
        %v3394 = vlaneseq
        %v3395 = vshrl.u32 %v3394, 7
        %v3396 = vsub.s32 3, %v3395
        %v3397 = vrot.slane %v2387, %v3396
        %v3398 = vlaneseq
        %v3399 = vshrl.u32 %v3398, 7
        %v3400 = vsub.s32 4, %v3399
        %v3401 = vrot.slane %v2387, %v3400
        %v3402 = vlaneseq
        %v3403 = vshrl.u32 %v3402, 7
        %v3404 = vsub.s32 5, %v3403
        %v3405 = vrot.slane %v2387, %v3404
        %v3406 = vlaneseq
        %v3407 = vshrl.u32 %v3406, 7
        %v3408 = vsub.s32 6, %v3407
        %v3409 = vrot.slane %v2387, %v3408
        %v3410 = vlaneseq
        %v3411 = vshrl.u32 %v3410, 7
        %v3412 = vsub.s32 7, %v3411
        %v3413 = vrot.slane %v2387, %v3412
        %v3414 = vlaneseq
        %v3415 = vshrl.u32 %v3414, 7
        %v3416 = vsub.s32 0, %v3415
        %v3417 = vrot.slane %v2389, %v3416
        %v3418 = vlaneseq
        %v3419 = vshrl.u32 %v3418, 7
        %v3420 = vsub.s32 1, %v3419
        %v3421 = vrot.slane %v2389, %v3420
        %v3422 = vlaneseq
        %v3423 = vshrl.u32 %v3422, 7
        %v3424 = vsub.s32 2, %v3423
        %v3425 = vrot.slane %v2389, %v3424
        %v3426 = vlaneseq
        %v3427 = vshrl.u32 %v3426, 7
        %v3428 = vsub.s32 3, %v3427
        %v3429 = vrot.slane %v2389, %v3428
        %v3430 = vlaneseq
        %v3431 = vshrl.u32 %v3430, 7
        %v3432 = vsub.s32 4, %v3431
        %v3433 = vrot.slane %v2389, %v3432
        %v3434 = vlaneseq
        %v3435 = vshrl.u32 %v3434, 7
        %v3436 = vsub.s32 5, %v3435
        %v3437 = vrot.slane %v2389, %v3436
        %v3438 = vlaneseq
        %v3439 = vshrl.u32 %v3438, 7
        %v3440 = vsub.s32 6, %v3439
        %v3441 = vrot.slane %v2389, %v3440
        %v3442 = vlaneseq
        %v3443 = vshrl.u32 %v3442, 7
        %v3444 = vsub.s32 7, %v3443
        %v3445 = vrot.slane %v2389, %v3444
        %v3446 = vcombine.low %v2425, %v2429
        %v3447 = vcombine.low %v2433, %v2437
        %v3448 = vcombine.low %v2441, %v2445
        %v3449 = vcombine.low %v2449, %v2453
        %v3451 = vunpack.c.l.s4 1966171168
        %v3452 = vunpack.c.0.s8 %v3451
        %v3453 = vlaneseq
        %v3454 = vshrl.u32 %v3453, 7
        %v3455 = vsub.s32 %v3452, %v3454
        %v3456 = vrot.slane %v3446, %v3455
        %v3458 = vunpack.c.l.s4 1966171168
        %v3459 = vunpack.c.0.s8 %v3458
        %v3460 = vlaneseq
        %v3461 = vshrl.u32 %v3460, 7
        %v3462 = vsub.s32 %v3459, %v3461
        %v3463 = vrot.slane %v3447, %v3462
        %v3465 = vunpack.c.l.s4 1966171168
        %v3466 = vunpack.c.0.s8 %v3465
        %v3467 = vlaneseq
        %v3468 = vshrl.u32 %v3467, 7
        %v3469 = vsub.s32 %v3466, %v3468
        %v3470 = vrot.slane %v3448, %v3469
        %v3472 = vunpack.c.l.s4 1966171168
        %v3473 = vunpack.c.0.s8 %v3472
        %v3474 = vlaneseq
        %v3475 = vshrl.u32 %v3474, 7
        %v3476 = vsub.s32 %v3473, %v3475
        %v3477 = vrot.slane %v3449, %v3476
        %v3478 = vcombine.low %v3456, %v3463
        %v3479 = vcombine.low %v3470, %v3477
        %v3481 = vunpack.c.l.s4 1966171168
        %v3482 = vunpack.c.0.s8 %v3481
        %v3483 = vlaneseq
        %v3484 = vshrl.u32 %v3483, 7
        %v3485 = vsub.s32 %v3482, %v3484
        %v3486 = vrot.slane %v3478, %v3485
        %v3488 = vunpack.c.l.s4 1966171168
        %v3489 = vunpack.c.0.s8 %v3488
        %v3490 = vlaneseq
        %v3491 = vshrl.u32 %v3490, 7
        %v3492 = vsub.s32 %v3489, %v3491
        %v3493 = vrot.slane %v3479, %v3492
        %v3494 = vcombine.low %v3486, %v3493
        %v3495 = vcombine.low %v2457, %v2461
        %v3496 = vcombine.low %v2465, %v2469
        %v3497 = vcombine.low %v2473, %v2477
        %v3498 = vcombine.low %v2481, %v2485
        %v3500 = vunpack.c.l.s4 1966171168
        %v3501 = vunpack.c.0.s8 %v3500
        %v3502 = vlaneseq
        %v3503 = vshrl.u32 %v3502, 7
        %v3504 = vsub.s32 %v3501, %v3503
        %v3505 = vrot.slane %v3495, %v3504
        %v3507 = vunpack.c.l.s4 1966171168
        %v3508 = vunpack.c.0.s8 %v3507
        %v3509 = vlaneseq
        %v3510 = vshrl.u32 %v3509, 7
        %v3511 = vsub.s32 %v3508, %v3510
        %v3512 = vrot.slane %v3496, %v3511
        %v3514 = vunpack.c.l.s4 1966171168
        %v3515 = vunpack.c.0.s8 %v3514
        %v3516 = vlaneseq
        %v3517 = vshrl.u32 %v3516, 7
        %v3518 = vsub.s32 %v3515, %v3517
        %v3519 = vrot.slane %v3497, %v3518
        %v3521 = vunpack.c.l.s4 1966171168
        %v3522 = vunpack.c.0.s8 %v3521
        %v3523 = vlaneseq
        %v3524 = vshrl.u32 %v3523, 7
        %v3525 = vsub.s32 %v3522, %v3524
        %v3526 = vrot.slane %v3498, %v3525
        %v3527 = vcombine.low %v3505, %v3512
        %v3528 = vcombine.low %v3519, %v3526
        %v3530 = vunpack.c.l.s4 1966171168
        %v3531 = vunpack.c.0.s8 %v3530
        %v3532 = vlaneseq
        %v3533 = vshrl.u32 %v3532, 7
        %v3534 = vsub.s32 %v3531, %v3533
        %v3535 = vrot.slane %v3527, %v3534
        %v3537 = vunpack.c.l.s4 1966171168
        %v3538 = vunpack.c.0.s8 %v3537
        %v3539 = vlaneseq
        %v3540 = vshrl.u32 %v3539, 7
        %v3541 = vsub.s32 %v3538, %v3540
        %v3542 = vrot.slane %v3528, %v3541
        %v3543 = vcombine.low %v3535, %v3542
        %v3544 = vcombine.low %v2489, %v2493
        %v3545 = vcombine.low %v2497, %v2501
        %v3546 = vcombine.low %v2505, %v2509
        %v3547 = vcombine.low %v2513, %v2517
        %v3549 = vunpack.c.l.s4 1966171168
        %v3550 = vunpack.c.0.s8 %v3549
        %v3551 = vlaneseq
        %v3552 = vshrl.u32 %v3551, 7
        %v3553 = vsub.s32 %v3550, %v3552
        %v3554 = vrot.slane %v3544, %v3553
        %v3556 = vunpack.c.l.s4 1966171168
        %v3557 = vunpack.c.0.s8 %v3556
        %v3558 = vlaneseq
        %v3559 = vshrl.u32 %v3558, 7
        %v3560 = vsub.s32 %v3557, %v3559
        %v3561 = vrot.slane %v3545, %v3560
        %v3563 = vunpack.c.l.s4 1966171168
        %v3564 = vunpack.c.0.s8 %v3563
        %v3565 = vlaneseq
        %v3566 = vshrl.u32 %v3565, 7
        %v3567 = vsub.s32 %v3564, %v3566
        %v3568 = vrot.slane %v3546, %v3567
        %v3570 = vunpack.c.l.s4 1966171168
        %v3571 = vunpack.c.0.s8 %v3570
        %v3572 = vlaneseq
        %v3573 = vshrl.u32 %v3572, 7
        %v3574 = vsub.s32 %v3571, %v3573
        %v3575 = vrot.slane %v3547, %v3574
        %v3576 = vcombine.low %v3554, %v3561
        %v3577 = vcombine.low %v3568, %v3575
        %v3579 = vunpack.c.l.s4 1966171168
        %v3580 = vunpack.c.0.s8 %v3579
        %v3581 = vlaneseq
        %v3582 = vshrl.u32 %v3581, 7
        %v3583 = vsub.s32 %v3580, %v3582
        %v3584 = vrot.slane %v3576, %v3583
        %v3586 = vunpack.c.l.s4 1966171168
        %v3587 = vunpack.c.0.s8 %v3586
        %v3588 = vlaneseq
        %v3589 = vshrl.u32 %v3588, 7
        %v3590 = vsub.s32 %v3587, %v3589
        %v3591 = vrot.slane %v3577, %v3590
        %v3592 = vcombine.low %v3584, %v3591
        %v3593 = vcombine.low %v2521, %v2525
        %v3594 = vcombine.low %v2529, %v2533
        %v3595 = vcombine.low %v2537, %v2541
        %v3596 = vcombine.low %v2545, %v2549
        %v3598 = vunpack.c.l.s4 1966171168
        %v3599 = vunpack.c.0.s8 %v3598
        %v3600 = vlaneseq
        %v3601 = vshrl.u32 %v3600, 7
        %v3602 = vsub.s32 %v3599, %v3601
        %v3603 = vrot.slane %v3593, %v3602
        %v3605 = vunpack.c.l.s4 1966171168
        %v3606 = vunpack.c.0.s8 %v3605
        %v3607 = vlaneseq
        %v3608 = vshrl.u32 %v3607, 7
        %v3609 = vsub.s32 %v3606, %v3608
        %v3610 = vrot.slane %v3594, %v3609
        %v3612 = vunpack.c.l.s4 1966171168
        %v3613 = vunpack.c.0.s8 %v3612
        %v3614 = vlaneseq
        %v3615 = vshrl.u32 %v3614, 7
        %v3616 = vsub.s32 %v3613, %v3615
        %v3617 = vrot.slane %v3595, %v3616
        %v3619 = vunpack.c.l.s4 1966171168
        %v3620 = vunpack.c.0.s8 %v3619
        %v3621 = vlaneseq
        %v3622 = vshrl.u32 %v3621, 7
        %v3623 = vsub.s32 %v3620, %v3622
        %v3624 = vrot.slane %v3596, %v3623
        %v3625 = vcombine.low %v3603, %v3610
        %v3626 = vcombine.low %v3617, %v3624
        %v3628 = vunpack.c.l.s4 1966171168
        %v3629 = vunpack.c.0.s8 %v3628
        %v3630 = vlaneseq
        %v3631 = vshrl.u32 %v3630, 7
        %v3632 = vsub.s32 %v3629, %v3631
        %v3633 = vrot.slane %v3625, %v3632
        %v3635 = vunpack.c.l.s4 1966171168
        %v3636 = vunpack.c.0.s8 %v3635
        %v3637 = vlaneseq
        %v3638 = vshrl.u32 %v3637, 7
        %v3639 = vsub.s32 %v3636, %v3638
        %v3640 = vrot.slane %v3626, %v3639
        %v3641 = vcombine.low %v3633, %v3640
        %v3642 = vcombine.low %v2553, %v2557
        %v3643 = vcombine.low %v2561, %v2565
        %v3644 = vcombine.low %v2569, %v2573
        %v3645 = vcombine.low %v2577, %v2581
        %v3647 = vunpack.c.l.s4 1966171168
        %v3648 = vunpack.c.0.s8 %v3647
        %v3649 = vlaneseq
        %v3650 = vshrl.u32 %v3649, 7
        %v3651 = vsub.s32 %v3648, %v3650
        %v3652 = vrot.slane %v3642, %v3651
        %v3654 = vunpack.c.l.s4 1966171168
        %v3655 = vunpack.c.0.s8 %v3654
        %v3656 = vlaneseq
        %v3657 = vshrl.u32 %v3656, 7
        %v3658 = vsub.s32 %v3655, %v3657
        %v3659 = vrot.slane %v3643, %v3658
        %v3661 = vunpack.c.l.s4 1966171168
        %v3662 = vunpack.c.0.s8 %v3661
        %v3663 = vlaneseq
        %v3664 = vshrl.u32 %v3663, 7
        %v3665 = vsub.s32 %v3662, %v3664
        %v3666 = vrot.slane %v3644, %v3665
        %v3668 = vunpack.c.l.s4 1966171168
        %v3669 = vunpack.c.0.s8 %v3668
        %v3670 = vlaneseq
        %v3671 = vshrl.u32 %v3670, 7
        %v3672 = vsub.s32 %v3669, %v3671
        %v3673 = vrot.slane %v3645, %v3672
        %v3674 = vcombine.low %v3652, %v3659
        %v3675 = vcombine.low %v3666, %v3673
        %v3677 = vunpack.c.l.s4 1966171168
        %v3678 = vunpack.c.0.s8 %v3677
        %v3679 = vlaneseq
        %v3680 = vshrl.u32 %v3679, 7
        %v3681 = vsub.s32 %v3678, %v3680
        %v3682 = vrot.slane %v3674, %v3681
        %v3684 = vunpack.c.l.s4 1966171168
        %v3685 = vunpack.c.0.s8 %v3684
        %v3686 = vlaneseq
        %v3687 = vshrl.u32 %v3686, 7
        %v3688 = vsub.s32 %v3685, %v3687
        %v3689 = vrot.slane %v3675, %v3688
        %v3690 = vcombine.low %v3682, %v3689
        %v3691 = vcombine.low %v2585, %v2589
        %v3692 = vcombine.low %v2593, %v2597
        %v3693 = vcombine.low %v2601, %v2605
        %v3694 = vcombine.low %v2609, %v2613
        %v3696 = vunpack.c.l.s4 1966171168
        %v3697 = vunpack.c.0.s8 %v3696
        %v3698 = vlaneseq
        %v3699 = vshrl.u32 %v3698, 7
        %v3700 = vsub.s32 %v3697, %v3699
        %v3701 = vrot.slane %v3691, %v3700
        %v3703 = vunpack.c.l.s4 1966171168
        %v3704 = vunpack.c.0.s8 %v3703
        %v3705 = vlaneseq
        %v3706 = vshrl.u32 %v3705, 7
        %v3707 = vsub.s32 %v3704, %v3706
        %v3708 = vrot.slane %v3692, %v3707
        %v3710 = vunpack.c.l.s4 1966171168
        %v3711 = vunpack.c.0.s8 %v3710
        %v3712 = vlaneseq
        %v3713 = vshrl.u32 %v3712, 7
        %v3714 = vsub.s32 %v3711, %v3713
        %v3715 = vrot.slane %v3693, %v3714
        %v3717 = vunpack.c.l.s4 1966171168
        %v3718 = vunpack.c.0.s8 %v3717
        %v3719 = vlaneseq
        %v3720 = vshrl.u32 %v3719, 7
        %v3721 = vsub.s32 %v3718, %v3720
        %v3722 = vrot.slane %v3694, %v3721
        %v3723 = vcombine.low %v3701, %v3708
        %v3724 = vcombine.low %v3715, %v3722
        %v3726 = vunpack.c.l.s4 1966171168
        %v3727 = vunpack.c.0.s8 %v3726
        %v3728 = vlaneseq
        %v3729 = vshrl.u32 %v3728, 7
        %v3730 = vsub.s32 %v3727, %v3729
        %v3731 = vrot.slane %v3723, %v3730
        %v3733 = vunpack.c.l.s4 1966171168
        %v3734 = vunpack.c.0.s8 %v3733
        %v3735 = vlaneseq
        %v3736 = vshrl.u32 %v3735, 7
        %v3737 = vsub.s32 %v3734, %v3736
        %v3738 = vrot.slane %v3724, %v3737
        %v3739 = vcombine.low %v3731, %v3738
        %v3740 = vcombine.low %v2617, %v2621
        %v3741 = vcombine.low %v2625, %v2629
        %v3742 = vcombine.low %v2633, %v2637
        %v3743 = vcombine.low %v2641, %v2645
        %v3745 = vunpack.c.l.s4 1966171168
        %v3746 = vunpack.c.0.s8 %v3745
        %v3747 = vlaneseq
        %v3748 = vshrl.u32 %v3747, 7
        %v3749 = vsub.s32 %v3746, %v3748
        %v3750 = vrot.slane %v3740, %v3749
        %v3752 = vunpack.c.l.s4 1966171168
        %v3753 = vunpack.c.0.s8 %v3752
        %v3754 = vlaneseq
        %v3755 = vshrl.u32 %v3754, 7
        %v3756 = vsub.s32 %v3753, %v3755
        %v3757 = vrot.slane %v3741, %v3756
        %v3759 = vunpack.c.l.s4 1966171168
        %v3760 = vunpack.c.0.s8 %v3759
        %v3761 = vlaneseq
        %v3762 = vshrl.u32 %v3761, 7
        %v3763 = vsub.s32 %v3760, %v3762
        %v3764 = vrot.slane %v3742, %v3763
        %v3766 = vunpack.c.l.s4 1966171168
        %v3767 = vunpack.c.0.s8 %v3766
        %v3768 = vlaneseq
        %v3769 = vshrl.u32 %v3768, 7
        %v3770 = vsub.s32 %v3767, %v3769
        %v3771 = vrot.slane %v3743, %v3770
        %v3772 = vcombine.low %v3750, %v3757
        %v3773 = vcombine.low %v3764, %v3771
        %v3775 = vunpack.c.l.s4 1966171168
        %v3776 = vunpack.c.0.s8 %v3775
        %v3777 = vlaneseq
        %v3778 = vshrl.u32 %v3777, 7
        %v3779 = vsub.s32 %v3776, %v3778
        %v3780 = vrot.slane %v3772, %v3779
        %v3782 = vunpack.c.l.s4 1966171168
        %v3783 = vunpack.c.0.s8 %v3782
        %v3784 = vlaneseq
        %v3785 = vshrl.u32 %v3784, 7
        %v3786 = vsub.s32 %v3783, %v3785
        %v3787 = vrot.slane %v3773, %v3786
        %v3788 = vcombine.low %v3780, %v3787
        %v3789 = vcombine.low %v2649, %v2653
        %v3790 = vcombine.low %v2657, %v2661
        %v3791 = vcombine.low %v2665, %v2669
        %v3792 = vcombine.low %v2673, %v2677
        %v3794 = vunpack.c.l.s4 1966171168
        %v3795 = vunpack.c.0.s8 %v3794
        %v3796 = vlaneseq
        %v3797 = vshrl.u32 %v3796, 7
        %v3798 = vsub.s32 %v3795, %v3797
        %v3799 = vrot.slane %v3789, %v3798
        %v3801 = vunpack.c.l.s4 1966171168
        %v3802 = vunpack.c.0.s8 %v3801
        %v3803 = vlaneseq
        %v3804 = vshrl.u32 %v3803, 7
        %v3805 = vsub.s32 %v3802, %v3804
        %v3806 = vrot.slane %v3790, %v3805
        %v3808 = vunpack.c.l.s4 1966171168
        %v3809 = vunpack.c.0.s8 %v3808
        %v3810 = vlaneseq
        %v3811 = vshrl.u32 %v3810, 7
        %v3812 = vsub.s32 %v3809, %v3811
        %v3813 = vrot.slane %v3791, %v3812
        %v3815 = vunpack.c.l.s4 1966171168
        %v3816 = vunpack.c.0.s8 %v3815
        %v3817 = vlaneseq
        %v3818 = vshrl.u32 %v3817, 7
        %v3819 = vsub.s32 %v3816, %v3818
        %v3820 = vrot.slane %v3792, %v3819
        %v3821 = vcombine.low %v3799, %v3806
        %v3822 = vcombine.low %v3813, %v3820
        %v3824 = vunpack.c.l.s4 1966171168
        %v3825 = vunpack.c.0.s8 %v3824
        %v3826 = vlaneseq
        %v3827 = vshrl.u32 %v3826, 7
        %v3828 = vsub.s32 %v3825, %v3827
        %v3829 = vrot.slane %v3821, %v3828
        %v3831 = vunpack.c.l.s4 1966171168
        %v3832 = vunpack.c.0.s8 %v3831
        %v3833 = vlaneseq
        %v3834 = vshrl.u32 %v3833, 7
        %v3835 = vsub.s32 %v3832, %v3834
        %v3836 = vrot.slane %v3822, %v3835
        %v3837 = vcombine.low %v3829, %v3836
        %v3838 = vcombine.low %v2681, %v2685
        %v3839 = vcombine.low %v2689, %v2693
        %v3840 = vcombine.low %v2697, %v2701
        %v3841 = vcombine.low %v2705, %v2709
        %v3843 = vunpack.c.l.s4 1966171168
        %v3844 = vunpack.c.0.s8 %v3843
        %v3845 = vlaneseq
        %v3846 = vshrl.u32 %v3845, 7
        %v3847 = vsub.s32 %v3844, %v3846
        %v3848 = vrot.slane %v3838, %v3847
        %v3850 = vunpack.c.l.s4 1966171168
        %v3851 = vunpack.c.0.s8 %v3850
        %v3852 = vlaneseq
        %v3853 = vshrl.u32 %v3852, 7
        %v3854 = vsub.s32 %v3851, %v3853
        %v3855 = vrot.slane %v3839, %v3854
        %v3857 = vunpack.c.l.s4 1966171168
        %v3858 = vunpack.c.0.s8 %v3857
        %v3859 = vlaneseq
        %v3860 = vshrl.u32 %v3859, 7
        %v3861 = vsub.s32 %v3858, %v3860
        %v3862 = vrot.slane %v3840, %v3861
        %v3864 = vunpack.c.l.s4 1966171168
        %v3865 = vunpack.c.0.s8 %v3864
        %v3866 = vlaneseq
        %v3867 = vshrl.u32 %v3866, 7
        %v3868 = vsub.s32 %v3865, %v3867
        %v3869 = vrot.slane %v3841, %v3868
        %v3870 = vcombine.low %v3848, %v3855
        %v3871 = vcombine.low %v3862, %v3869
        %v3873 = vunpack.c.l.s4 1966171168
        %v3874 = vunpack.c.0.s8 %v3873
        %v3875 = vlaneseq
        %v3876 = vshrl.u32 %v3875, 7
        %v3877 = vsub.s32 %v3874, %v3876
        %v3878 = vrot.slane %v3870, %v3877
        %v3880 = vunpack.c.l.s4 1966171168
        %v3881 = vunpack.c.0.s8 %v3880
        %v3882 = vlaneseq
        %v3883 = vshrl.u32 %v3882, 7
        %v3884 = vsub.s32 %v3881, %v3883
        %v3885 = vrot.slane %v3871, %v3884
        %v3886 = vcombine.low %v3878, %v3885
        %v3887 = vcombine.low %v2713, %v2717
        %v3888 = vcombine.low %v2721, %v2725
        %v3889 = vcombine.low %v2729, %v2733
        %v3890 = vcombine.low %v2737, %v2741
        %v3892 = vunpack.c.l.s4 1966171168
        %v3893 = vunpack.c.0.s8 %v3892
        %v3894 = vlaneseq
        %v3895 = vshrl.u32 %v3894, 7
        %v3896 = vsub.s32 %v3893, %v3895
        %v3897 = vrot.slane %v3887, %v3896
        %v3899 = vunpack.c.l.s4 1966171168
        %v3900 = vunpack.c.0.s8 %v3899
        %v3901 = vlaneseq
        %v3902 = vshrl.u32 %v3901, 7
        %v3903 = vsub.s32 %v3900, %v3902
        %v3904 = vrot.slane %v3888, %v3903
        %v3906 = vunpack.c.l.s4 1966171168
        %v3907 = vunpack.c.0.s8 %v3906
        %v3908 = vlaneseq
        %v3909 = vshrl.u32 %v3908, 7
        %v3910 = vsub.s32 %v3907, %v3909
        %v3911 = vrot.slane %v3889, %v3910
        %v3913 = vunpack.c.l.s4 1966171168
        %v3914 = vunpack.c.0.s8 %v3913
        %v3915 = vlaneseq
        %v3916 = vshrl.u32 %v3915, 7
        %v3917 = vsub.s32 %v3914, %v3916
        %v3918 = vrot.slane %v3890, %v3917
        %v3919 = vcombine.low %v3897, %v3904
        %v3920 = vcombine.low %v3911, %v3918
        %v3922 = vunpack.c.l.s4 1966171168
        %v3923 = vunpack.c.0.s8 %v3922
        %v3924 = vlaneseq
        %v3925 = vshrl.u32 %v3924, 7
        %v3926 = vsub.s32 %v3923, %v3925
        %v3927 = vrot.slane %v3919, %v3926
        %v3929 = vunpack.c.l.s4 1966171168
        %v3930 = vunpack.c.0.s8 %v3929
        %v3931 = vlaneseq
        %v3932 = vshrl.u32 %v3931, 7
        %v3933 = vsub.s32 %v3930, %v3932
        %v3934 = vrot.slane %v3920, %v3933
        %v3935 = vcombine.low %v3927, %v3934
        %v3936 = vcombine.low %v2745, %v2749
        %v3937 = vcombine.low %v2753, %v2757
        %v3938 = vcombine.low %v2761, %v2765
        %v3939 = vcombine.low %v2769, %v2773
        %v3941 = vunpack.c.l.s4 1966171168
        %v3942 = vunpack.c.0.s8 %v3941
        %v3943 = vlaneseq
        %v3944 = vshrl.u32 %v3943, 7
        %v3945 = vsub.s32 %v3942, %v3944
        %v3946 = vrot.slane %v3936, %v3945
        %v3948 = vunpack.c.l.s4 1966171168
        %v3949 = vunpack.c.0.s8 %v3948
        %v3950 = vlaneseq
        %v3951 = vshrl.u32 %v3950, 7
        %v3952 = vsub.s32 %v3949, %v3951
        %v3953 = vrot.slane %v3937, %v3952
        %v3955 = vunpack.c.l.s4 1966171168
        %v3956 = vunpack.c.0.s8 %v3955
        %v3957 = vlaneseq
        %v3958 = vshrl.u32 %v3957, 7
        %v3959 = vsub.s32 %v3956, %v3958
        %v3960 = vrot.slane %v3938, %v3959
        %v3962 = vunpack.c.l.s4 1966171168
        %v3963 = vunpack.c.0.s8 %v3962
        %v3964 = vlaneseq
        %v3965 = vshrl.u32 %v3964, 7
        %v3966 = vsub.s32 %v3963, %v3965
        %v3967 = vrot.slane %v3939, %v3966
        %v3968 = vcombine.low %v3946, %v3953
        %v3969 = vcombine.low %v3960, %v3967
        %v3971 = vunpack.c.l.s4 1966171168
        %v3972 = vunpack.c.0.s8 %v3971
        %v3973 = vlaneseq
        %v3974 = vshrl.u32 %v3973, 7
        %v3975 = vsub.s32 %v3972, %v3974
        %v3976 = vrot.slane %v3968, %v3975
        %v3978 = vunpack.c.l.s4 1966171168
        %v3979 = vunpack.c.0.s8 %v3978
        %v3980 = vlaneseq
        %v3981 = vshrl.u32 %v3980, 7
        %v3982 = vsub.s32 %v3979, %v3981
        %v3983 = vrot.slane %v3969, %v3982
        %v3984 = vcombine.low %v3976, %v3983
        %v3985 = vcombine.low %v2777, %v2781
        %v3986 = vcombine.low %v2785, %v2789
        %v3987 = vcombine.low %v2793, %v2797
        %v3988 = vcombine.low %v2801, %v2805
        %v3990 = vunpack.c.l.s4 1966171168
        %v3991 = vunpack.c.0.s8 %v3990
        %v3992 = vlaneseq
        %v3993 = vshrl.u32 %v3992, 7
        %v3994 = vsub.s32 %v3991, %v3993
        %v3995 = vrot.slane %v3985, %v3994
        %v3997 = vunpack.c.l.s4 1966171168
        %v3998 = vunpack.c.0.s8 %v3997
        %v3999 = vlaneseq
        %v4000 = vshrl.u32 %v3999, 7
        %v4001 = vsub.s32 %v3998, %v4000
        %v4002 = vrot.slane %v3986, %v4001
        %v4004 = vunpack.c.l.s4 1966171168
        %v4005 = vunpack.c.0.s8 %v4004
        %v4006 = vlaneseq
        %v4007 = vshrl.u32 %v4006, 7
        %v4008 = vsub.s32 %v4005, %v4007
        %v4009 = vrot.slane %v3987, %v4008
        %v4011 = vunpack.c.l.s4 1966171168
        %v4012 = vunpack.c.0.s8 %v4011
        %v4013 = vlaneseq
        %v4014 = vshrl.u32 %v4013, 7
        %v4015 = vsub.s32 %v4012, %v4014
        %v4016 = vrot.slane %v3988, %v4015
        %v4017 = vcombine.low %v3995, %v4002
        %v4018 = vcombine.low %v4009, %v4016
        %v4020 = vunpack.c.l.s4 1966171168
        %v4021 = vunpack.c.0.s8 %v4020
        %v4022 = vlaneseq
        %v4023 = vshrl.u32 %v4022, 7
        %v4024 = vsub.s32 %v4021, %v4023
        %v4025 = vrot.slane %v4017, %v4024
        %v4027 = vunpack.c.l.s4 1966171168
        %v4028 = vunpack.c.0.s8 %v4027
        %v4029 = vlaneseq
        %v4030 = vshrl.u32 %v4029, 7
        %v4031 = vsub.s32 %v4028, %v4030
        %v4032 = vrot.slane %v4018, %v4031
        %v4033 = vcombine.low %v4025, %v4032
        %v4034 = vcombine.low %v2809, %v2813
        %v4035 = vcombine.low %v2817, %v2821
        %v4036 = vcombine.low %v2825, %v2829
        %v4037 = vcombine.low %v2833, %v2837
        %v4039 = vunpack.c.l.s4 1966171168
        %v4040 = vunpack.c.0.s8 %v4039
        %v4041 = vlaneseq
        %v4042 = vshrl.u32 %v4041, 7
        %v4043 = vsub.s32 %v4040, %v4042
        %v4044 = vrot.slane %v4034, %v4043
        %v4046 = vunpack.c.l.s4 1966171168
        %v4047 = vunpack.c.0.s8 %v4046
        %v4048 = vlaneseq
        %v4049 = vshrl.u32 %v4048, 7
        %v4050 = vsub.s32 %v4047, %v4049
        %v4051 = vrot.slane %v4035, %v4050
        %v4053 = vunpack.c.l.s4 1966171168
        %v4054 = vunpack.c.0.s8 %v4053
        %v4055 = vlaneseq
        %v4056 = vshrl.u32 %v4055, 7
        %v4057 = vsub.s32 %v4054, %v4056
        %v4058 = vrot.slane %v4036, %v4057
        %v4060 = vunpack.c.l.s4 1966171168
        %v4061 = vunpack.c.0.s8 %v4060
        %v4062 = vlaneseq
        %v4063 = vshrl.u32 %v4062, 7
        %v4064 = vsub.s32 %v4061, %v4063
        %v4065 = vrot.slane %v4037, %v4064
        %v4066 = vcombine.low %v4044, %v4051
        %v4067 = vcombine.low %v4058, %v4065
        %v4069 = vunpack.c.l.s4 1966171168
        %v4070 = vunpack.c.0.s8 %v4069
        %v4071 = vlaneseq
        %v4072 = vshrl.u32 %v4071, 7
        %v4073 = vsub.s32 %v4070, %v4072
        %v4074 = vrot.slane %v4066, %v4073
        %v4076 = vunpack.c.l.s4 1966171168
        %v4077 = vunpack.c.0.s8 %v4076
        %v4078 = vlaneseq
        %v4079 = vshrl.u32 %v4078, 7
        %v4080 = vsub.s32 %v4077, %v4079
        %v4081 = vrot.slane %v4067, %v4080
        %v4082 = vcombine.low %v4074, %v4081
        %v4083 = vcombine.low %v2841, %v2845
        %v4084 = vcombine.low %v2849, %v2853
        %v4085 = vcombine.low %v2857, %v2861
        %v4086 = vcombine.low %v2865, %v2869
        %v4088 = vunpack.c.l.s4 1966171168
        %v4089 = vunpack.c.0.s8 %v4088
        %v4090 = vlaneseq
        %v4091 = vshrl.u32 %v4090, 7
        %v4092 = vsub.s32 %v4089, %v4091
        %v4093 = vrot.slane %v4083, %v4092
        %v4095 = vunpack.c.l.s4 1966171168
        %v4096 = vunpack.c.0.s8 %v4095
        %v4097 = vlaneseq
        %v4098 = vshrl.u32 %v4097, 7
        %v4099 = vsub.s32 %v4096, %v4098
        %v4100 = vrot.slane %v4084, %v4099
        %v4102 = vunpack.c.l.s4 1966171168
        %v4103 = vunpack.c.0.s8 %v4102
        %v4104 = vlaneseq
        %v4105 = vshrl.u32 %v4104, 7
        %v4106 = vsub.s32 %v4103, %v4105
        %v4107 = vrot.slane %v4085, %v4106
        %v4109 = vunpack.c.l.s4 1966171168
        %v4110 = vunpack.c.0.s8 %v4109
        %v4111 = vlaneseq
        %v4112 = vshrl.u32 %v4111, 7
        %v4113 = vsub.s32 %v4110, %v4112
        %v4114 = vrot.slane %v4086, %v4113
        %v4115 = vcombine.low %v4093, %v4100
        %v4116 = vcombine.low %v4107, %v4114
        %v4118 = vunpack.c.l.s4 1966171168
        %v4119 = vunpack.c.0.s8 %v4118
        %v4120 = vlaneseq
        %v4121 = vshrl.u32 %v4120, 7
        %v4122 = vsub.s32 %v4119, %v4121
        %v4123 = vrot.slane %v4115, %v4122
        %v4125 = vunpack.c.l.s4 1966171168
        %v4126 = vunpack.c.0.s8 %v4125
        %v4127 = vlaneseq
        %v4128 = vshrl.u32 %v4127, 7
        %v4129 = vsub.s32 %v4126, %v4128
        %v4130 = vrot.slane %v4116, %v4129
        %v4131 = vcombine.low %v4123, %v4130
        %v4132 = vcombine.low %v2873, %v2877
        %v4133 = vcombine.low %v2881, %v2885
        %v4134 = vcombine.low %v2889, %v2893
        %v4135 = vcombine.low %v2897, %v2901
        %v4137 = vunpack.c.l.s4 1966171168
        %v4138 = vunpack.c.0.s8 %v4137
        %v4139 = vlaneseq
        %v4140 = vshrl.u32 %v4139, 7
        %v4141 = vsub.s32 %v4138, %v4140
        %v4142 = vrot.slane %v4132, %v4141
        %v4144 = vunpack.c.l.s4 1966171168
        %v4145 = vunpack.c.0.s8 %v4144
        %v4146 = vlaneseq
        %v4147 = vshrl.u32 %v4146, 7
        %v4148 = vsub.s32 %v4145, %v4147
        %v4149 = vrot.slane %v4133, %v4148
        %v4151 = vunpack.c.l.s4 1966171168
        %v4152 = vunpack.c.0.s8 %v4151
        %v4153 = vlaneseq
        %v4154 = vshrl.u32 %v4153, 7
        %v4155 = vsub.s32 %v4152, %v4154
        %v4156 = vrot.slane %v4134, %v4155
        %v4158 = vunpack.c.l.s4 1966171168
        %v4159 = vunpack.c.0.s8 %v4158
        %v4160 = vlaneseq
        %v4161 = vshrl.u32 %v4160, 7
        %v4162 = vsub.s32 %v4159, %v4161
        %v4163 = vrot.slane %v4135, %v4162
        %v4164 = vcombine.low %v4142, %v4149
        %v4165 = vcombine.low %v4156, %v4163
        %v4167 = vunpack.c.l.s4 1966171168
        %v4168 = vunpack.c.0.s8 %v4167
        %v4169 = vlaneseq
        %v4170 = vshrl.u32 %v4169, 7
        %v4171 = vsub.s32 %v4168, %v4170
        %v4172 = vrot.slane %v4164, %v4171
        %v4174 = vunpack.c.l.s4 1966171168
        %v4175 = vunpack.c.0.s8 %v4174
        %v4176 = vlaneseq
        %v4177 = vshrl.u32 %v4176, 7
        %v4178 = vsub.s32 %v4175, %v4177
        %v4179 = vrot.slane %v4165, %v4178
        %v4180 = vcombine.low %v4172, %v4179
        %v4181 = vcombine.low %v2905, %v2909
        %v4182 = vcombine.low %v2913, %v2917
        %v4183 = vcombine.low %v2921, %v2925
        %v4184 = vcombine.low %v2929, %v2933
        %v4186 = vunpack.c.l.s4 1966171168
        %v4187 = vunpack.c.0.s8 %v4186
        %v4188 = vlaneseq
        %v4189 = vshrl.u32 %v4188, 7
        %v4190 = vsub.s32 %v4187, %v4189
        %v4191 = vrot.slane %v4181, %v4190
        %v4193 = vunpack.c.l.s4 1966171168
        %v4194 = vunpack.c.0.s8 %v4193
        %v4195 = vlaneseq
        %v4196 = vshrl.u32 %v4195, 7
        %v4197 = vsub.s32 %v4194, %v4196
        %v4198 = vrot.slane %v4182, %v4197
        %v4200 = vunpack.c.l.s4 1966171168
        %v4201 = vunpack.c.0.s8 %v4200
        %v4202 = vlaneseq
        %v4203 = vshrl.u32 %v4202, 7
        %v4204 = vsub.s32 %v4201, %v4203
        %v4205 = vrot.slane %v4183, %v4204
        %v4207 = vunpack.c.l.s4 1966171168
        %v4208 = vunpack.c.0.s8 %v4207
        %v4209 = vlaneseq
        %v4210 = vshrl.u32 %v4209, 7
        %v4211 = vsub.s32 %v4208, %v4210
        %v4212 = vrot.slane %v4184, %v4211
        %v4213 = vcombine.low %v4191, %v4198
        %v4214 = vcombine.low %v4205, %v4212
        %v4216 = vunpack.c.l.s4 1966171168
        %v4217 = vunpack.c.0.s8 %v4216
        %v4218 = vlaneseq
        %v4219 = vshrl.u32 %v4218, 7
        %v4220 = vsub.s32 %v4217, %v4219
        %v4221 = vrot.slane %v4213, %v4220
        %v4223 = vunpack.c.l.s4 1966171168
        %v4224 = vunpack.c.0.s8 %v4223
        %v4225 = vlaneseq
        %v4226 = vshrl.u32 %v4225, 7
        %v4227 = vsub.s32 %v4224, %v4226
        %v4228 = vrot.slane %v4214, %v4227
        %v4229 = vcombine.low %v4221, %v4228
        %v4230 = vcombine.low %v2937, %v2941
        %v4231 = vcombine.low %v2945, %v2949
        %v4232 = vcombine.low %v2953, %v2957
        %v4233 = vcombine.low %v2961, %v2965
        %v4235 = vunpack.c.l.s4 1966171168
        %v4236 = vunpack.c.0.s8 %v4235
        %v4237 = vlaneseq
        %v4238 = vshrl.u32 %v4237, 7
        %v4239 = vsub.s32 %v4236, %v4238
        %v4240 = vrot.slane %v4230, %v4239
        %v4242 = vunpack.c.l.s4 1966171168
        %v4243 = vunpack.c.0.s8 %v4242
        %v4244 = vlaneseq
        %v4245 = vshrl.u32 %v4244, 7
        %v4246 = vsub.s32 %v4243, %v4245
        %v4247 = vrot.slane %v4231, %v4246
        %v4249 = vunpack.c.l.s4 1966171168
        %v4250 = vunpack.c.0.s8 %v4249
        %v4251 = vlaneseq
        %v4252 = vshrl.u32 %v4251, 7
        %v4253 = vsub.s32 %v4250, %v4252
        %v4254 = vrot.slane %v4232, %v4253
        %v4256 = vunpack.c.l.s4 1966171168
        %v4257 = vunpack.c.0.s8 %v4256
        %v4258 = vlaneseq
        %v4259 = vshrl.u32 %v4258, 7
        %v4260 = vsub.s32 %v4257, %v4259
        %v4261 = vrot.slane %v4233, %v4260
        %v4262 = vcombine.low %v4240, %v4247
        %v4263 = vcombine.low %v4254, %v4261
        %v4265 = vunpack.c.l.s4 1966171168
        %v4266 = vunpack.c.0.s8 %v4265
        %v4267 = vlaneseq
        %v4268 = vshrl.u32 %v4267, 7
        %v4269 = vsub.s32 %v4266, %v4268
        %v4270 = vrot.slane %v4262, %v4269
        %v4272 = vunpack.c.l.s4 1966171168
        %v4273 = vunpack.c.0.s8 %v4272
        %v4274 = vlaneseq
        %v4275 = vshrl.u32 %v4274, 7
        %v4276 = vsub.s32 %v4273, %v4275
        %v4277 = vrot.slane %v4263, %v4276
        %v4278 = vcombine.low %v4270, %v4277
        %v4279 = vcombine.low %v2969, %v2973
        %v4280 = vcombine.low %v2977, %v2981
        %v4281 = vcombine.low %v2985, %v2989
        %v4282 = vcombine.low %v2993, %v2997
        %v4284 = vunpack.c.l.s4 1966171168
        %v4285 = vunpack.c.0.s8 %v4284
        %v4286 = vlaneseq
        %v4287 = vshrl.u32 %v4286, 7
        %v4288 = vsub.s32 %v4285, %v4287
        %v4289 = vrot.slane %v4279, %v4288
        %v4291 = vunpack.c.l.s4 1966171168
        %v4292 = vunpack.c.0.s8 %v4291
        %v4293 = vlaneseq
        %v4294 = vshrl.u32 %v4293, 7
        %v4295 = vsub.s32 %v4292, %v4294
        %v4296 = vrot.slane %v4280, %v4295
        %v4298 = vunpack.c.l.s4 1966171168
        %v4299 = vunpack.c.0.s8 %v4298
        %v4300 = vlaneseq
        %v4301 = vshrl.u32 %v4300, 7
        %v4302 = vsub.s32 %v4299, %v4301
        %v4303 = vrot.slane %v4281, %v4302
        %v4305 = vunpack.c.l.s4 1966171168
        %v4306 = vunpack.c.0.s8 %v4305
        %v4307 = vlaneseq
        %v4308 = vshrl.u32 %v4307, 7
        %v4309 = vsub.s32 %v4306, %v4308
        %v4310 = vrot.slane %v4282, %v4309
        %v4311 = vcombine.low %v4289, %v4296
        %v4312 = vcombine.low %v4303, %v4310
        %v4314 = vunpack.c.l.s4 1966171168
        %v4315 = vunpack.c.0.s8 %v4314
        %v4316 = vlaneseq
        %v4317 = vshrl.u32 %v4316, 7
        %v4318 = vsub.s32 %v4315, %v4317
        %v4319 = vrot.slane %v4311, %v4318
        %v4321 = vunpack.c.l.s4 1966171168
        %v4322 = vunpack.c.0.s8 %v4321
        %v4323 = vlaneseq
        %v4324 = vshrl.u32 %v4323, 7
        %v4325 = vsub.s32 %v4322, %v4324
        %v4326 = vrot.slane %v4312, %v4325
        %v4327 = vcombine.low %v4319, %v4326
        %v4328 = vcombine.low %v3001, %v3005
        %v4329 = vcombine.low %v3009, %v3013
        %v4330 = vcombine.low %v3017, %v3021
        %v4331 = vcombine.low %v3025, %v3029
        %v4333 = vunpack.c.l.s4 1966171168
        %v4334 = vunpack.c.0.s8 %v4333
        %v4335 = vlaneseq
        %v4336 = vshrl.u32 %v4335, 7
        %v4337 = vsub.s32 %v4334, %v4336
        %v4338 = vrot.slane %v4328, %v4337
        %v4340 = vunpack.c.l.s4 1966171168
        %v4341 = vunpack.c.0.s8 %v4340
        %v4342 = vlaneseq
        %v4343 = vshrl.u32 %v4342, 7
        %v4344 = vsub.s32 %v4341, %v4343
        %v4345 = vrot.slane %v4329, %v4344
        %v4347 = vunpack.c.l.s4 1966171168
        %v4348 = vunpack.c.0.s8 %v4347
        %v4349 = vlaneseq
        %v4350 = vshrl.u32 %v4349, 7
        %v4351 = vsub.s32 %v4348, %v4350
        %v4352 = vrot.slane %v4330, %v4351
        %v4354 = vunpack.c.l.s4 1966171168
        %v4355 = vunpack.c.0.s8 %v4354
        %v4356 = vlaneseq
        %v4357 = vshrl.u32 %v4356, 7
        %v4358 = vsub.s32 %v4355, %v4357
        %v4359 = vrot.slane %v4331, %v4358
        %v4360 = vcombine.low %v4338, %v4345
        %v4361 = vcombine.low %v4352, %v4359
        %v4363 = vunpack.c.l.s4 1966171168
        %v4364 = vunpack.c.0.s8 %v4363
        %v4365 = vlaneseq
        %v4366 = vshrl.u32 %v4365, 7
        %v4367 = vsub.s32 %v4364, %v4366
        %v4368 = vrot.slane %v4360, %v4367
        %v4370 = vunpack.c.l.s4 1966171168
        %v4371 = vunpack.c.0.s8 %v4370
        %v4372 = vlaneseq
        %v4373 = vshrl.u32 %v4372, 7
        %v4374 = vsub.s32 %v4371, %v4373
        %v4375 = vrot.slane %v4361, %v4374
        %v4376 = vcombine.low %v4368, %v4375
        %v4377 = vcombine.low %v3033, %v3037
        %v4378 = vcombine.low %v3041, %v3045
        %v4379 = vcombine.low %v3049, %v3053
        %v4380 = vcombine.low %v3057, %v3061
        %v4382 = vunpack.c.l.s4 1966171168
        %v4383 = vunpack.c.0.s8 %v4382
        %v4384 = vlaneseq
        %v4385 = vshrl.u32 %v4384, 7
        %v4386 = vsub.s32 %v4383, %v4385
        %v4387 = vrot.slane %v4377, %v4386
        %v4389 = vunpack.c.l.s4 1966171168
        %v4390 = vunpack.c.0.s8 %v4389
        %v4391 = vlaneseq
        %v4392 = vshrl.u32 %v4391, 7
        %v4393 = vsub.s32 %v4390, %v4392
        %v4394 = vrot.slane %v4378, %v4393
        %v4396 = vunpack.c.l.s4 1966171168
        %v4397 = vunpack.c.0.s8 %v4396
        %v4398 = vlaneseq
        %v4399 = vshrl.u32 %v4398, 7
        %v4400 = vsub.s32 %v4397, %v4399
        %v4401 = vrot.slane %v4379, %v4400
        %v4403 = vunpack.c.l.s4 1966171168
        %v4404 = vunpack.c.0.s8 %v4403
        %v4405 = vlaneseq
        %v4406 = vshrl.u32 %v4405, 7
        %v4407 = vsub.s32 %v4404, %v4406
        %v4408 = vrot.slane %v4380, %v4407
        %v4409 = vcombine.low %v4387, %v4394
        %v4410 = vcombine.low %v4401, %v4408
        %v4412 = vunpack.c.l.s4 1966171168
        %v4413 = vunpack.c.0.s8 %v4412
        %v4414 = vlaneseq
        %v4415 = vshrl.u32 %v4414, 7
        %v4416 = vsub.s32 %v4413, %v4415
        %v4417 = vrot.slane %v4409, %v4416
        %v4419 = vunpack.c.l.s4 1966171168
        %v4420 = vunpack.c.0.s8 %v4419
        %v4421 = vlaneseq
        %v4422 = vshrl.u32 %v4421, 7
        %v4423 = vsub.s32 %v4420, %v4422
        %v4424 = vrot.slane %v4410, %v4423
        %v4425 = vcombine.low %v4417, %v4424
        %v4426 = vcombine.low %v3065, %v3069
        %v4427 = vcombine.low %v3073, %v3077
        %v4428 = vcombine.low %v3081, %v3085
        %v4429 = vcombine.low %v3089, %v3093
        %v4431 = vunpack.c.l.s4 1966171168
        %v4432 = vunpack.c.0.s8 %v4431
        %v4433 = vlaneseq
        %v4434 = vshrl.u32 %v4433, 7
        %v4435 = vsub.s32 %v4432, %v4434
        %v4436 = vrot.slane %v4426, %v4435
        %v4438 = vunpack.c.l.s4 1966171168
        %v4439 = vunpack.c.0.s8 %v4438
        %v4440 = vlaneseq
        %v4441 = vshrl.u32 %v4440, 7
        %v4442 = vsub.s32 %v4439, %v4441
        %v4443 = vrot.slane %v4427, %v4442
        %v4445 = vunpack.c.l.s4 1966171168
        %v4446 = vunpack.c.0.s8 %v4445
        %v4447 = vlaneseq
        %v4448 = vshrl.u32 %v4447, 7
        %v4449 = vsub.s32 %v4446, %v4448
        %v4450 = vrot.slane %v4428, %v4449
        %v4452 = vunpack.c.l.s4 1966171168
        %v4453 = vunpack.c.0.s8 %v4452
        %v4454 = vlaneseq
        %v4455 = vshrl.u32 %v4454, 7
        %v4456 = vsub.s32 %v4453, %v4455
        %v4457 = vrot.slane %v4429, %v4456
        %v4458 = vcombine.low %v4436, %v4443
        %v4459 = vcombine.low %v4450, %v4457
        %v4461 = vunpack.c.l.s4 1966171168
        %v4462 = vunpack.c.0.s8 %v4461
        %v4463 = vlaneseq
        %v4464 = vshrl.u32 %v4463, 7
        %v4465 = vsub.s32 %v4462, %v4464
        %v4466 = vrot.slane %v4458, %v4465
        %v4468 = vunpack.c.l.s4 1966171168
        %v4469 = vunpack.c.0.s8 %v4468
        %v4470 = vlaneseq
        %v4471 = vshrl.u32 %v4470, 7
        %v4472 = vsub.s32 %v4469, %v4471
        %v4473 = vrot.slane %v4459, %v4472
        %v4474 = vcombine.low %v4466, %v4473
        %v4475 = vcombine.low %v3097, %v3101
        %v4476 = vcombine.low %v3105, %v3109
        %v4477 = vcombine.low %v3113, %v3117
        %v4478 = vcombine.low %v3121, %v3125
        %v4480 = vunpack.c.l.s4 1966171168
        %v4481 = vunpack.c.0.s8 %v4480
        %v4482 = vlaneseq
        %v4483 = vshrl.u32 %v4482, 7
        %v4484 = vsub.s32 %v4481, %v4483
        %v4485 = vrot.slane %v4475, %v4484
        %v4487 = vunpack.c.l.s4 1966171168
        %v4488 = vunpack.c.0.s8 %v4487
        %v4489 = vlaneseq
        %v4490 = vshrl.u32 %v4489, 7
        %v4491 = vsub.s32 %v4488, %v4490
        %v4492 = vrot.slane %v4476, %v4491
        %v4494 = vunpack.c.l.s4 1966171168
        %v4495 = vunpack.c.0.s8 %v4494
        %v4496 = vlaneseq
        %v4497 = vshrl.u32 %v4496, 7
        %v4498 = vsub.s32 %v4495, %v4497
        %v4499 = vrot.slane %v4477, %v4498
        %v4501 = vunpack.c.l.s4 1966171168
        %v4502 = vunpack.c.0.s8 %v4501
        %v4503 = vlaneseq
        %v4504 = vshrl.u32 %v4503, 7
        %v4505 = vsub.s32 %v4502, %v4504
        %v4506 = vrot.slane %v4478, %v4505
        %v4507 = vcombine.low %v4485, %v4492
        %v4508 = vcombine.low %v4499, %v4506
        %v4510 = vunpack.c.l.s4 1966171168
        %v4511 = vunpack.c.0.s8 %v4510
        %v4512 = vlaneseq
        %v4513 = vshrl.u32 %v4512, 7
        %v4514 = vsub.s32 %v4511, %v4513
        %v4515 = vrot.slane %v4507, %v4514
        %v4517 = vunpack.c.l.s4 1966171168
        %v4518 = vunpack.c.0.s8 %v4517
        %v4519 = vlaneseq
        %v4520 = vshrl.u32 %v4519, 7
        %v4521 = vsub.s32 %v4518, %v4520
        %v4522 = vrot.slane %v4508, %v4521
        %v4523 = vcombine.low %v4515, %v4522
        %v4524 = vcombine.low %v3129, %v3133
        %v4525 = vcombine.low %v3137, %v3141
        %v4526 = vcombine.low %v3145, %v3149
        %v4527 = vcombine.low %v3153, %v3157
        %v4529 = vunpack.c.l.s4 1966171168
        %v4530 = vunpack.c.0.s8 %v4529
        %v4531 = vlaneseq
        %v4532 = vshrl.u32 %v4531, 7
        %v4533 = vsub.s32 %v4530, %v4532
        %v4534 = vrot.slane %v4524, %v4533
        %v4536 = vunpack.c.l.s4 1966171168
        %v4537 = vunpack.c.0.s8 %v4536
        %v4538 = vlaneseq
        %v4539 = vshrl.u32 %v4538, 7
        %v4540 = vsub.s32 %v4537, %v4539
        %v4541 = vrot.slane %v4525, %v4540
        %v4543 = vunpack.c.l.s4 1966171168
        %v4544 = vunpack.c.0.s8 %v4543
        %v4545 = vlaneseq
        %v4546 = vshrl.u32 %v4545, 7
        %v4547 = vsub.s32 %v4544, %v4546
        %v4548 = vrot.slane %v4526, %v4547
        %v4550 = vunpack.c.l.s4 1966171168
        %v4551 = vunpack.c.0.s8 %v4550
        %v4552 = vlaneseq
        %v4553 = vshrl.u32 %v4552, 7
        %v4554 = vsub.s32 %v4551, %v4553
        %v4555 = vrot.slane %v4527, %v4554
        %v4556 = vcombine.low %v4534, %v4541
        %v4557 = vcombine.low %v4548, %v4555
        %v4559 = vunpack.c.l.s4 1966171168
        %v4560 = vunpack.c.0.s8 %v4559
        %v4561 = vlaneseq
        %v4562 = vshrl.u32 %v4561, 7
        %v4563 = vsub.s32 %v4560, %v4562
        %v4564 = vrot.slane %v4556, %v4563
        %v4566 = vunpack.c.l.s4 1966171168
        %v4567 = vunpack.c.0.s8 %v4566
        %v4568 = vlaneseq
        %v4569 = vshrl.u32 %v4568, 7
        %v4570 = vsub.s32 %v4567, %v4569
        %v4571 = vrot.slane %v4557, %v4570
        %v4572 = vcombine.low %v4564, %v4571
        %v4573 = vcombine.low %v3161, %v3165
        %v4574 = vcombine.low %v3169, %v3173
        %v4575 = vcombine.low %v3177, %v3181
        %v4576 = vcombine.low %v3185, %v3189
        %v4578 = vunpack.c.l.s4 1966171168
        %v4579 = vunpack.c.0.s8 %v4578
        %v4580 = vlaneseq
        %v4581 = vshrl.u32 %v4580, 7
        %v4582 = vsub.s32 %v4579, %v4581
        %v4583 = vrot.slane %v4573, %v4582
        %v4585 = vunpack.c.l.s4 1966171168
        %v4586 = vunpack.c.0.s8 %v4585
        %v4587 = vlaneseq
        %v4588 = vshrl.u32 %v4587, 7
        %v4589 = vsub.s32 %v4586, %v4588
        %v4590 = vrot.slane %v4574, %v4589
        %v4592 = vunpack.c.l.s4 1966171168
        %v4593 = vunpack.c.0.s8 %v4592
        %v4594 = vlaneseq
        %v4595 = vshrl.u32 %v4594, 7
        %v4596 = vsub.s32 %v4593, %v4595
        %v4597 = vrot.slane %v4575, %v4596
        %v4599 = vunpack.c.l.s4 1966171168
        %v4600 = vunpack.c.0.s8 %v4599
        %v4601 = vlaneseq
        %v4602 = vshrl.u32 %v4601, 7
        %v4603 = vsub.s32 %v4600, %v4602
        %v4604 = vrot.slane %v4576, %v4603
        %v4605 = vcombine.low %v4583, %v4590
        %v4606 = vcombine.low %v4597, %v4604
        %v4608 = vunpack.c.l.s4 1966171168
        %v4609 = vunpack.c.0.s8 %v4608
        %v4610 = vlaneseq
        %v4611 = vshrl.u32 %v4610, 7
        %v4612 = vsub.s32 %v4609, %v4611
        %v4613 = vrot.slane %v4605, %v4612
        %v4615 = vunpack.c.l.s4 1966171168
        %v4616 = vunpack.c.0.s8 %v4615
        %v4617 = vlaneseq
        %v4618 = vshrl.u32 %v4617, 7
        %v4619 = vsub.s32 %v4616, %v4618
        %v4620 = vrot.slane %v4606, %v4619
        %v4621 = vcombine.low %v4613, %v4620
        %v4622 = vcombine.low %v3193, %v3197
        %v4623 = vcombine.low %v3201, %v3205
        %v4624 = vcombine.low %v3209, %v3213
        %v4625 = vcombine.low %v3217, %v3221
        %v4627 = vunpack.c.l.s4 1966171168
        %v4628 = vunpack.c.0.s8 %v4627
        %v4629 = vlaneseq
        %v4630 = vshrl.u32 %v4629, 7
        %v4631 = vsub.s32 %v4628, %v4630
        %v4632 = vrot.slane %v4622, %v4631
        %v4634 = vunpack.c.l.s4 1966171168
        %v4635 = vunpack.c.0.s8 %v4634
        %v4636 = vlaneseq
        %v4637 = vshrl.u32 %v4636, 7
        %v4638 = vsub.s32 %v4635, %v4637
        %v4639 = vrot.slane %v4623, %v4638
        %v4641 = vunpack.c.l.s4 1966171168
        %v4642 = vunpack.c.0.s8 %v4641
        %v4643 = vlaneseq
        %v4644 = vshrl.u32 %v4643, 7
        %v4645 = vsub.s32 %v4642, %v4644
        %v4646 = vrot.slane %v4624, %v4645
        %v4648 = vunpack.c.l.s4 1966171168
        %v4649 = vunpack.c.0.s8 %v4648
        %v4650 = vlaneseq
        %v4651 = vshrl.u32 %v4650, 7
        %v4652 = vsub.s32 %v4649, %v4651
        %v4653 = vrot.slane %v4625, %v4652
        %v4654 = vcombine.low %v4632, %v4639
        %v4655 = vcombine.low %v4646, %v4653
        %v4657 = vunpack.c.l.s4 1966171168
        %v4658 = vunpack.c.0.s8 %v4657
        %v4659 = vlaneseq
        %v4660 = vshrl.u32 %v4659, 7
        %v4661 = vsub.s32 %v4658, %v4660
        %v4662 = vrot.slane %v4654, %v4661
        %v4664 = vunpack.c.l.s4 1966171168
        %v4665 = vunpack.c.0.s8 %v4664
        %v4666 = vlaneseq
        %v4667 = vshrl.u32 %v4666, 7
        %v4668 = vsub.s32 %v4665, %v4667
        %v4669 = vrot.slane %v4655, %v4668
        %v4670 = vcombine.low %v4662, %v4669
        %v4671 = vcombine.low %v3225, %v3229
        %v4672 = vcombine.low %v3233, %v3237
        %v4673 = vcombine.low %v3241, %v3245
        %v4674 = vcombine.low %v3249, %v3253
        %v4676 = vunpack.c.l.s4 1966171168
        %v4677 = vunpack.c.0.s8 %v4676
        %v4678 = vlaneseq
        %v4679 = vshrl.u32 %v4678, 7
        %v4680 = vsub.s32 %v4677, %v4679
        %v4681 = vrot.slane %v4671, %v4680
        %v4683 = vunpack.c.l.s4 1966171168
        %v4684 = vunpack.c.0.s8 %v4683
        %v4685 = vlaneseq
        %v4686 = vshrl.u32 %v4685, 7
        %v4687 = vsub.s32 %v4684, %v4686
        %v4688 = vrot.slane %v4672, %v4687
        %v4690 = vunpack.c.l.s4 1966171168
        %v4691 = vunpack.c.0.s8 %v4690
        %v4692 = vlaneseq
        %v4693 = vshrl.u32 %v4692, 7
        %v4694 = vsub.s32 %v4691, %v4693
        %v4695 = vrot.slane %v4673, %v4694
        %v4697 = vunpack.c.l.s4 1966171168
        %v4698 = vunpack.c.0.s8 %v4697
        %v4699 = vlaneseq
        %v4700 = vshrl.u32 %v4699, 7
        %v4701 = vsub.s32 %v4698, %v4700
        %v4702 = vrot.slane %v4674, %v4701
        %v4703 = vcombine.low %v4681, %v4688
        %v4704 = vcombine.low %v4695, %v4702
        %v4706 = vunpack.c.l.s4 1966171168
        %v4707 = vunpack.c.0.s8 %v4706
        %v4708 = vlaneseq
        %v4709 = vshrl.u32 %v4708, 7
        %v4710 = vsub.s32 %v4707, %v4709
        %v4711 = vrot.slane %v4703, %v4710
        %v4713 = vunpack.c.l.s4 1966171168
        %v4714 = vunpack.c.0.s8 %v4713
        %v4715 = vlaneseq
        %v4716 = vshrl.u32 %v4715, 7
        %v4717 = vsub.s32 %v4714, %v4716
        %v4718 = vrot.slane %v4704, %v4717
        %v4719 = vcombine.low %v4711, %v4718
        %v4720 = vcombine.low %v3257, %v3261
        %v4721 = vcombine.low %v3265, %v3269
        %v4722 = vcombine.low %v3273, %v3277
        %v4723 = vcombine.low %v3281, %v3285
        %v4725 = vunpack.c.l.s4 1966171168
        %v4726 = vunpack.c.0.s8 %v4725
        %v4727 = vlaneseq
        %v4728 = vshrl.u32 %v4727, 7
        %v4729 = vsub.s32 %v4726, %v4728
        %v4730 = vrot.slane %v4720, %v4729
        %v4732 = vunpack.c.l.s4 1966171168
        %v4733 = vunpack.c.0.s8 %v4732
        %v4734 = vlaneseq
        %v4735 = vshrl.u32 %v4734, 7
        %v4736 = vsub.s32 %v4733, %v4735
        %v4737 = vrot.slane %v4721, %v4736
        %v4739 = vunpack.c.l.s4 1966171168
        %v4740 = vunpack.c.0.s8 %v4739
        %v4741 = vlaneseq
        %v4742 = vshrl.u32 %v4741, 7
        %v4743 = vsub.s32 %v4740, %v4742
        %v4744 = vrot.slane %v4722, %v4743
        %v4746 = vunpack.c.l.s4 1966171168
        %v4747 = vunpack.c.0.s8 %v4746
        %v4748 = vlaneseq
        %v4749 = vshrl.u32 %v4748, 7
        %v4750 = vsub.s32 %v4747, %v4749
        %v4751 = vrot.slane %v4723, %v4750
        %v4752 = vcombine.low %v4730, %v4737
        %v4753 = vcombine.low %v4744, %v4751
        %v4755 = vunpack.c.l.s4 1966171168
        %v4756 = vunpack.c.0.s8 %v4755
        %v4757 = vlaneseq
        %v4758 = vshrl.u32 %v4757, 7
        %v4759 = vsub.s32 %v4756, %v4758
        %v4760 = vrot.slane %v4752, %v4759
        %v4762 = vunpack.c.l.s4 1966171168
        %v4763 = vunpack.c.0.s8 %v4762
        %v4764 = vlaneseq
        %v4765 = vshrl.u32 %v4764, 7
        %v4766 = vsub.s32 %v4763, %v4765
        %v4767 = vrot.slane %v4753, %v4766
        %v4768 = vcombine.low %v4760, %v4767
        %v4769 = vcombine.low %v3289, %v3293
        %v4770 = vcombine.low %v3297, %v3301
        %v4771 = vcombine.low %v3305, %v3309
        %v4772 = vcombine.low %v3313, %v3317
        %v4774 = vunpack.c.l.s4 1966171168
        %v4775 = vunpack.c.0.s8 %v4774
        %v4776 = vlaneseq
        %v4777 = vshrl.u32 %v4776, 7
        %v4778 = vsub.s32 %v4775, %v4777
        %v4779 = vrot.slane %v4769, %v4778
        %v4781 = vunpack.c.l.s4 1966171168
        %v4782 = vunpack.c.0.s8 %v4781
        %v4783 = vlaneseq
        %v4784 = vshrl.u32 %v4783, 7
        %v4785 = vsub.s32 %v4782, %v4784
        %v4786 = vrot.slane %v4770, %v4785
        %v4788 = vunpack.c.l.s4 1966171168
        %v4789 = vunpack.c.0.s8 %v4788
        %v4790 = vlaneseq
        %v4791 = vshrl.u32 %v4790, 7
        %v4792 = vsub.s32 %v4789, %v4791
        %v4793 = vrot.slane %v4771, %v4792
        %v4795 = vunpack.c.l.s4 1966171168
        %v4796 = vunpack.c.0.s8 %v4795
        %v4797 = vlaneseq
        %v4798 = vshrl.u32 %v4797, 7
        %v4799 = vsub.s32 %v4796, %v4798
        %v4800 = vrot.slane %v4772, %v4799
        %v4801 = vcombine.low %v4779, %v4786
        %v4802 = vcombine.low %v4793, %v4800
        %v4804 = vunpack.c.l.s4 1966171168
        %v4805 = vunpack.c.0.s8 %v4804
        %v4806 = vlaneseq
        %v4807 = vshrl.u32 %v4806, 7
        %v4808 = vsub.s32 %v4805, %v4807
        %v4809 = vrot.slane %v4801, %v4808
        %v4811 = vunpack.c.l.s4 1966171168
        %v4812 = vunpack.c.0.s8 %v4811
        %v4813 = vlaneseq
        %v4814 = vshrl.u32 %v4813, 7
        %v4815 = vsub.s32 %v4812, %v4814
        %v4816 = vrot.slane %v4802, %v4815
        %v4817 = vcombine.low %v4809, %v4816
        %v4818 = vcombine.low %v3321, %v3325
        %v4819 = vcombine.low %v3329, %v3333
        %v4820 = vcombine.low %v3337, %v3341
        %v4821 = vcombine.low %v3345, %v3349
        %v4823 = vunpack.c.l.s4 1966171168
        %v4824 = vunpack.c.0.s8 %v4823
        %v4825 = vlaneseq
        %v4826 = vshrl.u32 %v4825, 7
        %v4827 = vsub.s32 %v4824, %v4826
        %v4828 = vrot.slane %v4818, %v4827
        %v4830 = vunpack.c.l.s4 1966171168
        %v4831 = vunpack.c.0.s8 %v4830
        %v4832 = vlaneseq
        %v4833 = vshrl.u32 %v4832, 7
        %v4834 = vsub.s32 %v4831, %v4833
        %v4835 = vrot.slane %v4819, %v4834
        %v4837 = vunpack.c.l.s4 1966171168
        %v4838 = vunpack.c.0.s8 %v4837
        %v4839 = vlaneseq
        %v4840 = vshrl.u32 %v4839, 7
        %v4841 = vsub.s32 %v4838, %v4840
        %v4842 = vrot.slane %v4820, %v4841
        %v4844 = vunpack.c.l.s4 1966171168
        %v4845 = vunpack.c.0.s8 %v4844
        %v4846 = vlaneseq
        %v4847 = vshrl.u32 %v4846, 7
        %v4848 = vsub.s32 %v4845, %v4847
        %v4849 = vrot.slane %v4821, %v4848
        %v4850 = vcombine.low %v4828, %v4835
        %v4851 = vcombine.low %v4842, %v4849
        %v4853 = vunpack.c.l.s4 1966171168
        %v4854 = vunpack.c.0.s8 %v4853
        %v4855 = vlaneseq
        %v4856 = vshrl.u32 %v4855, 7
        %v4857 = vsub.s32 %v4854, %v4856
        %v4858 = vrot.slane %v4850, %v4857
        %v4860 = vunpack.c.l.s4 1966171168
        %v4861 = vunpack.c.0.s8 %v4860
        %v4862 = vlaneseq
        %v4863 = vshrl.u32 %v4862, 7
        %v4864 = vsub.s32 %v4861, %v4863
        %v4865 = vrot.slane %v4851, %v4864
        %v4866 = vcombine.low %v4858, %v4865
        %v4867 = vcombine.low %v3353, %v3357
        %v4868 = vcombine.low %v3361, %v3365
        %v4869 = vcombine.low %v3369, %v3373
        %v4870 = vcombine.low %v3377, %v3381
        %v4872 = vunpack.c.l.s4 1966171168
        %v4873 = vunpack.c.0.s8 %v4872
        %v4874 = vlaneseq
        %v4875 = vshrl.u32 %v4874, 7
        %v4876 = vsub.s32 %v4873, %v4875
        %v4877 = vrot.slane %v4867, %v4876
        %v4879 = vunpack.c.l.s4 1966171168
        %v4880 = vunpack.c.0.s8 %v4879
        %v4881 = vlaneseq
        %v4882 = vshrl.u32 %v4881, 7
        %v4883 = vsub.s32 %v4880, %v4882
        %v4884 = vrot.slane %v4868, %v4883
        %v4886 = vunpack.c.l.s4 1966171168
        %v4887 = vunpack.c.0.s8 %v4886
        %v4888 = vlaneseq
        %v4889 = vshrl.u32 %v4888, 7
        %v4890 = vsub.s32 %v4887, %v4889
        %v4891 = vrot.slane %v4869, %v4890
        %v4893 = vunpack.c.l.s4 1966171168
        %v4894 = vunpack.c.0.s8 %v4893
        %v4895 = vlaneseq
        %v4896 = vshrl.u32 %v4895, 7
        %v4897 = vsub.s32 %v4894, %v4896
        %v4898 = vrot.slane %v4870, %v4897
        %v4899 = vcombine.low %v4877, %v4884
        %v4900 = vcombine.low %v4891, %v4898
        %v4902 = vunpack.c.l.s4 1966171168
        %v4903 = vunpack.c.0.s8 %v4902
        %v4904 = vlaneseq
        %v4905 = vshrl.u32 %v4904, 7
        %v4906 = vsub.s32 %v4903, %v4905
        %v4907 = vrot.slane %v4899, %v4906
        %v4909 = vunpack.c.l.s4 1966171168
        %v4910 = vunpack.c.0.s8 %v4909
        %v4911 = vlaneseq
        %v4912 = vshrl.u32 %v4911, 7
        %v4913 = vsub.s32 %v4910, %v4912
        %v4914 = vrot.slane %v4900, %v4913
        %v4915 = vcombine.low %v4907, %v4914
        %v4916 = vcombine.low %v3385, %v3389
        %v4917 = vcombine.low %v3393, %v3397
        %v4918 = vcombine.low %v3401, %v3405
        %v4919 = vcombine.low %v3409, %v3413
        %v4921 = vunpack.c.l.s4 1966171168
        %v4922 = vunpack.c.0.s8 %v4921
        %v4923 = vlaneseq
        %v4924 = vshrl.u32 %v4923, 7
        %v4925 = vsub.s32 %v4922, %v4924
        %v4926 = vrot.slane %v4916, %v4925
        %v4928 = vunpack.c.l.s4 1966171168
        %v4929 = vunpack.c.0.s8 %v4928
        %v4930 = vlaneseq
        %v4931 = vshrl.u32 %v4930, 7
        %v4932 = vsub.s32 %v4929, %v4931
        %v4933 = vrot.slane %v4917, %v4932
        %v4935 = vunpack.c.l.s4 1966171168
        %v4936 = vunpack.c.0.s8 %v4935
        %v4937 = vlaneseq
        %v4938 = vshrl.u32 %v4937, 7
        %v4939 = vsub.s32 %v4936, %v4938
        %v4940 = vrot.slane %v4918, %v4939
        %v4942 = vunpack.c.l.s4 1966171168
        %v4943 = vunpack.c.0.s8 %v4942
        %v4944 = vlaneseq
        %v4945 = vshrl.u32 %v4944, 7
        %v4946 = vsub.s32 %v4943, %v4945
        %v4947 = vrot.slane %v4919, %v4946
        %v4948 = vcombine.low %v4926, %v4933
        %v4949 = vcombine.low %v4940, %v4947
        %v4951 = vunpack.c.l.s4 1966171168
        %v4952 = vunpack.c.0.s8 %v4951
        %v4953 = vlaneseq
        %v4954 = vshrl.u32 %v4953, 7
        %v4955 = vsub.s32 %v4952, %v4954
        %v4956 = vrot.slane %v4948, %v4955
        %v4958 = vunpack.c.l.s4 1966171168
        %v4959 = vunpack.c.0.s8 %v4958
        %v4960 = vlaneseq
        %v4961 = vshrl.u32 %v4960, 7
        %v4962 = vsub.s32 %v4959, %v4961
        %v4963 = vrot.slane %v4949, %v4962
        %v4964 = vcombine.low %v4956, %v4963
        %v4965 = vcombine.low %v3417, %v3421
        %v4966 = vcombine.low %v3425, %v3429
        %v4967 = vcombine.low %v3433, %v3437
        %v4968 = vcombine.low %v3441, %v3445
        %v4970 = vunpack.c.l.s4 1966171168
        %v4971 = vunpack.c.0.s8 %v4970
        %v4972 = vlaneseq
        %v4973 = vshrl.u32 %v4972, 7
        %v4974 = vsub.s32 %v4971, %v4973
        %v4975 = vrot.slane %v4965, %v4974
        %v4977 = vunpack.c.l.s4 1966171168
        %v4978 = vunpack.c.0.s8 %v4977
        %v4979 = vlaneseq
        %v4980 = vshrl.u32 %v4979, 7
        %v4981 = vsub.s32 %v4978, %v4980
        %v4982 = vrot.slane %v4966, %v4981
        %v4984 = vunpack.c.l.s4 1966171168
        %v4985 = vunpack.c.0.s8 %v4984
        %v4986 = vlaneseq
        %v4987 = vshrl.u32 %v4986, 7
        %v4988 = vsub.s32 %v4985, %v4987
        %v4989 = vrot.slane %v4967, %v4988
        %v4991 = vunpack.c.l.s4 1966171168
        %v4992 = vunpack.c.0.s8 %v4991
        %v4993 = vlaneseq
        %v4994 = vshrl.u32 %v4993, 7
        %v4995 = vsub.s32 %v4992, %v4994
        %v4996 = vrot.slane %v4968, %v4995
        %v4997 = vcombine.low %v4975, %v4982
        %v4998 = vcombine.low %v4989, %v4996
        %v5000 = vunpack.c.l.s4 1966171168
        %v5001 = vunpack.c.0.s8 %v5000
        %v5002 = vlaneseq
        %v5003 = vshrl.u32 %v5002, 7
        %v5004 = vsub.s32 %v5001, %v5003
        %v5005 = vrot.slane %v4997, %v5004
        %v5007 = vunpack.c.l.s4 1966171168
        %v5008 = vunpack.c.0.s8 %v5007
        %v5009 = vlaneseq
        %v5010 = vshrl.u32 %v5009, 7
        %v5011 = vsub.s32 %v5008, %v5010
        %v5012 = vrot.slane %v4998, %v5011
        %v5013 = vcombine.low %v5005, %v5012
        %5014 = vset.pattern.permute.xlu0 0
        %5015 = vperm.xlu0 %5014, %v3494
        %v5016 = vpop.permute.xlu0 %5015
        %5017 = vset.pattern.permute.xlu0 0
        %5018 = vperm.xlu0 %5017, %v3543
        %v5019 = vpop.permute.xlu0 %5018
        %5020 = vset.pattern.permute.xlu0 0
        %5021 = vperm.xlu0 %5020, %v3592
        %v5022 = vpop.permute.xlu0 %5021
        %5023 = vset.pattern.permute.xlu0 0
        %5024 = vperm.xlu0 %5023, %v3641
        %v5025 = vpop.permute.xlu0 %5024
        %5026 = vset.pattern.permute.xlu0 0
        %5027 = vperm.xlu0 %5026, %v3690
        %v5028 = vpop.permute.xlu0 %5027
        %5029 = vset.pattern.permute.xlu0 0
        %5030 = vperm.xlu0 %5029, %v3739
        %v5031 = vpop.permute.xlu0 %5030
        %5032 = vset.pattern.permute.xlu0 0
        %5033 = vperm.xlu0 %5032, %v3788
        %v5034 = vpop.permute.xlu0 %5033
        %5035 = vset.pattern.permute.xlu0 0
        %5036 = vperm.xlu0 %5035, %v3837
        %v5037 = vpop.permute.xlu0 %5036
        %5038 = vset.pattern.permute.xlu0 0
        %5039 = vperm.xlu0 %5038, %v3886
        %v5040 = vpop.permute.xlu0 %5039
        %5041 = vset.pattern.permute.xlu0 0
        %5042 = vperm.xlu0 %5041, %v3935
        %v5043 = vpop.permute.xlu0 %5042
        %5044 = vset.pattern.permute.xlu0 0
        %5045 = vperm.xlu0 %5044, %v3984
        %v5046 = vpop.permute.xlu0 %5045
        %5047 = vset.pattern.permute.xlu0 0
        %5048 = vperm.xlu0 %5047, %v4033
        %v5049 = vpop.permute.xlu0 %5048
        %5050 = vset.pattern.permute.xlu0 0
        %5051 = vperm.xlu0 %5050, %v4082
        %v5052 = vpop.permute.xlu0 %5051
        %5053 = vset.pattern.permute.xlu0 0
        %5054 = vperm.xlu0 %5053, %v4131
        %v5055 = vpop.permute.xlu0 %5054
        %5056 = vset.pattern.permute.xlu0 0
        %5057 = vperm.xlu0 %5056, %v4180
        %v5058 = vpop.permute.xlu0 %5057
        %5059 = vset.pattern.permute.xlu0 0
        %5060 = vperm.xlu0 %5059, %v4229
        %v5061 = vpop.permute.xlu0 %5060
        %5062 = vset.pattern.permute.xlu0 0
        %5063 = vperm.xlu0 %5062, %v4278
        %v5064 = vpop.permute.xlu0 %5063
        %5065 = vset.pattern.permute.xlu0 0
        %5066 = vperm.xlu0 %5065, %v4327
        %v5067 = vpop.permute.xlu0 %5066
        %5068 = vset.pattern.permute.xlu0 0
        %5069 = vperm.xlu0 %5068, %v4376
        %v5070 = vpop.permute.xlu0 %5069
        %5071 = vset.pattern.permute.xlu0 0
        %5072 = vperm.xlu0 %5071, %v4425
        %v5073 = vpop.permute.xlu0 %5072
        %5074 = vset.pattern.permute.xlu0 0
        %5075 = vperm.xlu0 %5074, %v4474
        %v5076 = vpop.permute.xlu0 %5075
        %5077 = vset.pattern.permute.xlu0 0
        %5078 = vperm.xlu0 %5077, %v4523
        %v5079 = vpop.permute.xlu0 %5078
        %5080 = vset.pattern.permute.xlu0 0
        %5081 = vperm.xlu0 %5080, %v4572
        %v5082 = vpop.permute.xlu0 %5081
        %5083 = vset.pattern.permute.xlu0 0
        %5084 = vperm.xlu0 %5083, %v4621
        %v5085 = vpop.permute.xlu0 %5084
        %5086 = vset.pattern.permute.xlu0 0
        %5087 = vperm.xlu0 %5086, %v4670
        %v5088 = vpop.permute.xlu0 %5087
        %5089 = vset.pattern.permute.xlu0 0
        %5090 = vperm.xlu0 %5089, %v4719
        %v5091 = vpop.permute.xlu0 %5090
        %5092 = vset.pattern.permute.xlu0 0
        %5093 = vperm.xlu0 %5092, %v4768
        %v5094 = vpop.permute.xlu0 %5093
        %5095 = vset.pattern.permute.xlu0 0
        %5096 = vperm.xlu0 %5095, %v4817
        %v5097 = vpop.permute.xlu0 %5096
        %5098 = vset.pattern.permute.xlu0 0
        %5099 = vperm.xlu0 %5098, %v4866
        %v5100 = vpop.permute.xlu0 %5099
        %5101 = vset.pattern.permute.xlu0 0
        %5102 = vperm.xlu0 %5101, %v4915
        %v5103 = vpop.permute.xlu0 %5102
        %5104 = vset.pattern.permute.xlu0 0
        %5105 = vperm.xlu0 %5104, %v4964
        %v5106 = vpop.permute.xlu0 %5105
        %5107 = vset.pattern.permute.xlu0 0
        %5108 = vperm.xlu0 %5107, %v5013
        %v5109 = vpop.permute.xlu0 %5108
        %v5110 = vlaneseq
        %v5111 = vand.u32 %v5110, 127
        %v5112 = vlaneseq
        %v5113 = vshrl.u32 %v5112, 7
        %v5114 = vsub.s32 %v5111, %v5113
        %v5115 = vrot.slane %v5016, %v5114
        %v5116 = vadd.s32 %v5111, 4294967288
        %v5117 = vlaneseq
        %v5118 = vshrl.u32 %v5117, 7
        %v5119 = vsub.s32 %v5116, %v5118
        %v5120 = vrot.slane %v5019, %v5119
        %vm5121 = vcmask 130112
        %v5122 = vsel %vm5121, %v5120, %v5115
        %v5123 = vadd.s32 %v5111, 4294967280
        %v5124 = vlaneseq
        %v5125 = vshrl.u32 %v5124, 7
        %v5126 = vsub.s32 %v5123, %v5125
        %v5127 = vrot.slane %v5022, %v5126
        %vm5128 = vcmask 195712
        %v5129 = vsel %vm5128, %v5127, %v5122
        %v5130 = vadd.s32 %v5111, 4294967272
        %v5131 = vlaneseq
        %v5132 = vshrl.u32 %v5131, 7
        %v5133 = vsub.s32 %v5130, %v5132
        %v5134 = vrot.slane %v5025, %v5133
        %vm5135 = vcmask 261312
        %v5136 = vsel %vm5135, %v5134, %v5129
        %v5137 = vadd.s32 %v5111, 4294967264
        %v5138 = vlaneseq
        %v5139 = vshrl.u32 %v5138, 7
        %v5140 = vsub.s32 %v5137, %v5139
        %v5141 = vrot.slane %v5028, %v5140
        %vm5142 = vcmask 326912
        %v5143 = vsel %vm5142, %v5141, %v5136
        %v5144 = vadd.s32 %v5111, 4294967256
        %v5145 = vlaneseq
        %v5146 = vshrl.u32 %v5145, 7
        %v5147 = vsub.s32 %v5144, %v5146
        %v5148 = vrot.slane %v5031, %v5147
        %vm5149 = vcmask 392512
        %v5150 = vsel %vm5149, %v5148, %v5143
        %v5151 = vadd.s32 %v5111, 4294967248
        %v5152 = vlaneseq
        %v5153 = vshrl.u32 %v5152, 7
        %v5154 = vsub.s32 %v5151, %v5153
        %v5155 = vrot.slane %v5034, %v5154
        %vm5156 = vcmask 458112
        %v5157 = vsel %vm5156, %v5155, %v5150
        %v5158 = vadd.s32 %v5111, 4294967240
        %v5159 = vlaneseq
        %v5160 = vshrl.u32 %v5159, 7
        %v5161 = vsub.s32 %v5158, %v5160
        %v5162 = vrot.slane %v5037, %v5161
        %vm5163 = vcmask 523712
        %v5164 = vsel %vm5163, %v5162, %v5157
        %v5165 = vadd.s32 %v5111, 4294967232
        %v5166 = vlaneseq
        %v5167 = vshrl.u32 %v5166, 7
        %v5168 = vsub.s32 %v5165, %v5167
        %v5169 = vrot.slane %v5040, %v5168
        %vm5170 = vcmask 589312
        %v5171 = vsel %vm5170, %v5169, %v5164
        %v5172 = vadd.s32 %v5111, 4294967224
        %v5173 = vlaneseq
        %v5174 = vshrl.u32 %v5173, 7
        %v5175 = vsub.s32 %v5172, %v5174
        %v5176 = vrot.slane %v5043, %v5175
        %vm5177 = vcmask 654912
        %v5178 = vsel %vm5177, %v5176, %v5171
        %v5179 = vadd.s32 %v5111, 4294967216
        %v5180 = vlaneseq
        %v5181 = vshrl.u32 %v5180, 7
        %v5182 = vsub.s32 %v5179, %v5181
        %v5183 = vrot.slane %v5046, %v5182
        %vm5184 = vcmask 720512
        %v5185 = vsel %vm5184, %v5183, %v5178
        %v5186 = vadd.s32 %v5111, 4294967208
        %v5187 = vlaneseq
        %v5188 = vshrl.u32 %v5187, 7
        %v5189 = vsub.s32 %v5186, %v5188
        %v5190 = vrot.slane %v5049, %v5189
        %vm5191 = vcmask 786112
        %v5192 = vsel %vm5191, %v5190, %v5185
        %v5193 = vadd.s32 %v5111, 4294967200
        %v5194 = vlaneseq
        %v5195 = vshrl.u32 %v5194, 7
        %v5196 = vsub.s32 %v5193, %v5195
        %v5197 = vrot.slane %v5052, %v5196
        %vm5198 = vcmask 851712
        %v5199 = vsel %vm5198, %v5197, %v5192
        %v5200 = vadd.s32 %v5111, 4294967192
        %v5201 = vlaneseq
        %v5202 = vshrl.u32 %v5201, 7
        %v5203 = vsub.s32 %v5200, %v5202
        %v5204 = vrot.slane %v5055, %v5203
        %vm5205 = vcmask 917312
        %v5206 = vsel %vm5205, %v5204, %v5199
        %v5207 = vadd.s32 %v5111, 4294967184
        %v5208 = vlaneseq
        %v5209 = vshrl.u32 %v5208, 7
        %v5210 = vsub.s32 %v5207, %v5209
        %v5211 = vrot.slane %v5058, %v5210
        %vm5212 = vcmask 982912
        %v5213 = vsel %vm5212, %v5211, %v5206
        %v5214 = vadd.s32 %v5111, 4294967176
        %v5215 = vlaneseq
        %v5216 = vshrl.u32 %v5215, 7
        %v5217 = vsub.s32 %v5214, %v5216
        %v5218 = vrot.slane %v5061, %v5217
        %vm5219 = vcmask 1048512
        %v5220 = vsel %vm5219, %v5218, %v5213
        %v5221 = vlaneseq
        %v5222 = vshrl.u32 %v5221, 7
        %v5223 = vsub.s32 %v5111, %v5222
        %v5224 = vrot.slane %v5064, %v5223
        %v5225 = vlaneseq
        %v5226 = vshrl.u32 %v5225, 7
        %v5227 = vsub.s32 %v5116, %v5226
        %v5228 = vrot.slane %v5067, %v5227
        %v5229 = vsel %vm5121, %v5228, %v5224
        %v5230 = vlaneseq
        %v5231 = vshrl.u32 %v5230, 7
        %v5232 = vsub.s32 %v5123, %v5231
        %v5233 = vrot.slane %v5070, %v5232
        %v5234 = vsel %vm5128, %v5233, %v5229
        %v5235 = vlaneseq
        %v5236 = vshrl.u32 %v5235, 7
        %v5237 = vsub.s32 %v5130, %v5236
        %v5238 = vrot.slane %v5073, %v5237
        %v5239 = vsel %vm5135, %v5238, %v5234
        %v5240 = vlaneseq
        %v5241 = vshrl.u32 %v5240, 7
        %v5242 = vsub.s32 %v5137, %v5241
        %v5243 = vrot.slane %v5076, %v5242
        %v5244 = vsel %vm5142, %v5243, %v5239
        %v5245 = vlaneseq
        %v5246 = vshrl.u32 %v5245, 7
        %v5247 = vsub.s32 %v5144, %v5246
        %v5248 = vrot.slane %v5079, %v5247
        %v5249 = vsel %vm5149, %v5248, %v5244
        %v5250 = vlaneseq
        %v5251 = vshrl.u32 %v5250, 7
        %v5252 = vsub.s32 %v5151, %v5251
        %v5253 = vrot.slane %v5082, %v5252
        %v5254 = vsel %vm5156, %v5253, %v5249
        %v5255 = vlaneseq
        %v5256 = vshrl.u32 %v5255, 7
        %v5257 = vsub.s32 %v5158, %v5256
        %v5258 = vrot.slane %v5085, %v5257
        %v5259 = vsel %vm5163, %v5258, %v5254
        %v5260 = vlaneseq
        %v5261 = vshrl.u32 %v5260, 7
        %v5262 = vsub.s32 %v5165, %v5261
        %v5263 = vrot.slane %v5088, %v5262
        %v5264 = vsel %vm5170, %v5263, %v5259
        %v5265 = vlaneseq
        %v5266 = vshrl.u32 %v5265, 7
        %v5267 = vsub.s32 %v5172, %v5266
        %v5268 = vrot.slane %v5091, %v5267
        %v5269 = vsel %vm5177, %v5268, %v5264
        %v5270 = vlaneseq
        %v5271 = vshrl.u32 %v5270, 7
        %v5272 = vsub.s32 %v5179, %v5271
        %v5273 = vrot.slane %v5094, %v5272
        %v5274 = vsel %vm5184, %v5273, %v5269
        %v5275 = vlaneseq
        %v5276 = vshrl.u32 %v5275, 7
        %v5277 = vsub.s32 %v5186, %v5276
        %v5278 = vrot.slane %v5097, %v5277
        %v5279 = vsel %vm5191, %v5278, %v5274
        %v5280 = vlaneseq
        %v5281 = vshrl.u32 %v5280, 7
        %v5282 = vsub.s32 %v5193, %v5281
        %v5283 = vrot.slane %v5100, %v5282
        %v5284 = vsel %vm5198, %v5283, %v5279
        %v5285 = vlaneseq
        %v5286 = vshrl.u32 %v5285, 7
        %v5287 = vsub.s32 %v5200, %v5286
        %v5288 = vrot.slane %v5103, %v5287
        %v5289 = vsel %vm5205, %v5288, %v5284
        %v5290 = vlaneseq
        %v5291 = vshrl.u32 %v5290, 7
        %v5292 = vsub.s32 %v5207, %v5291
        %v5293 = vrot.slane %v5106, %v5292
        %v5294 = vsel %vm5212, %v5293, %v5289
        %v5295 = vlaneseq
        %v5296 = vshrl.u32 %v5295, 7
        %v5297 = vsub.s32 %v5214, %v5296
        %v5298 = vrot.slane %v5109, %v5297
        %v5299 = vsel %vm5219, %v5298, %v5294
        %v5300 = vcombine.low %v5220, %v5299
        %v5302 = vunpack.c.l.s4 1966171168
        %v5303 = vunpack.c.0.s8 %v5302
        %v5304 = vlaneseq
        %v5305 = vshrl.u32 %v5304, 7
        %v5306 = vsub.s32 %v5303, %v5305
        %v5307 = vrot.slane %v5300, %v5306
        %v5309 = vunpack.c.l.s4 1966171168
        %v5310 = vunpack.c.0.s8 %v5309
        %v5311 = vlaneseq
        %v5312 = vshrl.u32 %v5311, 7
        %v5313 = vsub.s32 %v5310, %v5312
        %v5314 = vrot.slane %v5307, %v5313
        %v5316 = vlaneseq
        %vm5317 = vcmp.ge.s32.totalorder %v5316, 0
        %vm5318 = vcmp.lt.s32.totalorder %v5316, 256
        %vm5319 = vmand %vm5317, %vm5318
        %5320 = vst.msk [vmem:[%s314] sm:$0x3] %vm5319, %v5314
        %s5321 = sand.u32 %s165, 1
        %s5322 = scalar_lea.sflag [#allocation5], %s5321
        %s5323 = sand.u32 %s165, 1
        %s5324 = smul.addr %s5323, 2
        %s5325 = scalar_lea.vmem [#allocation11], %s5324
        // Predicated region
        $region61: #{tpu_custom_call.1} parent=43 // pred_check
          %p5326 = pneg %p175
        $region62: #{tpu_custom_call.1} parent=43 // pred_check_branch
          %5328 = sbr.rel (%p5326) target = $region64
        $region63: #{tpu_custom_call.1} parent=43 // pred_region
          %s5329 = smul.u32 2, %s26
          %s5331 = ssub.s32 32, 32
          %5332 = vsyncadd %s5322, %s5331
          %s5333 = smul.addr %s5329, 16
          %s5334 = scalar_lea.hbm %s6, %s5333
          %s5336 = sshll.u32 %s5325, 4
          %s5337 = int_to_ptr.vmem [resolvable:$true] %s5336
          %5339 = dma.vmem_to_hbm [thread:$0]  %s5337, 32, %s5334, %s5322
        $region64: #{tpu_custom_call.1} parent=43 // pred_fallthru
          _
      $region44: #{tpu_custom_call.1} parent=5 // pred_fallthru
        _
      %p5340 = scmp.le.s32.totalorder 2, %s21
      // Predicated region
      $region65: #{tpu_custom_call.1} parent=5 // pred_check
        %p5341 = pneg %p5340
      $region66: #{tpu_custom_call.1} parent=5 // pred_check_branch
        %5343 = sbr.rel (%p5341) target = $region68
      $region67: #{tpu_custom_call.1} parent=5 // pred_region
        %s5344 = ssub.s32 %s21, 2
        // Predicated region
        $region69: #{tpu_custom_call.1} parent=67 // pred_check
          %p5345 = pneg %p181
        $region70: #{tpu_custom_call.1} parent=67 // pred_check_branch
          %5347 = sbr.rel (%p5345) target = $region72
        $region71: #{tpu_custom_call.1} parent=67 // pred_region
          %s5348 = sand.u32 %s166, 1
          %s5349 = scalar_lea.sflag [#allocation5], %s5348
          %s5350 = sand.u32 %s166, 1
          %s5351 = smul.addr %s5350, 2
          %s5352 = scalar_lea.vmem [#allocation11], %s5351
          %5353 = dma.done %s5349, 32
        $region72: #{tpu_custom_call.1} parent=67 // pred_fallthru
          _
      $region68: #{tpu_custom_call.1} parent=5 // pred_fallthru
        _
    $region6: #{tpu_custom_call.1} parent=1 // loop_footer
      %s25 = sadd.s32 1, %s21
    $region7: #{tpu_custom_call.1} parent=1 // loop_footer_branch
      %20 = sbr.rel target = $region3
    $region8: #{tpu_custom_call.1} parent=1 // loop_exit
      _
    %5354 = vsyncpa [#allocation4], 1
    %s5355 = scalar_lea.sflag [#allocation4], 1
    %5356 = vsyncpa %s5355, 1
    %5357 = vsyncpa [#allocation7], 1
    %5358 = vsyncpa [#allocation10], 1
    %5359 = vsyncpa [#allocation5], 1
    %s5360 = scalar_lea.sflag [#allocation5], 1
    %5361 = vsyncpa %s5360, 1

</llo_original>
